<compile_context>
chip_gen: v6e
topology: v6e:2x2x1
jax: 0.10.0
libtpu: 0.0.40
codegen_flags: <defaults>
</compile_context>

<pallas_src>
import jax
import jax.numpy as jnp
from jax.experimental import pallas as pl
from jax.experimental.pallas import tpu as pltpu


def _round_up(x, m):
    return ((x + m - 1) // m) * m


def _double_conv_kernel(x_ref, w1_ref, b1_ref, w2_ref, b2_ref, o_ref,
                        xpad_ref, ypad_ref, p1_ref, p2_ref, acc_ref):
    """Fused double_conv for one batch element (NHWC).

    x_ref:   (1, H, W, Cin)  f32     input tile (Cin padded to a multiple of 8)
    w1_ref:  (3, 3*Cin, Cout) bf16   layer-1 weights, BN scale folded, K-order (dx, cin) per dy
    b1_ref:  (1, Cout) f32           layer-1 folded bias
    w2_ref:  (3, 3*Cout, Cout) bf16
    b2_ref:  (1, Cout) f32
    o_ref:   (1, H, W, Cout) f32     output tile
    scratch:
      xpad_ref: (H+2, W+2, Cin)  f32   zero-border padded input
      ypad_ref: (H+2, W+2, Cout) f32   zero-border padded layer-1 activation (never hits HBM)
      p1_ref:   (H*W, 3*Cin)  bf16     per-dy patch, layer 1
      p2_ref:   (H*W, 3*Cout) bf16     per-dy patch, layer 2
      acc_ref:  (H*W, Cout)   f32      MXU accumulator
    """
    _, H, W, Cout = o_ref.shape
    Cin = x_ref.shape[3]

    def zero_border(ref):
        # padding=1: only the 1-pixel border needs zeros; the interior is rewritten below.
        Hp, Wp, C = ref.shape
        ref[0:1, :, :] = jnp.zeros((1, Wp, C), ref.dtype)
        ref[Hp - 1:Hp, :, :] = jnp.zeros((1, Wp, C), ref.dtype)
        ref[:, 0:1, :] = jnp.zeros((Hp, 1, C), ref.dtype)
        ref[:, Wp - 1:Wp, :] = jnp.zeros((Hp, 1, C), ref.dtype)

    def conv3x3_bn_relu(src_ref, patch_ref, w_ref, b_ref, c):
        # Per-dy row group: one (H*W, 3*c) bf16 patch + one MXU matmul, accumulated into the
        # f32 VMEM accumulator (3 matmuls total; no 9x im2col blow-up, no spilled vreg acc).
        for dy in range(3):
            for dx in range(3):
                patch_ref[:, dx * c:(dx + 1) * c] = (
                    src_ref[dy:dy + H, dx:dx + W, :]
                    .reshape(H * W, c).astype(patch_ref.dtype))
            part = jnp.dot(patch_ref[...], w_ref[dy],
                           preferred_element_type=jnp.float32)
            if dy == 0:
                acc_ref[...] = part
            else:
                acc_ref[...] += part
        return jnp.maximum(acc_ref[...] + b_ref[...], 0.0)   # bias + ReLU epilogue, f32

    zero_border(xpad_ref)
    zero_border(ypad_ref)

    # In-kernel zero padding for padding=1 (no jnp.pad round-trip through HBM).
    xpad_ref[1:H + 1, 1:W + 1, :] = x_ref[0]
    y1 = conv3x3_bn_relu(xpad_ref, p1_ref, w1_ref, b1_ref, Cin)      # (H*W, Cout) f32

    # Layer-1 activation stays resident in VMEM.
    ypad_ref[1:H + 1, 1:W + 1, :] = y1.reshape(H, W, Cout)
    y2 = conv3x3_bn_relu(ypad_ref, p2_ref, w2_ref, b2_ref, Cout)

    o_ref[...] = y2.reshape(1, H, W, Cout).astype(o_ref.dtype)


def _prep_layer(w_hwio, scale, bias, cin_pad):
    """Fold BN scale into the weights, pad Cin, cast to bf16, reshape to (3, 3*cin_pad, Cout)."""
    cin, cout = w_hwio.shape[2], w_hwio.shape[3]
    w = w_hwio * scale                                             # fold BN scale (over Cout)
    w = jnp.pad(w, ((0, 0), (0, 0), (0, cin_pad - cin), (0, 0)))
    w = w.reshape(3, 3 * cin_pad, cout).astype(jnp.bfloat16)       # K-order (dx, cin) per dy
    b = bias.reshape(1, cout).astype(jnp.float32)
    return w, b


def _vmem_estimate(H, W, cin, cout):
    """Rough tile-padded VMEM bytes (double-buffered blocks + scratch)."""
    def padded(shape, itemsize, sub):
        s = list(shape)
        s[-1] = _round_up(s[-1], 128)
        if len(s) >= 2:
            s[-2] = _round_up(s[-2], sub)
        n = 1
        for d in s:
            n *= d
        return n * itemsize

    est = 2 * (padded((1, H, W, cin), 4, 8) + padded((1, H, W, cout), 4, 8))
    est += 2 * (padded((3, 3 * cin, cout), 2, 16) + padded((3, 3 * cout, cout), 2, 16)
                + 2 * padded((1, cout), 4, 8))
    est += padded((H + 2, W + 2, cin), 4, 8) + padded((H + 2, W + 2, cout), 4, 8)
    est += padded((H * W, 3 * cin), 2, 16) + padded((H * W, 3 * cout), 2, 16)
    est += padded((H * W, cout), 4, 8)
    return est


def double_conv_forward_nhwc(x_nhwc, w1, s1, b1, w2, s2, b2):
    """double_conv forward, NHWC in / NHWC out — the layout chained AE blocks should use."""
    N, H, W, Cin = x_nhwc.shape
    Cout = w1.shape[-1]
    Cin_p = _round_up(Cin, 8)        # >=32B innermost DMA run for tiny Cin (e.g. RGB input)
    if Cin_p != Cin:
        x_nhwc = jnp.pad(x_nhwc, ((0, 0), (0, 0), (0, 0), (0, Cin_p - Cin)))

    w1p, b1p = _prep_layer(w1, s1, b1, Cin_p)
    w2p, b2p = _prep_layer(w2, s2, b2, Cout)

    vmem_limit = int(min(64 * 2**20,
                         max(16 * 2**20, 2 * _vmem_estimate(H, W, Cin_p, Cout))))

    return pl.pallas_call(
        _double_conv_kernel,
        out_shape=jax.ShapeDtypeStruct((N, H, W, Cout), jnp.float32),
        grid_spec=pltpu.PrefetchScalarGridSpec(
            num_scalar_prefetch=0,
            grid=(N,),                                  # batch axis; parallel across TCs
            in_specs=[
                pl.BlockSpec((1, H, W, Cin_p), lambda n: (n, 0, 0, 0)),
                pl.BlockSpec((3, 3 * Cin_p, Cout), lambda n: (0, 0, 0)),
                pl.BlockSpec((1, Cout), lambda n: (0, 0)),
                pl.BlockSpec((3, 3 * Cout, Cout), lambda n: (0, 0, 0)),
                pl.BlockSpec((1, Cout), lambda n: (0, 0)),
            ],
            out_specs=pl.BlockSpec((1, H, W, Cout), lambda n: (n, 0, 0, 0)),
            scratch_shapes=[
                pltpu.VMEM((H + 2, W + 2, Cin_p), jnp.float32),   # padded input
                pltpu.VMEM((H + 2, W + 2, Cout), jnp.float32),    # padded layer-1 activation
                pltpu.VMEM((H * W, 3 * Cin_p), jnp.bfloat16),     # per-dy patch, layer 1
                pltpu.VMEM((H * W, 3 * Cout), jnp.bfloat16),      # per-dy patch, layer 2
                pltpu.VMEM((H * W, Cout), jnp.float32),           # f32 MXU accumulator
            ],
        ),
        compiler_params=pltpu.CompilerParams(
            dimension_semantics=("parallel",),
            vmem_limit_bytes=vmem_limit,
        ),
    )(x_nhwc, w1p, b1p, w2p, b2p)


@jax.jit
def double_conv_forward(x_nchw, w1, s1, b1, w2, s2, b2):
    """PyTorch-facing wrapper: NCHW in / NCHW out (layout converted only at the boundary)."""
    x = jnp.transpose(x_nchw, (0, 2, 3, 1))
    y = double_conv_forward_nhwc(x, w1, s1, b1, w2, s2, b2)
    return jnp.transpose(y, (0, 3, 1, 2))


# inconv(in_ch, out_ch).forward == double_conv(in_ch, out_ch).forward
inconv_forward = double_conv_forward


def make_params(key, in_ch, out_ch):
    """Deterministic synthetic parameters for double_conv(in_ch, out_ch), BN eval-mode folded."""
    ks = jax.random.split(key, 12)
    eps = 1e-5

    def conv_layer(keys, cin, cout):
        kw, kb, kg, kbt, km, kv = keys
        # PyTorch conv weight layout is (cout, cin, 3, 3); store as HWIO for NHWC.
        w_oihw = jax.random.normal(kw, (cout, cin, 3, 3), jnp.float32) * 0.1
        w_hwio = jnp.transpose(w_oihw, (2, 3, 1, 0))
        b = jax.random.normal(kb, (cout,), jnp.float32) * 0.1
        gamma = 1.0 + 0.1 * jax.random.normal(kg, (cout,), jnp.float32)
        beta = 0.1 * jax.random.normal(kbt, (cout,), jnp.float32)
        running_mean = 0.1 * jax.random.normal(km, (cout,), jnp.float32)
        running_var = 1.0 + 0.1 * jax.random.uniform(kv, (cout,), jnp.float32)
        # Fold BN (eval mode) + conv bias into per-channel scale / bias.
        scale = gamma / jnp.sqrt(running_var + eps)
        bias = scale * (b - running_mean) + beta
        return w_hwio, scale, bias

    return conv_layer(ks[0:6], in_ch, out_ch), conv_layer(ks[6:12], out_ch, out_ch)


def _reference(x_nchw, w1, s1, b1, w2, s2, b2):
    """Plain-JAX reference mirroring the kernel's bf16-operand / f32-accumulate matmuls."""
    q = lambda a: a.astype(jnp.bfloat16).astype(jnp.float32)

    def layer(x, w, s, b):
        y = jax.lax.conv_general_dilated(
            q(x), q(w * s), window_strides=(1, 1), padding="SAME",
            dimension_numbers=("NHWC", "HWIO", "NHWC"),
            precision=jax.lax.Precision.HIGHEST)
        return jnp.maximum(y + b, 0.0)

    x = jnp.transpose(x_nchw, (0, 2, 3, 1))
    y = layer(layer(x, w1, s1, b1), w2, s2, b2)
    return jnp.transpose(y, (0, 3, 1, 2))


if __name__ == "__main__":
    test_cases = [
        # (N, Cin, Cout, H, W)
        (2, 4, 8, 16, 16),    # small smoke test
        (2, 3, 64, 16, 16),   # AE inconv(3, 16*w) channel widths at reduced spatial size
    ]
    key = jax.random.PRNGKey(0)
    for (N, Cin, Cout, H, W) in test_cases:
        key, kx, kp = jax.random.split(key, 3)
        x = jax.random.normal(kx, (N, Cin, H, W), jnp.float32)   # NCHW like PyTorch
        (w1, s1, b1), (w2, s2, b2) = make_params(kp, Cin, Cout)

        out = jax.block_until_ready(inconv_forward(x, w1, s1, b1, w2, s2, b2))
        ref = _reference(x, w1, s1, b1, w2, s2, b2)

        assert out.shape == (N, Cout, H, W), out.shape
        max_err = float(jnp.max(jnp.abs(out - ref)))
        assert jnp.allclose(out, ref, atol=1e-2, rtol=1e-2), \
            f"mismatch vs reference for case {(N, Cin, Cout, H, W)}: max_abs_err={max_err}"

    print("KERNEL_OK")
</pallas_src>

<mosaic_0001>
module attributes {stable_mosaic.version = 11 : i64} {
  func.func @_double_conv_kernel(%arg0: i32, %arg1: memref<1x16x16x8xf32, #tpu.memory_space<vmem>>, %arg2: memref<3x24x8xbf16, #tpu.memory_space<vmem>>, %arg3: memref<1x8xf32, #tpu.memory_space<vmem>>, %arg4: memref<3x24x8xbf16, #tpu.memory_space<vmem>>, %arg5: memref<1x8xf32, #tpu.memory_space<vmem>>, %arg6: memref<1x16x16x8xf32, #tpu.memory_space<vmem>>, %arg7: memref<18x18x8xf32, #tpu.memory_space<vmem>>, %arg8: memref<18x18x8xf32, #tpu.memory_space<vmem>>, %arg9: memref<256x24xbf16, #tpu.memory_space<vmem>>, %arg10: memref<256x24xbf16, #tpu.memory_space<vmem>>, %arg11: memref<256x8xf32, #tpu.memory_space<vmem>>) attributes {dimension_semantics = [#tpu.dimension_semantics<parallel>], iteration_bounds = array<i64: 2>, scalar_prefetch = 0 : i64, scratch_operands = 5 : i64, tpu.core_type = #tpu.core_type<tc>, window_params = [{transform_indices = @transform_0, window_bounds = array<i64: 1, 16, 16, 8>}, {pipeline_mode = #tpu.pipeline_mode<synchronous>, transform_indices = @transform_1, window_bounds = array<i64: 3, 24, 8>}, {pipeline_mode = #tpu.pipeline_mode<synchronous>, transform_indices = @transform_2, window_bounds = array<i64: 1, 8>}, {pipeline_mode = #tpu.pipeline_mode<synchronous>, transform_indices = @transform_3, window_bounds = array<i64: 3, 24, 8>}, {pipeline_mode = #tpu.pipeline_mode<synchronous>, transform_indices = @transform_4, window_bounds = array<i64: 1, 8>}, {transform_indices = @transform_5, window_bounds = array<i64: 1, 16, 16, 8>}]} {
    %cst = arith.constant 0.000000e+00 : f32
    %0 = vector.broadcast %cst : f32 to vector<1x18x8xf32>
    %c0 = arith.constant 0 : index
    %c0_0 = arith.constant 0 : index
    %c0_1 = arith.constant 0 : index
    %1 = vector.load %arg7[%c0, %c0_0, %c0_1] : memref<18x18x8xf32, #tpu.memory_space<vmem>>, vector<1x18x8xf32>
    tpu.vector_store %arg7[%c0, %c0_0, %c0_1], %0 {strides = array<i32>} : memref<18x18x8xf32, #tpu.memory_space<vmem>>, vector<1x18x8xf32>,
    %cst_2 = arith.constant 0.000000e+00 : f32
    %2 = vector.broadcast %cst_2 : f32 to vector<1x18x8xf32>
    %c17 = arith.constant 17 : index
    %c0_3 = arith.constant 0 : index
    %c0_4 = arith.constant 0 : index
    %3 = vector.load %arg7[%c17, %c0_3, %c0_4] : memref<18x18x8xf32, #tpu.memory_space<vmem>>, vector<1x18x8xf32>
    tpu.vector_store %arg7[%c17, %c0_3, %c0_4], %2 {strides = array<i32>} : memref<18x18x8xf32, #tpu.memory_space<vmem>>, vector<1x18x8xf32>,
    %cst_5 = arith.constant 0.000000e+00 : f32
    %4 = vector.broadcast %cst_5 : f32 to vector<18x1x8xf32>
    %c0_6 = arith.constant 0 : index
    %c0_7 = arith.constant 0 : index
    %c0_8 = arith.constant 0 : index
    %5 = vector.load %arg7[%c0_6, %c0_7, %c0_8] : memref<18x18x8xf32, #tpu.memory_space<vmem>>, vector<18x1x8xf32>
    tpu.vector_store %arg7[%c0_6, %c0_7, %c0_8], %4 {strides = array<i32>} : memref<18x18x8xf32, #tpu.memory_space<vmem>>, vector<18x1x8xf32>,
    %cst_9 = arith.constant 0.000000e+00 : f32
    %6 = vector.broadcast %cst_9 : f32 to vector<18x1x8xf32>
    %c0_10 = arith.constant 0 : index
    %c17_11 = arith.constant 17 : index
    %c0_12 = arith.constant 0 : index
    %7 = vector.load %arg7[%c0_10, %c17_11, %c0_12] : memref<18x18x8xf32, #tpu.memory_space<vmem>>, vector<18x1x8xf32>
    tpu.vector_store %arg7[%c0_10, %c17_11, %c0_12], %6 {strides = array<i32>} : memref<18x18x8xf32, #tpu.memory_space<vmem>>, vector<18x1x8xf32>,
    %cst_13 = arith.constant 0.000000e+00 : f32
    %8 = vector.broadcast %cst_13 : f32 to vector<1x18x8xf32>
    %c0_14 = arith.constant 0 : index
    %c0_15 = arith.constant 0 : index
    %c0_16 = arith.constant 0 : index
    %9 = vector.load %arg8[%c0_14, %c0_15, %c0_16] : memref<18x18x8xf32, #tpu.memory_space<vmem>>, vector<1x18x8xf32>
    tpu.vector_store %arg8[%c0_14, %c0_15, %c0_16], %8 {strides = array<i32>} : memref<18x18x8xf32, #tpu.memory_space<vmem>>, vector<1x18x8xf32>,
    %cst_17 = arith.constant 0.000000e+00 : f32
    %10 = vector.broadcast %cst_17 : f32 to vector<1x18x8xf32>
    %c17_18 = arith.constant 17 : index
    %c0_19 = arith.constant 0 : index
    %c0_20 = arith.constant 0 : index
    %11 = vector.load %arg8[%c17_18, %c0_19, %c0_20] : memref<18x18x8xf32, #tpu.memory_space<vmem>>, vector<1x18x8xf32>
    tpu.vector_store %arg8[%c17_18, %c0_19, %c0_20], %10 {strides = array<i32>} : memref<18x18x8xf32, #tpu.memory_space<vmem>>, vector<1x18x8xf32>,
    %cst_21 = arith.constant 0.000000e+00 : f32
    %12 = vector.broadcast %cst_21 : f32 to vector<18x1x8xf32>
    %c0_22 = arith.constant 0 : index
    %c0_23 = arith.constant 0 : index
    %c0_24 = arith.constant 0 : index
    %13 = vector.load %arg8[%c0_22, %c0_23, %c0_24] : memref<18x18x8xf32, #tpu.memory_space<vmem>>, vector<18x1x8xf32>
    tpu.vector_store %arg8[%c0_22, %c0_23, %c0_24], %12 {strides = array<i32>} : memref<18x18x8xf32, #tpu.memory_space<vmem>>, vector<18x1x8xf32>,
    %cst_25 = arith.constant 0.000000e+00 : f32
    %14 = vector.broadcast %cst_25 : f32 to vector<18x1x8xf32>
    %c0_26 = arith.constant 0 : index
    %c17_27 = arith.constant 17 : index
    %c0_28 = arith.constant 0 : index
    %15 = vector.load %arg8[%c0_26, %c17_27, %c0_28] : memref<18x18x8xf32, #tpu.memory_space<vmem>>, vector<18x1x8xf32>
    tpu.vector_store %arg8[%c0_26, %c17_27, %c0_28], %14 {strides = array<i32>} : memref<18x18x8xf32, #tpu.memory_space<vmem>>, vector<18x1x8xf32>,
    %c0_29 = arith.constant 0 : index
    %c0_30 = arith.constant 0 : index
    %c0_31 = arith.constant 0 : index
    %c0_32 = arith.constant 0 : index
    %16 = vector.load %arg1[%c0_29, %c0_30, %c0_31, %c0_32] : memref<1x16x16x8xf32, #tpu.memory_space<vmem>>, vector<1x16x16x8xf32>
    %17 = vector.shape_cast %16 : vector<1x16x16x8xf32> to vector<16x16x8xf32>
    %c1 = arith.constant 1 : index
    %c1_33 = arith.constant 1 : index
    %c0_34 = arith.constant 0 : index
    %18 = vector.load %arg7[%c1, %c1_33, %c0_34] : memref<18x18x8xf32, #tpu.memory_space<vmem>>, vector<16x16x8xf32>
    tpu.vector_store %arg7[%c1, %c1_33, %c0_34], %17 {strides = array<i32>} : memref<18x18x8xf32, #tpu.memory_space<vmem>>, vector<16x16x8xf32>,
    %c0_35 = arith.constant 0 : index
    %c0_36 = arith.constant 0 : index
    %c0_37 = arith.constant 0 : index
    %19 = vector.load %arg7[%c0_35, %c0_36, %c0_37] : memref<18x18x8xf32, #tpu.memory_space<vmem>>, vector<16x16x8xf32>
    %20 = vector.shape_cast %19 : vector<16x16x8xf32> to vector<256x8xf32>
    %21 = arith.truncf %20 : vector<256x8xf32> to vector<256x8xbf16>
    %c0_38 = arith.constant 0 : index
    %c0_39 = arith.constant 0 : index
    %22 = vector.load %arg9[%c0_38, %c0_39] : memref<256x24xbf16, #tpu.memory_space<vmem>>, vector<256x8xbf16>
    tpu.vector_store %arg9[%c0_38, %c0_39], %21 {strides = array<i32>} : memref<256x24xbf16, #tpu.memory_space<vmem>>, vector<256x8xbf16>,
    %c0_40 = arith.constant 0 : index
    %c1_41 = arith.constant 1 : index
    %c0_42 = arith.constant 0 : index
    %23 = vector.load %arg7[%c0_40, %c1_41, %c0_42] : memref<18x18x8xf32, #tpu.memory_space<vmem>>, vector<16x16x8xf32>
    %24 = vector.shape_cast %23 : vector<16x16x8xf32> to vector<256x8xf32>
    %25 = arith.truncf %24 : vector<256x8xf32> to vector<256x8xbf16>
    %c0_43 = arith.constant 0 : index
    %c8 = arith.constant 8 : index
    %26 = vector.load %arg9[%c0_43, %c8] : memref<256x24xbf16, #tpu.memory_space<vmem>>, vector<256x8xbf16>
    tpu.vector_store %arg9[%c0_43, %c8], %25 {strides = array<i32>} : memref<256x24xbf16, #tpu.memory_space<vmem>>, vector<256x8xbf16>,
    %c0_44 = arith.constant 0 : index
    %c2 = arith.constant 2 : index
    %c0_45 = arith.constant 0 : index
    %27 = vector.load %arg7[%c0_44, %c2, %c0_45] : memref<18x18x8xf32, #tpu.memory_space<vmem>>, vector<16x16x8xf32>
    %28 = vector.shape_cast %27 : vector<16x16x8xf32> to vector<256x8xf32>
    %29 = arith.truncf %28 : vector<256x8xf32> to vector<256x8xbf16>
    %c0_46 = arith.constant 0 : index
    %c16 = arith.constant 16 : index
    %30 = vector.load %arg9[%c0_46, %c16] : memref<256x24xbf16, #tpu.memory_space<vmem>>, vector<256x8xbf16>
    tpu.vector_store %arg9[%c0_46, %c16], %29 {strides = array<i32>} : memref<256x24xbf16, #tpu.memory_space<vmem>>, vector<256x8xbf16>,
    %c0_47 = arith.constant 0 : index
    %c0_48 = arith.constant 0 : index
    %31 = vector.load %arg9[%c0_47, %c0_48] : memref<256x24xbf16, #tpu.memory_space<vmem>>, vector<256x24xbf16>
    %c0_49 = arith.constant 0 : index
    %c0_50 = arith.constant 0 : index
    %c0_51 = arith.constant 0 : index
    %32 = vector.load %arg2[%c0_49, %c0_50, %c0_51] : memref<3x24x8xbf16, #tpu.memory_space<vmem>>, vector<1x24x8xbf16>
    %33 = vector.shape_cast %32 : vector<1x24x8xbf16> to vector<24x8xbf16>
    %cst_52 = arith.constant dense<0.000000e+00> : vector<256x8xf32>
    %34 = tpu.matmul %31, %33, %cst_52 {dimension_numbers = #tpu.dot_dimension_numbers<[1], [0], [0], [1], [0, 0, 1, 1], [], []>} : vector<256x24xbf16>, vector<24x8xbf16>, vector<256x8xf32> -> vector<256x8xf32>
    %c0_53 = arith.constant 0 : index
    %c0_54 = arith.constant 0 : index
    %35 = vector.load %arg11[%c0_53, %c0_54] : memref<256x8xf32, #tpu.memory_space<vmem>>, vector<256x8xf32>
    tpu.vector_store %arg11[%c0_53, %c0_54], %34 {strides = array<i32>} : memref<256x8xf32, #tpu.memory_space<vmem>>, vector<256x8xf32>,
    %c1_55 = arith.constant 1 : index
    %c0_56 = arith.constant 0 : index
    %c0_57 = arith.constant 0 : index
    %36 = vector.load %arg7[%c1_55, %c0_56, %c0_57] : memref<18x18x8xf32, #tpu.memory_space<vmem>>, vector<16x16x8xf32>
    %37 = vector.shape_cast %36 : vector<16x16x8xf32> to vector<256x8xf32>
    %38 = arith.truncf %37 : vector<256x8xf32> to vector<256x8xbf16>
    %c0_58 = arith.constant 0 : index
    %c0_59 = arith.constant 0 : index
    %39 = vector.load %arg9[%c0_58, %c0_59] : memref<256x24xbf16, #tpu.memory_space<vmem>>, vector<256x8xbf16>
    tpu.vector_store %arg9[%c0_58, %c0_59], %38 {strides = array<i32>} : memref<256x24xbf16, #tpu.memory_space<vmem>>, vector<256x8xbf16>,
    %c1_60 = arith.constant 1 : index
    %c1_61 = arith.constant 1 : index
    %c0_62 = arith.constant 0 : index
    %40 = vector.load %arg7[%c1_60, %c1_61, %c0_62] : memref<18x18x8xf32, #tpu.memory_space<vmem>>, vector<16x16x8xf32>
    %41 = vector.shape_cast %40 : vector<16x16x8xf32> to vector<256x8xf32>
    %42 = arith.truncf %41 : vector<256x8xf32> to vector<256x8xbf16>
    %c0_63 = arith.constant 0 : index
    %c8_64 = arith.constant 8 : index
    %43 = vector.load %arg9[%c0_63, %c8_64] : memref<256x24xbf16, #tpu.memory_space<vmem>>, vector<256x8xbf16>
    tpu.vector_store %arg9[%c0_63, %c8_64], %42 {strides = array<i32>} : memref<256x24xbf16, #tpu.memory_space<vmem>>, vector<256x8xbf16>,
    %c1_65 = arith.constant 1 : index
    %c2_66 = arith.constant 2 : index
    %c0_67 = arith.constant 0 : index
    %44 = vector.load %arg7[%c1_65, %c2_66, %c0_67] : memref<18x18x8xf32, #tpu.memory_space<vmem>>, vector<16x16x8xf32>
    %45 = vector.shape_cast %44 : vector<16x16x8xf32> to vector<256x8xf32>
    %46 = arith.truncf %45 : vector<256x8xf32> to vector<256x8xbf16>
    %c0_68 = arith.constant 0 : index
    %c16_69 = arith.constant 16 : index
    %47 = vector.load %arg9[%c0_68, %c16_69] : memref<256x24xbf16, #tpu.memory_space<vmem>>, vector<256x8xbf16>
    tpu.vector_store %arg9[%c0_68, %c16_69], %46 {strides = array<i32>} : memref<256x24xbf16, #tpu.memory_space<vmem>>, vector<256x8xbf16>,
    %c0_70 = arith.constant 0 : index
    %c0_71 = arith.constant 0 : index
    %48 = vector.load %arg9[%c0_70, %c0_71] : memref<256x24xbf16, #tpu.memory_space<vmem>>, vector<256x24xbf16>
    %c1_72 = arith.constant 1 : index
    %c0_73 = arith.constant 0 : index
    %c0_74 = arith.constant 0 : index
    %49 = vector.load %arg2[%c1_72, %c0_73, %c0_74] : memref<3x24x8xbf16, #tpu.memory_space<vmem>>, vector<1x24x8xbf16>
    %50 = vector.shape_cast %49 : vector<1x24x8xbf16> to vector<24x8xbf16>
    %cst_75 = arith.constant dense<0.000000e+00> : vector<256x8xf32>
    %51 = tpu.matmul %48, %50, %cst_75 {dimension_numbers = #tpu.dot_dimension_numbers<[1], [0], [0], [1], [0, 0, 1, 1], [], []>} : vector<256x24xbf16>, vector<24x8xbf16>, vector<256x8xf32> -> vector<256x8xf32>
    %c0_76 = arith.constant 0 : index
    %c0_77 = arith.constant 0 : index
    %52 = vector.load %arg11[%c0_76, %c0_77] : memref<256x8xf32, #tpu.memory_space<vmem>>, vector<256x8xf32>
    %53 = arith.addf %52, %51 : vector<256x8xf32>
    %c0_78 = arith.constant 0 : index
    %c0_79 = arith.constant 0 : index
    %54 = vector.load %arg11[%c0_78, %c0_79] : memref<256x8xf32, #tpu.memory_space<vmem>>, vector<256x8xf32>
    tpu.vector_store %arg11[%c0_78, %c0_79], %53 {strides = array<i32>} : memref<256x8xf32, #tpu.memory_space<vmem>>, vector<256x8xf32>,
    %c2_80 = arith.constant 2 : index
    %c0_81 = arith.constant 0 : index
    %c0_82 = arith.constant 0 : index
    %55 = vector.load %arg7[%c2_80, %c0_81, %c0_82] : memref<18x18x8xf32, #tpu.memory_space<vmem>>, vector<16x16x8xf32>
    %56 = vector.shape_cast %55 : vector<16x16x8xf32> to vector<256x8xf32>
    %57 = arith.truncf %56 : vector<256x8xf32> to vector<256x8xbf16>
    %c0_83 = arith.constant 0 : index
    %c0_84 = arith.constant 0 : index
    %58 = vector.load %arg9[%c0_83, %c0_84] : memref<256x24xbf16, #tpu.memory_space<vmem>>, vector<256x8xbf16>
    tpu.vector_store %arg9[%c0_83, %c0_84], %57 {strides = array<i32>} : memref<256x24xbf16, #tpu.memory_space<vmem>>, vector<256x8xbf16>,
    %c2_85 = arith.constant 2 : index
    %c1_86 = arith.constant 1 : index
    %c0_87 = arith.constant 0 : index
    %59 = vector.load %arg7[%c2_85, %c1_86, %c0_87] : memref<18x18x8xf32, #tpu.memory_space<vmem>>, vector<16x16x8xf32>
    %60 = vector.shape_cast %59 : vector<16x16x8xf32> to vector<256x8xf32>
    %61 = arith.truncf %60 : vector<256x8xf32> to vector<256x8xbf16>
    %c0_88 = arith.constant 0 : index
    %c8_89 = arith.constant 8 : index
    %62 = vector.load %arg9[%c0_88, %c8_89] : memref<256x24xbf16, #tpu.memory_space<vmem>>, vector<256x8xbf16>
    tpu.vector_store %arg9[%c0_88, %c8_89], %61 {strides = array<i32>} : memref<256x24xbf16, #tpu.memory_space<vmem>>, vector<256x8xbf16>,
    %c2_90 = arith.constant 2 : index
    %c2_91 = arith.constant 2 : index
    %c0_92 = arith.constant 0 : index
    %63 = vector.load %arg7[%c2_90, %c2_91, %c0_92] : memref<18x18x8xf32, #tpu.memory_space<vmem>>, vector<16x16x8xf32>
    %64 = vector.shape_cast %63 : vector<16x16x8xf32> to vector<256x8xf32>
    %65 = arith.truncf %64 : vector<256x8xf32> to vector<256x8xbf16>
    %c0_93 = arith.constant 0 : index
    %c16_94 = arith.constant 16 : index
    %66 = vector.load %arg9[%c0_93, %c16_94] : memref<256x24xbf16, #tpu.memory_space<vmem>>, vector<256x8xbf16>
    tpu.vector_store %arg9[%c0_93, %c16_94], %65 {strides = array<i32>} : memref<256x24xbf16, #tpu.memory_space<vmem>>, vector<256x8xbf16>,
    %c0_95 = arith.constant 0 : index
    %c0_96 = arith.constant 0 : index
    %67 = vector.load %arg9[%c0_95, %c0_96] : memref<256x24xbf16, #tpu.memory_space<vmem>>, vector<256x24xbf16>
    %c2_97 = arith.constant 2 : index
    %c0_98 = arith.constant 0 : index
    %c0_99 = arith.constant 0 : index
    %68 = vector.load %arg2[%c2_97, %c0_98, %c0_99] : memref<3x24x8xbf16, #tpu.memory_space<vmem>>, vector<1x24x8xbf16>
    %69 = vector.shape_cast %68 : vector<1x24x8xbf16> to vector<24x8xbf16>
    %cst_100 = arith.constant dense<0.000000e+00> : vector<256x8xf32>
    %70 = tpu.matmul %67, %69, %cst_100 {dimension_numbers = #tpu.dot_dimension_numbers<[1], [0], [0], [1], [0, 0, 1, 1], [], []>} : vector<256x24xbf16>, vector<24x8xbf16>, vector<256x8xf32> -> vector<256x8xf32>
    %c0_101 = arith.constant 0 : index
    %c0_102 = arith.constant 0 : index
    %71 = vector.load %arg11[%c0_101, %c0_102] : memref<256x8xf32, #tpu.memory_space<vmem>>, vector<256x8xf32>
    %72 = arith.addf %71, %70 : vector<256x8xf32>
    %c0_103 = arith.constant 0 : index
    %c0_104 = arith.constant 0 : index
    %73 = vector.load %arg11[%c0_103, %c0_104] : memref<256x8xf32, #tpu.memory_space<vmem>>, vector<256x8xf32>
    tpu.vector_store %arg11[%c0_103, %c0_104], %72 {strides = array<i32>} : memref<256x8xf32, #tpu.memory_space<vmem>>, vector<256x8xf32>,
    %c0_105 = arith.constant 0 : index
    %c0_106 = arith.constant 0 : index
    %74 = vector.load %arg11[%c0_105, %c0_106] : memref<256x8xf32, #tpu.memory_space<vmem>>, vector<256x8xf32>
    %c0_107 = arith.constant 0 : index
    %c0_108 = arith.constant 0 : index
    %75 = vector.load %arg3[%c0_107, %c0_108] : memref<1x8xf32, #tpu.memory_space<vmem>>, vector<1x8xf32>
    %76 = vector.broadcast %75 : vector<1x8xf32> to vector<256x8xf32>
    %77 = arith.addf %74, %76 : vector<256x8xf32>
    %cst_109 = arith.constant 0.000000e+00 : f32
    %78 = vector.broadcast %cst_109 : f32 to vector<256x8xf32>
    %79 = arith.maximumf %77, %78 : vector<256x8xf32>
    %80 = vector.shape_cast %79 : vector<256x8xf32> to vector<16x16x8xf32>
    %c1_110 = arith.constant 1 : index
    %c1_111 = arith.constant 1 : index
    %c0_112 = arith.constant 0 : index
    %81 = vector.load %arg8[%c1_110, %c1_111, %c0_112] : memref<18x18x8xf32, #tpu.memory_space<vmem>>, vector<16x16x8xf32>
    tpu.vector_store %arg8[%c1_110, %c1_111, %c0_112], %80 {strides = array<i32>} : memref<18x18x8xf32, #tpu.memory_space<vmem>>, vector<16x16x8xf32>,
    %c0_113 = arith.constant 0 : index
    %c0_114 = arith.constant 0 : index
    %c0_115 = arith.constant 0 : index
    %82 = vector.load %arg8[%c0_113, %c0_114, %c0_115] : memref<18x18x8xf32, #tpu.memory_space<vmem>>, vector<16x16x8xf32>
    %83 = vector.shape_cast %82 : vector<16x16x8xf32> to vector<256x8xf32>
    %84 = arith.truncf %83 : vector<256x8xf32> to vector<256x8xbf16>
    %c0_116 = arith.constant 0 : index
    %c0_117 = arith.constant 0 : index
    %85 = vector.load %arg10[%c0_116, %c0_117] : memref<256x24xbf16, #tpu.memory_space<vmem>>, vector<256x8xbf16>
    tpu.vector_store %arg10[%c0_116, %c0_117], %84 {strides = array<i32>} : memref<256x24xbf16, #tpu.memory_space<vmem>>, vector<256x8xbf16>,
    %c0_118 = arith.constant 0 : index
    %c1_119 = arith.constant 1 : index
    %c0_120 = arith.constant 0 : index
    %86 = vector.load %arg8[%c0_118, %c1_119, %c0_120] : memref<18x18x8xf32, #tpu.memory_space<vmem>>, vector<16x16x8xf32>
    %87 = vector.shape_cast %86 : vector<16x16x8xf32> to vector<256x8xf32>
    %88 = arith.truncf %87 : vector<256x8xf32> to vector<256x8xbf16>
    %c0_121 = arith.constant 0 : index
    %c8_122 = arith.constant 8 : index
    %89 = vector.load %arg10[%c0_121, %c8_122] : memref<256x24xbf16, #tpu.memory_space<vmem>>, vector<256x8xbf16>
    tpu.vector_store %arg10[%c0_121, %c8_122], %88 {strides = array<i32>} : memref<256x24xbf16, #tpu.memory_space<vmem>>, vector<256x8xbf16>,
    %c0_123 = arith.constant 0 : index
    %c2_124 = arith.constant 2 : index
    %c0_125 = arith.constant 0 : index
    %90 = vector.load %arg8[%c0_123, %c2_124, %c0_125] : memref<18x18x8xf32, #tpu.memory_space<vmem>>, vector<16x16x8xf32>
    %91 = vector.shape_cast %90 : vector<16x16x8xf32> to vector<256x8xf32>
    %92 = arith.truncf %91 : vector<256x8xf32> to vector<256x8xbf16>
    %c0_126 = arith.constant 0 : index
    %c16_127 = arith.constant 16 : index
    %93 = vector.load %arg10[%c0_126, %c16_127] : memref<256x24xbf16, #tpu.memory_space<vmem>>, vector<256x8xbf16>
    tpu.vector_store %arg10[%c0_126, %c16_127], %92 {strides = array<i32>} : memref<256x24xbf16, #tpu.memory_space<vmem>>, vector<256x8xbf16>,
    %c0_128 = arith.constant 0 : index
    %c0_129 = arith.constant 0 : index
    %94 = vector.load %arg10[%c0_128, %c0_129] : memref<256x24xbf16, #tpu.memory_space<vmem>>, vector<256x24xbf16>
    %c0_130 = arith.constant 0 : index
    %c0_131 = arith.constant 0 : index
    %c0_132 = arith.constant 0 : index
    %95 = vector.load %arg4[%c0_130, %c0_131, %c0_132] : memref<3x24x8xbf16, #tpu.memory_space<vmem>>, vector<1x24x8xbf16>
    %96 = vector.shape_cast %95 : vector<1x24x8xbf16> to vector<24x8xbf16>
    %cst_133 = arith.constant dense<0.000000e+00> : vector<256x8xf32>
    %97 = tpu.matmul %94, %96, %cst_133 {dimension_numbers = #tpu.dot_dimension_numbers<[1], [0], [0], [1], [0, 0, 1, 1], [], []>} : vector<256x24xbf16>, vector<24x8xbf16>, vector<256x8xf32> -> vector<256x8xf32>
    %c0_134 = arith.constant 0 : index
    %c0_135 = arith.constant 0 : index
    %98 = vector.load %arg11[%c0_134, %c0_135] : memref<256x8xf32, #tpu.memory_space<vmem>>, vector<256x8xf32>
    tpu.vector_store %arg11[%c0_134, %c0_135], %97 {strides = array<i32>} : memref<256x8xf32, #tpu.memory_space<vmem>>, vector<256x8xf32>,
    %c1_136 = arith.constant 1 : index
    %c0_137 = arith.constant 0 : index
    %c0_138 = arith.constant 0 : index
    %99 = vector.load %arg8[%c1_136, %c0_137, %c0_138] : memref<18x18x8xf32, #tpu.memory_space<vmem>>, vector<16x16x8xf32>
    %100 = vector.shape_cast %99 : vector<16x16x8xf32> to vector<256x8xf32>
    %101 = arith.truncf %100 : vector<256x8xf32> to vector<256x8xbf16>
    %c0_139 = arith.constant 0 : index
    %c0_140 = arith.constant 0 : index
    %102 = vector.load %arg10[%c0_139, %c0_140] : memref<256x24xbf16, #tpu.memory_space<vmem>>, vector<256x8xbf16>
    tpu.vector_store %arg10[%c0_139, %c0_140], %101 {strides = array<i32>} : memref<256x24xbf16, #tpu.memory_space<vmem>>, vector<256x8xbf16>,
    %c1_141 = arith.constant 1 : index
    %c1_142 = arith.constant 1 : index
    %c0_143 = arith.constant 0 : index
    %103 = vector.load %arg8[%c1_141, %c1_142, %c0_143] : memref<18x18x8xf32, #tpu.memory_space<vmem>>, vector<16x16x8xf32>
    %104 = vector.shape_cast %103 : vector<16x16x8xf32> to vector<256x8xf32>
    %105 = arith.truncf %104 : vector<256x8xf32> to vector<256x8xbf16>
    %c0_144 = arith.constant 0 : index
    %c8_145 = arith.constant 8 : index
    %106 = vector.load %arg10[%c0_144, %c8_145] : memref<256x24xbf16, #tpu.memory_space<vmem>>, vector<256x8xbf16>
    tpu.vector_store %arg10[%c0_144, %c8_145], %105 {strides = array<i32>} : memref<256x24xbf16, #tpu.memory_space<vmem>>, vector<256x8xbf16>,
    %c1_146 = arith.constant 1 : index
    %c2_147 = arith.constant 2 : index
    %c0_148 = arith.constant 0 : index
    %107 = vector.load %arg8[%c1_146, %c2_147, %c0_148] : memref<18x18x8xf32, #tpu.memory_space<vmem>>, vector<16x16x8xf32>
    %108 = vector.shape_cast %107 : vector<16x16x8xf32> to vector<256x8xf32>
    %109 = arith.truncf %108 : vector<256x8xf32> to vector<256x8xbf16>
    %c0_149 = arith.constant 0 : index
    %c16_150 = arith.constant 16 : index
    %110 = vector.load %arg10[%c0_149, %c16_150] : memref<256x24xbf16, #tpu.memory_space<vmem>>, vector<256x8xbf16>
    tpu.vector_store %arg10[%c0_149, %c16_150], %109 {strides = array<i32>} : memref<256x24xbf16, #tpu.memory_space<vmem>>, vector<256x8xbf16>,
    %c0_151 = arith.constant 0 : index
    %c0_152 = arith.constant 0 : index
    %111 = vector.load %arg10[%c0_151, %c0_152] : memref<256x24xbf16, #tpu.memory_space<vmem>>, vector<256x24xbf16>
    %c1_153 = arith.constant 1 : index
    %c0_154 = arith.constant 0 : index
    %c0_155 = arith.constant 0 : index
    %112 = vector.load %arg4[%c1_153, %c0_154, %c0_155] : memref<3x24x8xbf16, #tpu.memory_space<vmem>>, vector<1x24x8xbf16>
    %113 = vector.shape_cast %112 : vector<1x24x8xbf16> to vector<24x8xbf16>
    %cst_156 = arith.constant dense<0.000000e+00> : vector<256x8xf32>
    %114 = tpu.matmul %111, %113, %cst_156 {dimension_numbers = #tpu.dot_dimension_numbers<[1], [0], [0], [1], [0, 0, 1, 1], [], []>} : vector<256x24xbf16>, vector<24x8xbf16>, vector<256x8xf32> -> vector<256x8xf32>
    %c0_157 = arith.constant 0 : index
    %c0_158 = arith.constant 0 : index
    %115 = vector.load %arg11[%c0_157, %c0_158] : memref<256x8xf32, #tpu.memory_space<vmem>>, vector<256x8xf32>
    %116 = arith.addf %115, %114 : vector<256x8xf32>
    %c0_159 = arith.constant 0 : index
    %c0_160 = arith.constant 0 : index
    %117 = vector.load %arg11[%c0_159, %c0_160] : memref<256x8xf32, #tpu.memory_space<vmem>>, vector<256x8xf32>
    tpu.vector_store %arg11[%c0_159, %c0_160], %116 {strides = array<i32>} : memref<256x8xf32, #tpu.memory_space<vmem>>, vector<256x8xf32>,
    %c2_161 = arith.constant 2 : index
    %c0_162 = arith.constant 0 : index
    %c0_163 = arith.constant 0 : index
    %118 = vector.load %arg8[%c2_161, %c0_162, %c0_163] : memref<18x18x8xf32, #tpu.memory_space<vmem>>, vector<16x16x8xf32>
    %119 = vector.shape_cast %118 : vector<16x16x8xf32> to vector<256x8xf32>
    %120 = arith.truncf %119 : vector<256x8xf32> to vector<256x8xbf16>
    %c0_164 = arith.constant 0 : index
    %c0_165 = arith.constant 0 : index
    %121 = vector.load %arg10[%c0_164, %c0_165] : memref<256x24xbf16, #tpu.memory_space<vmem>>, vector<256x8xbf16>
    tpu.vector_store %arg10[%c0_164, %c0_165], %120 {strides = array<i32>} : memref<256x24xbf16, #tpu.memory_space<vmem>>, vector<256x8xbf16>,
    %c2_166 = arith.constant 2 : index
    %c1_167 = arith.constant 1 : index
    %c0_168 = arith.constant 0 : index
    %122 = vector.load %arg8[%c2_166, %c1_167, %c0_168] : memref<18x18x8xf32, #tpu.memory_space<vmem>>, vector<16x16x8xf32>
    %123 = vector.shape_cast %122 : vector<16x16x8xf32> to vector<256x8xf32>
    %124 = arith.truncf %123 : vector<256x8xf32> to vector<256x8xbf16>
    %c0_169 = arith.constant 0 : index
    %c8_170 = arith.constant 8 : index
    %125 = vector.load %arg10[%c0_169, %c8_170] : memref<256x24xbf16, #tpu.memory_space<vmem>>, vector<256x8xbf16>
    tpu.vector_store %arg10[%c0_169, %c8_170], %124 {strides = array<i32>} : memref<256x24xbf16, #tpu.memory_space<vmem>>, vector<256x8xbf16>,
    %c2_171 = arith.constant 2 : index
    %c2_172 = arith.constant 2 : index
    %c0_173 = arith.constant 0 : index
    %126 = vector.load %arg8[%c2_171, %c2_172, %c0_173] : memref<18x18x8xf32, #tpu.memory_space<vmem>>, vector<16x16x8xf32>
    %127 = vector.shape_cast %126 : vector<16x16x8xf32> to vector<256x8xf32>
    %128 = arith.truncf %127 : vector<256x8xf32> to vector<256x8xbf16>
    %c0_174 = arith.constant 0 : index
    %c16_175 = arith.constant 16 : index
    %129 = vector.load %arg10[%c0_174, %c16_175] : memref<256x24xbf16, #tpu.memory_space<vmem>>, vector<256x8xbf16>
    tpu.vector_store %arg10[%c0_174, %c16_175], %128 {strides = array<i32>} : memref<256x24xbf16, #tpu.memory_space<vmem>>, vector<256x8xbf16>,
    %c0_176 = arith.constant 0 : index
    %c0_177 = arith.constant 0 : index
    %130 = vector.load %arg10[%c0_176, %c0_177] : memref<256x24xbf16, #tpu.memory_space<vmem>>, vector<256x24xbf16>
    %c2_178 = arith.constant 2 : index
    %c0_179 = arith.constant 0 : index
    %c0_180 = arith.constant 0 : index
    %131 = vector.load %arg4[%c2_178, %c0_179, %c0_180] : memref<3x24x8xbf16, #tpu.memory_space<vmem>>, vector<1x24x8xbf16>
    %132 = vector.shape_cast %131 : vector<1x24x8xbf16> to vector<24x8xbf16>
    %cst_181 = arith.constant dense<0.000000e+00> : vector<256x8xf32>
    %133 = tpu.matmul %130, %132, %cst_181 {dimension_numbers = #tpu.dot_dimension_numbers<[1], [0], [0], [1], [0, 0, 1, 1], [], []>} : vector<256x24xbf16>, vector<24x8xbf16>, vector<256x8xf32> -> vector<256x8xf32>
    %c0_182 = arith.constant 0 : index
    %c0_183 = arith.constant 0 : index
    %134 = vector.load %arg11[%c0_182, %c0_183] : memref<256x8xf32, #tpu.memory_space<vmem>>, vector<256x8xf32>
    %135 = arith.addf %134, %133 : vector<256x8xf32>
    %c0_184 = arith.constant 0 : index
    %c0_185 = arith.constant 0 : index
    %136 = vector.load %arg11[%c0_184, %c0_185] : memref<256x8xf32, #tpu.memory_space<vmem>>, vector<256x8xf32>
    tpu.vector_store %arg11[%c0_184, %c0_185], %135 {strides = array<i32>} : memref<256x8xf32, #tpu.memory_space<vmem>>, vector<256x8xf32>,
    %c0_186 = arith.constant 0 : index
    %c0_187 = arith.constant 0 : index
    %137 = vector.load %arg11[%c0_186, %c0_187] : memref<256x8xf32, #tpu.memory_space<vmem>>, vector<256x8xf32>
    %c0_188 = arith.constant 0 : index
    %c0_189 = arith.constant 0 : index
    %138 = vector.load %arg5[%c0_188, %c0_189] : memref<1x8xf32, #tpu.memory_space<vmem>>, vector<1x8xf32>
    %139 = vector.broadcast %138 : vector<1x8xf32> to vector<256x8xf32>
    %140 = arith.addf %137, %139 : vector<256x8xf32>
    %cst_190 = arith.constant 0.000000e+00 : f32
    %141 = vector.broadcast %cst_190 : f32 to vector<256x8xf32>
    %142 = arith.maximumf %140, %141 : vector<256x8xf32>
    %143 = vector.shape_cast %142 : vector<256x8xf32> to vector<1x16x16x8xf32>
    %c0_191 = arith.constant 0 : index
    %c0_192 = arith.constant 0 : index
    %c0_193 = arith.constant 0 : index
    %c0_194 = arith.constant 0 : index
    %144 = vector.load %arg6[%c0_191, %c0_192, %c0_193, %c0_194] : memref<1x16x16x8xf32, #tpu.memory_space<vmem>>, vector<1x16x16x8xf32>
    tpu.vector_store %arg6[%c0_191, %c0_192, %c0_193, %c0_194], %143 {strides = array<i32>} : memref<1x16x16x8xf32, #tpu.memory_space<vmem>>, vector<1x16x16x8xf32>,
    return
  }
  func.func @transform_0(%arg0: i32) -> (i32, i32, i32, i32) {
    %c0_i32 = arith.constant 0 : i32
    %c0_i32_0 = arith.constant 0 : i32
    %c0_i32_1 = arith.constant 0 : i32
    %c0_i32_2 = arith.constant 0 : i32
    return %arg0, %c0_i32, %c0_i32_0, %c0_i32_1 : i32, i32, i32, i32
  }
  func.func @transform_1(%arg0: i32) -> (i32, i32, i32) {
    %c0_i32 = arith.constant 0 : i32
    %c0_i32_0 = arith.constant 0 : i32
    %c0_i32_1 = arith.constant 0 : i32
    %c0_i32_2 = arith.constant 0 : i32
    return %c0_i32, %c0_i32_0, %c0_i32_1 : i32, i32, i32
  }
  func.func @transform_2(%arg0: i32) -> (i32, i32) {
    %c0_i32 = arith.constant 0 : i32
    %c0_i32_0 = arith.constant 0 : i32
    %c0_i32_1 = arith.constant 0 : i32
    return %c0_i32, %c0_i32_0 : i32, i32
  }
  func.func @transform_3(%arg0: i32) -> (i32, i32, i32) {
    %c0_i32 = arith.constant 0 : i32
    %c0_i32_0 = arith.constant 0 : i32
    %c0_i32_1 = arith.constant 0 : i32
    %c0_i32_2 = arith.constant 0 : i32
    return %c0_i32, %c0_i32_0, %c0_i32_1 : i32, i32, i32
  }
  func.func @transform_4(%arg0: i32) -> (i32, i32) {
    %c0_i32 = arith.constant 0 : i32
    %c0_i32_0 = arith.constant 0 : i32
    %c0_i32_1 = arith.constant 0 : i32
    return %c0_i32, %c0_i32_0 : i32, i32
  }
  func.func @transform_5(%arg0: i32) -> (i32, i32, i32, i32) {
    %c0_i32 = arith.constant 0 : i32
    %c0_i32_0 = arith.constant 0 : i32
    %c0_i32_1 = arith.constant 0 : i32
    %c0_i32_2 = arith.constant 0 : i32
    return %arg0, %c0_i32, %c0_i32_0, %c0_i32_1 : i32, i32, i32, i32
  }
}

</mosaic_0001>

<llo_original>
// kernel: double_conv_forward.1
$region0: #{double_conv_forward.1}
  #allocation0 [shape = 'u32[]', space=smem, size = 0x4, offset = 0x4, fixed_abs, tag = 'smem constant byte address 0x4 - core index']
  #allocation1 [shape = 'u32[144,128]{1,0:T(1,128)}', space=vmem, size = 0x12000, scoped, tag = 'internal scratch']
  #allocation2 [shape = 'f32[18,18,8]{2,1,0:T(8,128)}', space=vmem, size = 0x36000, scoped, tag = 'scratch operand']
  #allocation3 [shape = 'f32[18,18,8]{2,1,0:T(8,128)}', space=vmem, size = 0x36000, scoped, tag = 'scratch operand']
  #allocation4 [shape = 'bf16[256,24]{1,0:T(8,128)(2,1)}', space=vmem, size = 0x10000, scoped, tag = 'scratch operand']
  #allocation5 [shape = 'bf16[256,24]{1,0:T(8,128)(2,1)}', space=vmem, size = 0x10000, scoped, tag = 'scratch operand']
  #allocation6 [shape = 'f32[256,8]{1,0:T(8,128)}', space=vmem, size = 0x20000, scoped, tag = 'scratch operand']
  %s0 = inlined_call_operand.vmem [shape: f32[2,16,16,8], index: 0, kind: input, shape index: {}]
  %s1 = inlined_call_operand.vmem [shape: bf16[3,24,8], index: 1, kind: input, shape index: {}]
  %s2 = inlined_call_operand.vmem [shape: f32[1,8], index: 2, kind: input, shape index: {}]
  %s3 = inlined_call_operand.vmem [shape: bf16[3,24,8], index: 3, kind: input, shape index: {}]
  %s4 = inlined_call_operand.vmem [shape: f32[1,8], index: 4, kind: input, shape index: {}]
  %s5 = inlined_call_operand.vmem [shape: f32[2,16,16,8], index: 5, kind: output, shape index: {}]
  %s6 = sld [smem:[#allocation0]]
  $region53: #{double_conv_forward.1} parent=0
    _
  %s8 = ssub.s32 1, %s6
  %s9 = scalar_select 0, %s8, %s6
  loop: start=0, step=1, limit=4
  $region2: #{double_conv_forward.1} parent=0 // loop_pre_header
    _
  $region3: #{double_conv_forward.1} parent=0 // loop_header
    %s11 = sphi 0, %s15
    %p12 = scmp.ge.s32.totalorder %s11, 4
    %s21 = sphi 0, %s23
    %s24 = sphi 0, %s21
    %s25 = sphi 0, %s24
    %s41 = sphi 0, %s25
    %s45 = sphi 0, %s45
    %s47 = sphi 0, %s45
    %s48 = sphi 0, %s47
    %s62 = sphi 0, %s48
    %s66 = sphi 0, %s66
    %s68 = sphi 0, %s66
    %s69 = sphi 0, %s68
    %s83 = sphi 0, %s69
    %s87 = sphi 0, %s87
    %s89 = sphi 0, %s87
    %s90 = sphi 0, %s89
    %s104 = sphi 0, %s90
    %s108 = sphi 0, %s108
    %s110 = sphi 0, %s108
    %s111 = sphi 0, %s110
    %s125 = sphi 0, %s111
    %s131 = sphi 0, %s133
    %s134 = sphi 0, %s131
    %s135 = sphi 0, %s134
    %s151 = sphi 0, %s135
  $region4: #{double_conv_forward.1} parent=0 // loop_header_branch
    %14 = sbr.rel (%p12) target = $region8
  $region5: #{double_conv_forward.1} parent=0 // loop_body
    %s16 = ssub.s32 %s11, 1
    %s17 = ssub.s32 %s11, 2
    %s18 = sadd.s32 %s11, 1
    %s19 = ssub.s32 %s11, %s18
    %p20 = scmp.eq.s32.totalorder %s19, 0
    %s22 = sadd.s32 %s21, 1
    %s23 = scalar_select %p20, %s21, %s22
    %p26 = pneg %p20
    %p27 = scmp.eq.s32.totalorder %s11, 1
    %p28 = por %p26, %p27
    %p29 = scmp.ne.s32.totalorder %s21, %s24
    %p30 = scmp.eq.s32.totalorder %s11, 0
    %p31 = por %p29, %p30
    %p32 = scmp.ne.s32.totalorder %s21, %s24
    %p33 = scmp.eq.s32.totalorder %s16, 1
    %p34 = por %p32, %p33
    %p35 = scmp.ne.s32.totalorder %s24, %s25
    %p36 = scmp.eq.s32.totalorder %s16, 0
    %p37 = por %p35, %p36
    %p38 = scmp.ne.s32.totalorder %s24, %s25
    %p39 = scmp.eq.s32.totalorder %s17, 1
    %p40 = por %p38, %p39
    %p42 = scmp.ne.s32.totalorder %s25, %s41
    %p43 = scmp.eq.s32.totalorder %s17, 0
    %p44 = por %p42, %p43
    %s46 = sadd.s32 %s45, 1
    %p49 = scmp.eq.s32.totalorder %s11, 1
    %p50 = scmp.ne.s32.totalorder %s45, %s47
    %p51 = scmp.eq.s32.totalorder %s11, 0
    %p52 = por %p50, %p51
    %p53 = scmp.ne.s32.totalorder %s45, %s47
    %p54 = scmp.eq.s32.totalorder %s16, 1
    %p55 = por %p53, %p54
    %p56 = scmp.ne.s32.totalorder %s47, %s48
    %p57 = scmp.eq.s32.totalorder %s16, 0
    %p58 = por %p56, %p57
    %p59 = scmp.ne.s32.totalorder %s47, %s48
    %p60 = scmp.eq.s32.totalorder %s17, 1
    %p61 = por %p59, %p60
    %p63 = scmp.ne.s32.totalorder %s48, %s62
    %p64 = scmp.eq.s32.totalorder %s17, 0
    %p65 = por %p63, %p64
    %s67 = sadd.s32 %s66, 1
    %p70 = scmp.eq.s32.totalorder %s11, 1
    %p71 = scmp.ne.s32.totalorder %s66, %s68
    %p72 = scmp.eq.s32.totalorder %s11, 0
    %p73 = por %p71, %p72
    %p74 = scmp.ne.s32.totalorder %s66, %s68
    %p75 = scmp.eq.s32.totalorder %s16, 1
    %p76 = por %p74, %p75
    %p77 = scmp.ne.s32.totalorder %s68, %s69
    %p78 = scmp.eq.s32.totalorder %s16, 0
    %p79 = por %p77, %p78
    %p80 = scmp.ne.s32.totalorder %s68, %s69
    %p81 = scmp.eq.s32.totalorder %s17, 1
    %p82 = por %p80, %p81
    %p84 = scmp.ne.s32.totalorder %s69, %s83
    %p85 = scmp.eq.s32.totalorder %s17, 0
    %p86 = por %p84, %p85
    %s88 = sadd.s32 %s87, 1
    %p91 = scmp.eq.s32.totalorder %s11, 1
    %p92 = scmp.ne.s32.totalorder %s87, %s89
    %p93 = scmp.eq.s32.totalorder %s11, 0
    %p94 = por %p92, %p93
    %p95 = scmp.ne.s32.totalorder %s87, %s89
    %p96 = scmp.eq.s32.totalorder %s16, 1
    %p97 = por %p95, %p96
    %p98 = scmp.ne.s32.totalorder %s89, %s90
    %p99 = scmp.eq.s32.totalorder %s16, 0
    %p100 = por %p98, %p99
    %p101 = scmp.ne.s32.totalorder %s89, %s90
    %p102 = scmp.eq.s32.totalorder %s17, 1
    %p103 = por %p101, %p102
    %p105 = scmp.ne.s32.totalorder %s90, %s104
    %p106 = scmp.eq.s32.totalorder %s17, 0
    %p107 = por %p105, %p106
    %s109 = sadd.s32 %s108, 1
    %p112 = scmp.eq.s32.totalorder %s11, 1
    %p113 = scmp.ne.s32.totalorder %s108, %s110
    %p114 = scmp.eq.s32.totalorder %s11, 0
    %p115 = por %p113, %p114
    %p116 = scmp.ne.s32.totalorder %s108, %s110
    %p117 = scmp.eq.s32.totalorder %s16, 1
    %p118 = por %p116, %p117
    %p119 = scmp.ne.s32.totalorder %s110, %s111
    %p120 = scmp.eq.s32.totalorder %s16, 0
    %p121 = por %p119, %p120
    %p122 = scmp.ne.s32.totalorder %s110, %s111
    %p123 = scmp.eq.s32.totalorder %s17, 1
    %p124 = por %p122, %p123
    %p126 = scmp.ne.s32.totalorder %s111, %s125
    %p127 = scmp.eq.s32.totalorder %s17, 0
    %p128 = por %p126, %p127
    %s129 = ssub.s32 %s11, %s18
    %p130 = scmp.eq.s32.totalorder %s129, 0
    %s132 = sadd.s32 %s131, 1
    %s133 = scalar_select %p130, %s131, %s132
    %p136 = pneg %p130
    %p137 = scmp.eq.s32.totalorder %s11, 1
    %p138 = por %p136, %p137
    %p139 = scmp.ne.s32.totalorder %s131, %s134
    %p140 = scmp.eq.s32.totalorder %s11, 0
    %p141 = por %p139, %p140
    %p142 = scmp.ne.s32.totalorder %s131, %s134
    %p143 = scmp.eq.s32.totalorder %s16, 1
    %p144 = por %p142, %p143
    %p145 = scmp.ne.s32.totalorder %s134, %s135
    %p146 = scmp.eq.s32.totalorder %s16, 0
    %p147 = por %p145, %p146
    %p148 = scmp.ne.s32.totalorder %s134, %s135
    %p149 = scmp.eq.s32.totalorder %s17, 1
    %p150 = por %p148, %p149
    %p152 = scmp.ne.s32.totalorder %s135, %s151
    %p153 = scmp.eq.s32.totalorder %s17, 0
    %p154 = por %p152, %p153
    %p155 = scmp.le.s32.totalorder 1, %s11
    %p156 = scmp.lt.s32.totalorder %s11, 3
    %p157 = pnand %p155, %p156
    %p158 = pneg %p157
    // Predicated region
    $region9: #{double_conv_forward.1} parent=5 // pred_check
      _
    $region10: #{double_conv_forward.1} parent=5 // pred_check_branch
      %160 = sbr.rel (%p157) target = $region12
    $region11: #{double_conv_forward.1} parent=5 // pred_region
      %s161 = ssub.s32 %s11, 1
      // Predicated region
      $region13: #{double_conv_forward.1} parent=11 // pred_check
        %p162 = pneg %p58
      $region14: #{double_conv_forward.1} parent=11 // pred_check_branch
        %164 = sbr.rel (%p162) target = $region16
      $region15: #{double_conv_forward.1} parent=11 // pred_region
        _
      $region16: #{double_conv_forward.1} parent=11 // pred_fallthru
        _
      // Predicated region
      $region17: #{double_conv_forward.1} parent=11 // pred_check
        %p165 = pneg %p79
      $region18: #{double_conv_forward.1} parent=11 // pred_check_branch
        %167 = sbr.rel (%p165) target = $region20
      $region19: #{double_conv_forward.1} parent=11 // pred_region
        _
      $region20: #{double_conv_forward.1} parent=11 // pred_fallthru
        _
      // Predicated region
      $region21: #{double_conv_forward.1} parent=11 // pred_check
        %p168 = pneg %p100
      $region22: #{double_conv_forward.1} parent=11 // pred_check_branch
        %170 = sbr.rel (%p168) target = $region24
      $region23: #{double_conv_forward.1} parent=11 // pred_region
        _
      $region24: #{double_conv_forward.1} parent=11 // pred_fallthru
        _
      // Predicated region
      $region25: #{double_conv_forward.1} parent=11 // pred_check
        %p171 = pneg %p121
      $region26: #{double_conv_forward.1} parent=11 // pred_check_branch
        %173 = sbr.rel (%p171) target = $region28
      $region27: #{double_conv_forward.1} parent=11 // pred_region
        _
      $region28: #{double_conv_forward.1} parent=11 // pred_fallthru
        _
    $region12: #{double_conv_forward.1} parent=5 // pred_fallthru
      _
    %p174 = scmp.lt.s32.totalorder %s11, 2
    // Predicated region
    $region29: #{double_conv_forward.1} parent=5 // pred_check
      %p175 = pneg %p174
    $region30: #{double_conv_forward.1} parent=5 // pred_check_branch
      %177 = sbr.rel (%p175) target = $region32
    $region31: #{double_conv_forward.1} parent=5 // pred_region
      // Predicated region
      $region33: #{double_conv_forward.1} parent=31 // pred_check
        %p178 = pneg %p31
      $region34: #{double_conv_forward.1} parent=31 // pred_check_branch
        %180 = sbr.rel (%p178) target = $region36
      $region35: #{double_conv_forward.1} parent=31 // pred_region
        %p181 = scmp.lt.s32.totalorder %s11, 1
        %s182 = scalar_select %p181, %s11, 1
        %s183 = smul.addr %s182, 32
        %s184 = smul.addr %s183, 8
        %s185 = scalar_lea.vmem %s0, %s184
      $region36: #{double_conv_forward.1} parent=31 // pred_fallthru
        _
    $region32: #{double_conv_forward.1} parent=5 // pred_fallthru
      _
    %p186 = scmp.le.s32.totalorder 1, %s11
    %p187 = scmp.lt.s32.totalorder %s11, 3
    %p188 = pnand %p186, %p187
    %p189 = pneg %p188
    // Predicated region
    $region37: #{double_conv_forward.1} parent=5 // pred_check
      _
    $region38: #{double_conv_forward.1} parent=5 // pred_check_branch
      %191 = sbr.rel (%p188) target = $region40
    $region39: #{double_conv_forward.1} parent=5 // pred_region
      %s192 = ssub.s32 %s11, 1
      %p193 = scmp.lt.s32.totalorder %s16, 1
      %s194 = scalar_select %p193, %s16, 1
      %s195 = smul.addr %s194, 32
      %s196 = smul.addr %s195, 8
      %s197 = scalar_lea.vmem %s0, %s196
      %p198 = pneg %p37
      %p199 = pneg %p34
      %p200 = pneg %p58
      %p201 = pneg %p55
      %p202 = pneg %p79
      %p203 = pneg %p76
      %p204 = pneg %p100
      %p205 = pneg %p97
      %p206 = pneg %p121
      %p207 = pneg %p118
      %p208 = pneg %p147
      %p209 = pneg %p144
      %p210 = scmp.lt.s32.totalorder %s16, 1
      %s211 = scalar_select %p210, %s16, 1
      %s212 = smul.addr %s211, 32
      %s213 = smul.addr %s212, 8
      %s214 = scalar_lea.vmem %s5, %s213
      %p215 = scmp.lt.s32.totalorder %s16, 1
      %s216 = scalar_select %p215, %s16, 1
      %s217 = smul.addr %s216, 32
      %s218 = smul.addr %s217, 8
      %s219 = scalar_lea.vmem %s0, %s218
      %p220 = scmp.lt.s32.totalorder %s16, 1
      %s221 = scalar_select %p220, %s16, 1
      %s222 = smul.addr %s221, 32
      %s223 = smul.addr %s222, 8
      %s224 = scalar_lea.vmem %s5, %s223
      %vm226 = vcmask 64512
      %227 = vst.msk [vmem:[#allocation2] sm:$0xff] %vm226, 0.0
      %228 = vst.msk [vmem:[#allocation2 + $0x8] sm:$0xff] %vm226, 0.0
      %vm229 = vcmask 58368
      %230 = vst.msk [vmem:[#allocation2 + $0x10] sm:$0x3] %vm229, 0.0
      %s231 = scalar_lea.vmem [#allocation2], 408
      %232 = vst.msk [vmem:[%s231] sm:$0xff] %vm226, 0.0
      %233 = vst.msk [vmem:[%s231 + $0x8] sm:$0xff] %vm226, 0.0
      %234 = vst.msk [vmem:[%s231 + $0x10] sm:$0x3] %vm229, 0.0
      %vm235 = vcmask 57344
      %236 = vst.msk [vmem:[#allocation2] sm:$0x1] %vm235, 0.0
      %237 = vst.msk [vmem:[#allocation2 + $0x18] sm:$0x1] %vm235, 0.0
      %238 = vst.msk [vmem:[#allocation2 + $0x30] sm:$0x1] %vm235, 0.0
      %239 = vst.msk [vmem:[#allocation2 + $0x48] sm:$0x1] %vm235, 0.0
      %240 = vst.msk [vmem:[#allocation2 + $0x60] sm:$0x1] %vm235, 0.0
      %241 = vst.msk [vmem:[#allocation2 + $0x78] sm:$0x1] %vm235, 0.0
      %242 = vst.msk [vmem:[#allocation2 + $0x90] sm:$0x1] %vm235, 0.0
      %243 = vst.msk [vmem:[#allocation2 + $0xa8] sm:$0x1] %vm235, 0.0
      %244 = vst.msk [vmem:[#allocation2 + $0xc0] sm:$0x1] %vm235, 0.0
      %245 = vst.msk [vmem:[#allocation2 + $0xd8] sm:$0x1] %vm235, 0.0
      %246 = vst.msk [vmem:[#allocation2 + $0xf0] sm:$0x1] %vm235, 0.0
      %247 = vst.msk [vmem:[#allocation2 + $0x108] sm:$0x1] %vm235, 0.0
      %248 = vst.msk [vmem:[#allocation2 + $0x120] sm:$0x1] %vm235, 0.0
      %249 = vst.msk [vmem:[#allocation2 + $0x138] sm:$0x1] %vm235, 0.0
      %250 = vst.msk [vmem:[#allocation2 + $0x150] sm:$0x1] %vm235, 0.0
      %251 = vst.msk [vmem:[#allocation2 + $0x168] sm:$0x1] %vm235, 0.0
      %252 = vst.msk [vmem:[#allocation2 + $0x180] sm:$0x1] %vm235, 0.0
      %253 = vst.msk [vmem:[#allocation2 + $0x198] sm:$0x1] %vm235, 0.0
      %254 = vst.msk [vmem:[#allocation2 + $0x11] sm:$0x1] %vm235, 0.0
      %255 = vst.msk [vmem:[#allocation2 + $0x29] sm:$0x1] %vm235, 0.0
      %256 = vst.msk [vmem:[#allocation2 + $0x41] sm:$0x1] %vm235, 0.0
      %257 = vst.msk [vmem:[#allocation2 + $0x59] sm:$0x1] %vm235, 0.0
      %258 = vst.msk [vmem:[#allocation2 + $0x71] sm:$0x1] %vm235, 0.0
      %259 = vst.msk [vmem:[#allocation2 + $0x89] sm:$0x1] %vm235, 0.0
      %260 = vst.msk [vmem:[#allocation2 + $0xa1] sm:$0x1] %vm235, 0.0
      %261 = vst.msk [vmem:[#allocation2 + $0xb9] sm:$0x1] %vm235, 0.0
      %262 = vst.msk [vmem:[#allocation2 + $0xd1] sm:$0x1] %vm235, 0.0
      %263 = vst.msk [vmem:[#allocation2 + $0xe9] sm:$0x1] %vm235, 0.0
      %264 = vst.msk [vmem:[#allocation2 + $0x101] sm:$0x1] %vm235, 0.0
      %265 = vst.msk [vmem:[#allocation2 + $0x119] sm:$0x1] %vm235, 0.0
      %266 = vst.msk [vmem:[#allocation2 + $0x131] sm:$0x1] %vm235, 0.0
      %267 = vst.msk [vmem:[#allocation2 + $0x149] sm:$0x1] %vm235, 0.0
      %268 = vst.msk [vmem:[#allocation2 + $0x161] sm:$0x1] %vm235, 0.0
      %269 = vst.msk [vmem:[#allocation2 + $0x179] sm:$0x1] %vm235, 0.0
      %270 = vst.msk [vmem:[#allocation2 + $0x191] sm:$0x1] %vm235, 0.0
      %271 = vst.msk [vmem:[#allocation2 + $0x1a9] sm:$0x1] %vm235, 0.0
      %272 = vst.msk [vmem:[#allocation3] sm:$0xff] %vm226, 0.0
      %273 = vst.msk [vmem:[#allocation3 + $0x8] sm:$0xff] %vm226, 0.0
      %274 = vst.msk [vmem:[#allocation3 + $0x10] sm:$0x3] %vm229, 0.0
      %s275 = scalar_lea.vmem [#allocation3], 408
      %276 = vst.msk [vmem:[%s275] sm:$0xff] %vm226, 0.0
      %277 = vst.msk [vmem:[%s275 + $0x8] sm:$0xff] %vm226, 0.0
      %278 = vst.msk [vmem:[%s275 + $0x10] sm:$0x3] %vm229, 0.0
      %279 = vst.msk [vmem:[#allocation3] sm:$0x1] %vm235, 0.0
      %280 = vst.msk [vmem:[#allocation3 + $0x18] sm:$0x1] %vm235, 0.0
      %281 = vst.msk [vmem:[#allocation3 + $0x30] sm:$0x1] %vm235, 0.0
      %282 = vst.msk [vmem:[#allocation3 + $0x48] sm:$0x1] %vm235, 0.0
      %283 = vst.msk [vmem:[#allocation3 + $0x60] sm:$0x1] %vm235, 0.0
      %284 = vst.msk [vmem:[#allocation3 + $0x78] sm:$0x1] %vm235, 0.0
      %285 = vst.msk [vmem:[#allocation3 + $0x90] sm:$0x1] %vm235, 0.0
      %286 = vst.msk [vmem:[#allocation3 + $0xa8] sm:$0x1] %vm235, 0.0
      %287 = vst.msk [vmem:[#allocation3 + $0xc0] sm:$0x1] %vm235, 0.0
      %288 = vst.msk [vmem:[#allocation3 + $0xd8] sm:$0x1] %vm235, 0.0
      %289 = vst.msk [vmem:[#allocation3 + $0xf0] sm:$0x1] %vm235, 0.0
      %290 = vst.msk [vmem:[#allocation3 + $0x108] sm:$0x1] %vm235, 0.0
      %291 = vst.msk [vmem:[#allocation3 + $0x120] sm:$0x1] %vm235, 0.0
      %292 = vst.msk [vmem:[#allocation3 + $0x138] sm:$0x1] %vm235, 0.0
      %293 = vst.msk [vmem:[#allocation3 + $0x150] sm:$0x1] %vm235, 0.0
      %294 = vst.msk [vmem:[#allocation3 + $0x168] sm:$0x1] %vm235, 0.0
      %295 = vst.msk [vmem:[#allocation3 + $0x180] sm:$0x1] %vm235, 0.0
      %296 = vst.msk [vmem:[#allocation3 + $0x198] sm:$0x1] %vm235, 0.0
      %297 = vst.msk [vmem:[#allocation3 + $0x11] sm:$0x1] %vm235, 0.0
      %298 = vst.msk [vmem:[#allocation3 + $0x29] sm:$0x1] %vm235, 0.0
      %299 = vst.msk [vmem:[#allocation3 + $0x41] sm:$0x1] %vm235, 0.0
      %300 = vst.msk [vmem:[#allocation3 + $0x59] sm:$0x1] %vm235, 0.0
      %301 = vst.msk [vmem:[#allocation3 + $0x71] sm:$0x1] %vm235, 0.0
      %302 = vst.msk [vmem:[#allocation3 + $0x89] sm:$0x1] %vm235, 0.0
      %303 = vst.msk [vmem:[#allocation3 + $0xa1] sm:$0x1] %vm235, 0.0
      %304 = vst.msk [vmem:[#allocation3 + $0xb9] sm:$0x1] %vm235, 0.0
      %305 = vst.msk [vmem:[#allocation3 + $0xd1] sm:$0x1] %vm235, 0.0
      %306 = vst.msk [vmem:[#allocation3 + $0xe9] sm:$0x1] %vm235, 0.0
      %307 = vst.msk [vmem:[#allocation3 + $0x101] sm:$0x1] %vm235, 0.0
      %308 = vst.msk [vmem:[#allocation3 + $0x119] sm:$0x1] %vm235, 0.0
      %309 = vst.msk [vmem:[#allocation3 + $0x131] sm:$0x1] %vm235, 0.0
      %310 = vst.msk [vmem:[#allocation3 + $0x149] sm:$0x1] %vm235, 0.0
      %311 = vst.msk [vmem:[#allocation3 + $0x161] sm:$0x1] %vm235, 0.0
      %312 = vst.msk [vmem:[#allocation3 + $0x179] sm:$0x1] %vm235, 0.0
      %313 = vst.msk [vmem:[#allocation3 + $0x191] sm:$0x1] %vm235, 0.0
      %314 = vst.msk [vmem:[#allocation3 + $0x1a9] sm:$0x1] %vm235, 0.0
      %v315 = vld [vmem:[%s219] sm:$0xff]
      %v316 = vld [vmem:[%s219 + $0x8] sm:$0xff]
      %v317 = vld [vmem:[%s219 + $0x10] sm:$0xff]
      %v318 = vld [vmem:[%s219 + $0x18] sm:$0xff]
      %v319 = vld [vmem:[%s219 + $0x20] sm:$0xff]
      %v320 = vld [vmem:[%s219 + $0x28] sm:$0xff]
      %v321 = vld [vmem:[%s219 + $0x30] sm:$0xff]
      %v322 = vld [vmem:[%s219 + $0x38] sm:$0xff]
      %v323 = vld [vmem:[%s219 + $0x40] sm:$0xff]
      %v324 = vld [vmem:[%s219 + $0x48] sm:$0xff]
      %v325 = vld [vmem:[%s219 + $0x50] sm:$0xff]
      %v326 = vld [vmem:[%s219 + $0x58] sm:$0xff]
      %v327 = vld [vmem:[%s219 + $0x60] sm:$0xff]
      %v328 = vld [vmem:[%s219 + $0x68] sm:$0xff]
      %v329 = vld [vmem:[%s219 + $0x70] sm:$0xff]
      %v330 = vld [vmem:[%s219 + $0x78] sm:$0xff]
      %v331 = vld [vmem:[%s219 + $0x80] sm:$0xff]
      %v332 = vld [vmem:[%s219 + $0x88] sm:$0xff]
      %v333 = vld [vmem:[%s219 + $0x90] sm:$0xff]
      %v334 = vld [vmem:[%s219 + $0x98] sm:$0xff]
      %v335 = vld [vmem:[%s219 + $0xa0] sm:$0xff]
      %v336 = vld [vmem:[%s219 + $0xa8] sm:$0xff]
      %v337 = vld [vmem:[%s219 + $0xb0] sm:$0xff]
      %v338 = vld [vmem:[%s219 + $0xb8] sm:$0xff]
      %v339 = vld [vmem:[%s219 + $0xc0] sm:$0xff]
      %v340 = vld [vmem:[%s219 + $0xc8] sm:$0xff]
      %v341 = vld [vmem:[%s219 + $0xd0] sm:$0xff]
      %v342 = vld [vmem:[%s219 + $0xd8] sm:$0xff]
      %v343 = vld [vmem:[%s219 + $0xe0] sm:$0xff]
      %v344 = vld [vmem:[%s219 + $0xe8] sm:$0xff]
      %v345 = vld [vmem:[%s219 + $0xf0] sm:$0xff]
      %v346 = vld [vmem:[%s219 + $0xf8] sm:$0xff]
      %s347 = scalar_lea.vmem [#allocation2], 24
      %348 = vst.msk [vmem:[%s347 + $0x1] sm:$0xff] %vm226, %v315
      %349 = vst.msk [vmem:[%s347 + $0x9] sm:$0xff] %vm226, %v316
      %350 = vst.msk [vmem:[%s347 + $0x19] sm:$0xff] %vm226, %v317
      %351 = vst.msk [vmem:[%s347 + $0x21] sm:$0xff] %vm226, %v318
      %352 = vst.msk [vmem:[%s347 + $0x31] sm:$0xff] %vm226, %v319
      %353 = vst.msk [vmem:[%s347 + $0x39] sm:$0xff] %vm226, %v320
      %354 = vst.msk [vmem:[%s347 + $0x49] sm:$0xff] %vm226, %v321
      %355 = vst.msk [vmem:[%s347 + $0x51] sm:$0xff] %vm226, %v322
      %356 = vst.msk [vmem:[%s347 + $0x61] sm:$0xff] %vm226, %v323
      %357 = vst.msk [vmem:[%s347 + $0x69] sm:$0xff] %vm226, %v324
      %358 = vst.msk [vmem:[%s347 + $0x79] sm:$0xff] %vm226, %v325
      %359 = vst.msk [vmem:[%s347 + $0x81] sm:$0xff] %vm226, %v326
      %360 = vst.msk [vmem:[%s347 + $0x91] sm:$0xff] %vm226, %v327
      %361 = vst.msk [vmem:[%s347 + $0x99] sm:$0xff] %vm226, %v328
      %362 = vst.msk [vmem:[%s347 + $0xa9] sm:$0xff] %vm226, %v329
      %363 = vst.msk [vmem:[%s347 + $0xb1] sm:$0xff] %vm226, %v330
      %364 = vst.msk [vmem:[%s347 + $0xc1] sm:$0xff] %vm226, %v331
      %365 = vst.msk [vmem:[%s347 + $0xc9] sm:$0xff] %vm226, %v332
      %366 = vst.msk [vmem:[%s347 + $0xd9] sm:$0xff] %vm226, %v333
      %367 = vst.msk [vmem:[%s347 + $0xe1] sm:$0xff] %vm226, %v334
      %368 = vst.msk [vmem:[%s347 + $0xf1] sm:$0xff] %vm226, %v335
      %369 = vst.msk [vmem:[%s347 + $0xf9] sm:$0xff] %vm226, %v336
      %370 = vst.msk [vmem:[%s347 + $0x109] sm:$0xff] %vm226, %v337
      %371 = vst.msk [vmem:[%s347 + $0x111] sm:$0xff] %vm226, %v338
      %372 = vst.msk [vmem:[%s347 + $0x121] sm:$0xff] %vm226, %v339
      %373 = vst.msk [vmem:[%s347 + $0x129] sm:$0xff] %vm226, %v340
      %374 = vst.msk [vmem:[%s347 + $0x139] sm:$0xff] %vm226, %v341
      %375 = vst.msk [vmem:[%s347 + $0x141] sm:$0xff] %vm226, %v342
      %376 = vst.msk [vmem:[%s347 + $0x151] sm:$0xff] %vm226, %v343
      %377 = vst.msk [vmem:[%s347 + $0x159] sm:$0xff] %vm226, %v344
      %378 = vst.msk [vmem:[%s347 + $0x169] sm:$0xff] %vm226, %v345
      %379 = vst.msk [vmem:[%s347 + $0x171] sm:$0xff] %vm226, %v346
      %v380 = vld [vmem:[#allocation2] sm:$0xff]
      %v381 = vld [vmem:[#allocation2 + $0x8] sm:$0xff]
      %v382 = vld [vmem:[#allocation2 + $0x18] sm:$0xff]
      %v383 = vld [vmem:[#allocation2 + $0x20] sm:$0xff]
      %v384 = vld [vmem:[#allocation2 + $0x30] sm:$0xff]
      %v385 = vld [vmem:[#allocation2 + $0x38] sm:$0xff]
      %v386 = vld [vmem:[#allocation2 + $0x48] sm:$0xff]
      %v387 = vld [vmem:[#allocation2 + $0x50] sm:$0xff]
      %v388 = vld [vmem:[#allocation2 + $0x60] sm:$0xff]
      %v389 = vld [vmem:[#allocation2 + $0x68] sm:$0xff]
      %v390 = vld [vmem:[#allocation2 + $0x78] sm:$0xff]
      %v391 = vld [vmem:[#allocation2 + $0x80] sm:$0xff]
      %v392 = vld [vmem:[#allocation2 + $0x90] sm:$0xff]
      %v393 = vld [vmem:[#allocation2 + $0x98] sm:$0xff]
      %v394 = vld [vmem:[#allocation2 + $0xa8] sm:$0xff]
      %v395 = vld [vmem:[#allocation2 + $0xb0] sm:$0xff]
      %v396 = vld [vmem:[#allocation2 + $0xc0] sm:$0xff]
      %v397 = vld [vmem:[#allocation2 + $0xc8] sm:$0xff]
      %v398 = vld [vmem:[#allocation2 + $0xd8] sm:$0xff]
      %v399 = vld [vmem:[#allocation2 + $0xe0] sm:$0xff]
      %v400 = vld [vmem:[#allocation2 + $0xf0] sm:$0xff]
      %v401 = vld [vmem:[#allocation2 + $0xf8] sm:$0xff]
      %v402 = vld [vmem:[#allocation2 + $0x108] sm:$0xff]
      %v403 = vld [vmem:[#allocation2 + $0x110] sm:$0xff]
      %v404 = vld [vmem:[#allocation2 + $0x120] sm:$0xff]
      %v405 = vld [vmem:[#allocation2 + $0x128] sm:$0xff]
      %v406 = vld [vmem:[#allocation2 + $0x138] sm:$0xff]
      %v407 = vld [vmem:[#allocation2 + $0x140] sm:$0xff]
      %v408 = vld [vmem:[#allocation2 + $0x150] sm:$0xff]
      %v409 = vld [vmem:[#allocation2 + $0x158] sm:$0xff]
      %v410 = vld [vmem:[#allocation2 + $0x168] sm:$0xff]
      %v411 = vld [vmem:[#allocation2 + $0x170] sm:$0xff]
      %v412 = vpack.c.bf16 %v381, %v380
      %v413 = vpack.c.bf16 %v383, %v382
      %v414 = vpack.c.bf16 %v385, %v384
      %v415 = vpack.c.bf16 %v387, %v386
      %v416 = vpack.c.bf16 %v389, %v388
      %v417 = vpack.c.bf16 %v391, %v390
      %v418 = vpack.c.bf16 %v393, %v392
      %v419 = vpack.c.bf16 %v395, %v394
      %v420 = vpack.c.bf16 %v397, %v396
      %v421 = vpack.c.bf16 %v399, %v398
      %v422 = vpack.c.bf16 %v401, %v400
      %v423 = vpack.c.bf16 %v403, %v402
      %v424 = vpack.c.bf16 %v405, %v404
      %v425 = vpack.c.bf16 %v407, %v406
      %v426 = vpack.c.bf16 %v409, %v408
      %v427 = vpack.c.bf16 %v411, %v410
      %v444 = vunpack.c.l.b16 %v412
      %v445 = vunpack.c.h.b16 %v412
      %v446 = vunpack.c.l.b16 %v413
      %v447 = vunpack.c.h.b16 %v413
      %v448 = vunpack.c.l.b16 %v414
      %v449 = vunpack.c.h.b16 %v414
      %v450 = vunpack.c.l.b16 %v415
      %v451 = vunpack.c.h.b16 %v415
      %v452 = vunpack.c.l.b16 %v416
      %v453 = vunpack.c.h.b16 %v416
      %v454 = vunpack.c.l.b16 %v417
      %v455 = vunpack.c.h.b16 %v417
      %v456 = vunpack.c.l.b16 %v418
      %v457 = vunpack.c.h.b16 %v418
      %v458 = vunpack.c.l.b16 %v419
      %v459 = vunpack.c.h.b16 %v419
      %v460 = vunpack.c.l.b16 %v420
      %v461 = vunpack.c.h.b16 %v420
      %v462 = vunpack.c.l.b16 %v421
      %v463 = vunpack.c.h.b16 %v421
      %v464 = vunpack.c.l.b16 %v422
      %v465 = vunpack.c.h.b16 %v422
      %v466 = vunpack.c.l.b16 %v423
      %v467 = vunpack.c.h.b16 %v423
      %v468 = vunpack.c.l.b16 %v424
      %v469 = vunpack.c.h.b16 %v424
      %v470 = vunpack.c.l.b16 %v425
      %v471 = vunpack.c.h.b16 %v425
      %v472 = vunpack.c.l.b16 %v426
      %v473 = vunpack.c.h.b16 %v426
      %v474 = vunpack.c.l.b16 %v427
      %v475 = vunpack.c.h.b16 %v427
      %v476 = vpack.c.b16 %v444, %v444
      %v477 = vpack.c.b16 %v445, %v445
      %v478 = vpack.c.b16 %v446, %v446
      %v479 = vpack.c.b16 %v447, %v447
      %v480 = vpack.c.b16 %v448, %v448
      %v481 = vpack.c.b16 %v449, %v449
      %v482 = vpack.c.b16 %v450, %v450
      %v483 = vpack.c.b16 %v451, %v451
      %v484 = vpack.c.b16 %v452, %v452
      %v485 = vpack.c.b16 %v453, %v453
      %v486 = vpack.c.b16 %v454, %v454
      %v487 = vpack.c.b16 %v455, %v455
      %v488 = vpack.c.b16 %v456, %v456
      %v489 = vpack.c.b16 %v457, %v457
      %v490 = vpack.c.b16 %v458, %v458
      %v491 = vpack.c.b16 %v459, %v459
      %v492 = vpack.c.b16 %v460, %v460
      %v493 = vpack.c.b16 %v461, %v461
      %v494 = vpack.c.b16 %v462, %v462
      %v495 = vpack.c.b16 %v463, %v463
      %v496 = vpack.c.b16 %v464, %v464
      %v497 = vpack.c.b16 %v465, %v465
      %v498 = vpack.c.b16 %v466, %v466
      %v499 = vpack.c.b16 %v467, %v467
      %v500 = vpack.c.b16 %v468, %v468
      %v501 = vpack.c.b16 %v469, %v469
      %v502 = vpack.c.b16 %v470, %v470
      %v503 = vpack.c.b16 %v471, %v471
      %v504 = vpack.c.b16 %v472, %v472
      %v505 = vpack.c.b16 %v473, %v473
      %v506 = vpack.c.b16 %v474, %v474
      %v507 = vpack.c.b16 %v475, %v475
      %vm540 = vcmask 60416
      %541 = vst.msk [vmem:[#allocation4] sm:$0xf] %vm540, %v476
      %542 = vst.msk [vmem:[#allocation4 + $0x4] sm:$0xf] %vm540, %v477
      %543 = vst.msk [vmem:[#allocation4 + $0x8] sm:$0xf] %vm540, %v478
      %544 = vst.msk [vmem:[#allocation4 + $0xc] sm:$0xf] %vm540, %v479
      %545 = vst.msk [vmem:[#allocation4 + $0x10] sm:$0xf] %vm540, %v480
      %546 = vst.msk [vmem:[#allocation4 + $0x14] sm:$0xf] %vm540, %v481
      %547 = vst.msk [vmem:[#allocation4 + $0x18] sm:$0xf] %vm540, %v482
      %548 = vst.msk [vmem:[#allocation4 + $0x1c] sm:$0xf] %vm540, %v483
      %549 = vst.msk [vmem:[#allocation4 + $0x20] sm:$0xf] %vm540, %v484
      %550 = vst.msk [vmem:[#allocation4 + $0x24] sm:$0xf] %vm540, %v485
      %551 = vst.msk [vmem:[#allocation4 + $0x28] sm:$0xf] %vm540, %v486
      %552 = vst.msk [vmem:[#allocation4 + $0x2c] sm:$0xf] %vm540, %v487
      %553 = vst.msk [vmem:[#allocation4 + $0x30] sm:$0xf] %vm540, %v488
      %554 = vst.msk [vmem:[#allocation4 + $0x34] sm:$0xf] %vm540, %v489
      %555 = vst.msk [vmem:[#allocation4 + $0x38] sm:$0xf] %vm540, %v490
      %556 = vst.msk [vmem:[#allocation4 + $0x3c] sm:$0xf] %vm540, %v491
      %557 = vst.msk [vmem:[#allocation4 + $0x40] sm:$0xf] %vm540, %v492
      %558 = vst.msk [vmem:[#allocation4 + $0x44] sm:$0xf] %vm540, %v493
      %559 = vst.msk [vmem:[#allocation4 + $0x48] sm:$0xf] %vm540, %v494
      %560 = vst.msk [vmem:[#allocation4 + $0x4c] sm:$0xf] %vm540, %v495
      %561 = vst.msk [vmem:[#allocation4 + $0x50] sm:$0xf] %vm540, %v496
      %562 = vst.msk [vmem:[#allocation4 + $0x54] sm:$0xf] %vm540, %v497
      %563 = vst.msk [vmem:[#allocation4 + $0x58] sm:$0xf] %vm540, %v498
      %564 = vst.msk [vmem:[#allocation4 + $0x5c] sm:$0xf] %vm540, %v499
      %565 = vst.msk [vmem:[#allocation4 + $0x60] sm:$0xf] %vm540, %v500
      %566 = vst.msk [vmem:[#allocation4 + $0x64] sm:$0xf] %vm540, %v501
      %567 = vst.msk [vmem:[#allocation4 + $0x68] sm:$0xf] %vm540, %v502
      %568 = vst.msk [vmem:[#allocation4 + $0x6c] sm:$0xf] %vm540, %v503
      %569 = vst.msk [vmem:[#allocation4 + $0x70] sm:$0xf] %vm540, %v504
      %570 = vst.msk [vmem:[#allocation4 + $0x74] sm:$0xf] %vm540, %v505
      %571 = vst.msk [vmem:[#allocation4 + $0x78] sm:$0xf] %vm540, %v506
      %572 = vst.msk [vmem:[#allocation4 + $0x7c] sm:$0xf] %vm540, %v507
      %v573 = vld [vmem:[#allocation2 + $0x1] sm:$0xff]
      %v574 = vld [vmem:[#allocation2 + $0x9] sm:$0xff]
      %v575 = vld [vmem:[#allocation2 + $0x19] sm:$0xff]
      %v576 = vld [vmem:[#allocation2 + $0x21] sm:$0xff]
      %v577 = vld [vmem:[#allocation2 + $0x31] sm:$0xff]
      %v578 = vld [vmem:[#allocation2 + $0x39] sm:$0xff]
      %v579 = vld [vmem:[#allocation2 + $0x49] sm:$0xff]
      %v580 = vld [vmem:[#allocation2 + $0x51] sm:$0xff]
      %v581 = vld [vmem:[#allocation2 + $0x61] sm:$0xff]
      %v582 = vld [vmem:[#allocation2 + $0x69] sm:$0xff]
      %v583 = vld [vmem:[#allocation2 + $0x79] sm:$0xff]
      %v584 = vld [vmem:[#allocation2 + $0x81] sm:$0xff]
      %v585 = vld [vmem:[#allocation2 + $0x91] sm:$0xff]
      %v586 = vld [vmem:[#allocation2 + $0x99] sm:$0xff]
      %v587 = vld [vmem:[#allocation2 + $0xa9] sm:$0xff]
      %v588 = vld [vmem:[#allocation2 + $0xb1] sm:$0xff]
      %v589 = vld [vmem:[#allocation2 + $0xc1] sm:$0xff]
      %v590 = vld [vmem:[#allocation2 + $0xc9] sm:$0xff]
      %v591 = vld [vmem:[#allocation2 + $0xd9] sm:$0xff]
      %v592 = vld [vmem:[#allocation2 + $0xe1] sm:$0xff]
      %v593 = vld [vmem:[#allocation2 + $0xf1] sm:$0xff]
      %v594 = vld [vmem:[#allocation2 + $0xf9] sm:$0xff]
      %v595 = vld [vmem:[#allocation2 + $0x109] sm:$0xff]
      %v596 = vld [vmem:[#allocation2 + $0x111] sm:$0xff]
      %v597 = vld [vmem:[#allocation2 + $0x121] sm:$0xff]
      %v598 = vld [vmem:[#allocation2 + $0x129] sm:$0xff]
      %v599 = vld [vmem:[#allocation2 + $0x139] sm:$0xff]
      %v600 = vld [vmem:[#allocation2 + $0x141] sm:$0xff]
      %v601 = vld [vmem:[#allocation2 + $0x151] sm:$0xff]
      %v602 = vld [vmem:[#allocation2 + $0x159] sm:$0xff]
      %v603 = vld [vmem:[#allocation2 + $0x169] sm:$0xff]
      %v604 = vld [vmem:[#allocation2 + $0x171] sm:$0xff]
      %v605 = vpack.c.bf16 %v574, %v573
      %v606 = vpack.c.bf16 %v576, %v575
      %v607 = vpack.c.bf16 %v578, %v577
      %v608 = vpack.c.bf16 %v580, %v579
      %v609 = vpack.c.bf16 %v582, %v581
      %v610 = vpack.c.bf16 %v584, %v583
      %v611 = vpack.c.bf16 %v586, %v585
      %v612 = vpack.c.bf16 %v588, %v587
      %v613 = vpack.c.bf16 %v590, %v589
      %v614 = vpack.c.bf16 %v592, %v591
      %v615 = vpack.c.bf16 %v594, %v593
      %v616 = vpack.c.bf16 %v596, %v595
      %v617 = vpack.c.bf16 %v598, %v597
      %v618 = vpack.c.bf16 %v600, %v599
      %v619 = vpack.c.bf16 %v602, %v601
      %v620 = vpack.c.bf16 %v604, %v603
      %v637 = vunpack.c.l.b16 %v605
      %v638 = vunpack.c.h.b16 %v605
      %v639 = vunpack.c.l.b16 %v606
      %v640 = vunpack.c.h.b16 %v606
      %v641 = vunpack.c.l.b16 %v607
      %v642 = vunpack.c.h.b16 %v607
      %v643 = vunpack.c.l.b16 %v608
      %v644 = vunpack.c.h.b16 %v608
      %v645 = vunpack.c.l.b16 %v609
      %v646 = vunpack.c.h.b16 %v609
      %v647 = vunpack.c.l.b16 %v610
      %v648 = vunpack.c.h.b16 %v610
      %v649 = vunpack.c.l.b16 %v611
      %v650 = vunpack.c.h.b16 %v611
      %v651 = vunpack.c.l.b16 %v612
      %v652 = vunpack.c.h.b16 %v612
      %v653 = vunpack.c.l.b16 %v613
      %v654 = vunpack.c.h.b16 %v613
      %v655 = vunpack.c.l.b16 %v614
      %v656 = vunpack.c.h.b16 %v614
      %v657 = vunpack.c.l.b16 %v615
      %v658 = vunpack.c.h.b16 %v615
      %v659 = vunpack.c.l.b16 %v616
      %v660 = vunpack.c.h.b16 %v616
      %v661 = vunpack.c.l.b16 %v617
      %v662 = vunpack.c.h.b16 %v617
      %v663 = vunpack.c.l.b16 %v618
      %v664 = vunpack.c.h.b16 %v618
      %v665 = vunpack.c.l.b16 %v619
      %v666 = vunpack.c.h.b16 %v619
      %v667 = vunpack.c.l.b16 %v620
      %v668 = vunpack.c.h.b16 %v620
      %v669 = vpack.c.b16 %v637, %v637
      %v670 = vpack.c.b16 %v638, %v638
      %v671 = vpack.c.b16 %v639, %v639
      %v672 = vpack.c.b16 %v640, %v640
      %v673 = vpack.c.b16 %v641, %v641
      %v674 = vpack.c.b16 %v642, %v642
      %v675 = vpack.c.b16 %v643, %v643
      %v676 = vpack.c.b16 %v644, %v644
      %v677 = vpack.c.b16 %v645, %v645
      %v678 = vpack.c.b16 %v646, %v646
      %v679 = vpack.c.b16 %v647, %v647
      %v680 = vpack.c.b16 %v648, %v648
      %v681 = vpack.c.b16 %v649, %v649
      %v682 = vpack.c.b16 %v650, %v650
      %v683 = vpack.c.b16 %v651, %v651
      %v684 = vpack.c.b16 %v652, %v652
      %v685 = vpack.c.b16 %v653, %v653
      %v686 = vpack.c.b16 %v654, %v654
      %v687 = vpack.c.b16 %v655, %v655
      %v688 = vpack.c.b16 %v656, %v656
      %v689 = vpack.c.b16 %v657, %v657
      %v690 = vpack.c.b16 %v658, %v658
      %v691 = vpack.c.b16 %v659, %v659
      %v692 = vpack.c.b16 %v660, %v660
      %v693 = vpack.c.b16 %v661, %v661
      %v694 = vpack.c.b16 %v662, %v662
      %v695 = vpack.c.b16 %v663, %v663
      %v696 = vpack.c.b16 %v664, %v664
      %v697 = vpack.c.b16 %v665, %v665
      %v698 = vpack.c.b16 %v666, %v666
      %v699 = vpack.c.b16 %v667, %v667
      %v700 = vpack.c.b16 %v668, %v668
      %701 = vrot.lane.b32.xlu0 %v669, 8
      %v702 = vpop.permute.xlu0 %701
      %703 = vrot.lane.b32.xlu0 %v670, 8
      %v704 = vpop.permute.xlu0 %703
      %705 = vrot.lane.b32.xlu0 %v671, 8
      %v706 = vpop.permute.xlu0 %705
      %707 = vrot.lane.b32.xlu0 %v672, 8
      %v708 = vpop.permute.xlu0 %707
      %709 = vrot.lane.b32.xlu0 %v673, 8
      %v710 = vpop.permute.xlu0 %709
      %711 = vrot.lane.b32.xlu0 %v674, 8
      %v712 = vpop.permute.xlu0 %711
      %713 = vrot.lane.b32.xlu0 %v675, 8
      %v714 = vpop.permute.xlu0 %713
      %715 = vrot.lane.b32.xlu0 %v676, 8
      %v716 = vpop.permute.xlu0 %715
      %717 = vrot.lane.b32.xlu0 %v677, 8
      %v718 = vpop.permute.xlu0 %717
      %719 = vrot.lane.b32.xlu0 %v678, 8
      %v720 = vpop.permute.xlu0 %719
      %721 = vrot.lane.b32.xlu0 %v679, 8
      %v722 = vpop.permute.xlu0 %721
      %723 = vrot.lane.b32.xlu0 %v680, 8
      %v724 = vpop.permute.xlu0 %723
      %725 = vrot.lane.b32.xlu0 %v681, 8
      %v726 = vpop.permute.xlu0 %725
      %727 = vrot.lane.b32.xlu0 %v682, 8
      %v728 = vpop.permute.xlu0 %727
      %729 = vrot.lane.b32.xlu0 %v683, 8
      %v730 = vpop.permute.xlu0 %729
      %731 = vrot.lane.b32.xlu0 %v684, 8
      %v732 = vpop.permute.xlu0 %731
      %733 = vrot.lane.b32.xlu0 %v685, 8
      %v734 = vpop.permute.xlu0 %733
      %735 = vrot.lane.b32.xlu0 %v686, 8
      %v736 = vpop.permute.xlu0 %735
      %737 = vrot.lane.b32.xlu0 %v687, 8
      %v738 = vpop.permute.xlu0 %737
      %739 = vrot.lane.b32.xlu0 %v688, 8
      %v740 = vpop.permute.xlu0 %739
      %741 = vrot.lane.b32.xlu0 %v689, 8
      %v742 = vpop.permute.xlu0 %741
      %743 = vrot.lane.b32.xlu0 %v690, 8
      %v744 = vpop.permute.xlu0 %743
      %745 = vrot.lane.b32.xlu0 %v691, 8
      %v746 = vpop.permute.xlu0 %745
      %747 = vrot.lane.b32.xlu0 %v692, 8
      %v748 = vpop.permute.xlu0 %747
      %749 = vrot.lane.b32.xlu0 %v693, 8
      %v750 = vpop.permute.xlu0 %749
      %751 = vrot.lane.b32.xlu0 %v694, 8
      %v752 = vpop.permute.xlu0 %751
      %753 = vrot.lane.b32.xlu0 %v695, 8
      %v754 = vpop.permute.xlu0 %753
      %755 = vrot.lane.b32.xlu0 %v696, 8
      %v756 = vpop.permute.xlu0 %755
      %757 = vrot.lane.b32.xlu0 %v697, 8
      %v758 = vpop.permute.xlu0 %757
      %759 = vrot.lane.b32.xlu0 %v698, 8
      %v760 = vpop.permute.xlu0 %759
      %761 = vrot.lane.b32.xlu0 %v699, 8
      %v762 = vpop.permute.xlu0 %761
      %763 = vrot.lane.b32.xlu0 %v700, 8
      %v764 = vpop.permute.xlu0 %763
      %vm797 = vcmask 126016
      %798 = vst.msk [vmem:[#allocation4] sm:$0xf] %vm797, %v702
      %799 = vst.msk [vmem:[#allocation4 + $0x4] sm:$0xf] %vm797, %v704
      %800 = vst.msk [vmem:[#allocation4 + $0x8] sm:$0xf] %vm797, %v706
      %801 = vst.msk [vmem:[#allocation4 + $0xc] sm:$0xf] %vm797, %v708
      %802 = vst.msk [vmem:[#allocation4 + $0x10] sm:$0xf] %vm797, %v710
      %803 = vst.msk [vmem:[#allocation4 + $0x14] sm:$0xf] %vm797, %v712
      %804 = vst.msk [vmem:[#allocation4 + $0x18] sm:$0xf] %vm797, %v714
      %805 = vst.msk [vmem:[#allocation4 + $0x1c] sm:$0xf] %vm797, %v716
      %806 = vst.msk [vmem:[#allocation4 + $0x20] sm:$0xf] %vm797, %v718
      %807 = vst.msk [vmem:[#allocation4 + $0x24] sm:$0xf] %vm797, %v720
      %808 = vst.msk [vmem:[#allocation4 + $0x28] sm:$0xf] %vm797, %v722
      %809 = vst.msk [vmem:[#allocation4 + $0x2c] sm:$0xf] %vm797, %v724
      %810 = vst.msk [vmem:[#allocation4 + $0x30] sm:$0xf] %vm797, %v726
      %811 = vst.msk [vmem:[#allocation4 + $0x34] sm:$0xf] %vm797, %v728
      %812 = vst.msk [vmem:[#allocation4 + $0x38] sm:$0xf] %vm797, %v730
      %813 = vst.msk [vmem:[#allocation4 + $0x3c] sm:$0xf] %vm797, %v732
      %814 = vst.msk [vmem:[#allocation4 + $0x40] sm:$0xf] %vm797, %v734
      %815 = vst.msk [vmem:[#allocation4 + $0x44] sm:$0xf] %vm797, %v736
      %816 = vst.msk [vmem:[#allocation4 + $0x48] sm:$0xf] %vm797, %v738
      %817 = vst.msk [vmem:[#allocation4 + $0x4c] sm:$0xf] %vm797, %v740
      %818 = vst.msk [vmem:[#allocation4 + $0x50] sm:$0xf] %vm797, %v742
      %819 = vst.msk [vmem:[#allocation4 + $0x54] sm:$0xf] %vm797, %v744
      %820 = vst.msk [vmem:[#allocation4 + $0x58] sm:$0xf] %vm797, %v746
      %821 = vst.msk [vmem:[#allocation4 + $0x5c] sm:$0xf] %vm797, %v748
      %822 = vst.msk [vmem:[#allocation4 + $0x60] sm:$0xf] %vm797, %v750
      %823 = vst.msk [vmem:[#allocation4 + $0x64] sm:$0xf] %vm797, %v752
      %824 = vst.msk [vmem:[#allocation4 + $0x68] sm:$0xf] %vm797, %v754
      %825 = vst.msk [vmem:[#allocation4 + $0x6c] sm:$0xf] %vm797, %v756
      %826 = vst.msk [vmem:[#allocation4 + $0x70] sm:$0xf] %vm797, %v758
      %827 = vst.msk [vmem:[#allocation4 + $0x74] sm:$0xf] %vm797, %v760
      %828 = vst.msk [vmem:[#allocation4 + $0x78] sm:$0xf] %vm797, %v762
      %829 = vst.msk [vmem:[#allocation4 + $0x7c] sm:$0xf] %vm797, %v764
      %v830 = vld [vmem:[#allocation2 + $0x2] sm:$0xff]
      %v831 = vld [vmem:[#allocation2 + $0xa] sm:$0xff]
      %v832 = vld [vmem:[#allocation2 + $0x1a] sm:$0xff]
      %v833 = vld [vmem:[#allocation2 + $0x22] sm:$0xff]
      %v834 = vld [vmem:[#allocation2 + $0x32] sm:$0xff]
      %v835 = vld [vmem:[#allocation2 + $0x3a] sm:$0xff]
      %v836 = vld [vmem:[#allocation2 + $0x4a] sm:$0xff]
      %v837 = vld [vmem:[#allocation2 + $0x52] sm:$0xff]
      %v838 = vld [vmem:[#allocation2 + $0x62] sm:$0xff]
      %v839 = vld [vmem:[#allocation2 + $0x6a] sm:$0xff]
      %v840 = vld [vmem:[#allocation2 + $0x7a] sm:$0xff]
      %v841 = vld [vmem:[#allocation2 + $0x82] sm:$0xff]
      %v842 = vld [vmem:[#allocation2 + $0x92] sm:$0xff]
      %v843 = vld [vmem:[#allocation2 + $0x9a] sm:$0xff]
      %v844 = vld [vmem:[#allocation2 + $0xaa] sm:$0xff]
      %v845 = vld [vmem:[#allocation2 + $0xb2] sm:$0xff]
      %v846 = vld [vmem:[#allocation2 + $0xc2] sm:$0xff]
      %v847 = vld [vmem:[#allocation2 + $0xca] sm:$0xff]
      %v848 = vld [vmem:[#allocation2 + $0xda] sm:$0xff]
      %v849 = vld [vmem:[#allocation2 + $0xe2] sm:$0xff]
      %v850 = vld [vmem:[#allocation2 + $0xf2] sm:$0xff]
      %v851 = vld [vmem:[#allocation2 + $0xfa] sm:$0xff]
      %v852 = vld [vmem:[#allocation2 + $0x10a] sm:$0xff]
      %v853 = vld [vmem:[#allocation2 + $0x112] sm:$0xff]
      %v854 = vld [vmem:[#allocation2 + $0x122] sm:$0xff]
      %v855 = vld [vmem:[#allocation2 + $0x12a] sm:$0xff]
      %v856 = vld [vmem:[#allocation2 + $0x13a] sm:$0xff]
      %v857 = vld [vmem:[#allocation2 + $0x142] sm:$0xff]
      %v858 = vld [vmem:[#allocation2 + $0x152] sm:$0xff]
      %v859 = vld [vmem:[#allocation2 + $0x15a] sm:$0xff]
      %v860 = vld [vmem:[#allocation2 + $0x16a] sm:$0xff]
      %v861 = vld [vmem:[#allocation2 + $0x172] sm:$0xff]
      %v862 = vpack.c.bf16 %v831, %v830
      %v863 = vpack.c.bf16 %v833, %v832
      %v864 = vpack.c.bf16 %v835, %v834
      %v865 = vpack.c.bf16 %v837, %v836
      %v866 = vpack.c.bf16 %v839, %v838
      %v867 = vpack.c.bf16 %v841, %v840
      %v868 = vpack.c.bf16 %v843, %v842
      %v869 = vpack.c.bf16 %v845, %v844
      %v870 = vpack.c.bf16 %v847, %v846
      %v871 = vpack.c.bf16 %v849, %v848
      %v872 = vpack.c.bf16 %v851, %v850
      %v873 = vpack.c.bf16 %v853, %v852
      %v874 = vpack.c.bf16 %v855, %v854
      %v875 = vpack.c.bf16 %v857, %v856
      %v876 = vpack.c.bf16 %v859, %v858
      %v877 = vpack.c.bf16 %v861, %v860
      %v894 = vunpack.c.l.b16 %v862
      %v895 = vunpack.c.h.b16 %v862
      %v896 = vunpack.c.l.b16 %v863
      %v897 = vunpack.c.h.b16 %v863
      %v898 = vunpack.c.l.b16 %v864
      %v899 = vunpack.c.h.b16 %v864
      %v900 = vunpack.c.l.b16 %v865
      %v901 = vunpack.c.h.b16 %v865
      %v902 = vunpack.c.l.b16 %v866
      %v903 = vunpack.c.h.b16 %v866
      %v904 = vunpack.c.l.b16 %v867
      %v905 = vunpack.c.h.b16 %v867
      %v906 = vunpack.c.l.b16 %v868
      %v907 = vunpack.c.h.b16 %v868
      %v908 = vunpack.c.l.b16 %v869
      %v909 = vunpack.c.h.b16 %v869
      %v910 = vunpack.c.l.b16 %v870
      %v911 = vunpack.c.h.b16 %v870
      %v912 = vunpack.c.l.b16 %v871
      %v913 = vunpack.c.h.b16 %v871
      %v914 = vunpack.c.l.b16 %v872
      %v915 = vunpack.c.h.b16 %v872
      %v916 = vunpack.c.l.b16 %v873
      %v917 = vunpack.c.h.b16 %v873
      %v918 = vunpack.c.l.b16 %v874
      %v919 = vunpack.c.h.b16 %v874
      %v920 = vunpack.c.l.b16 %v875
      %v921 = vunpack.c.h.b16 %v875
      %v922 = vunpack.c.l.b16 %v876
      %v923 = vunpack.c.h.b16 %v876
      %v924 = vunpack.c.l.b16 %v877
      %v925 = vunpack.c.h.b16 %v877
      %v926 = vpack.c.b16 %v894, %v894
      %v927 = vpack.c.b16 %v895, %v895
      %v928 = vpack.c.b16 %v896, %v896
      %v929 = vpack.c.b16 %v897, %v897
      %v930 = vpack.c.b16 %v898, %v898
      %v931 = vpack.c.b16 %v899, %v899
      %v932 = vpack.c.b16 %v900, %v900
      %v933 = vpack.c.b16 %v901, %v901
      %v934 = vpack.c.b16 %v902, %v902
      %v935 = vpack.c.b16 %v903, %v903
      %v936 = vpack.c.b16 %v904, %v904
      %v937 = vpack.c.b16 %v905, %v905
      %v938 = vpack.c.b16 %v906, %v906
      %v939 = vpack.c.b16 %v907, %v907
      %v940 = vpack.c.b16 %v908, %v908
      %v941 = vpack.c.b16 %v909, %v909
      %v942 = vpack.c.b16 %v910, %v910
      %v943 = vpack.c.b16 %v911, %v911
      %v944 = vpack.c.b16 %v912, %v912
      %v945 = vpack.c.b16 %v913, %v913
      %v946 = vpack.c.b16 %v914, %v914
      %v947 = vpack.c.b16 %v915, %v915
      %v948 = vpack.c.b16 %v916, %v916
      %v949 = vpack.c.b16 %v917, %v917
      %v950 = vpack.c.b16 %v918, %v918
      %v951 = vpack.c.b16 %v919, %v919
      %v952 = vpack.c.b16 %v920, %v920
      %v953 = vpack.c.b16 %v921, %v921
      %v954 = vpack.c.b16 %v922, %v922
      %v955 = vpack.c.b16 %v923, %v923
      %v956 = vpack.c.b16 %v924, %v924
      %v957 = vpack.c.b16 %v925, %v925
      %958 = vrot.lane.b32.xlu0 %v926, 16
      %v959 = vpop.permute.xlu0 %958
      %960 = vrot.lane.b32.xlu0 %v927, 16
      %v961 = vpop.permute.xlu0 %960
      %962 = vrot.lane.b32.xlu0 %v928, 16
      %v963 = vpop.permute.xlu0 %962
      %964 = vrot.lane.b32.xlu0 %v929, 16
      %v965 = vpop.permute.xlu0 %964
      %966 = vrot.lane.b32.xlu0 %v930, 16
      %v967 = vpop.permute.xlu0 %966
      %968 = vrot.lane.b32.xlu0 %v931, 16
      %v969 = vpop.permute.xlu0 %968
      %970 = vrot.lane.b32.xlu0 %v932, 16
      %v971 = vpop.permute.xlu0 %970
      %972 = vrot.lane.b32.xlu0 %v933, 16
      %v973 = vpop.permute.xlu0 %972
      %974 = vrot.lane.b32.xlu0 %v934, 16
      %v975 = vpop.permute.xlu0 %974
      %976 = vrot.lane.b32.xlu0 %v935, 16
      %v977 = vpop.permute.xlu0 %976
      %978 = vrot.lane.b32.xlu0 %v936, 16
      %v979 = vpop.permute.xlu0 %978
      %980 = vrot.lane.b32.xlu0 %v937, 16
      %v981 = vpop.permute.xlu0 %980
      %982 = vrot.lane.b32.xlu0 %v938, 16
      %v983 = vpop.permute.xlu0 %982
      %984 = vrot.lane.b32.xlu0 %v939, 16
      %v985 = vpop.permute.xlu0 %984
      %986 = vrot.lane.b32.xlu0 %v940, 16
      %v987 = vpop.permute.xlu0 %986
      %988 = vrot.lane.b32.xlu0 %v941, 16
      %v989 = vpop.permute.xlu0 %988
      %990 = vrot.lane.b32.xlu0 %v942, 16
      %v991 = vpop.permute.xlu0 %990
      %992 = vrot.lane.b32.xlu0 %v943, 16
      %v993 = vpop.permute.xlu0 %992
      %994 = vrot.lane.b32.xlu0 %v944, 16
      %v995 = vpop.permute.xlu0 %994
      %996 = vrot.lane.b32.xlu0 %v945, 16
      %v997 = vpop.permute.xlu0 %996
      %998 = vrot.lane.b32.xlu0 %v946, 16
      %v999 = vpop.permute.xlu0 %998
      %1000 = vrot.lane.b32.xlu0 %v947, 16
      %v1001 = vpop.permute.xlu0 %1000
      %1002 = vrot.lane.b32.xlu0 %v948, 16
      %v1003 = vpop.permute.xlu0 %1002
      %1004 = vrot.lane.b32.xlu0 %v949, 16
      %v1005 = vpop.permute.xlu0 %1004
      %1006 = vrot.lane.b32.xlu0 %v950, 16
      %v1007 = vpop.permute.xlu0 %1006
      %1008 = vrot.lane.b32.xlu0 %v951, 16
      %v1009 = vpop.permute.xlu0 %1008
      %1010 = vrot.lane.b32.xlu0 %v952, 16
      %v1011 = vpop.permute.xlu0 %1010
      %1012 = vrot.lane.b32.xlu0 %v953, 16
      %v1013 = vpop.permute.xlu0 %1012
      %1014 = vrot.lane.b32.xlu0 %v954, 16
      %v1015 = vpop.permute.xlu0 %1014
      %1016 = vrot.lane.b32.xlu0 %v955, 16
      %v1017 = vpop.permute.xlu0 %1016
      %1018 = vrot.lane.b32.xlu0 %v956, 16
      %v1019 = vpop.permute.xlu0 %1018
      %1020 = vrot.lane.b32.xlu0 %v957, 16
      %v1021 = vpop.permute.xlu0 %1020
      %vm1054 = vcmask 191616
      %1055 = vst.msk [vmem:[#allocation4] sm:$0xf] %vm1054, %v959
      %1056 = vst.msk [vmem:[#allocation4 + $0x4] sm:$0xf] %vm1054, %v961
      %1057 = vst.msk [vmem:[#allocation4 + $0x8] sm:$0xf] %vm1054, %v963
      %1058 = vst.msk [vmem:[#allocation4 + $0xc] sm:$0xf] %vm1054, %v965
      %1059 = vst.msk [vmem:[#allocation4 + $0x10] sm:$0xf] %vm1054, %v967
      %1060 = vst.msk [vmem:[#allocation4 + $0x14] sm:$0xf] %vm1054, %v969
      %1061 = vst.msk [vmem:[#allocation4 + $0x18] sm:$0xf] %vm1054, %v971
      %1062 = vst.msk [vmem:[#allocation4 + $0x1c] sm:$0xf] %vm1054, %v973
      %1063 = vst.msk [vmem:[#allocation4 + $0x20] sm:$0xf] %vm1054, %v975
      %1064 = vst.msk [vmem:[#allocation4 + $0x24] sm:$0xf] %vm1054, %v977
      %1065 = vst.msk [vmem:[#allocation4 + $0x28] sm:$0xf] %vm1054, %v979
      %1066 = vst.msk [vmem:[#allocation4 + $0x2c] sm:$0xf] %vm1054, %v981
      %1067 = vst.msk [vmem:[#allocation4 + $0x30] sm:$0xf] %vm1054, %v983
      %1068 = vst.msk [vmem:[#allocation4 + $0x34] sm:$0xf] %vm1054, %v985
      %1069 = vst.msk [vmem:[#allocation4 + $0x38] sm:$0xf] %vm1054, %v987
      %1070 = vst.msk [vmem:[#allocation4 + $0x3c] sm:$0xf] %vm1054, %v989
      %1071 = vst.msk [vmem:[#allocation4 + $0x40] sm:$0xf] %vm1054, %v991
      %1072 = vst.msk [vmem:[#allocation4 + $0x44] sm:$0xf] %vm1054, %v993
      %1073 = vst.msk [vmem:[#allocation4 + $0x48] sm:$0xf] %vm1054, %v995
      %1074 = vst.msk [vmem:[#allocation4 + $0x4c] sm:$0xf] %vm1054, %v997
      %1075 = vst.msk [vmem:[#allocation4 + $0x50] sm:$0xf] %vm1054, %v999
      %1076 = vst.msk [vmem:[#allocation4 + $0x54] sm:$0xf] %vm1054, %v1001
      %1077 = vst.msk [vmem:[#allocation4 + $0x58] sm:$0xf] %vm1054, %v1003
      %1078 = vst.msk [vmem:[#allocation4 + $0x5c] sm:$0xf] %vm1054, %v1005
      %1079 = vst.msk [vmem:[#allocation4 + $0x60] sm:$0xf] %vm1054, %v1007
      %1080 = vst.msk [vmem:[#allocation4 + $0x64] sm:$0xf] %vm1054, %v1009
      %1081 = vst.msk [vmem:[#allocation4 + $0x68] sm:$0xf] %vm1054, %v1011
      %1082 = vst.msk [vmem:[#allocation4 + $0x6c] sm:$0xf] %vm1054, %v1013
      %1083 = vst.msk [vmem:[#allocation4 + $0x70] sm:$0xf] %vm1054, %v1015
      %1084 = vst.msk [vmem:[#allocation4 + $0x74] sm:$0xf] %vm1054, %v1017
      %1085 = vst.msk [vmem:[#allocation4 + $0x78] sm:$0xf] %vm1054, %v1019
      %1086 = vst.msk [vmem:[#allocation4 + $0x7c] sm:$0xf] %vm1054, %v1021
      %v1087 = vld [vmem:[#allocation4] sm:$0xf]
      %v1088 = vld [vmem:[#allocation4 + $0x4] sm:$0xf]
      %v1089 = vld [vmem:[#allocation4 + $0x8] sm:$0xf]
      %v1090 = vld [vmem:[#allocation4 + $0xc] sm:$0xf]
      %v1091 = vld [vmem:[#allocation4 + $0x10] sm:$0xf]
      %v1092 = vld [vmem:[#allocation4 + $0x14] sm:$0xf]
      %v1093 = vld [vmem:[#allocation4 + $0x18] sm:$0xf]
      %v1094 = vld [vmem:[#allocation4 + $0x1c] sm:$0xf]
      %v1095 = vld [vmem:[#allocation4 + $0x20] sm:$0xf]
      %v1096 = vld [vmem:[#allocation4 + $0x24] sm:$0xf]
      %v1097 = vld [vmem:[#allocation4 + $0x28] sm:$0xf]
      %v1098 = vld [vmem:[#allocation4 + $0x2c] sm:$0xf]
      %v1099 = vld [vmem:[#allocation4 + $0x30] sm:$0xf]
      %v1100 = vld [vmem:[#allocation4 + $0x34] sm:$0xf]
      %v1101 = vld [vmem:[#allocation4 + $0x38] sm:$0xf]
      %v1102 = vld [vmem:[#allocation4 + $0x3c] sm:$0xf]
      %v1103 = vld [vmem:[#allocation4 + $0x40] sm:$0xf]
      %v1104 = vld [vmem:[#allocation4 + $0x44] sm:$0xf]
      %v1105 = vld [vmem:[#allocation4 + $0x48] sm:$0xf]
      %v1106 = vld [vmem:[#allocation4 + $0x4c] sm:$0xf]
      %v1107 = vld [vmem:[#allocation4 + $0x50] sm:$0xf]
      %v1108 = vld [vmem:[#allocation4 + $0x54] sm:$0xf]
      %v1109 = vld [vmem:[#allocation4 + $0x58] sm:$0xf]
      %v1110 = vld [vmem:[#allocation4 + $0x5c] sm:$0xf]
      %v1111 = vld [vmem:[#allocation4 + $0x60] sm:$0xf]
      %v1112 = vld [vmem:[#allocation4 + $0x64] sm:$0xf]
      %v1113 = vld [vmem:[#allocation4 + $0x68] sm:$0xf]
      %v1114 = vld [vmem:[#allocation4 + $0x6c] sm:$0xf]
      %v1115 = vld [vmem:[#allocation4 + $0x70] sm:$0xf]
      %v1116 = vld [vmem:[#allocation4 + $0x74] sm:$0xf]
      %v1117 = vld [vmem:[#allocation4 + $0x78] sm:$0xf]
      %v1118 = vld [vmem:[#allocation4 + $0x7c] sm:$0xf]
      %v1119 = vld [vmem:[%s1] sm:$0xf]
      %v1120 = vld [vmem:[%s1 + $0x4] sm:$0xf]
      %v1121 = vld [vmem:[%s1 + $0x8] sm:$0xf]
      %v1154 = vunpack.c.l.b16 %v1087
      %v1155 = vunpack.c.l.b16 %v1088
      %v1156 = vunpack.c.l.b16 %v1089
      %v1157 = vunpack.c.l.b16 %v1090
      %v1158 = vunpack.c.l.b16 %v1091
      %v1159 = vunpack.c.l.b16 %v1092
      %v1160 = vunpack.c.l.b16 %v1093
      %v1161 = vunpack.c.l.b16 %v1094
      %v1162 = vunpack.c.l.b16 %v1095
      %v1163 = vunpack.c.l.b16 %v1096
      %v1164 = vunpack.c.l.b16 %v1097
      %v1165 = vunpack.c.l.b16 %v1098
      %v1166 = vunpack.c.l.b16 %v1099
      %v1167 = vunpack.c.l.b16 %v1100
      %v1168 = vunpack.c.l.b16 %v1101
      %v1169 = vunpack.c.l.b16 %v1102
      %v1170 = vunpack.c.l.b16 %v1103
      %v1171 = vunpack.c.l.b16 %v1104
      %v1172 = vunpack.c.l.b16 %v1105
      %v1173 = vunpack.c.l.b16 %v1106
      %v1174 = vunpack.c.l.b16 %v1107
      %v1175 = vunpack.c.l.b16 %v1108
      %v1176 = vunpack.c.l.b16 %v1109
      %v1177 = vunpack.c.l.b16 %v1110
      %v1178 = vunpack.c.l.b16 %v1111
      %v1179 = vunpack.c.l.b16 %v1112
      %v1180 = vunpack.c.l.b16 %v1113
      %v1181 = vunpack.c.l.b16 %v1114
      %v1182 = vunpack.c.l.b16 %v1115
      %v1183 = vunpack.c.l.b16 %v1116
      %v1184 = vunpack.c.l.b16 %v1117
      %v1185 = vunpack.c.l.b16 %v1118
      %v1186 = vpack.c.b16 %v1155, %v1154
      %v1187 = vpack.c.b16 %v1157, %v1156
      %v1188 = vpack.c.b16 %v1159, %v1158
      %v1189 = vpack.c.b16 %v1161, %v1160
      %v1190 = vpack.c.b16 %v1163, %v1162
      %v1191 = vpack.c.b16 %v1165, %v1164
      %v1192 = vpack.c.b16 %v1167, %v1166
      %v1193 = vpack.c.b16 %v1169, %v1168
      %v1194 = vpack.c.b16 %v1171, %v1170
      %v1195 = vpack.c.b16 %v1173, %v1172
      %v1196 = vpack.c.b16 %v1175, %v1174
      %v1197 = vpack.c.b16 %v1177, %v1176
      %v1198 = vpack.c.b16 %v1179, %v1178
      %v1199 = vpack.c.b16 %v1181, %v1180
      %v1200 = vpack.c.b16 %v1183, %v1182
      %v1201 = vpack.c.b16 %v1185, %v1184
      %v1205 = vunpack.c.l.b16 %v1119
      %v1206 = vunpack.c.l.b16 %v1120
      %v1207 = vunpack.c.l.b16 %v1121
      %v1208 = vpack.c.b16 %v1206, %v1205
      %v1209 = vpack.c.b16 %v1207, %v1207
      %vm1211 = vcmask 195584
      %v1213 = vsel %vm1211, %v1186, 0
      %v1216 = vsel %vm1211, %v1187, 0
      %v1219 = vsel %vm1211, %v1188, 0
      %v1222 = vsel %vm1211, %v1189, 0
      %v1225 = vsel %vm1211, %v1190, 0
      %v1228 = vsel %vm1211, %v1191, 0
      %v1231 = vsel %vm1211, %v1192, 0
      %v1234 = vsel %vm1211, %v1193, 0
      %v1237 = vsel %vm1211, %v1194, 0
      %v1240 = vsel %vm1211, %v1195, 0
      %v1243 = vsel %vm1211, %v1196, 0
      %v1246 = vsel %vm1211, %v1197, 0
      %v1249 = vsel %vm1211, %v1198, 0
      %v1252 = vsel %vm1211, %v1199, 0
      %v1255 = vsel %vm1211, %v1200, 0
      %v1258 = vsel %vm1211, %v1201, 0
      %vm1260 = vcmask 1043456
      %v1262 = vsel %vm1260, %v1209, 0
      %1264 = vmatprep.subr.bf16.mxu0 0
      %1265 = vmatpush1.bf16.msra.mxu0 0
      %1266 = vmatprep.subr.bf16.mxu0 0
      %1267 = vmatpush1.bf16.msra.mxu0 0
      %1268 = vmatprep.subr.bf16.mxu0 0
      %1269 = vmatpush1.bf16.msra.mxu0 0
      %1270 = vmatprep.subr.bf16.mxu0 0
      %1271 = vmatpush1.bf16.msra.mxu0 0
      %1272 = vmatprep.subr.bf16.mxu0 0
      %1273 = vmatpush1.bf16.msra.mxu0 0
      %1274 = vmatprep.subr.bf16.mxu0 0
      %1275 = vmatpush1.bf16.msra.mxu0 0
      %1276 = vmatprep.subr.bf16.mxu0 0
      %1277 = vmatpush1.bf16.msra.mxu0 %v1262
      %1278 = vmatprep.subr.bf16.mxu0 0
      %1279 = vmatpush1.bf16.msra.mxu0 %v1208
      %1280 = vmatprep.subr.bf16.mxu0 0
      %1281 = vmatpush2.bf16.msra.mxu0 0
      %1282 = vmatprep.subr.bf16.mxu0 0
      %1283 = vmatpush2.bf16.msra.mxu0 0
      %1284 = vmatprep.subr.bf16.mxu0 0
      %1285 = vmatpush2.bf16.msra.mxu0 0
      %1286 = vmatprep.subr.bf16.mxu0 0
      %1287 = vmatpush2.bf16.msra.mxu0 0
      %1288 = vmatprep.subr.bf16.mxu0 0
      %1289 = vmatpush2.bf16.msra.mxu0 0
      %1290 = vmatprep.subr.bf16.mxu0 0
      %1291 = vmatpush2.bf16.msra.mxu0 0
      %1292 = vmatprep.subr.bf16.mxu0 0
      %1293 = vmatpush2.bf16.msra.mxu0 0
      %1294 = vmatprep.subr.bf16.mxu0 0
      %1295 = vmatpush2.bf16.msra.mxu0 0
      %1296 = vmatprep.mubr.bf16.mxu0 0
      %1297 = vmatmul.mubr.bf16.gmra.mxu0 %v1213
      %v1298 = vpop.f32.mrf.mxu0
      %v1299 = vadd.f32 0.0, %v1298
      %v1300 = vpop.f32.mrf.mxu0
      %v1301 = vpop.f32.mrf.mxu0
      %v1302 = vadd.f32 0.0, %v1301
      %v1303 = vpop.f32.mrf.mxu0
      %1304 = vmatprep.mubr.bf16.mxu0 0
      %1305 = vmatmul.mubr.bf16.gmra.mxu0 %v1216
      %v1306 = vpop.f32.mrf.mxu0
      %v1307 = vadd.f32 0.0, %v1306
      %v1308 = vpop.f32.mrf.mxu0
      %v1309 = vpop.f32.mrf.mxu0
      %v1310 = vadd.f32 0.0, %v1309
      %v1311 = vpop.f32.mrf.mxu0
      %1312 = vmatprep.mubr.bf16.mxu0 0
      %1313 = vmatmul.mubr.bf16.gmra.mxu0 %v1219
      %v1314 = vpop.f32.mrf.mxu0
      %v1315 = vadd.f32 0.0, %v1314
      %v1316 = vpop.f32.mrf.mxu0
      %v1317 = vpop.f32.mrf.mxu0
      %v1318 = vadd.f32 0.0, %v1317
      %v1319 = vpop.f32.mrf.mxu0
      %1320 = vmatprep.mubr.bf16.mxu0 0
      %1321 = vmatmul.mubr.bf16.gmra.mxu0 %v1222
      %v1322 = vpop.f32.mrf.mxu0
      %v1323 = vadd.f32 0.0, %v1322
      %v1324 = vpop.f32.mrf.mxu0
      %v1325 = vpop.f32.mrf.mxu0
      %v1326 = vadd.f32 0.0, %v1325
      %v1327 = vpop.f32.mrf.mxu0
      %1328 = vmatprep.mubr.bf16.mxu0 0
      %1329 = vmatmul.mubr.bf16.gmra.mxu0 %v1225
      %v1330 = vpop.f32.mrf.mxu0
      %v1331 = vadd.f32 0.0, %v1330
      %v1332 = vpop.f32.mrf.mxu0
      %v1333 = vpop.f32.mrf.mxu0
      %v1334 = vadd.f32 0.0, %v1333
      %v1335 = vpop.f32.mrf.mxu0
      %1336 = vmatprep.mubr.bf16.mxu0 0
      %1337 = vmatmul.mubr.bf16.gmra.mxu0 %v1228
      %v1338 = vpop.f32.mrf.mxu0
      %v1339 = vadd.f32 0.0, %v1338
      %v1340 = vpop.f32.mrf.mxu0
      %v1341 = vpop.f32.mrf.mxu0
      %v1342 = vadd.f32 0.0, %v1341
      %v1343 = vpop.f32.mrf.mxu0
      %1344 = vmatprep.mubr.bf16.mxu0 0
      %1345 = vmatmul.mubr.bf16.gmra.mxu0 %v1231
      %v1346 = vpop.f32.mrf.mxu0
      %v1347 = vadd.f32 0.0, %v1346
      %v1348 = vpop.f32.mrf.mxu0
      %v1349 = vpop.f32.mrf.mxu0
      %v1350 = vadd.f32 0.0, %v1349
      %v1351 = vpop.f32.mrf.mxu0
      %1352 = vmatprep.mubr.bf16.mxu0 0
      %1353 = vmatmul.mubr.bf16.gmra.mxu0 %v1234
      %v1354 = vpop.f32.mrf.mxu0
      %v1355 = vadd.f32 0.0, %v1354
      %v1356 = vpop.f32.mrf.mxu0
      %v1357 = vpop.f32.mrf.mxu0
      %v1358 = vadd.f32 0.0, %v1357
      %v1359 = vpop.f32.mrf.mxu0
      %1360 = vmatprep.mubr.bf16.mxu0 0
      %1361 = vmatmul.mubr.bf16.gmra.mxu0 %v1237
      %v1362 = vpop.f32.mrf.mxu0
      %v1363 = vadd.f32 0.0, %v1362
      %v1364 = vpop.f32.mrf.mxu0
      %v1365 = vpop.f32.mrf.mxu0
      %v1366 = vadd.f32 0.0, %v1365
      %v1367 = vpop.f32.mrf.mxu0
      %1368 = vmatprep.mubr.bf16.mxu0 0
      %1369 = vmatmul.mubr.bf16.gmra.mxu0 %v1240
      %v1370 = vpop.f32.mrf.mxu0
      %v1371 = vadd.f32 0.0, %v1370
      %v1372 = vpop.f32.mrf.mxu0
      %v1373 = vpop.f32.mrf.mxu0
      %v1374 = vadd.f32 0.0, %v1373
      %v1375 = vpop.f32.mrf.mxu0
      %1376 = vmatprep.mubr.bf16.mxu0 0
      %1377 = vmatmul.mubr.bf16.gmra.mxu0 %v1243
      %v1378 = vpop.f32.mrf.mxu0
      %v1379 = vadd.f32 0.0, %v1378
      %v1380 = vpop.f32.mrf.mxu0
      %v1381 = vpop.f32.mrf.mxu0
      %v1382 = vadd.f32 0.0, %v1381
      %v1383 = vpop.f32.mrf.mxu0
      %1384 = vmatprep.mubr.bf16.mxu0 0
      %1385 = vmatmul.mubr.bf16.gmra.mxu0 %v1246
      %v1386 = vpop.f32.mrf.mxu0
      %v1387 = vadd.f32 0.0, %v1386
      %v1388 = vpop.f32.mrf.mxu0
      %v1389 = vpop.f32.mrf.mxu0
      %v1390 = vadd.f32 0.0, %v1389
      %v1391 = vpop.f32.mrf.mxu0
      %1392 = vmatprep.mubr.bf16.mxu0 0
      %1393 = vmatmul.mubr.bf16.gmra.mxu0 %v1249
      %v1394 = vpop.f32.mrf.mxu0
      %v1395 = vadd.f32 0.0, %v1394
      %v1396 = vpop.f32.mrf.mxu0
      %v1397 = vpop.f32.mrf.mxu0
      %v1398 = vadd.f32 0.0, %v1397
      %v1399 = vpop.f32.mrf.mxu0
      %1400 = vmatprep.mubr.bf16.mxu0 0
      %1401 = vmatmul.mubr.bf16.gmra.mxu0 %v1252
      %v1402 = vpop.f32.mrf.mxu0
      %v1403 = vadd.f32 0.0, %v1402
      %v1404 = vpop.f32.mrf.mxu0
      %v1405 = vpop.f32.mrf.mxu0
      %v1406 = vadd.f32 0.0, %v1405
      %v1407 = vpop.f32.mrf.mxu0
      %1408 = vmatprep.mubr.bf16.mxu0 0
      %1409 = vmatmul.mubr.bf16.gmra.mxu0 %v1255
      %v1410 = vpop.f32.mrf.mxu0
      %v1411 = vadd.f32 0.0, %v1410
      %v1412 = vpop.f32.mrf.mxu0
      %v1413 = vpop.f32.mrf.mxu0
      %v1414 = vadd.f32 0.0, %v1413
      %v1415 = vpop.f32.mrf.mxu0
      %1416 = vmatprep.mubr.bf16.mxu0 0
      %1417 = vmatmul.mubr.bf16.gmra.mxu0 %v1258
      %v1418 = vpop.f32.mrf.mxu0
      %v1419 = vadd.f32 0.0, %v1418
      %v1420 = vpop.f32.mrf.mxu0
      %v1421 = vpop.f32.mrf.mxu0
      %v1422 = vadd.f32 0.0, %v1421
      %v1423 = vpop.f32.mrf.mxu0
      %1424 = vdwg.mxu0
      %1425 = vst.msk [vmem:[#allocation6] sm:$0xff] %vm226, %v1299
      %1426 = vst.msk [vmem:[#allocation6 + $0x8] sm:$0xff] %vm226, %v1302
      %1427 = vst.msk [vmem:[#allocation6 + $0x10] sm:$0xff] %vm226, %v1307
      %1428 = vst.msk [vmem:[#allocation6 + $0x18] sm:$0xff] %vm226, %v1310
      %1429 = vst.msk [vmem:[#allocation6 + $0x20] sm:$0xff] %vm226, %v1315
      %1430 = vst.msk [vmem:[#allocation6 + $0x28] sm:$0xff] %vm226, %v1318
      %1431 = vst.msk [vmem:[#allocation6 + $0x30] sm:$0xff] %vm226, %v1323
      %1432 = vst.msk [vmem:[#allocation6 + $0x38] sm:$0xff] %vm226, %v1326
      %1433 = vst.msk [vmem:[#allocation6 + $0x40] sm:$0xff] %vm226, %v1331
      %1434 = vst.msk [vmem:[#allocation6 + $0x48] sm:$0xff] %vm226, %v1334
      %1435 = vst.msk [vmem:[#allocation6 + $0x50] sm:$0xff] %vm226, %v1339
      %1436 = vst.msk [vmem:[#allocation6 + $0x58] sm:$0xff] %vm226, %v1342
      %1437 = vst.msk [vmem:[#allocation6 + $0x60] sm:$0xff] %vm226, %v1347
      %1438 = vst.msk [vmem:[#allocation6 + $0x68] sm:$0xff] %vm226, %v1350
      %1439 = vst.msk [vmem:[#allocation6 + $0x70] sm:$0xff] %vm226, %v1355
      %1440 = vst.msk [vmem:[#allocation6 + $0x78] sm:$0xff] %vm226, %v1358
      %1441 = vst.msk [vmem:[#allocation6 + $0x80] sm:$0xff] %vm226, %v1363
      %1442 = vst.msk [vmem:[#allocation6 + $0x88] sm:$0xff] %vm226, %v1366
      %1443 = vst.msk [vmem:[#allocation6 + $0x90] sm:$0xff] %vm226, %v1371
      %1444 = vst.msk [vmem:[#allocation6 + $0x98] sm:$0xff] %vm226, %v1374
      %1445 = vst.msk [vmem:[#allocation6 + $0xa0] sm:$0xff] %vm226, %v1379
      %1446 = vst.msk [vmem:[#allocation6 + $0xa8] sm:$0xff] %vm226, %v1382
      %1447 = vst.msk [vmem:[#allocation6 + $0xb0] sm:$0xff] %vm226, %v1387
      %1448 = vst.msk [vmem:[#allocation6 + $0xb8] sm:$0xff] %vm226, %v1390
      %1449 = vst.msk [vmem:[#allocation6 + $0xc0] sm:$0xff] %vm226, %v1395
      %1450 = vst.msk [vmem:[#allocation6 + $0xc8] sm:$0xff] %vm226, %v1398
      %1451 = vst.msk [vmem:[#allocation6 + $0xd0] sm:$0xff] %vm226, %v1403
      %1452 = vst.msk [vmem:[#allocation6 + $0xd8] sm:$0xff] %vm226, %v1406
      %1453 = vst.msk [vmem:[#allocation6 + $0xe0] sm:$0xff] %vm226, %v1411
      %1454 = vst.msk [vmem:[#allocation6 + $0xe8] sm:$0xff] %vm226, %v1414
      %1455 = vst.msk [vmem:[#allocation6 + $0xf0] sm:$0xff] %vm226, %v1419
      %1456 = vst.msk [vmem:[#allocation6 + $0xf8] sm:$0xff] %vm226, %v1422
      %v1457 = vld [vmem:[%s347] sm:$0xff]
      %v1458 = vld [vmem:[%s347 + $0x8] sm:$0xff]
      %v1459 = vld [vmem:[%s347 + $0x18] sm:$0xff]
      %v1460 = vld [vmem:[%s347 + $0x20] sm:$0xff]
      %v1461 = vld [vmem:[%s347 + $0x30] sm:$0xff]
      %v1462 = vld [vmem:[%s347 + $0x38] sm:$0xff]
      %v1463 = vld [vmem:[%s347 + $0x48] sm:$0xff]
      %v1464 = vld [vmem:[%s347 + $0x50] sm:$0xff]
      %v1465 = vld [vmem:[%s347 + $0x60] sm:$0xff]
      %v1466 = vld [vmem:[%s347 + $0x68] sm:$0xff]
      %v1467 = vld [vmem:[%s347 + $0x78] sm:$0xff]
      %v1468 = vld [vmem:[%s347 + $0x80] sm:$0xff]
      %v1469 = vld [vmem:[%s347 + $0x90] sm:$0xff]
      %v1470 = vld [vmem:[%s347 + $0x98] sm:$0xff]
      %v1471 = vld [vmem:[%s347 + $0xa8] sm:$0xff]
      %v1472 = vld [vmem:[%s347 + $0xb0] sm:$0xff]
      %v1473 = vld [vmem:[%s347 + $0xc0] sm:$0xff]
      %v1474 = vld [vmem:[%s347 + $0xc8] sm:$0xff]
      %v1475 = vld [vmem:[%s347 + $0xd8] sm:$0xff]
      %v1476 = vld [vmem:[%s347 + $0xe0] sm:$0xff]
      %v1477 = vld [vmem:[%s347 + $0xf0] sm:$0xff]
      %v1478 = vld [vmem:[%s347 + $0xf8] sm:$0xff]
      %v1479 = vld [vmem:[%s347 + $0x108] sm:$0xff]
      %v1480 = vld [vmem:[%s347 + $0x110] sm:$0xff]
      %v1481 = vld [vmem:[%s347 + $0x120] sm:$0xff]
      %v1482 = vld [vmem:[%s347 + $0x128] sm:$0xff]
      %v1483 = vld [vmem:[%s347 + $0x138] sm:$0xff]
      %v1484 = vld [vmem:[%s347 + $0x140] sm:$0xff]
      %v1485 = vld [vmem:[%s347 + $0x150] sm:$0xff]
      %v1486 = vld [vmem:[%s347 + $0x158] sm:$0xff]
      %v1487 = vld [vmem:[%s347 + $0x168] sm:$0xff]
      %v1488 = vld [vmem:[%s347 + $0x170] sm:$0xff]
      %v1489 = vpack.c.bf16 %v1458, %v1457
      %v1490 = vpack.c.bf16 %v1460, %v1459
      %v1491 = vpack.c.bf16 %v1462, %v1461
      %v1492 = vpack.c.bf16 %v1464, %v1463
      %v1493 = vpack.c.bf16 %v1466, %v1465
      %v1494 = vpack.c.bf16 %v1468, %v1467
      %v1495 = vpack.c.bf16 %v1470, %v1469
      %v1496 = vpack.c.bf16 %v1472, %v1471
      %v1497 = vpack.c.bf16 %v1474, %v1473
      %v1498 = vpack.c.bf16 %v1476, %v1475
      %v1499 = vpack.c.bf16 %v1478, %v1477
      %v1500 = vpack.c.bf16 %v1480, %v1479
      %v1501 = vpack.c.bf16 %v1482, %v1481
      %v1502 = vpack.c.bf16 %v1484, %v1483
      %v1503 = vpack.c.bf16 %v1486, %v1485
      %v1504 = vpack.c.bf16 %v1488, %v1487
      %v1521 = vunpack.c.l.b16 %v1489
      %v1522 = vunpack.c.h.b16 %v1489
      %v1523 = vunpack.c.l.b16 %v1490
      %v1524 = vunpack.c.h.b16 %v1490
      %v1525 = vunpack.c.l.b16 %v1491
      %v1526 = vunpack.c.h.b16 %v1491
      %v1527 = vunpack.c.l.b16 %v1492
      %v1528 = vunpack.c.h.b16 %v1492
      %v1529 = vunpack.c.l.b16 %v1493
      %v1530 = vunpack.c.h.b16 %v1493
      %v1531 = vunpack.c.l.b16 %v1494
      %v1532 = vunpack.c.h.b16 %v1494
      %v1533 = vunpack.c.l.b16 %v1495
      %v1534 = vunpack.c.h.b16 %v1495
      %v1535 = vunpack.c.l.b16 %v1496
      %v1536 = vunpack.c.h.b16 %v1496
      %v1537 = vunpack.c.l.b16 %v1497
      %v1538 = vunpack.c.h.b16 %v1497
      %v1539 = vunpack.c.l.b16 %v1498
      %v1540 = vunpack.c.h.b16 %v1498
      %v1541 = vunpack.c.l.b16 %v1499
      %v1542 = vunpack.c.h.b16 %v1499
      %v1543 = vunpack.c.l.b16 %v1500
      %v1544 = vunpack.c.h.b16 %v1500
      %v1545 = vunpack.c.l.b16 %v1501
      %v1546 = vunpack.c.h.b16 %v1501
      %v1547 = vunpack.c.l.b16 %v1502
      %v1548 = vunpack.c.h.b16 %v1502
      %v1549 = vunpack.c.l.b16 %v1503
      %v1550 = vunpack.c.h.b16 %v1503
      %v1551 = vunpack.c.l.b16 %v1504
      %v1552 = vunpack.c.h.b16 %v1504
      %v1553 = vpack.c.b16 %v1521, %v1521
      %v1554 = vpack.c.b16 %v1522, %v1522
      %v1555 = vpack.c.b16 %v1523, %v1523
      %v1556 = vpack.c.b16 %v1524, %v1524
      %v1557 = vpack.c.b16 %v1525, %v1525
      %v1558 = vpack.c.b16 %v1526, %v1526
      %v1559 = vpack.c.b16 %v1527, %v1527
      %v1560 = vpack.c.b16 %v1528, %v1528
      %v1561 = vpack.c.b16 %v1529, %v1529
      %v1562 = vpack.c.b16 %v1530, %v1530
      %v1563 = vpack.c.b16 %v1531, %v1531
      %v1564 = vpack.c.b16 %v1532, %v1532
      %v1565 = vpack.c.b16 %v1533, %v1533
      %v1566 = vpack.c.b16 %v1534, %v1534
      %v1567 = vpack.c.b16 %v1535, %v1535
      %v1568 = vpack.c.b16 %v1536, %v1536
      %v1569 = vpack.c.b16 %v1537, %v1537
      %v1570 = vpack.c.b16 %v1538, %v1538
      %v1571 = vpack.c.b16 %v1539, %v1539
      %v1572 = vpack.c.b16 %v1540, %v1540
      %v1573 = vpack.c.b16 %v1541, %v1541
      %v1574 = vpack.c.b16 %v1542, %v1542
      %v1575 = vpack.c.b16 %v1543, %v1543
      %v1576 = vpack.c.b16 %v1544, %v1544
      %v1577 = vpack.c.b16 %v1545, %v1545
      %v1578 = vpack.c.b16 %v1546, %v1546
      %v1579 = vpack.c.b16 %v1547, %v1547
      %v1580 = vpack.c.b16 %v1548, %v1548
      %v1581 = vpack.c.b16 %v1549, %v1549
      %v1582 = vpack.c.b16 %v1550, %v1550
      %v1583 = vpack.c.b16 %v1551, %v1551
      %v1584 = vpack.c.b16 %v1552, %v1552
      %1617 = vst.msk [vmem:[#allocation4] sm:$0xf] %vm540, %v1553
      %1618 = vst.msk [vmem:[#allocation4 + $0x4] sm:$0xf] %vm540, %v1554
      %1619 = vst.msk [vmem:[#allocation4 + $0x8] sm:$0xf] %vm540, %v1555
      %1620 = vst.msk [vmem:[#allocation4 + $0xc] sm:$0xf] %vm540, %v1556
      %1621 = vst.msk [vmem:[#allocation4 + $0x10] sm:$0xf] %vm540, %v1557
      %1622 = vst.msk [vmem:[#allocation4 + $0x14] sm:$0xf] %vm540, %v1558
      %1623 = vst.msk [vmem:[#allocation4 + $0x18] sm:$0xf] %vm540, %v1559
      %1624 = vst.msk [vmem:[#allocation4 + $0x1c] sm:$0xf] %vm540, %v1560
      %1625 = vst.msk [vmem:[#allocation4 + $0x20] sm:$0xf] %vm540, %v1561
      %1626 = vst.msk [vmem:[#allocation4 + $0x24] sm:$0xf] %vm540, %v1562
      %1627 = vst.msk [vmem:[#allocation4 + $0x28] sm:$0xf] %vm540, %v1563
      %1628 = vst.msk [vmem:[#allocation4 + $0x2c] sm:$0xf] %vm540, %v1564
      %1629 = vst.msk [vmem:[#allocation4 + $0x30] sm:$0xf] %vm540, %v1565
      %1630 = vst.msk [vmem:[#allocation4 + $0x34] sm:$0xf] %vm540, %v1566
      %1631 = vst.msk [vmem:[#allocation4 + $0x38] sm:$0xf] %vm540, %v1567
      %1632 = vst.msk [vmem:[#allocation4 + $0x3c] sm:$0xf] %vm540, %v1568
      %1633 = vst.msk [vmem:[#allocation4 + $0x40] sm:$0xf] %vm540, %v1569
      %1634 = vst.msk [vmem:[#allocation4 + $0x44] sm:$0xf] %vm540, %v1570
      %1635 = vst.msk [vmem:[#allocation4 + $0x48] sm:$0xf] %vm540, %v1571
      %1636 = vst.msk [vmem:[#allocation4 + $0x4c] sm:$0xf] %vm540, %v1572
      %1637 = vst.msk [vmem:[#allocation4 + $0x50] sm:$0xf] %vm540, %v1573
      %1638 = vst.msk [vmem:[#allocation4 + $0x54] sm:$0xf] %vm540, %v1574
      %1639 = vst.msk [vmem:[#allocation4 + $0x58] sm:$0xf] %vm540, %v1575
      %1640 = vst.msk [vmem:[#allocation4 + $0x5c] sm:$0xf] %vm540, %v1576
      %1641 = vst.msk [vmem:[#allocation4 + $0x60] sm:$0xf] %vm540, %v1577
      %1642 = vst.msk [vmem:[#allocation4 + $0x64] sm:$0xf] %vm540, %v1578
      %1643 = vst.msk [vmem:[#allocation4 + $0x68] sm:$0xf] %vm540, %v1579
      %1644 = vst.msk [vmem:[#allocation4 + $0x6c] sm:$0xf] %vm540, %v1580
      %1645 = vst.msk [vmem:[#allocation4 + $0x70] sm:$0xf] %vm540, %v1581
      %1646 = vst.msk [vmem:[#allocation4 + $0x74] sm:$0xf] %vm540, %v1582
      %1647 = vst.msk [vmem:[#allocation4 + $0x78] sm:$0xf] %vm540, %v1583
      %1648 = vst.msk [vmem:[#allocation4 + $0x7c] sm:$0xf] %vm540, %v1584
      %v1649 = vld [vmem:[%s347 + $0x1] sm:$0xff]
      %v1650 = vld [vmem:[%s347 + $0x9] sm:$0xff]
      %v1651 = vld [vmem:[%s347 + $0x19] sm:$0xff]
      %v1652 = vld [vmem:[%s347 + $0x21] sm:$0xff]
      %v1653 = vld [vmem:[%s347 + $0x31] sm:$0xff]
      %v1654 = vld [vmem:[%s347 + $0x39] sm:$0xff]
      %v1655 = vld [vmem:[%s347 + $0x49] sm:$0xff]
      %v1656 = vld [vmem:[%s347 + $0x51] sm:$0xff]
      %v1657 = vld [vmem:[%s347 + $0x61] sm:$0xff]
      %v1658 = vld [vmem:[%s347 + $0x69] sm:$0xff]
      %v1659 = vld [vmem:[%s347 + $0x79] sm:$0xff]
      %v1660 = vld [vmem:[%s347 + $0x81] sm:$0xff]
      %v1661 = vld [vmem:[%s347 + $0x91] sm:$0xff]
      %v1662 = vld [vmem:[%s347 + $0x99] sm:$0xff]
      %v1663 = vld [vmem:[%s347 + $0xa9] sm:$0xff]
      %v1664 = vld [vmem:[%s347 + $0xb1] sm:$0xff]
      %v1665 = vld [vmem:[%s347 + $0xc1] sm:$0xff]
      %v1666 = vld [vmem:[%s347 + $0xc9] sm:$0xff]
      %v1667 = vld [vmem:[%s347 + $0xd9] sm:$0xff]
      %v1668 = vld [vmem:[%s347 + $0xe1] sm:$0xff]
      %v1669 = vld [vmem:[%s347 + $0xf1] sm:$0xff]
      %v1670 = vld [vmem:[%s347 + $0xf9] sm:$0xff]
      %v1671 = vld [vmem:[%s347 + $0x109] sm:$0xff]
      %v1672 = vld [vmem:[%s347 + $0x111] sm:$0xff]
      %v1673 = vld [vmem:[%s347 + $0x121] sm:$0xff]
      %v1674 = vld [vmem:[%s347 + $0x129] sm:$0xff]
      %v1675 = vld [vmem:[%s347 + $0x139] sm:$0xff]
      %v1676 = vld [vmem:[%s347 + $0x141] sm:$0xff]
      %v1677 = vld [vmem:[%s347 + $0x151] sm:$0xff]
      %v1678 = vld [vmem:[%s347 + $0x159] sm:$0xff]
      %v1679 = vld [vmem:[%s347 + $0x169] sm:$0xff]
      %v1680 = vld [vmem:[%s347 + $0x171] sm:$0xff]
      %v1681 = vpack.c.bf16 %v1650, %v1649
      %v1682 = vpack.c.bf16 %v1652, %v1651
      %v1683 = vpack.c.bf16 %v1654, %v1653
      %v1684 = vpack.c.bf16 %v1656, %v1655
      %v1685 = vpack.c.bf16 %v1658, %v1657
      %v1686 = vpack.c.bf16 %v1660, %v1659
      %v1687 = vpack.c.bf16 %v1662, %v1661
      %v1688 = vpack.c.bf16 %v1664, %v1663
      %v1689 = vpack.c.bf16 %v1666, %v1665
      %v1690 = vpack.c.bf16 %v1668, %v1667
      %v1691 = vpack.c.bf16 %v1670, %v1669
      %v1692 = vpack.c.bf16 %v1672, %v1671
      %v1693 = vpack.c.bf16 %v1674, %v1673
      %v1694 = vpack.c.bf16 %v1676, %v1675
      %v1695 = vpack.c.bf16 %v1678, %v1677
      %v1696 = vpack.c.bf16 %v1680, %v1679
      %v1713 = vunpack.c.l.b16 %v1681
      %v1714 = vunpack.c.h.b16 %v1681
      %v1715 = vunpack.c.l.b16 %v1682
      %v1716 = vunpack.c.h.b16 %v1682
      %v1717 = vunpack.c.l.b16 %v1683
      %v1718 = vunpack.c.h.b16 %v1683
      %v1719 = vunpack.c.l.b16 %v1684
      %v1720 = vunpack.c.h.b16 %v1684
      %v1721 = vunpack.c.l.b16 %v1685
      %v1722 = vunpack.c.h.b16 %v1685
      %v1723 = vunpack.c.l.b16 %v1686
      %v1724 = vunpack.c.h.b16 %v1686
      %v1725 = vunpack.c.l.b16 %v1687
      %v1726 = vunpack.c.h.b16 %v1687
      %v1727 = vunpack.c.l.b16 %v1688
      %v1728 = vunpack.c.h.b16 %v1688
      %v1729 = vunpack.c.l.b16 %v1689
      %v1730 = vunpack.c.h.b16 %v1689
      %v1731 = vunpack.c.l.b16 %v1690
      %v1732 = vunpack.c.h.b16 %v1690
      %v1733 = vunpack.c.l.b16 %v1691
      %v1734 = vunpack.c.h.b16 %v1691
      %v1735 = vunpack.c.l.b16 %v1692
      %v1736 = vunpack.c.h.b16 %v1692
      %v1737 = vunpack.c.l.b16 %v1693
      %v1738 = vunpack.c.h.b16 %v1693
      %v1739 = vunpack.c.l.b16 %v1694
      %v1740 = vunpack.c.h.b16 %v1694
      %v1741 = vunpack.c.l.b16 %v1695
      %v1742 = vunpack.c.h.b16 %v1695
      %v1743 = vunpack.c.l.b16 %v1696
      %v1744 = vunpack.c.h.b16 %v1696
      %v1745 = vpack.c.b16 %v1713, %v1713
      %v1746 = vpack.c.b16 %v1714, %v1714
      %v1747 = vpack.c.b16 %v1715, %v1715
      %v1748 = vpack.c.b16 %v1716, %v1716
      %v1749 = vpack.c.b16 %v1717, %v1717
      %v1750 = vpack.c.b16 %v1718, %v1718
      %v1751 = vpack.c.b16 %v1719, %v1719
      %v1752 = vpack.c.b16 %v1720, %v1720
      %v1753 = vpack.c.b16 %v1721, %v1721
      %v1754 = vpack.c.b16 %v1722, %v1722
      %v1755 = vpack.c.b16 %v1723, %v1723
      %v1756 = vpack.c.b16 %v1724, %v1724
      %v1757 = vpack.c.b16 %v1725, %v1725
      %v1758 = vpack.c.b16 %v1726, %v1726
      %v1759 = vpack.c.b16 %v1727, %v1727
      %v1760 = vpack.c.b16 %v1728, %v1728
      %v1761 = vpack.c.b16 %v1729, %v1729
      %v1762 = vpack.c.b16 %v1730, %v1730
      %v1763 = vpack.c.b16 %v1731, %v1731
      %v1764 = vpack.c.b16 %v1732, %v1732
      %v1765 = vpack.c.b16 %v1733, %v1733
      %v1766 = vpack.c.b16 %v1734, %v1734
      %v1767 = vpack.c.b16 %v1735, %v1735
      %v1768 = vpack.c.b16 %v1736, %v1736
      %v1769 = vpack.c.b16 %v1737, %v1737
      %v1770 = vpack.c.b16 %v1738, %v1738
      %v1771 = vpack.c.b16 %v1739, %v1739
      %v1772 = vpack.c.b16 %v1740, %v1740
      %v1773 = vpack.c.b16 %v1741, %v1741
      %v1774 = vpack.c.b16 %v1742, %v1742
      %v1775 = vpack.c.b16 %v1743, %v1743
      %v1776 = vpack.c.b16 %v1744, %v1744
      %1777 = vrot.lane.b32.xlu0 %v1745, 8
      %v1778 = vpop.permute.xlu0 %1777
      %1779 = vrot.lane.b32.xlu0 %v1746, 8
      %v1780 = vpop.permute.xlu0 %1779
      %1781 = vrot.lane.b32.xlu0 %v1747, 8
      %v1782 = vpop.permute.xlu0 %1781
      %1783 = vrot.lane.b32.xlu0 %v1748, 8
      %v1784 = vpop.permute.xlu0 %1783
      %1785 = vrot.lane.b32.xlu0 %v1749, 8
      %v1786 = vpop.permute.xlu0 %1785
      %1787 = vrot.lane.b32.xlu0 %v1750, 8
      %v1788 = vpop.permute.xlu0 %1787
      %1789 = vrot.lane.b32.xlu0 %v1751, 8
      %v1790 = vpop.permute.xlu0 %1789
      %1791 = vrot.lane.b32.xlu0 %v1752, 8
      %v1792 = vpop.permute.xlu0 %1791
      %1793 = vrot.lane.b32.xlu0 %v1753, 8
      %v1794 = vpop.permute.xlu0 %1793
      %1795 = vrot.lane.b32.xlu0 %v1754, 8
      %v1796 = vpop.permute.xlu0 %1795
      %1797 = vrot.lane.b32.xlu0 %v1755, 8
      %v1798 = vpop.permute.xlu0 %1797
      %1799 = vrot.lane.b32.xlu0 %v1756, 8
      %v1800 = vpop.permute.xlu0 %1799
      %1801 = vrot.lane.b32.xlu0 %v1757, 8
      %v1802 = vpop.permute.xlu0 %1801
      %1803 = vrot.lane.b32.xlu0 %v1758, 8
      %v1804 = vpop.permute.xlu0 %1803
      %1805 = vrot.lane.b32.xlu0 %v1759, 8
      %v1806 = vpop.permute.xlu0 %1805
      %1807 = vrot.lane.b32.xlu0 %v1760, 8
      %v1808 = vpop.permute.xlu0 %1807
      %1809 = vrot.lane.b32.xlu0 %v1761, 8
      %v1810 = vpop.permute.xlu0 %1809
      %1811 = vrot.lane.b32.xlu0 %v1762, 8
      %v1812 = vpop.permute.xlu0 %1811
      %1813 = vrot.lane.b32.xlu0 %v1763, 8
      %v1814 = vpop.permute.xlu0 %1813
      %1815 = vrot.lane.b32.xlu0 %v1764, 8
      %v1816 = vpop.permute.xlu0 %1815
      %1817 = vrot.lane.b32.xlu0 %v1765, 8
      %v1818 = vpop.permute.xlu0 %1817
      %1819 = vrot.lane.b32.xlu0 %v1766, 8
      %v1820 = vpop.permute.xlu0 %1819
      %1821 = vrot.lane.b32.xlu0 %v1767, 8
      %v1822 = vpop.permute.xlu0 %1821
      %1823 = vrot.lane.b32.xlu0 %v1768, 8
      %v1824 = vpop.permute.xlu0 %1823
      %1825 = vrot.lane.b32.xlu0 %v1769, 8
      %v1826 = vpop.permute.xlu0 %1825
      %1827 = vrot.lane.b32.xlu0 %v1770, 8
      %v1828 = vpop.permute.xlu0 %1827
      %1829 = vrot.lane.b32.xlu0 %v1771, 8
      %v1830 = vpop.permute.xlu0 %1829
      %1831 = vrot.lane.b32.xlu0 %v1772, 8
      %v1832 = vpop.permute.xlu0 %1831
      %1833 = vrot.lane.b32.xlu0 %v1773, 8
      %v1834 = vpop.permute.xlu0 %1833
      %1835 = vrot.lane.b32.xlu0 %v1774, 8
      %v1836 = vpop.permute.xlu0 %1835
      %1837 = vrot.lane.b32.xlu0 %v1775, 8
      %v1838 = vpop.permute.xlu0 %1837
      %1839 = vrot.lane.b32.xlu0 %v1776, 8
      %v1840 = vpop.permute.xlu0 %1839
      %1873 = vst.msk [vmem:[#allocation4] sm:$0xf] %vm797, %v1778
      %1874 = vst.msk [vmem:[#allocation4 + $0x4] sm:$0xf] %vm797, %v1780
      %1875 = vst.msk [vmem:[#allocation4 + $0x8] sm:$0xf] %vm797, %v1782
      %1876 = vst.msk [vmem:[#allocation4 + $0xc] sm:$0xf] %vm797, %v1784
      %1877 = vst.msk [vmem:[#allocation4 + $0x10] sm:$0xf] %vm797, %v1786
      %1878 = vst.msk [vmem:[#allocation4 + $0x14] sm:$0xf] %vm797, %v1788
      %1879 = vst.msk [vmem:[#allocation4 + $0x18] sm:$0xf] %vm797, %v1790
      %1880 = vst.msk [vmem:[#allocation4 + $0x1c] sm:$0xf] %vm797, %v1792
      %1881 = vst.msk [vmem:[#allocation4 + $0x20] sm:$0xf] %vm797, %v1794
      %1882 = vst.msk [vmem:[#allocation4 + $0x24] sm:$0xf] %vm797, %v1796
      %1883 = vst.msk [vmem:[#allocation4 + $0x28] sm:$0xf] %vm797, %v1798
      %1884 = vst.msk [vmem:[#allocation4 + $0x2c] sm:$0xf] %vm797, %v1800
      %1885 = vst.msk [vmem:[#allocation4 + $0x30] sm:$0xf] %vm797, %v1802
      %1886 = vst.msk [vmem:[#allocation4 + $0x34] sm:$0xf] %vm797, %v1804
      %1887 = vst.msk [vmem:[#allocation4 + $0x38] sm:$0xf] %vm797, %v1806
      %1888 = vst.msk [vmem:[#allocation4 + $0x3c] sm:$0xf] %vm797, %v1808
      %1889 = vst.msk [vmem:[#allocation4 + $0x40] sm:$0xf] %vm797, %v1810
      %1890 = vst.msk [vmem:[#allocation4 + $0x44] sm:$0xf] %vm797, %v1812
      %1891 = vst.msk [vmem:[#allocation4 + $0x48] sm:$0xf] %vm797, %v1814
      %1892 = vst.msk [vmem:[#allocation4 + $0x4c] sm:$0xf] %vm797, %v1816
      %1893 = vst.msk [vmem:[#allocation4 + $0x50] sm:$0xf] %vm797, %v1818
      %1894 = vst.msk [vmem:[#allocation4 + $0x54] sm:$0xf] %vm797, %v1820
      %1895 = vst.msk [vmem:[#allocation4 + $0x58] sm:$0xf] %vm797, %v1822
      %1896 = vst.msk [vmem:[#allocation4 + $0x5c] sm:$0xf] %vm797, %v1824
      %1897 = vst.msk [vmem:[#allocation4 + $0x60] sm:$0xf] %vm797, %v1826
      %1898 = vst.msk [vmem:[#allocation4 + $0x64] sm:$0xf] %vm797, %v1828
      %1899 = vst.msk [vmem:[#allocation4 + $0x68] sm:$0xf] %vm797, %v1830
      %1900 = vst.msk [vmem:[#allocation4 + $0x6c] sm:$0xf] %vm797, %v1832
      %1901 = vst.msk [vmem:[#allocation4 + $0x70] sm:$0xf] %vm797, %v1834
      %1902 = vst.msk [vmem:[#allocation4 + $0x74] sm:$0xf] %vm797, %v1836
      %1903 = vst.msk [vmem:[#allocation4 + $0x78] sm:$0xf] %vm797, %v1838
      %1904 = vst.msk [vmem:[#allocation4 + $0x7c] sm:$0xf] %vm797, %v1840
      %v1905 = vld [vmem:[%s347 + $0x2] sm:$0xff]
      %v1906 = vld [vmem:[%s347 + $0xa] sm:$0xff]
      %v1907 = vld [vmem:[%s347 + $0x1a] sm:$0xff]
      %v1908 = vld [vmem:[%s347 + $0x22] sm:$0xff]
      %v1909 = vld [vmem:[%s347 + $0x32] sm:$0xff]
      %v1910 = vld [vmem:[%s347 + $0x3a] sm:$0xff]
      %v1911 = vld [vmem:[%s347 + $0x4a] sm:$0xff]
      %v1912 = vld [vmem:[%s347 + $0x52] sm:$0xff]
      %v1913 = vld [vmem:[%s347 + $0x62] sm:$0xff]
      %v1914 = vld [vmem:[%s347 + $0x6a] sm:$0xff]
      %v1915 = vld [vmem:[%s347 + $0x7a] sm:$0xff]
      %v1916 = vld [vmem:[%s347 + $0x82] sm:$0xff]
      %v1917 = vld [vmem:[%s347 + $0x92] sm:$0xff]
      %v1918 = vld [vmem:[%s347 + $0x9a] sm:$0xff]
      %v1919 = vld [vmem:[%s347 + $0xaa] sm:$0xff]
      %v1920 = vld [vmem:[%s347 + $0xb2] sm:$0xff]
      %v1921 = vld [vmem:[%s347 + $0xc2] sm:$0xff]
      %v1922 = vld [vmem:[%s347 + $0xca] sm:$0xff]
      %v1923 = vld [vmem:[%s347 + $0xda] sm:$0xff]
      %v1924 = vld [vmem:[%s347 + $0xe2] sm:$0xff]
      %v1925 = vld [vmem:[%s347 + $0xf2] sm:$0xff]
      %v1926 = vld [vmem:[%s347 + $0xfa] sm:$0xff]
      %v1927 = vld [vmem:[%s347 + $0x10a] sm:$0xff]
      %v1928 = vld [vmem:[%s347 + $0x112] sm:$0xff]
      %v1929 = vld [vmem:[%s347 + $0x122] sm:$0xff]
      %v1930 = vld [vmem:[%s347 + $0x12a] sm:$0xff]
      %v1931 = vld [vmem:[%s347 + $0x13a] sm:$0xff]
      %v1932 = vld [vmem:[%s347 + $0x142] sm:$0xff]
      %v1933 = vld [vmem:[%s347 + $0x152] sm:$0xff]
      %v1934 = vld [vmem:[%s347 + $0x15a] sm:$0xff]
      %v1935 = vld [vmem:[%s347 + $0x16a] sm:$0xff]
      %v1936 = vld [vmem:[%s347 + $0x172] sm:$0xff]
      %v1937 = vpack.c.bf16 %v1906, %v1905
      %v1938 = vpack.c.bf16 %v1908, %v1907
      %v1939 = vpack.c.bf16 %v1910, %v1909
      %v1940 = vpack.c.bf16 %v1912, %v1911
      %v1941 = vpack.c.bf16 %v1914, %v1913
      %v1942 = vpack.c.bf16 %v1916, %v1915
      %v1943 = vpack.c.bf16 %v1918, %v1917
      %v1944 = vpack.c.bf16 %v1920, %v1919
      %v1945 = vpack.c.bf16 %v1922, %v1921
      %v1946 = vpack.c.bf16 %v1924, %v1923
      %v1947 = vpack.c.bf16 %v1926, %v1925
      %v1948 = vpack.c.bf16 %v1928, %v1927
      %v1949 = vpack.c.bf16 %v1930, %v1929
      %v1950 = vpack.c.bf16 %v1932, %v1931
      %v1951 = vpack.c.bf16 %v1934, %v1933
      %v1952 = vpack.c.bf16 %v1936, %v1935
      %v1969 = vunpack.c.l.b16 %v1937
      %v1970 = vunpack.c.h.b16 %v1937
      %v1971 = vunpack.c.l.b16 %v1938
      %v1972 = vunpack.c.h.b16 %v1938
      %v1973 = vunpack.c.l.b16 %v1939
      %v1974 = vunpack.c.h.b16 %v1939
      %v1975 = vunpack.c.l.b16 %v1940
      %v1976 = vunpack.c.h.b16 %v1940
      %v1977 = vunpack.c.l.b16 %v1941
      %v1978 = vunpack.c.h.b16 %v1941
      %v1979 = vunpack.c.l.b16 %v1942
      %v1980 = vunpack.c.h.b16 %v1942
      %v1981 = vunpack.c.l.b16 %v1943
      %v1982 = vunpack.c.h.b16 %v1943
      %v1983 = vunpack.c.l.b16 %v1944
      %v1984 = vunpack.c.h.b16 %v1944
      %v1985 = vunpack.c.l.b16 %v1945
      %v1986 = vunpack.c.h.b16 %v1945
      %v1987 = vunpack.c.l.b16 %v1946
      %v1988 = vunpack.c.h.b16 %v1946
      %v1989 = vunpack.c.l.b16 %v1947
      %v1990 = vunpack.c.h.b16 %v1947
      %v1991 = vunpack.c.l.b16 %v1948
      %v1992 = vunpack.c.h.b16 %v1948
      %v1993 = vunpack.c.l.b16 %v1949
      %v1994 = vunpack.c.h.b16 %v1949
      %v1995 = vunpack.c.l.b16 %v1950
      %v1996 = vunpack.c.h.b16 %v1950
      %v1997 = vunpack.c.l.b16 %v1951
      %v1998 = vunpack.c.h.b16 %v1951
      %v1999 = vunpack.c.l.b16 %v1952
      %v2000 = vunpack.c.h.b16 %v1952
      %v2001 = vpack.c.b16 %v1969, %v1969
      %v2002 = vpack.c.b16 %v1970, %v1970
      %v2003 = vpack.c.b16 %v1971, %v1971
      %v2004 = vpack.c.b16 %v1972, %v1972
      %v2005 = vpack.c.b16 %v1973, %v1973
      %v2006 = vpack.c.b16 %v1974, %v1974
      %v2007 = vpack.c.b16 %v1975, %v1975
      %v2008 = vpack.c.b16 %v1976, %v1976
      %v2009 = vpack.c.b16 %v1977, %v1977
      %v2010 = vpack.c.b16 %v1978, %v1978
      %v2011 = vpack.c.b16 %v1979, %v1979
      %v2012 = vpack.c.b16 %v1980, %v1980
      %v2013 = vpack.c.b16 %v1981, %v1981
      %v2014 = vpack.c.b16 %v1982, %v1982
      %v2015 = vpack.c.b16 %v1983, %v1983
      %v2016 = vpack.c.b16 %v1984, %v1984
      %v2017 = vpack.c.b16 %v1985, %v1985
      %v2018 = vpack.c.b16 %v1986, %v1986
      %v2019 = vpack.c.b16 %v1987, %v1987
      %v2020 = vpack.c.b16 %v1988, %v1988
      %v2021 = vpack.c.b16 %v1989, %v1989
      %v2022 = vpack.c.b16 %v1990, %v1990
      %v2023 = vpack.c.b16 %v1991, %v1991
      %v2024 = vpack.c.b16 %v1992, %v1992
      %v2025 = vpack.c.b16 %v1993, %v1993
      %v2026 = vpack.c.b16 %v1994, %v1994
      %v2027 = vpack.c.b16 %v1995, %v1995
      %v2028 = vpack.c.b16 %v1996, %v1996
      %v2029 = vpack.c.b16 %v1997, %v1997
      %v2030 = vpack.c.b16 %v1998, %v1998
      %v2031 = vpack.c.b16 %v1999, %v1999
      %v2032 = vpack.c.b16 %v2000, %v2000
      %2033 = vrot.lane.b32.xlu0 %v2001, 16
      %v2034 = vpop.permute.xlu0 %2033
      %2035 = vrot.lane.b32.xlu0 %v2002, 16
      %v2036 = vpop.permute.xlu0 %2035
      %2037 = vrot.lane.b32.xlu0 %v2003, 16
      %v2038 = vpop.permute.xlu0 %2037
      %2039 = vrot.lane.b32.xlu0 %v2004, 16
      %v2040 = vpop.permute.xlu0 %2039
      %2041 = vrot.lane.b32.xlu0 %v2005, 16
      %v2042 = vpop.permute.xlu0 %2041
      %2043 = vrot.lane.b32.xlu0 %v2006, 16
      %v2044 = vpop.permute.xlu0 %2043
      %2045 = vrot.lane.b32.xlu0 %v2007, 16
      %v2046 = vpop.permute.xlu0 %2045
      %2047 = vrot.lane.b32.xlu0 %v2008, 16
      %v2048 = vpop.permute.xlu0 %2047
      %2049 = vrot.lane.b32.xlu0 %v2009, 16
      %v2050 = vpop.permute.xlu0 %2049
      %2051 = vrot.lane.b32.xlu0 %v2010, 16
      %v2052 = vpop.permute.xlu0 %2051
      %2053 = vrot.lane.b32.xlu0 %v2011, 16
      %v2054 = vpop.permute.xlu0 %2053
      %2055 = vrot.lane.b32.xlu0 %v2012, 16
      %v2056 = vpop.permute.xlu0 %2055
      %2057 = vrot.lane.b32.xlu0 %v2013, 16
      %v2058 = vpop.permute.xlu0 %2057
      %2059 = vrot.lane.b32.xlu0 %v2014, 16
      %v2060 = vpop.permute.xlu0 %2059
      %2061 = vrot.lane.b32.xlu0 %v2015, 16
      %v2062 = vpop.permute.xlu0 %2061
      %2063 = vrot.lane.b32.xlu0 %v2016, 16
      %v2064 = vpop.permute.xlu0 %2063
      %2065 = vrot.lane.b32.xlu0 %v2017, 16
      %v2066 = vpop.permute.xlu0 %2065
      %2067 = vrot.lane.b32.xlu0 %v2018, 16
      %v2068 = vpop.permute.xlu0 %2067
      %2069 = vrot.lane.b32.xlu0 %v2019, 16
      %v2070 = vpop.permute.xlu0 %2069
      %2071 = vrot.lane.b32.xlu0 %v2020, 16
      %v2072 = vpop.permute.xlu0 %2071
      %2073 = vrot.lane.b32.xlu0 %v2021, 16
      %v2074 = vpop.permute.xlu0 %2073
      %2075 = vrot.lane.b32.xlu0 %v2022, 16
      %v2076 = vpop.permute.xlu0 %2075
      %2077 = vrot.lane.b32.xlu0 %v2023, 16
      %v2078 = vpop.permute.xlu0 %2077
      %2079 = vrot.lane.b32.xlu0 %v2024, 16
      %v2080 = vpop.permute.xlu0 %2079
      %2081 = vrot.lane.b32.xlu0 %v2025, 16
      %v2082 = vpop.permute.xlu0 %2081
      %2083 = vrot.lane.b32.xlu0 %v2026, 16
      %v2084 = vpop.permute.xlu0 %2083
      %2085 = vrot.lane.b32.xlu0 %v2027, 16
      %v2086 = vpop.permute.xlu0 %2085
      %2087 = vrot.lane.b32.xlu0 %v2028, 16
      %v2088 = vpop.permute.xlu0 %2087
      %2089 = vrot.lane.b32.xlu0 %v2029, 16
      %v2090 = vpop.permute.xlu0 %2089
      %2091 = vrot.lane.b32.xlu0 %v2030, 16
      %v2092 = vpop.permute.xlu0 %2091
      %2093 = vrot.lane.b32.xlu0 %v2031, 16
      %v2094 = vpop.permute.xlu0 %2093
      %2095 = vrot.lane.b32.xlu0 %v2032, 16
      %v2096 = vpop.permute.xlu0 %2095
      %2129 = vst.msk [vmem:[#allocation4] sm:$0xf] %vm1054, %v2034
      %2130 = vst.msk [vmem:[#allocation4 + $0x4] sm:$0xf] %vm1054, %v2036
      %2131 = vst.msk [vmem:[#allocation4 + $0x8] sm:$0xf] %vm1054, %v2038
      %2132 = vst.msk [vmem:[#allocation4 + $0xc] sm:$0xf] %vm1054, %v2040
      %2133 = vst.msk [vmem:[#allocation4 + $0x10] sm:$0xf] %vm1054, %v2042
      %2134 = vst.msk [vmem:[#allocation4 + $0x14] sm:$0xf] %vm1054, %v2044
      %2135 = vst.msk [vmem:[#allocation4 + $0x18] sm:$0xf] %vm1054, %v2046
      %2136 = vst.msk [vmem:[#allocation4 + $0x1c] sm:$0xf] %vm1054, %v2048
      %2137 = vst.msk [vmem:[#allocation4 + $0x20] sm:$0xf] %vm1054, %v2050
      %2138 = vst.msk [vmem:[#allocation4 + $0x24] sm:$0xf] %vm1054, %v2052
      %2139 = vst.msk [vmem:[#allocation4 + $0x28] sm:$0xf] %vm1054, %v2054
      %2140 = vst.msk [vmem:[#allocation4 + $0x2c] sm:$0xf] %vm1054, %v2056
      %2141 = vst.msk [vmem:[#allocation4 + $0x30] sm:$0xf] %vm1054, %v2058
      %2142 = vst.msk [vmem:[#allocation4 + $0x34] sm:$0xf] %vm1054, %v2060
      %2143 = vst.msk [vmem:[#allocation4 + $0x38] sm:$0xf] %vm1054, %v2062
      %2144 = vst.msk [vmem:[#allocation4 + $0x3c] sm:$0xf] %vm1054, %v2064
      %2145 = vst.msk [vmem:[#allocation4 + $0x40] sm:$0xf] %vm1054, %v2066
      %2146 = vst.msk [vmem:[#allocation4 + $0x44] sm:$0xf] %vm1054, %v2068
      %2147 = vst.msk [vmem:[#allocation4 + $0x48] sm:$0xf] %vm1054, %v2070
      %2148 = vst.msk [vmem:[#allocation4 + $0x4c] sm:$0xf] %vm1054, %v2072
      %2149 = vst.msk [vmem:[#allocation4 + $0x50] sm:$0xf] %vm1054, %v2074
      %2150 = vst.msk [vmem:[#allocation4 + $0x54] sm:$0xf] %vm1054, %v2076
      %2151 = vst.msk [vmem:[#allocation4 + $0x58] sm:$0xf] %vm1054, %v2078
      %2152 = vst.msk [vmem:[#allocation4 + $0x5c] sm:$0xf] %vm1054, %v2080
      %2153 = vst.msk [vmem:[#allocation4 + $0x60] sm:$0xf] %vm1054, %v2082
      %2154 = vst.msk [vmem:[#allocation4 + $0x64] sm:$0xf] %vm1054, %v2084
      %2155 = vst.msk [vmem:[#allocation4 + $0x68] sm:$0xf] %vm1054, %v2086
      %2156 = vst.msk [vmem:[#allocation4 + $0x6c] sm:$0xf] %vm1054, %v2088
      %2157 = vst.msk [vmem:[#allocation4 + $0x70] sm:$0xf] %vm1054, %v2090
      %2158 = vst.msk [vmem:[#allocation4 + $0x74] sm:$0xf] %vm1054, %v2092
      %2159 = vst.msk [vmem:[#allocation4 + $0x78] sm:$0xf] %vm1054, %v2094
      %2160 = vst.msk [vmem:[#allocation4 + $0x7c] sm:$0xf] %vm1054, %v2096
      %v2161 = vld [vmem:[#allocation4] sm:$0xf]
      %v2162 = vld [vmem:[#allocation4 + $0x4] sm:$0xf]
      %v2163 = vld [vmem:[#allocation4 + $0x8] sm:$0xf]
      %v2164 = vld [vmem:[#allocation4 + $0xc] sm:$0xf]
      %v2165 = vld [vmem:[#allocation4 + $0x10] sm:$0xf]
      %v2166 = vld [vmem:[#allocation4 + $0x14] sm:$0xf]
      %v2167 = vld [vmem:[#allocation4 + $0x18] sm:$0xf]
      %v2168 = vld [vmem:[#allocation4 + $0x1c] sm:$0xf]
      %v2169 = vld [vmem:[#allocation4 + $0x20] sm:$0xf]
      %v2170 = vld [vmem:[#allocation4 + $0x24] sm:$0xf]
      %v2171 = vld [vmem:[#allocation4 + $0x28] sm:$0xf]
      %v2172 = vld [vmem:[#allocation4 + $0x2c] sm:$0xf]
      %v2173 = vld [vmem:[#allocation4 + $0x30] sm:$0xf]
      %v2174 = vld [vmem:[#allocation4 + $0x34] sm:$0xf]
      %v2175 = vld [vmem:[#allocation4 + $0x38] sm:$0xf]
      %v2176 = vld [vmem:[#allocation4 + $0x3c] sm:$0xf]
      %v2177 = vld [vmem:[#allocation4 + $0x40] sm:$0xf]
      %v2178 = vld [vmem:[#allocation4 + $0x44] sm:$0xf]
      %v2179 = vld [vmem:[#allocation4 + $0x48] sm:$0xf]
      %v2180 = vld [vmem:[#allocation4 + $0x4c] sm:$0xf]
      %v2181 = vld [vmem:[#allocation4 + $0x50] sm:$0xf]
      %v2182 = vld [vmem:[#allocation4 + $0x54] sm:$0xf]
      %v2183 = vld [vmem:[#allocation4 + $0x58] sm:$0xf]
      %v2184 = vld [vmem:[#allocation4 + $0x5c] sm:$0xf]
      %v2185 = vld [vmem:[#allocation4 + $0x60] sm:$0xf]
      %v2186 = vld [vmem:[#allocation4 + $0x64] sm:$0xf]
      %v2187 = vld [vmem:[#allocation4 + $0x68] sm:$0xf]
      %v2188 = vld [vmem:[#allocation4 + $0x6c] sm:$0xf]
      %v2189 = vld [vmem:[#allocation4 + $0x70] sm:$0xf]
      %v2190 = vld [vmem:[#allocation4 + $0x74] sm:$0xf]
      %v2191 = vld [vmem:[#allocation4 + $0x78] sm:$0xf]
      %v2192 = vld [vmem:[#allocation4 + $0x7c] sm:$0xf]
      %s2193 = scalar_lea.vmem %s1, 12
      %v2194 = vld [vmem:[%s2193] sm:$0xf]
      %v2195 = vld [vmem:[%s2193 + $0x4] sm:$0xf]
      %v2196 = vld [vmem:[%s2193 + $0x8] sm:$0xf]
      %v2229 = vunpack.c.l.b16 %v2161
      %v2230 = vunpack.c.l.b16 %v2162
      %v2231 = vunpack.c.l.b16 %v2163
      %v2232 = vunpack.c.l.b16 %v2164
      %v2233 = vunpack.c.l.b16 %v2165
      %v2234 = vunpack.c.l.b16 %v2166
      %v2235 = vunpack.c.l.b16 %v2167
      %v2236 = vunpack.c.l.b16 %v2168
      %v2237 = vunpack.c.l.b16 %v2169
      %v2238 = vunpack.c.l.b16 %v2170
      %v2239 = vunpack.c.l.b16 %v2171
      %v2240 = vunpack.c.l.b16 %v2172
      %v2241 = vunpack.c.l.b16 %v2173
      %v2242 = vunpack.c.l.b16 %v2174
      %v2243 = vunpack.c.l.b16 %v2175
      %v2244 = vunpack.c.l.b16 %v2176
      %v2245 = vunpack.c.l.b16 %v2177
      %v2246 = vunpack.c.l.b16 %v2178
      %v2247 = vunpack.c.l.b16 %v2179
      %v2248 = vunpack.c.l.b16 %v2180
      %v2249 = vunpack.c.l.b16 %v2181
      %v2250 = vunpack.c.l.b16 %v2182
      %v2251 = vunpack.c.l.b16 %v2183
      %v2252 = vunpack.c.l.b16 %v2184
      %v2253 = vunpack.c.l.b16 %v2185
      %v2254 = vunpack.c.l.b16 %v2186
      %v2255 = vunpack.c.l.b16 %v2187
      %v2256 = vunpack.c.l.b16 %v2188
      %v2257 = vunpack.c.l.b16 %v2189
      %v2258 = vunpack.c.l.b16 %v2190
      %v2259 = vunpack.c.l.b16 %v2191
      %v2260 = vunpack.c.l.b16 %v2192
      %v2261 = vpack.c.b16 %v2230, %v2229
      %v2262 = vpack.c.b16 %v2232, %v2231
      %v2263 = vpack.c.b16 %v2234, %v2233
      %v2264 = vpack.c.b16 %v2236, %v2235
      %v2265 = vpack.c.b16 %v2238, %v2237
      %v2266 = vpack.c.b16 %v2240, %v2239
      %v2267 = vpack.c.b16 %v2242, %v2241
      %v2268 = vpack.c.b16 %v2244, %v2243
      %v2269 = vpack.c.b16 %v2246, %v2245
      %v2270 = vpack.c.b16 %v2248, %v2247
      %v2271 = vpack.c.b16 %v2250, %v2249
      %v2272 = vpack.c.b16 %v2252, %v2251
      %v2273 = vpack.c.b16 %v2254, %v2253
      %v2274 = vpack.c.b16 %v2256, %v2255
      %v2275 = vpack.c.b16 %v2258, %v2257
      %v2276 = vpack.c.b16 %v2260, %v2259
      %v2280 = vunpack.c.l.b16 %v2194
      %v2281 = vunpack.c.l.b16 %v2195
      %v2282 = vunpack.c.l.b16 %v2196
      %v2283 = vpack.c.b16 %v2281, %v2280
      %v2284 = vpack.c.b16 %v2282, %v2282
      %v2287 = vsel %vm1211, %v2261, 0
      %v2290 = vsel %vm1211, %v2262, 0
      %v2293 = vsel %vm1211, %v2263, 0
      %v2296 = vsel %vm1211, %v2264, 0
      %v2299 = vsel %vm1211, %v2265, 0
      %v2302 = vsel %vm1211, %v2266, 0
      %v2305 = vsel %vm1211, %v2267, 0
      %v2308 = vsel %vm1211, %v2268, 0
      %v2311 = vsel %vm1211, %v2269, 0
      %v2314 = vsel %vm1211, %v2270, 0
      %v2317 = vsel %vm1211, %v2271, 0
      %v2320 = vsel %vm1211, %v2272, 0
      %v2323 = vsel %vm1211, %v2273, 0
      %v2326 = vsel %vm1211, %v2274, 0
      %v2329 = vsel %vm1211, %v2275, 0
      %v2332 = vsel %vm1211, %v2276, 0
      %v2335 = vsel %vm1260, %v2284, 0
      %2337 = vmatprep.subr.bf16.mxu0 0
      %2338 = vmatpush1.bf16.msra.mxu0 0
      %2339 = vmatprep.subr.bf16.mxu0 0
      %2340 = vmatpush1.bf16.msra.mxu0 0
      %2341 = vmatprep.subr.bf16.mxu0 0
      %2342 = vmatpush1.bf16.msra.mxu0 0
      %2343 = vmatprep.subr.bf16.mxu0 0
      %2344 = vmatpush1.bf16.msra.mxu0 0
      %2345 = vmatprep.subr.bf16.mxu0 0
      %2346 = vmatpush1.bf16.msra.mxu0 0
      %2347 = vmatprep.subr.bf16.mxu0 0
      %2348 = vmatpush1.bf16.msra.mxu0 0
      %2349 = vmatprep.subr.bf16.mxu0 0
      %2350 = vmatpush1.bf16.msra.mxu0 %v2335
      %2351 = vmatprep.subr.bf16.mxu0 0
      %2352 = vmatpush1.bf16.msra.mxu0 %v2283
      %2353 = vmatprep.subr.bf16.mxu0 0
      %2354 = vmatpush2.bf16.msra.mxu0 0
      %2355 = vmatprep.subr.bf16.mxu0 0
      %2356 = vmatpush2.bf16.msra.mxu0 0
      %2357 = vmatprep.subr.bf16.mxu0 0
      %2358 = vmatpush2.bf16.msra.mxu0 0
      %2359 = vmatprep.subr.bf16.mxu0 0
      %2360 = vmatpush2.bf16.msra.mxu0 0
      %2361 = vmatprep.subr.bf16.mxu0 0
      %2362 = vmatpush2.bf16.msra.mxu0 0
      %2363 = vmatprep.subr.bf16.mxu0 0
      %2364 = vmatpush2.bf16.msra.mxu0 0
      %2365 = vmatprep.subr.bf16.mxu0 0
      %2366 = vmatpush2.bf16.msra.mxu0 0
      %2367 = vmatprep.subr.bf16.mxu0 0
      %2368 = vmatpush2.bf16.msra.mxu0 0
      %2369 = vmatprep.mubr.bf16.mxu0 0
      %2370 = vmatmul.mubr.bf16.gmra.mxu0 %v2287
      %v2371 = vpop.f32.mrf.mxu0
      %v2372 = vadd.f32 0.0, %v2371
      %v2373 = vpop.f32.mrf.mxu0
      %v2374 = vpop.f32.mrf.mxu0
      %v2375 = vadd.f32 0.0, %v2374
      %v2376 = vpop.f32.mrf.mxu0
      %2377 = vmatprep.mubr.bf16.mxu0 0
      %2378 = vmatmul.mubr.bf16.gmra.mxu0 %v2290
      %v2379 = vpop.f32.mrf.mxu0
      %v2380 = vadd.f32 0.0, %v2379
      %v2381 = vpop.f32.mrf.mxu0
      %v2382 = vpop.f32.mrf.mxu0
      %v2383 = vadd.f32 0.0, %v2382
      %v2384 = vpop.f32.mrf.mxu0
      %2385 = vmatprep.mubr.bf16.mxu0 0
      %2386 = vmatmul.mubr.bf16.gmra.mxu0 %v2293
      %v2387 = vpop.f32.mrf.mxu0
      %v2388 = vadd.f32 0.0, %v2387
      %v2389 = vpop.f32.mrf.mxu0
      %v2390 = vpop.f32.mrf.mxu0
      %v2391 = vadd.f32 0.0, %v2390
      %v2392 = vpop.f32.mrf.mxu0
      %2393 = vmatprep.mubr.bf16.mxu0 0
      %2394 = vmatmul.mubr.bf16.gmra.mxu0 %v2296
      %v2395 = vpop.f32.mrf.mxu0
      %v2396 = vadd.f32 0.0, %v2395
      %v2397 = vpop.f32.mrf.mxu0
      %v2398 = vpop.f32.mrf.mxu0
      %v2399 = vadd.f32 0.0, %v2398
      %v2400 = vpop.f32.mrf.mxu0
      %2401 = vmatprep.mubr.bf16.mxu0 0
      %2402 = vmatmul.mubr.bf16.gmra.mxu0 %v2299
      %v2403 = vpop.f32.mrf.mxu0
      %v2404 = vadd.f32 0.0, %v2403
      %v2405 = vpop.f32.mrf.mxu0
      %v2406 = vpop.f32.mrf.mxu0
      %v2407 = vadd.f32 0.0, %v2406
      %v2408 = vpop.f32.mrf.mxu0
      %2409 = vmatprep.mubr.bf16.mxu0 0
      %2410 = vmatmul.mubr.bf16.gmra.mxu0 %v2302
      %v2411 = vpop.f32.mrf.mxu0
      %v2412 = vadd.f32 0.0, %v2411
      %v2413 = vpop.f32.mrf.mxu0
      %v2414 = vpop.f32.mrf.mxu0
      %v2415 = vadd.f32 0.0, %v2414
      %v2416 = vpop.f32.mrf.mxu0
      %2417 = vmatprep.mubr.bf16.mxu0 0
      %2418 = vmatmul.mubr.bf16.gmra.mxu0 %v2305
      %v2419 = vpop.f32.mrf.mxu0
      %v2420 = vadd.f32 0.0, %v2419
      %v2421 = vpop.f32.mrf.mxu0
      %v2422 = vpop.f32.mrf.mxu0
      %v2423 = vadd.f32 0.0, %v2422
      %v2424 = vpop.f32.mrf.mxu0
      %2425 = vmatprep.mubr.bf16.mxu0 0
      %2426 = vmatmul.mubr.bf16.gmra.mxu0 %v2308
      %v2427 = vpop.f32.mrf.mxu0
      %v2428 = vadd.f32 0.0, %v2427
      %v2429 = vpop.f32.mrf.mxu0
      %v2430 = vpop.f32.mrf.mxu0
      %v2431 = vadd.f32 0.0, %v2430
      %v2432 = vpop.f32.mrf.mxu0
      %2433 = vmatprep.mubr.bf16.mxu0 0
      %2434 = vmatmul.mubr.bf16.gmra.mxu0 %v2311
      %v2435 = vpop.f32.mrf.mxu0
      %v2436 = vadd.f32 0.0, %v2435
      %v2437 = vpop.f32.mrf.mxu0
      %v2438 = vpop.f32.mrf.mxu0
      %v2439 = vadd.f32 0.0, %v2438
      %v2440 = vpop.f32.mrf.mxu0
      %2441 = vmatprep.mubr.bf16.mxu0 0
      %2442 = vmatmul.mubr.bf16.gmra.mxu0 %v2314
      %v2443 = vpop.f32.mrf.mxu0
      %v2444 = vadd.f32 0.0, %v2443
      %v2445 = vpop.f32.mrf.mxu0
      %v2446 = vpop.f32.mrf.mxu0
      %v2447 = vadd.f32 0.0, %v2446
      %v2448 = vpop.f32.mrf.mxu0
      %2449 = vmatprep.mubr.bf16.mxu0 0
      %2450 = vmatmul.mubr.bf16.gmra.mxu0 %v2317
      %v2451 = vpop.f32.mrf.mxu0
      %v2452 = vadd.f32 0.0, %v2451
      %v2453 = vpop.f32.mrf.mxu0
      %v2454 = vpop.f32.mrf.mxu0
      %v2455 = vadd.f32 0.0, %v2454
      %v2456 = vpop.f32.mrf.mxu0
      %2457 = vmatprep.mubr.bf16.mxu0 0
      %2458 = vmatmul.mubr.bf16.gmra.mxu0 %v2320
      %v2459 = vpop.f32.mrf.mxu0
      %v2460 = vadd.f32 0.0, %v2459
      %v2461 = vpop.f32.mrf.mxu0
      %v2462 = vpop.f32.mrf.mxu0
      %v2463 = vadd.f32 0.0, %v2462
      %v2464 = vpop.f32.mrf.mxu0
      %2465 = vmatprep.mubr.bf16.mxu0 0
      %2466 = vmatmul.mubr.bf16.gmra.mxu0 %v2323
      %v2467 = vpop.f32.mrf.mxu0
      %v2468 = vadd.f32 0.0, %v2467
      %v2469 = vpop.f32.mrf.mxu0
      %v2470 = vpop.f32.mrf.mxu0
      %v2471 = vadd.f32 0.0, %v2470
      %v2472 = vpop.f32.mrf.mxu0
      %2473 = vmatprep.mubr.bf16.mxu0 0
      %2474 = vmatmul.mubr.bf16.gmra.mxu0 %v2326
      %v2475 = vpop.f32.mrf.mxu0
      %v2476 = vadd.f32 0.0, %v2475
      %v2477 = vpop.f32.mrf.mxu0
      %v2478 = vpop.f32.mrf.mxu0
      %v2479 = vadd.f32 0.0, %v2478
      %v2480 = vpop.f32.mrf.mxu0
      %2481 = vmatprep.mubr.bf16.mxu0 0
      %2482 = vmatmul.mubr.bf16.gmra.mxu0 %v2329
      %v2483 = vpop.f32.mrf.mxu0
      %v2484 = vadd.f32 0.0, %v2483
      %v2485 = vpop.f32.mrf.mxu0
      %v2486 = vpop.f32.mrf.mxu0
      %v2487 = vadd.f32 0.0, %v2486
      %v2488 = vpop.f32.mrf.mxu0
      %2489 = vmatprep.mubr.bf16.mxu0 0
      %2490 = vmatmul.mubr.bf16.gmra.mxu0 %v2332
      %v2491 = vpop.f32.mrf.mxu0
      %v2492 = vadd.f32 0.0, %v2491
      %v2493 = vpop.f32.mrf.mxu0
      %v2494 = vpop.f32.mrf.mxu0
      %v2495 = vadd.f32 0.0, %v2494
      %v2496 = vpop.f32.mrf.mxu0
      %2497 = vdwg.mxu0
      %v2498 = vld [vmem:[#allocation6] sm:$0xff]
      %v2499 = vld [vmem:[#allocation6 + $0x8] sm:$0xff]
      %v2500 = vld [vmem:[#allocation6 + $0x10] sm:$0xff]
      %v2501 = vld [vmem:[#allocation6 + $0x18] sm:$0xff]
      %v2502 = vld [vmem:[#allocation6 + $0x20] sm:$0xff]
      %v2503 = vld [vmem:[#allocation6 + $0x28] sm:$0xff]
      %v2504 = vld [vmem:[#allocation6 + $0x30] sm:$0xff]
      %v2505 = vld [vmem:[#allocation6 + $0x38] sm:$0xff]
      %v2506 = vld [vmem:[#allocation6 + $0x40] sm:$0xff]
      %v2507 = vld [vmem:[#allocation6 + $0x48] sm:$0xff]
      %v2508 = vld [vmem:[#allocation6 + $0x50] sm:$0xff]
      %v2509 = vld [vmem:[#allocation6 + $0x58] sm:$0xff]
      %v2510 = vld [vmem:[#allocation6 + $0x60] sm:$0xff]
      %v2511 = vld [vmem:[#allocation6 + $0x68] sm:$0xff]
      %v2512 = vld [vmem:[#allocation6 + $0x70] sm:$0xff]
      %v2513 = vld [vmem:[#allocation6 + $0x78] sm:$0xff]
      %v2514 = vld [vmem:[#allocation6 + $0x80] sm:$0xff]
      %v2515 = vld [vmem:[#allocation6 + $0x88] sm:$0xff]
      %v2516 = vld [vmem:[#allocation6 + $0x90] sm:$0xff]
      %v2517 = vld [vmem:[#allocation6 + $0x98] sm:$0xff]
      %v2518 = vld [vmem:[#allocation6 + $0xa0] sm:$0xff]
      %v2519 = vld [vmem:[#allocation6 + $0xa8] sm:$0xff]
      %v2520 = vld [vmem:[#allocation6 + $0xb0] sm:$0xff]
      %v2521 = vld [vmem:[#allocation6 + $0xb8] sm:$0xff]
      %v2522 = vld [vmem:[#allocation6 + $0xc0] sm:$0xff]
      %v2523 = vld [vmem:[#allocation6 + $0xc8] sm:$0xff]
      %v2524 = vld [vmem:[#allocation6 + $0xd0] sm:$0xff]
      %v2525 = vld [vmem:[#allocation6 + $0xd8] sm:$0xff]
      %v2526 = vld [vmem:[#allocation6 + $0xe0] sm:$0xff]
      %v2527 = vld [vmem:[#allocation6 + $0xe8] sm:$0xff]
      %v2528 = vld [vmem:[#allocation6 + $0xf0] sm:$0xff]
      %v2529 = vld [vmem:[#allocation6 + $0xf8] sm:$0xff]
      %v2530 = vadd.f32 %v2498, %v2372
      %v2531 = vadd.f32 %v2499, %v2375
      %v2532 = vadd.f32 %v2500, %v2380
      %v2533 = vadd.f32 %v2501, %v2383
      %v2534 = vadd.f32 %v2502, %v2388
      %v2535 = vadd.f32 %v2503, %v2391
      %v2536 = vadd.f32 %v2504, %v2396
      %v2537 = vadd.f32 %v2505, %v2399
      %v2538 = vadd.f32 %v2506, %v2404
      %v2539 = vadd.f32 %v2507, %v2407
      %v2540 = vadd.f32 %v2508, %v2412
      %v2541 = vadd.f32 %v2509, %v2415
      %v2542 = vadd.f32 %v2510, %v2420
      %v2543 = vadd.f32 %v2511, %v2423
      %v2544 = vadd.f32 %v2512, %v2428
      %v2545 = vadd.f32 %v2513, %v2431
      %v2546 = vadd.f32 %v2514, %v2436
      %v2547 = vadd.f32 %v2515, %v2439
      %v2548 = vadd.f32 %v2516, %v2444
      %v2549 = vadd.f32 %v2517, %v2447
      %v2550 = vadd.f32 %v2518, %v2452
      %v2551 = vadd.f32 %v2519, %v2455
      %v2552 = vadd.f32 %v2520, %v2460
      %v2553 = vadd.f32 %v2521, %v2463
      %v2554 = vadd.f32 %v2522, %v2468
      %v2555 = vadd.f32 %v2523, %v2471
      %v2556 = vadd.f32 %v2524, %v2476
      %v2557 = vadd.f32 %v2525, %v2479
      %v2558 = vadd.f32 %v2526, %v2484
      %v2559 = vadd.f32 %v2527, %v2487
      %v2560 = vadd.f32 %v2528, %v2492
      %v2561 = vadd.f32 %v2529, %v2495
      %2562 = vst.msk [vmem:[#allocation6] sm:$0xff] %vm226, %v2530
      %2563 = vst.msk [vmem:[#allocation6 + $0x8] sm:$0xff] %vm226, %v2531
      %2564 = vst.msk [vmem:[#allocation6 + $0x10] sm:$0xff] %vm226, %v2532
      %2565 = vst.msk [vmem:[#allocation6 + $0x18] sm:$0xff] %vm226, %v2533
      %2566 = vst.msk [vmem:[#allocation6 + $0x20] sm:$0xff] %vm226, %v2534
      %2567 = vst.msk [vmem:[#allocation6 + $0x28] sm:$0xff] %vm226, %v2535
      %2568 = vst.msk [vmem:[#allocation6 + $0x30] sm:$0xff] %vm226, %v2536
      %2569 = vst.msk [vmem:[#allocation6 + $0x38] sm:$0xff] %vm226, %v2537
      %2570 = vst.msk [vmem:[#allocation6 + $0x40] sm:$0xff] %vm226, %v2538
      %2571 = vst.msk [vmem:[#allocation6 + $0x48] sm:$0xff] %vm226, %v2539
      %2572 = vst.msk [vmem:[#allocation6 + $0x50] sm:$0xff] %vm226, %v2540
      %2573 = vst.msk [vmem:[#allocation6 + $0x58] sm:$0xff] %vm226, %v2541
      %2574 = vst.msk [vmem:[#allocation6 + $0x60] sm:$0xff] %vm226, %v2542
      %2575 = vst.msk [vmem:[#allocation6 + $0x68] sm:$0xff] %vm226, %v2543
      %2576 = vst.msk [vmem:[#allocation6 + $0x70] sm:$0xff] %vm226, %v2544
      %2577 = vst.msk [vmem:[#allocation6 + $0x78] sm:$0xff] %vm226, %v2545
      %2578 = vst.msk [vmem:[#allocation6 + $0x80] sm:$0xff] %vm226, %v2546
      %2579 = vst.msk [vmem:[#allocation6 + $0x88] sm:$0xff] %vm226, %v2547
      %2580 = vst.msk [vmem:[#allocation6 + $0x90] sm:$0xff] %vm226, %v2548
      %2581 = vst.msk [vmem:[#allocation6 + $0x98] sm:$0xff] %vm226, %v2549
      %2582 = vst.msk [vmem:[#allocation6 + $0xa0] sm:$0xff] %vm226, %v2550
      %2583 = vst.msk [vmem:[#allocation6 + $0xa8] sm:$0xff] %vm226, %v2551
      %2584 = vst.msk [vmem:[#allocation6 + $0xb0] sm:$0xff] %vm226, %v2552
      %2585 = vst.msk [vmem:[#allocation6 + $0xb8] sm:$0xff] %vm226, %v2553
      %2586 = vst.msk [vmem:[#allocation6 + $0xc0] sm:$0xff] %vm226, %v2554
      %2587 = vst.msk [vmem:[#allocation6 + $0xc8] sm:$0xff] %vm226, %v2555
      %2588 = vst.msk [vmem:[#allocation6 + $0xd0] sm:$0xff] %vm226, %v2556
      %2589 = vst.msk [vmem:[#allocation6 + $0xd8] sm:$0xff] %vm226, %v2557
      %2590 = vst.msk [vmem:[#allocation6 + $0xe0] sm:$0xff] %vm226, %v2558
      %2591 = vst.msk [vmem:[#allocation6 + $0xe8] sm:$0xff] %vm226, %v2559
      %2592 = vst.msk [vmem:[#allocation6 + $0xf0] sm:$0xff] %vm226, %v2560
      %2593 = vst.msk [vmem:[#allocation6 + $0xf8] sm:$0xff] %vm226, %v2561
      %s2594 = scalar_lea.vmem [#allocation2], 48
      %v2595 = vld [vmem:[%s2594] sm:$0xff]
      %v2596 = vld [vmem:[%s2594 + $0x8] sm:$0xff]
      %v2597 = vld [vmem:[%s2594 + $0x18] sm:$0xff]
      %v2598 = vld [vmem:[%s2594 + $0x20] sm:$0xff]
      %v2599 = vld [vmem:[%s2594 + $0x30] sm:$0xff]
      %v2600 = vld [vmem:[%s2594 + $0x38] sm:$0xff]
      %v2601 = vld [vmem:[%s2594 + $0x48] sm:$0xff]
      %v2602 = vld [vmem:[%s2594 + $0x50] sm:$0xff]
      %v2603 = vld [vmem:[%s2594 + $0x60] sm:$0xff]
      %v2604 = vld [vmem:[%s2594 + $0x68] sm:$0xff]
      %v2605 = vld [vmem:[%s2594 + $0x78] sm:$0xff]
      %v2606 = vld [vmem:[%s2594 + $0x80] sm:$0xff]
      %v2607 = vld [vmem:[%s2594 + $0x90] sm:$0xff]
      %v2608 = vld [vmem:[%s2594 + $0x98] sm:$0xff]
      %v2609 = vld [vmem:[%s2594 + $0xa8] sm:$0xff]
      %v2610 = vld [vmem:[%s2594 + $0xb0] sm:$0xff]
      %v2611 = vld [vmem:[%s2594 + $0xc0] sm:$0xff]
      %v2612 = vld [vmem:[%s2594 + $0xc8] sm:$0xff]
      %v2613 = vld [vmem:[%s2594 + $0xd8] sm:$0xff]
      %v2614 = vld [vmem:[%s2594 + $0xe0] sm:$0xff]
      %v2615 = vld [vmem:[%s2594 + $0xf0] sm:$0xff]
      %v2616 = vld [vmem:[%s2594 + $0xf8] sm:$0xff]
      %v2617 = vld [vmem:[%s2594 + $0x108] sm:$0xff]
      %v2618 = vld [vmem:[%s2594 + $0x110] sm:$0xff]
      %v2619 = vld [vmem:[%s2594 + $0x120] sm:$0xff]
      %v2620 = vld [vmem:[%s2594 + $0x128] sm:$0xff]
      %v2621 = vld [vmem:[%s2594 + $0x138] sm:$0xff]
      %v2622 = vld [vmem:[%s2594 + $0x140] sm:$0xff]
      %v2623 = vld [vmem:[%s2594 + $0x150] sm:$0xff]
      %v2624 = vld [vmem:[%s2594 + $0x158] sm:$0xff]
      %v2625 = vld [vmem:[%s2594 + $0x168] sm:$0xff]
      %v2626 = vld [vmem:[%s2594 + $0x170] sm:$0xff]
      %v2627 = vpack.c.bf16 %v2596, %v2595
      %v2628 = vpack.c.bf16 %v2598, %v2597
      %v2629 = vpack.c.bf16 %v2600, %v2599
      %v2630 = vpack.c.bf16 %v2602, %v2601
      %v2631 = vpack.c.bf16 %v2604, %v2603
      %v2632 = vpack.c.bf16 %v2606, %v2605
      %v2633 = vpack.c.bf16 %v2608, %v2607
      %v2634 = vpack.c.bf16 %v2610, %v2609
      %v2635 = vpack.c.bf16 %v2612, %v2611
      %v2636 = vpack.c.bf16 %v2614, %v2613
      %v2637 = vpack.c.bf16 %v2616, %v2615
      %v2638 = vpack.c.bf16 %v2618, %v2617
      %v2639 = vpack.c.bf16 %v2620, %v2619
      %v2640 = vpack.c.bf16 %v2622, %v2621
      %v2641 = vpack.c.bf16 %v2624, %v2623
      %v2642 = vpack.c.bf16 %v2626, %v2625
      %v2659 = vunpack.c.l.b16 %v2627
      %v2660 = vunpack.c.h.b16 %v2627
      %v2661 = vunpack.c.l.b16 %v2628
      %v2662 = vunpack.c.h.b16 %v2628
      %v2663 = vunpack.c.l.b16 %v2629
      %v2664 = vunpack.c.h.b16 %v2629
      %v2665 = vunpack.c.l.b16 %v2630
      %v2666 = vunpack.c.h.b16 %v2630
      %v2667 = vunpack.c.l.b16 %v2631
      %v2668 = vunpack.c.h.b16 %v2631
      %v2669 = vunpack.c.l.b16 %v2632
      %v2670 = vunpack.c.h.b16 %v2632
      %v2671 = vunpack.c.l.b16 %v2633
      %v2672 = vunpack.c.h.b16 %v2633
      %v2673 = vunpack.c.l.b16 %v2634
      %v2674 = vunpack.c.h.b16 %v2634
      %v2675 = vunpack.c.l.b16 %v2635
      %v2676 = vunpack.c.h.b16 %v2635
      %v2677 = vunpack.c.l.b16 %v2636
      %v2678 = vunpack.c.h.b16 %v2636
      %v2679 = vunpack.c.l.b16 %v2637
      %v2680 = vunpack.c.h.b16 %v2637
      %v2681 = vunpack.c.l.b16 %v2638
      %v2682 = vunpack.c.h.b16 %v2638
      %v2683 = vunpack.c.l.b16 %v2639
      %v2684 = vunpack.c.h.b16 %v2639
      %v2685 = vunpack.c.l.b16 %v2640
      %v2686 = vunpack.c.h.b16 %v2640
      %v2687 = vunpack.c.l.b16 %v2641
      %v2688 = vunpack.c.h.b16 %v2641
      %v2689 = vunpack.c.l.b16 %v2642
      %v2690 = vunpack.c.h.b16 %v2642
      %v2691 = vpack.c.b16 %v2659, %v2659
      %v2692 = vpack.c.b16 %v2660, %v2660
      %v2693 = vpack.c.b16 %v2661, %v2661
      %v2694 = vpack.c.b16 %v2662, %v2662
      %v2695 = vpack.c.b16 %v2663, %v2663
      %v2696 = vpack.c.b16 %v2664, %v2664
      %v2697 = vpack.c.b16 %v2665, %v2665
      %v2698 = vpack.c.b16 %v2666, %v2666
      %v2699 = vpack.c.b16 %v2667, %v2667
      %v2700 = vpack.c.b16 %v2668, %v2668
      %v2701 = vpack.c.b16 %v2669, %v2669
      %v2702 = vpack.c.b16 %v2670, %v2670
      %v2703 = vpack.c.b16 %v2671, %v2671
      %v2704 = vpack.c.b16 %v2672, %v2672
      %v2705 = vpack.c.b16 %v2673, %v2673
      %v2706 = vpack.c.b16 %v2674, %v2674
      %v2707 = vpack.c.b16 %v2675, %v2675
      %v2708 = vpack.c.b16 %v2676, %v2676
      %v2709 = vpack.c.b16 %v2677, %v2677
      %v2710 = vpack.c.b16 %v2678, %v2678
      %v2711 = vpack.c.b16 %v2679, %v2679
      %v2712 = vpack.c.b16 %v2680, %v2680
      %v2713 = vpack.c.b16 %v2681, %v2681
      %v2714 = vpack.c.b16 %v2682, %v2682
      %v2715 = vpack.c.b16 %v2683, %v2683
      %v2716 = vpack.c.b16 %v2684, %v2684
      %v2717 = vpack.c.b16 %v2685, %v2685
      %v2718 = vpack.c.b16 %v2686, %v2686
      %v2719 = vpack.c.b16 %v2687, %v2687
      %v2720 = vpack.c.b16 %v2688, %v2688
      %v2721 = vpack.c.b16 %v2689, %v2689
      %v2722 = vpack.c.b16 %v2690, %v2690
      %2755 = vst.msk [vmem:[#allocation4] sm:$0xf] %vm540, %v2691
      %2756 = vst.msk [vmem:[#allocation4 + $0x4] sm:$0xf] %vm540, %v2692
      %2757 = vst.msk [vmem:[#allocation4 + $0x8] sm:$0xf] %vm540, %v2693
      %2758 = vst.msk [vmem:[#allocation4 + $0xc] sm:$0xf] %vm540, %v2694
      %2759 = vst.msk [vmem:[#allocation4 + $0x10] sm:$0xf] %vm540, %v2695
      %2760 = vst.msk [vmem:[#allocation4 + $0x14] sm:$0xf] %vm540, %v2696
      %2761 = vst.msk [vmem:[#allocation4 + $0x18] sm:$0xf] %vm540, %v2697
      %2762 = vst.msk [vmem:[#allocation4 + $0x1c] sm:$0xf] %vm540, %v2698
      %2763 = vst.msk [vmem:[#allocation4 + $0x20] sm:$0xf] %vm540, %v2699
      %2764 = vst.msk [vmem:[#allocation4 + $0x24] sm:$0xf] %vm540, %v2700
      %2765 = vst.msk [vmem:[#allocation4 + $0x28] sm:$0xf] %vm540, %v2701
      %2766 = vst.msk [vmem:[#allocation4 + $0x2c] sm:$0xf] %vm540, %v2702
      %2767 = vst.msk [vmem:[#allocation4 + $0x30] sm:$0xf] %vm540, %v2703
      %2768 = vst.msk [vmem:[#allocation4 + $0x34] sm:$0xf] %vm540, %v2704
      %2769 = vst.msk [vmem:[#allocation4 + $0x38] sm:$0xf] %vm540, %v2705
      %2770 = vst.msk [vmem:[#allocation4 + $0x3c] sm:$0xf] %vm540, %v2706
      %2771 = vst.msk [vmem:[#allocation4 + $0x40] sm:$0xf] %vm540, %v2707
      %2772 = vst.msk [vmem:[#allocation4 + $0x44] sm:$0xf] %vm540, %v2708
      %2773 = vst.msk [vmem:[#allocation4 + $0x48] sm:$0xf] %vm540, %v2709
      %2774 = vst.msk [vmem:[#allocation4 + $0x4c] sm:$0xf] %vm540, %v2710
      %2775 = vst.msk [vmem:[#allocation4 + $0x50] sm:$0xf] %vm540, %v2711
      %2776 = vst.msk [vmem:[#allocation4 + $0x54] sm:$0xf] %vm540, %v2712
      %2777 = vst.msk [vmem:[#allocation4 + $0x58] sm:$0xf] %vm540, %v2713
      %2778 = vst.msk [vmem:[#allocation4 + $0x5c] sm:$0xf] %vm540, %v2714
      %2779 = vst.msk [vmem:[#allocation4 + $0x60] sm:$0xf] %vm540, %v2715
      %2780 = vst.msk [vmem:[#allocation4 + $0x64] sm:$0xf] %vm540, %v2716
      %2781 = vst.msk [vmem:[#allocation4 + $0x68] sm:$0xf] %vm540, %v2717
      %2782 = vst.msk [vmem:[#allocation4 + $0x6c] sm:$0xf] %vm540, %v2718
      %2783 = vst.msk [vmem:[#allocation4 + $0x70] sm:$0xf] %vm540, %v2719
      %2784 = vst.msk [vmem:[#allocation4 + $0x74] sm:$0xf] %vm540, %v2720
      %2785 = vst.msk [vmem:[#allocation4 + $0x78] sm:$0xf] %vm540, %v2721
      %2786 = vst.msk [vmem:[#allocation4 + $0x7c] sm:$0xf] %vm540, %v2722
      %v2787 = vld [vmem:[%s2594 + $0x1] sm:$0xff]
      %v2788 = vld [vmem:[%s2594 + $0x9] sm:$0xff]
      %v2789 = vld [vmem:[%s2594 + $0x19] sm:$0xff]
      %v2790 = vld [vmem:[%s2594 + $0x21] sm:$0xff]
      %v2791 = vld [vmem:[%s2594 + $0x31] sm:$0xff]
      %v2792 = vld [vmem:[%s2594 + $0x39] sm:$0xff]
      %v2793 = vld [vmem:[%s2594 + $0x49] sm:$0xff]
      %v2794 = vld [vmem:[%s2594 + $0x51] sm:$0xff]
      %v2795 = vld [vmem:[%s2594 + $0x61] sm:$0xff]
      %v2796 = vld [vmem:[%s2594 + $0x69] sm:$0xff]
      %v2797 = vld [vmem:[%s2594 + $0x79] sm:$0xff]
      %v2798 = vld [vmem:[%s2594 + $0x81] sm:$0xff]
      %v2799 = vld [vmem:[%s2594 + $0x91] sm:$0xff]
      %v2800 = vld [vmem:[%s2594 + $0x99] sm:$0xff]
      %v2801 = vld [vmem:[%s2594 + $0xa9] sm:$0xff]
      %v2802 = vld [vmem:[%s2594 + $0xb1] sm:$0xff]
      %v2803 = vld [vmem:[%s2594 + $0xc1] sm:$0xff]
      %v2804 = vld [vmem:[%s2594 + $0xc9] sm:$0xff]
      %v2805 = vld [vmem:[%s2594 + $0xd9] sm:$0xff]
      %v2806 = vld [vmem:[%s2594 + $0xe1] sm:$0xff]
      %v2807 = vld [vmem:[%s2594 + $0xf1] sm:$0xff]
      %v2808 = vld [vmem:[%s2594 + $0xf9] sm:$0xff]
      %v2809 = vld [vmem:[%s2594 + $0x109] sm:$0xff]
      %v2810 = vld [vmem:[%s2594 + $0x111] sm:$0xff]
      %v2811 = vld [vmem:[%s2594 + $0x121] sm:$0xff]
      %v2812 = vld [vmem:[%s2594 + $0x129] sm:$0xff]
      %v2813 = vld [vmem:[%s2594 + $0x139] sm:$0xff]
      %v2814 = vld [vmem:[%s2594 + $0x141] sm:$0xff]
      %v2815 = vld [vmem:[%s2594 + $0x151] sm:$0xff]
      %v2816 = vld [vmem:[%s2594 + $0x159] sm:$0xff]
      %v2817 = vld [vmem:[%s2594 + $0x169] sm:$0xff]
      %v2818 = vld [vmem:[%s2594 + $0x171] sm:$0xff]
      %v2819 = vpack.c.bf16 %v2788, %v2787
      %v2820 = vpack.c.bf16 %v2790, %v2789
      %v2821 = vpack.c.bf16 %v2792, %v2791
      %v2822 = vpack.c.bf16 %v2794, %v2793
      %v2823 = vpack.c.bf16 %v2796, %v2795
      %v2824 = vpack.c.bf16 %v2798, %v2797
      %v2825 = vpack.c.bf16 %v2800, %v2799
      %v2826 = vpack.c.bf16 %v2802, %v2801
      %v2827 = vpack.c.bf16 %v2804, %v2803
      %v2828 = vpack.c.bf16 %v2806, %v2805
      %v2829 = vpack.c.bf16 %v2808, %v2807
      %v2830 = vpack.c.bf16 %v2810, %v2809
      %v2831 = vpack.c.bf16 %v2812, %v2811
      %v2832 = vpack.c.bf16 %v2814, %v2813
      %v2833 = vpack.c.bf16 %v2816, %v2815
      %v2834 = vpack.c.bf16 %v2818, %v2817
      %v2851 = vunpack.c.l.b16 %v2819
      %v2852 = vunpack.c.h.b16 %v2819
      %v2853 = vunpack.c.l.b16 %v2820
      %v2854 = vunpack.c.h.b16 %v2820
      %v2855 = vunpack.c.l.b16 %v2821
      %v2856 = vunpack.c.h.b16 %v2821
      %v2857 = vunpack.c.l.b16 %v2822
      %v2858 = vunpack.c.h.b16 %v2822
      %v2859 = vunpack.c.l.b16 %v2823
      %v2860 = vunpack.c.h.b16 %v2823
      %v2861 = vunpack.c.l.b16 %v2824
      %v2862 = vunpack.c.h.b16 %v2824
      %v2863 = vunpack.c.l.b16 %v2825
      %v2864 = vunpack.c.h.b16 %v2825
      %v2865 = vunpack.c.l.b16 %v2826
      %v2866 = vunpack.c.h.b16 %v2826
      %v2867 = vunpack.c.l.b16 %v2827
      %v2868 = vunpack.c.h.b16 %v2827
      %v2869 = vunpack.c.l.b16 %v2828
      %v2870 = vunpack.c.h.b16 %v2828
      %v2871 = vunpack.c.l.b16 %v2829
      %v2872 = vunpack.c.h.b16 %v2829
      %v2873 = vunpack.c.l.b16 %v2830
      %v2874 = vunpack.c.h.b16 %v2830
      %v2875 = vunpack.c.l.b16 %v2831
      %v2876 = vunpack.c.h.b16 %v2831
      %v2877 = vunpack.c.l.b16 %v2832
      %v2878 = vunpack.c.h.b16 %v2832
      %v2879 = vunpack.c.l.b16 %v2833
      %v2880 = vunpack.c.h.b16 %v2833
      %v2881 = vunpack.c.l.b16 %v2834
      %v2882 = vunpack.c.h.b16 %v2834
      %v2883 = vpack.c.b16 %v2851, %v2851
      %v2884 = vpack.c.b16 %v2852, %v2852
      %v2885 = vpack.c.b16 %v2853, %v2853
      %v2886 = vpack.c.b16 %v2854, %v2854
      %v2887 = vpack.c.b16 %v2855, %v2855
      %v2888 = vpack.c.b16 %v2856, %v2856
      %v2889 = vpack.c.b16 %v2857, %v2857
      %v2890 = vpack.c.b16 %v2858, %v2858
      %v2891 = vpack.c.b16 %v2859, %v2859
      %v2892 = vpack.c.b16 %v2860, %v2860
      %v2893 = vpack.c.b16 %v2861, %v2861
      %v2894 = vpack.c.b16 %v2862, %v2862
      %v2895 = vpack.c.b16 %v2863, %v2863
      %v2896 = vpack.c.b16 %v2864, %v2864
      %v2897 = vpack.c.b16 %v2865, %v2865
      %v2898 = vpack.c.b16 %v2866, %v2866
      %v2899 = vpack.c.b16 %v2867, %v2867
      %v2900 = vpack.c.b16 %v2868, %v2868
      %v2901 = vpack.c.b16 %v2869, %v2869
      %v2902 = vpack.c.b16 %v2870, %v2870
      %v2903 = vpack.c.b16 %v2871, %v2871
      %v2904 = vpack.c.b16 %v2872, %v2872
      %v2905 = vpack.c.b16 %v2873, %v2873
      %v2906 = vpack.c.b16 %v2874, %v2874
      %v2907 = vpack.c.b16 %v2875, %v2875
      %v2908 = vpack.c.b16 %v2876, %v2876
      %v2909 = vpack.c.b16 %v2877, %v2877
      %v2910 = vpack.c.b16 %v2878, %v2878
      %v2911 = vpack.c.b16 %v2879, %v2879
      %v2912 = vpack.c.b16 %v2880, %v2880
      %v2913 = vpack.c.b16 %v2881, %v2881
      %v2914 = vpack.c.b16 %v2882, %v2882
      %2915 = vrot.lane.b32.xlu0 %v2883, 8
      %v2916 = vpop.permute.xlu0 %2915
      %2917 = vrot.lane.b32.xlu0 %v2884, 8
      %v2918 = vpop.permute.xlu0 %2917
      %2919 = vrot.lane.b32.xlu0 %v2885, 8
      %v2920 = vpop.permute.xlu0 %2919
      %2921 = vrot.lane.b32.xlu0 %v2886, 8
      %v2922 = vpop.permute.xlu0 %2921
      %2923 = vrot.lane.b32.xlu0 %v2887, 8
      %v2924 = vpop.permute.xlu0 %2923
      %2925 = vrot.lane.b32.xlu0 %v2888, 8
      %v2926 = vpop.permute.xlu0 %2925
      %2927 = vrot.lane.b32.xlu0 %v2889, 8
      %v2928 = vpop.permute.xlu0 %2927
      %2929 = vrot.lane.b32.xlu0 %v2890, 8
      %v2930 = vpop.permute.xlu0 %2929
      %2931 = vrot.lane.b32.xlu0 %v2891, 8
      %v2932 = vpop.permute.xlu0 %2931
      %2933 = vrot.lane.b32.xlu0 %v2892, 8
      %v2934 = vpop.permute.xlu0 %2933
      %2935 = vrot.lane.b32.xlu0 %v2893, 8
      %v2936 = vpop.permute.xlu0 %2935
      %2937 = vrot.lane.b32.xlu0 %v2894, 8
      %v2938 = vpop.permute.xlu0 %2937
      %2939 = vrot.lane.b32.xlu0 %v2895, 8
      %v2940 = vpop.permute.xlu0 %2939
      %2941 = vrot.lane.b32.xlu0 %v2896, 8
      %v2942 = vpop.permute.xlu0 %2941
      %2943 = vrot.lane.b32.xlu0 %v2897, 8
      %v2944 = vpop.permute.xlu0 %2943
      %2945 = vrot.lane.b32.xlu0 %v2898, 8
      %v2946 = vpop.permute.xlu0 %2945
      %2947 = vrot.lane.b32.xlu0 %v2899, 8
      %v2948 = vpop.permute.xlu0 %2947
      %2949 = vrot.lane.b32.xlu0 %v2900, 8
      %v2950 = vpop.permute.xlu0 %2949
      %2951 = vrot.lane.b32.xlu0 %v2901, 8
      %v2952 = vpop.permute.xlu0 %2951
      %2953 = vrot.lane.b32.xlu0 %v2902, 8
      %v2954 = vpop.permute.xlu0 %2953
      %2955 = vrot.lane.b32.xlu0 %v2903, 8
      %v2956 = vpop.permute.xlu0 %2955
      %2957 = vrot.lane.b32.xlu0 %v2904, 8
      %v2958 = vpop.permute.xlu0 %2957
      %2959 = vrot.lane.b32.xlu0 %v2905, 8
      %v2960 = vpop.permute.xlu0 %2959
      %2961 = vrot.lane.b32.xlu0 %v2906, 8
      %v2962 = vpop.permute.xlu0 %2961
      %2963 = vrot.lane.b32.xlu0 %v2907, 8
      %v2964 = vpop.permute.xlu0 %2963
      %2965 = vrot.lane.b32.xlu0 %v2908, 8
      %v2966 = vpop.permute.xlu0 %2965
      %2967 = vrot.lane.b32.xlu0 %v2909, 8
      %v2968 = vpop.permute.xlu0 %2967
      %2969 = vrot.lane.b32.xlu0 %v2910, 8
      %v2970 = vpop.permute.xlu0 %2969
      %2971 = vrot.lane.b32.xlu0 %v2911, 8
      %v2972 = vpop.permute.xlu0 %2971
      %2973 = vrot.lane.b32.xlu0 %v2912, 8
      %v2974 = vpop.permute.xlu0 %2973
      %2975 = vrot.lane.b32.xlu0 %v2913, 8
      %v2976 = vpop.permute.xlu0 %2975
      %2977 = vrot.lane.b32.xlu0 %v2914, 8
      %v2978 = vpop.permute.xlu0 %2977
      %3011 = vst.msk [vmem:[#allocation4] sm:$0xf] %vm797, %v2916
      %3012 = vst.msk [vmem:[#allocation4 + $0x4] sm:$0xf] %vm797, %v2918
      %3013 = vst.msk [vmem:[#allocation4 + $0x8] sm:$0xf] %vm797, %v2920
      %3014 = vst.msk [vmem:[#allocation4 + $0xc] sm:$0xf] %vm797, %v2922
      %3015 = vst.msk [vmem:[#allocation4 + $0x10] sm:$0xf] %vm797, %v2924
      %3016 = vst.msk [vmem:[#allocation4 + $0x14] sm:$0xf] %vm797, %v2926
      %3017 = vst.msk [vmem:[#allocation4 + $0x18] sm:$0xf] %vm797, %v2928
      %3018 = vst.msk [vmem:[#allocation4 + $0x1c] sm:$0xf] %vm797, %v2930
      %3019 = vst.msk [vmem:[#allocation4 + $0x20] sm:$0xf] %vm797, %v2932
      %3020 = vst.msk [vmem:[#allocation4 + $0x24] sm:$0xf] %vm797, %v2934
      %3021 = vst.msk [vmem:[#allocation4 + $0x28] sm:$0xf] %vm797, %v2936
      %3022 = vst.msk [vmem:[#allocation4 + $0x2c] sm:$0xf] %vm797, %v2938
      %3023 = vst.msk [vmem:[#allocation4 + $0x30] sm:$0xf] %vm797, %v2940
      %3024 = vst.msk [vmem:[#allocation4 + $0x34] sm:$0xf] %vm797, %v2942
      %3025 = vst.msk [vmem:[#allocation4 + $0x38] sm:$0xf] %vm797, %v2944
      %3026 = vst.msk [vmem:[#allocation4 + $0x3c] sm:$0xf] %vm797, %v2946
      %3027 = vst.msk [vmem:[#allocation4 + $0x40] sm:$0xf] %vm797, %v2948
      %3028 = vst.msk [vmem:[#allocation4 + $0x44] sm:$0xf] %vm797, %v2950
      %3029 = vst.msk [vmem:[#allocation4 + $0x48] sm:$0xf] %vm797, %v2952
      %3030 = vst.msk [vmem:[#allocation4 + $0x4c] sm:$0xf] %vm797, %v2954
      %3031 = vst.msk [vmem:[#allocation4 + $0x50] sm:$0xf] %vm797, %v2956
      %3032 = vst.msk [vmem:[#allocation4 + $0x54] sm:$0xf] %vm797, %v2958
      %3033 = vst.msk [vmem:[#allocation4 + $0x58] sm:$0xf] %vm797, %v2960
      %3034 = vst.msk [vmem:[#allocation4 + $0x5c] sm:$0xf] %vm797, %v2962
      %3035 = vst.msk [vmem:[#allocation4 + $0x60] sm:$0xf] %vm797, %v2964
      %3036 = vst.msk [vmem:[#allocation4 + $0x64] sm:$0xf] %vm797, %v2966
      %3037 = vst.msk [vmem:[#allocation4 + $0x68] sm:$0xf] %vm797, %v2968
      %3038 = vst.msk [vmem:[#allocation4 + $0x6c] sm:$0xf] %vm797, %v2970
      %3039 = vst.msk [vmem:[#allocation4 + $0x70] sm:$0xf] %vm797, %v2972
      %3040 = vst.msk [vmem:[#allocation4 + $0x74] sm:$0xf] %vm797, %v2974
      %3041 = vst.msk [vmem:[#allocation4 + $0x78] sm:$0xf] %vm797, %v2976
      %3042 = vst.msk [vmem:[#allocation4 + $0x7c] sm:$0xf] %vm797, %v2978
      %v3043 = vld [vmem:[%s2594 + $0x2] sm:$0xff]
      %v3044 = vld [vmem:[%s2594 + $0xa] sm:$0xff]
      %v3045 = vld [vmem:[%s2594 + $0x1a] sm:$0xff]
      %v3046 = vld [vmem:[%s2594 + $0x22] sm:$0xff]
      %v3047 = vld [vmem:[%s2594 + $0x32] sm:$0xff]
      %v3048 = vld [vmem:[%s2594 + $0x3a] sm:$0xff]
      %v3049 = vld [vmem:[%s2594 + $0x4a] sm:$0xff]
      %v3050 = vld [vmem:[%s2594 + $0x52] sm:$0xff]
      %v3051 = vld [vmem:[%s2594 + $0x62] sm:$0xff]
      %v3052 = vld [vmem:[%s2594 + $0x6a] sm:$0xff]
      %v3053 = vld [vmem:[%s2594 + $0x7a] sm:$0xff]
      %v3054 = vld [vmem:[%s2594 + $0x82] sm:$0xff]
      %v3055 = vld [vmem:[%s2594 + $0x92] sm:$0xff]
      %v3056 = vld [vmem:[%s2594 + $0x9a] sm:$0xff]
      %v3057 = vld [vmem:[%s2594 + $0xaa] sm:$0xff]
      %v3058 = vld [vmem:[%s2594 + $0xb2] sm:$0xff]
      %v3059 = vld [vmem:[%s2594 + $0xc2] sm:$0xff]
      %v3060 = vld [vmem:[%s2594 + $0xca] sm:$0xff]
      %v3061 = vld [vmem:[%s2594 + $0xda] sm:$0xff]
      %v3062 = vld [vmem:[%s2594 + $0xe2] sm:$0xff]
      %v3063 = vld [vmem:[%s2594 + $0xf2] sm:$0xff]
      %v3064 = vld [vmem:[%s2594 + $0xfa] sm:$0xff]
      %v3065 = vld [vmem:[%s2594 + $0x10a] sm:$0xff]
      %v3066 = vld [vmem:[%s2594 + $0x112] sm:$0xff]
      %v3067 = vld [vmem:[%s2594 + $0x122] sm:$0xff]
      %v3068 = vld [vmem:[%s2594 + $0x12a] sm:$0xff]
      %v3069 = vld [vmem:[%s2594 + $0x13a] sm:$0xff]
      %v3070 = vld [vmem:[%s2594 + $0x142] sm:$0xff]
      %v3071 = vld [vmem:[%s2594 + $0x152] sm:$0xff]
      %v3072 = vld [vmem:[%s2594 + $0x15a] sm:$0xff]
      %v3073 = vld [vmem:[%s2594 + $0x16a] sm:$0xff]
      %v3074 = vld [vmem:[%s2594 + $0x172] sm:$0xff]
      %v3075 = vpack.c.bf16 %v3044, %v3043
      %v3076 = vpack.c.bf16 %v3046, %v3045
      %v3077 = vpack.c.bf16 %v3048, %v3047
      %v3078 = vpack.c.bf16 %v3050, %v3049
      %v3079 = vpack.c.bf16 %v3052, %v3051
      %v3080 = vpack.c.bf16 %v3054, %v3053
      %v3081 = vpack.c.bf16 %v3056, %v3055
      %v3082 = vpack.c.bf16 %v3058, %v3057
      %v3083 = vpack.c.bf16 %v3060, %v3059
      %v3084 = vpack.c.bf16 %v3062, %v3061
      %v3085 = vpack.c.bf16 %v3064, %v3063
      %v3086 = vpack.c.bf16 %v3066, %v3065
      %v3087 = vpack.c.bf16 %v3068, %v3067
      %v3088 = vpack.c.bf16 %v3070, %v3069
      %v3089 = vpack.c.bf16 %v3072, %v3071
      %v3090 = vpack.c.bf16 %v3074, %v3073
      %v3107 = vunpack.c.l.b16 %v3075
      %v3108 = vunpack.c.h.b16 %v3075
      %v3109 = vunpack.c.l.b16 %v3076
      %v3110 = vunpack.c.h.b16 %v3076
      %v3111 = vunpack.c.l.b16 %v3077
      %v3112 = vunpack.c.h.b16 %v3077
      %v3113 = vunpack.c.l.b16 %v3078
      %v3114 = vunpack.c.h.b16 %v3078
      %v3115 = vunpack.c.l.b16 %v3079
      %v3116 = vunpack.c.h.b16 %v3079
      %v3117 = vunpack.c.l.b16 %v3080
      %v3118 = vunpack.c.h.b16 %v3080
      %v3119 = vunpack.c.l.b16 %v3081
      %v3120 = vunpack.c.h.b16 %v3081
      %v3121 = vunpack.c.l.b16 %v3082
      %v3122 = vunpack.c.h.b16 %v3082
      %v3123 = vunpack.c.l.b16 %v3083
      %v3124 = vunpack.c.h.b16 %v3083
      %v3125 = vunpack.c.l.b16 %v3084
      %v3126 = vunpack.c.h.b16 %v3084
      %v3127 = vunpack.c.l.b16 %v3085
      %v3128 = vunpack.c.h.b16 %v3085
      %v3129 = vunpack.c.l.b16 %v3086
      %v3130 = vunpack.c.h.b16 %v3086
      %v3131 = vunpack.c.l.b16 %v3087
      %v3132 = vunpack.c.h.b16 %v3087
      %v3133 = vunpack.c.l.b16 %v3088
      %v3134 = vunpack.c.h.b16 %v3088
      %v3135 = vunpack.c.l.b16 %v3089
      %v3136 = vunpack.c.h.b16 %v3089
      %v3137 = vunpack.c.l.b16 %v3090
      %v3138 = vunpack.c.h.b16 %v3090
      %v3139 = vpack.c.b16 %v3107, %v3107
      %v3140 = vpack.c.b16 %v3108, %v3108
      %v3141 = vpack.c.b16 %v3109, %v3109
      %v3142 = vpack.c.b16 %v3110, %v3110
      %v3143 = vpack.c.b16 %v3111, %v3111
      %v3144 = vpack.c.b16 %v3112, %v3112
      %v3145 = vpack.c.b16 %v3113, %v3113
      %v3146 = vpack.c.b16 %v3114, %v3114
      %v3147 = vpack.c.b16 %v3115, %v3115
      %v3148 = vpack.c.b16 %v3116, %v3116
      %v3149 = vpack.c.b16 %v3117, %v3117
      %v3150 = vpack.c.b16 %v3118, %v3118
      %v3151 = vpack.c.b16 %v3119, %v3119
      %v3152 = vpack.c.b16 %v3120, %v3120
      %v3153 = vpack.c.b16 %v3121, %v3121
      %v3154 = vpack.c.b16 %v3122, %v3122
      %v3155 = vpack.c.b16 %v3123, %v3123
      %v3156 = vpack.c.b16 %v3124, %v3124
      %v3157 = vpack.c.b16 %v3125, %v3125
      %v3158 = vpack.c.b16 %v3126, %v3126
      %v3159 = vpack.c.b16 %v3127, %v3127
      %v3160 = vpack.c.b16 %v3128, %v3128
      %v3161 = vpack.c.b16 %v3129, %v3129
      %v3162 = vpack.c.b16 %v3130, %v3130
      %v3163 = vpack.c.b16 %v3131, %v3131
      %v3164 = vpack.c.b16 %v3132, %v3132
      %v3165 = vpack.c.b16 %v3133, %v3133
      %v3166 = vpack.c.b16 %v3134, %v3134
      %v3167 = vpack.c.b16 %v3135, %v3135
      %v3168 = vpack.c.b16 %v3136, %v3136
      %v3169 = vpack.c.b16 %v3137, %v3137
      %v3170 = vpack.c.b16 %v3138, %v3138
      %3171 = vrot.lane.b32.xlu0 %v3139, 16
      %v3172 = vpop.permute.xlu0 %3171
      %3173 = vrot.lane.b32.xlu0 %v3140, 16
      %v3174 = vpop.permute.xlu0 %3173
      %3175 = vrot.lane.b32.xlu0 %v3141, 16
      %v3176 = vpop.permute.xlu0 %3175
      %3177 = vrot.lane.b32.xlu0 %v3142, 16
      %v3178 = vpop.permute.xlu0 %3177
      %3179 = vrot.lane.b32.xlu0 %v3143, 16
      %v3180 = vpop.permute.xlu0 %3179
      %3181 = vrot.lane.b32.xlu0 %v3144, 16
      %v3182 = vpop.permute.xlu0 %3181
      %3183 = vrot.lane.b32.xlu0 %v3145, 16
      %v3184 = vpop.permute.xlu0 %3183
      %3185 = vrot.lane.b32.xlu0 %v3146, 16
      %v3186 = vpop.permute.xlu0 %3185
      %3187 = vrot.lane.b32.xlu0 %v3147, 16
      %v3188 = vpop.permute.xlu0 %3187
      %3189 = vrot.lane.b32.xlu0 %v3148, 16
      %v3190 = vpop.permute.xlu0 %3189
      %3191 = vrot.lane.b32.xlu0 %v3149, 16
      %v3192 = vpop.permute.xlu0 %3191
      %3193 = vrot.lane.b32.xlu0 %v3150, 16
      %v3194 = vpop.permute.xlu0 %3193
      %3195 = vrot.lane.b32.xlu0 %v3151, 16
      %v3196 = vpop.permute.xlu0 %3195
      %3197 = vrot.lane.b32.xlu0 %v3152, 16
      %v3198 = vpop.permute.xlu0 %3197
      %3199 = vrot.lane.b32.xlu0 %v3153, 16
      %v3200 = vpop.permute.xlu0 %3199
      %3201 = vrot.lane.b32.xlu0 %v3154, 16
      %v3202 = vpop.permute.xlu0 %3201
      %3203 = vrot.lane.b32.xlu0 %v3155, 16
      %v3204 = vpop.permute.xlu0 %3203
      %3205 = vrot.lane.b32.xlu0 %v3156, 16
      %v3206 = vpop.permute.xlu0 %3205
      %3207 = vrot.lane.b32.xlu0 %v3157, 16
      %v3208 = vpop.permute.xlu0 %3207
      %3209 = vrot.lane.b32.xlu0 %v3158, 16
      %v3210 = vpop.permute.xlu0 %3209
      %3211 = vrot.lane.b32.xlu0 %v3159, 16
      %v3212 = vpop.permute.xlu0 %3211
      %3213 = vrot.lane.b32.xlu0 %v3160, 16
      %v3214 = vpop.permute.xlu0 %3213
      %3215 = vrot.lane.b32.xlu0 %v3161, 16
      %v3216 = vpop.permute.xlu0 %3215
      %3217 = vrot.lane.b32.xlu0 %v3162, 16
      %v3218 = vpop.permute.xlu0 %3217
      %3219 = vrot.lane.b32.xlu0 %v3163, 16
      %v3220 = vpop.permute.xlu0 %3219
      %3221 = vrot.lane.b32.xlu0 %v3164, 16
      %v3222 = vpop.permute.xlu0 %3221
      %3223 = vrot.lane.b32.xlu0 %v3165, 16
      %v3224 = vpop.permute.xlu0 %3223
      %3225 = vrot.lane.b32.xlu0 %v3166, 16
      %v3226 = vpop.permute.xlu0 %3225
      %3227 = vrot.lane.b32.xlu0 %v3167, 16
      %v3228 = vpop.permute.xlu0 %3227
      %3229 = vrot.lane.b32.xlu0 %v3168, 16
      %v3230 = vpop.permute.xlu0 %3229
      %3231 = vrot.lane.b32.xlu0 %v3169, 16
      %v3232 = vpop.permute.xlu0 %3231
      %3233 = vrot.lane.b32.xlu0 %v3170, 16
      %v3234 = vpop.permute.xlu0 %3233
      %3267 = vst.msk [vmem:[#allocation4] sm:$0xf] %vm1054, %v3172
      %3268 = vst.msk [vmem:[#allocation4 + $0x4] sm:$0xf] %vm1054, %v3174
      %3269 = vst.msk [vmem:[#allocation4 + $0x8] sm:$0xf] %vm1054, %v3176
      %3270 = vst.msk [vmem:[#allocation4 + $0xc] sm:$0xf] %vm1054, %v3178
      %3271 = vst.msk [vmem:[#allocation4 + $0x10] sm:$0xf] %vm1054, %v3180
      %3272 = vst.msk [vmem:[#allocation4 + $0x14] sm:$0xf] %vm1054, %v3182
      %3273 = vst.msk [vmem:[#allocation4 + $0x18] sm:$0xf] %vm1054, %v3184
      %3274 = vst.msk [vmem:[#allocation4 + $0x1c] sm:$0xf] %vm1054, %v3186
      %3275 = vst.msk [vmem:[#allocation4 + $0x20] sm:$0xf] %vm1054, %v3188
      %3276 = vst.msk [vmem:[#allocation4 + $0x24] sm:$0xf] %vm1054, %v3190
      %3277 = vst.msk [vmem:[#allocation4 + $0x28] sm:$0xf] %vm1054, %v3192
      %3278 = vst.msk [vmem:[#allocation4 + $0x2c] sm:$0xf] %vm1054, %v3194
      %3279 = vst.msk [vmem:[#allocation4 + $0x30] sm:$0xf] %vm1054, %v3196
      %3280 = vst.msk [vmem:[#allocation4 + $0x34] sm:$0xf] %vm1054, %v3198
      %3281 = vst.msk [vmem:[#allocation4 + $0x38] sm:$0xf] %vm1054, %v3200
      %3282 = vst.msk [vmem:[#allocation4 + $0x3c] sm:$0xf] %vm1054, %v3202
      %3283 = vst.msk [vmem:[#allocation4 + $0x40] sm:$0xf] %vm1054, %v3204
      %3284 = vst.msk [vmem:[#allocation4 + $0x44] sm:$0xf] %vm1054, %v3206
      %3285 = vst.msk [vmem:[#allocation4 + $0x48] sm:$0xf] %vm1054, %v3208
      %3286 = vst.msk [vmem:[#allocation4 + $0x4c] sm:$0xf] %vm1054, %v3210
      %3287 = vst.msk [vmem:[#allocation4 + $0x50] sm:$0xf] %vm1054, %v3212
      %3288 = vst.msk [vmem:[#allocation4 + $0x54] sm:$0xf] %vm1054, %v3214
      %3289 = vst.msk [vmem:[#allocation4 + $0x58] sm:$0xf] %vm1054, %v3216
      %3290 = vst.msk [vmem:[#allocation4 + $0x5c] sm:$0xf] %vm1054, %v3218
      %3291 = vst.msk [vmem:[#allocation4 + $0x60] sm:$0xf] %vm1054, %v3220
      %3292 = vst.msk [vmem:[#allocation4 + $0x64] sm:$0xf] %vm1054, %v3222
      %3293 = vst.msk [vmem:[#allocation4 + $0x68] sm:$0xf] %vm1054, %v3224
      %3294 = vst.msk [vmem:[#allocation4 + $0x6c] sm:$0xf] %vm1054, %v3226
      %3295 = vst.msk [vmem:[#allocation4 + $0x70] sm:$0xf] %vm1054, %v3228
      %3296 = vst.msk [vmem:[#allocation4 + $0x74] sm:$0xf] %vm1054, %v3230
      %3297 = vst.msk [vmem:[#allocation4 + $0x78] sm:$0xf] %vm1054, %v3232
      %3298 = vst.msk [vmem:[#allocation4 + $0x7c] sm:$0xf] %vm1054, %v3234
      %v3299 = vld [vmem:[#allocation4] sm:$0xf]
      %v3300 = vld [vmem:[#allocation4 + $0x4] sm:$0xf]
      %v3301 = vld [vmem:[#allocation4 + $0x8] sm:$0xf]
      %v3302 = vld [vmem:[#allocation4 + $0xc] sm:$0xf]
      %v3303 = vld [vmem:[#allocation4 + $0x10] sm:$0xf]
      %v3304 = vld [vmem:[#allocation4 + $0x14] sm:$0xf]
      %v3305 = vld [vmem:[#allocation4 + $0x18] sm:$0xf]
      %v3306 = vld [vmem:[#allocation4 + $0x1c] sm:$0xf]
      %v3307 = vld [vmem:[#allocation4 + $0x20] sm:$0xf]
      %v3308 = vld [vmem:[#allocation4 + $0x24] sm:$0xf]
      %v3309 = vld [vmem:[#allocation4 + $0x28] sm:$0xf]
      %v3310 = vld [vmem:[#allocation4 + $0x2c] sm:$0xf]
      %v3311 = vld [vmem:[#allocation4 + $0x30] sm:$0xf]
      %v3312 = vld [vmem:[#allocation4 + $0x34] sm:$0xf]
      %v3313 = vld [vmem:[#allocation4 + $0x38] sm:$0xf]
      %v3314 = vld [vmem:[#allocation4 + $0x3c] sm:$0xf]
      %v3315 = vld [vmem:[#allocation4 + $0x40] sm:$0xf]
      %v3316 = vld [vmem:[#allocation4 + $0x44] sm:$0xf]
      %v3317 = vld [vmem:[#allocation4 + $0x48] sm:$0xf]
      %v3318 = vld [vmem:[#allocation4 + $0x4c] sm:$0xf]
      %v3319 = vld [vmem:[#allocation4 + $0x50] sm:$0xf]
      %v3320 = vld [vmem:[#allocation4 + $0x54] sm:$0xf]
      %v3321 = vld [vmem:[#allocation4 + $0x58] sm:$0xf]
      %v3322 = vld [vmem:[#allocation4 + $0x5c] sm:$0xf]
      %v3323 = vld [vmem:[#allocation4 + $0x60] sm:$0xf]
      %v3324 = vld [vmem:[#allocation4 + $0x64] sm:$0xf]
      %v3325 = vld [vmem:[#allocation4 + $0x68] sm:$0xf]
      %v3326 = vld [vmem:[#allocation4 + $0x6c] sm:$0xf]
      %v3327 = vld [vmem:[#allocation4 + $0x70] sm:$0xf]
      %v3328 = vld [vmem:[#allocation4 + $0x74] sm:$0xf]
      %v3329 = vld [vmem:[#allocation4 + $0x78] sm:$0xf]
      %v3330 = vld [vmem:[#allocation4 + $0x7c] sm:$0xf]
      %s3331 = scalar_lea.vmem %s1, 24
      %v3332 = vld [vmem:[%s3331] sm:$0xf]
      %v3333 = vld [vmem:[%s3331 + $0x4] sm:$0xf]
      %v3334 = vld [vmem:[%s3331 + $0x8] sm:$0xf]
      %v3367 = vunpack.c.l.b16 %v3299
      %v3368 = vunpack.c.l.b16 %v3300
      %v3369 = vunpack.c.l.b16 %v3301
      %v3370 = vunpack.c.l.b16 %v3302
      %v3371 = vunpack.c.l.b16 %v3303
      %v3372 = vunpack.c.l.b16 %v3304
      %v3373 = vunpack.c.l.b16 %v3305
      %v3374 = vunpack.c.l.b16 %v3306
      %v3375 = vunpack.c.l.b16 %v3307
      %v3376 = vunpack.c.l.b16 %v3308
      %v3377 = vunpack.c.l.b16 %v3309
      %v3378 = vunpack.c.l.b16 %v3310
      %v3379 = vunpack.c.l.b16 %v3311
      %v3380 = vunpack.c.l.b16 %v3312
      %v3381 = vunpack.c.l.b16 %v3313
      %v3382 = vunpack.c.l.b16 %v3314
      %v3383 = vunpack.c.l.b16 %v3315
      %v3384 = vunpack.c.l.b16 %v3316
      %v3385 = vunpack.c.l.b16 %v3317
      %v3386 = vunpack.c.l.b16 %v3318
      %v3387 = vunpack.c.l.b16 %v3319
      %v3388 = vunpack.c.l.b16 %v3320
      %v3389 = vunpack.c.l.b16 %v3321
      %v3390 = vunpack.c.l.b16 %v3322
      %v3391 = vunpack.c.l.b16 %v3323
      %v3392 = vunpack.c.l.b16 %v3324
      %v3393 = vunpack.c.l.b16 %v3325
      %v3394 = vunpack.c.l.b16 %v3326
      %v3395 = vunpack.c.l.b16 %v3327
      %v3396 = vunpack.c.l.b16 %v3328
      %v3397 = vunpack.c.l.b16 %v3329
      %v3398 = vunpack.c.l.b16 %v3330
      %v3399 = vpack.c.b16 %v3368, %v3367
      %v3400 = vpack.c.b16 %v3370, %v3369
      %v3401 = vpack.c.b16 %v3372, %v3371
      %v3402 = vpack.c.b16 %v3374, %v3373
      %v3403 = vpack.c.b16 %v3376, %v3375
      %v3404 = vpack.c.b16 %v3378, %v3377
      %v3405 = vpack.c.b16 %v3380, %v3379
      %v3406 = vpack.c.b16 %v3382, %v3381
      %v3407 = vpack.c.b16 %v3384, %v3383
      %v3408 = vpack.c.b16 %v3386, %v3385
      %v3409 = vpack.c.b16 %v3388, %v3387
      %v3410 = vpack.c.b16 %v3390, %v3389
      %v3411 = vpack.c.b16 %v3392, %v3391
      %v3412 = vpack.c.b16 %v3394, %v3393
      %v3413 = vpack.c.b16 %v3396, %v3395
      %v3414 = vpack.c.b16 %v3398, %v3397
      %v3418 = vunpack.c.l.b16 %v3332
      %v3419 = vunpack.c.l.b16 %v3333
      %v3420 = vunpack.c.l.b16 %v3334
      %v3421 = vpack.c.b16 %v3419, %v3418
      %v3422 = vpack.c.b16 %v3420, %v3420
      %v3425 = vsel %vm1211, %v3399, 0
      %v3428 = vsel %vm1211, %v3400, 0
      %v3431 = vsel %vm1211, %v3401, 0
      %v3434 = vsel %vm1211, %v3402, 0
      %v3437 = vsel %vm1211, %v3403, 0
      %v3440 = vsel %vm1211, %v3404, 0
      %v3443 = vsel %vm1211, %v3405, 0
      %v3446 = vsel %vm1211, %v3406, 0
      %v3449 = vsel %vm1211, %v3407, 0
      %v3452 = vsel %vm1211, %v3408, 0
      %v3455 = vsel %vm1211, %v3409, 0
      %v3458 = vsel %vm1211, %v3410, 0
      %v3461 = vsel %vm1211, %v3411, 0
      %v3464 = vsel %vm1211, %v3412, 0
      %v3467 = vsel %vm1211, %v3413, 0
      %v3470 = vsel %vm1211, %v3414, 0
      %v3473 = vsel %vm1260, %v3422, 0
      %3475 = vmatprep.subr.bf16.mxu0 0
      %3476 = vmatpush1.bf16.msra.mxu0 0
      %3477 = vmatprep.subr.bf16.mxu0 0
      %3478 = vmatpush1.bf16.msra.mxu0 0
      %3479 = vmatprep.subr.bf16.mxu0 0
      %3480 = vmatpush1.bf16.msra.mxu0 0
      %3481 = vmatprep.subr.bf16.mxu0 0
      %3482 = vmatpush1.bf16.msra.mxu0 0
      %3483 = vmatprep.subr.bf16.mxu0 0
      %3484 = vmatpush1.bf16.msra.mxu0 0
      %3485 = vmatprep.subr.bf16.mxu0 0
      %3486 = vmatpush1.bf16.msra.mxu0 0
      %3487 = vmatprep.subr.bf16.mxu0 0
      %3488 = vmatpush1.bf16.msra.mxu0 %v3473
      %3489 = vmatprep.subr.bf16.mxu0 0
      %3490 = vmatpush1.bf16.msra.mxu0 %v3421
      %3491 = vmatprep.subr.bf16.mxu0 0
      %3492 = vmatpush2.bf16.msra.mxu0 0
      %3493 = vmatprep.subr.bf16.mxu0 0
      %3494 = vmatpush2.bf16.msra.mxu0 0
      %3495 = vmatprep.subr.bf16.mxu0 0
      %3496 = vmatpush2.bf16.msra.mxu0 0
      %3497 = vmatprep.subr.bf16.mxu0 0
      %3498 = vmatpush2.bf16.msra.mxu0 0
      %3499 = vmatprep.subr.bf16.mxu0 0
      %3500 = vmatpush2.bf16.msra.mxu0 0
      %3501 = vmatprep.subr.bf16.mxu0 0
      %3502 = vmatpush2.bf16.msra.mxu0 0
      %3503 = vmatprep.subr.bf16.mxu0 0
      %3504 = vmatpush2.bf16.msra.mxu0 0
      %3505 = vmatprep.subr.bf16.mxu0 0
      %3506 = vmatpush2.bf16.msra.mxu0 0
      %3507 = vmatprep.mubr.bf16.mxu0 0
      %3508 = vmatmul.mubr.bf16.gmra.mxu0 %v3425
      %v3509 = vpop.f32.mrf.mxu0
      %v3510 = vadd.f32 0.0, %v3509
      %v3511 = vpop.f32.mrf.mxu0
      %v3512 = vpop.f32.mrf.mxu0
      %v3513 = vadd.f32 0.0, %v3512
      %v3514 = vpop.f32.mrf.mxu0
      %3515 = vmatprep.mubr.bf16.mxu0 0
      %3516 = vmatmul.mubr.bf16.gmra.mxu0 %v3428
      %v3517 = vpop.f32.mrf.mxu0
      %v3518 = vadd.f32 0.0, %v3517
      %v3519 = vpop.f32.mrf.mxu0
      %v3520 = vpop.f32.mrf.mxu0
      %v3521 = vadd.f32 0.0, %v3520
      %v3522 = vpop.f32.mrf.mxu0
      %3523 = vmatprep.mubr.bf16.mxu0 0
      %3524 = vmatmul.mubr.bf16.gmra.mxu0 %v3431
      %v3525 = vpop.f32.mrf.mxu0
      %v3526 = vadd.f32 0.0, %v3525
      %v3527 = vpop.f32.mrf.mxu0
      %v3528 = vpop.f32.mrf.mxu0
      %v3529 = vadd.f32 0.0, %v3528
      %v3530 = vpop.f32.mrf.mxu0
      %3531 = vmatprep.mubr.bf16.mxu0 0
      %3532 = vmatmul.mubr.bf16.gmra.mxu0 %v3434
      %v3533 = vpop.f32.mrf.mxu0
      %v3534 = vadd.f32 0.0, %v3533
      %v3535 = vpop.f32.mrf.mxu0
      %v3536 = vpop.f32.mrf.mxu0
      %v3537 = vadd.f32 0.0, %v3536
      %v3538 = vpop.f32.mrf.mxu0
      %3539 = vmatprep.mubr.bf16.mxu0 0
      %3540 = vmatmul.mubr.bf16.gmra.mxu0 %v3437
      %v3541 = vpop.f32.mrf.mxu0
      %v3542 = vadd.f32 0.0, %v3541
      %v3543 = vpop.f32.mrf.mxu0
      %v3544 = vpop.f32.mrf.mxu0
      %v3545 = vadd.f32 0.0, %v3544
      %v3546 = vpop.f32.mrf.mxu0
      %3547 = vmatprep.mubr.bf16.mxu0 0
      %3548 = vmatmul.mubr.bf16.gmra.mxu0 %v3440
      %v3549 = vpop.f32.mrf.mxu0
      %v3550 = vadd.f32 0.0, %v3549
      %v3551 = vpop.f32.mrf.mxu0
      %v3552 = vpop.f32.mrf.mxu0
      %v3553 = vadd.f32 0.0, %v3552
      %v3554 = vpop.f32.mrf.mxu0
      %3555 = vmatprep.mubr.bf16.mxu0 0
      %3556 = vmatmul.mubr.bf16.gmra.mxu0 %v3443
      %v3557 = vpop.f32.mrf.mxu0
      %v3558 = vadd.f32 0.0, %v3557
      %v3559 = vpop.f32.mrf.mxu0
      %v3560 = vpop.f32.mrf.mxu0
      %v3561 = vadd.f32 0.0, %v3560
      %v3562 = vpop.f32.mrf.mxu0
      %3563 = vmatprep.mubr.bf16.mxu0 0
      %3564 = vmatmul.mubr.bf16.gmra.mxu0 %v3446
      %v3565 = vpop.f32.mrf.mxu0
      %v3566 = vadd.f32 0.0, %v3565
      %v3567 = vpop.f32.mrf.mxu0
      %v3568 = vpop.f32.mrf.mxu0
      %v3569 = vadd.f32 0.0, %v3568
      %v3570 = vpop.f32.mrf.mxu0
      %3571 = vmatprep.mubr.bf16.mxu0 0
      %3572 = vmatmul.mubr.bf16.gmra.mxu0 %v3449
      %v3573 = vpop.f32.mrf.mxu0
      %v3574 = vadd.f32 0.0, %v3573
      %v3575 = vpop.f32.mrf.mxu0
      %v3576 = vpop.f32.mrf.mxu0
      %v3577 = vadd.f32 0.0, %v3576
      %v3578 = vpop.f32.mrf.mxu0
      %3579 = vmatprep.mubr.bf16.mxu0 0
      %3580 = vmatmul.mubr.bf16.gmra.mxu0 %v3452
      %v3581 = vpop.f32.mrf.mxu0
      %v3582 = vadd.f32 0.0, %v3581
      %v3583 = vpop.f32.mrf.mxu0
      %v3584 = vpop.f32.mrf.mxu0
      %v3585 = vadd.f32 0.0, %v3584
      %v3586 = vpop.f32.mrf.mxu0
      %3587 = vmatprep.mubr.bf16.mxu0 0
      %3588 = vmatmul.mubr.bf16.gmra.mxu0 %v3455
      %v3589 = vpop.f32.mrf.mxu0
      %v3590 = vadd.f32 0.0, %v3589
      %v3591 = vpop.f32.mrf.mxu0
      %v3592 = vpop.f32.mrf.mxu0
      %v3593 = vadd.f32 0.0, %v3592
      %v3594 = vpop.f32.mrf.mxu0
      %3595 = vmatprep.mubr.bf16.mxu0 0
      %3596 = vmatmul.mubr.bf16.gmra.mxu0 %v3458
      %v3597 = vpop.f32.mrf.mxu0
      %v3598 = vadd.f32 0.0, %v3597
      %v3599 = vpop.f32.mrf.mxu0
      %v3600 = vpop.f32.mrf.mxu0
      %v3601 = vadd.f32 0.0, %v3600
      %v3602 = vpop.f32.mrf.mxu0
      %3603 = vmatprep.mubr.bf16.mxu0 0
      %3604 = vmatmul.mubr.bf16.gmra.mxu0 %v3461
      %v3605 = vpop.f32.mrf.mxu0
      %v3606 = vadd.f32 0.0, %v3605
      %v3607 = vpop.f32.mrf.mxu0
      %v3608 = vpop.f32.mrf.mxu0
      %v3609 = vadd.f32 0.0, %v3608
      %v3610 = vpop.f32.mrf.mxu0
      %3611 = vmatprep.mubr.bf16.mxu0 0
      %3612 = vmatmul.mubr.bf16.gmra.mxu0 %v3464
      %v3613 = vpop.f32.mrf.mxu0
      %v3614 = vadd.f32 0.0, %v3613
      %v3615 = vpop.f32.mrf.mxu0
      %v3616 = vpop.f32.mrf.mxu0
      %v3617 = vadd.f32 0.0, %v3616
      %v3618 = vpop.f32.mrf.mxu0
      %3619 = vmatprep.mubr.bf16.mxu0 0
      %3620 = vmatmul.mubr.bf16.gmra.mxu0 %v3467
      %v3621 = vpop.f32.mrf.mxu0
      %v3622 = vadd.f32 0.0, %v3621
      %v3623 = vpop.f32.mrf.mxu0
      %v3624 = vpop.f32.mrf.mxu0
      %v3625 = vadd.f32 0.0, %v3624
      %v3626 = vpop.f32.mrf.mxu0
      %3627 = vmatprep.mubr.bf16.mxu0 0
      %3628 = vmatmul.mubr.bf16.gmra.mxu0 %v3470
      %v3629 = vpop.f32.mrf.mxu0
      %v3630 = vadd.f32 0.0, %v3629
      %v3631 = vpop.f32.mrf.mxu0
      %v3632 = vpop.f32.mrf.mxu0
      %v3633 = vadd.f32 0.0, %v3632
      %v3634 = vpop.f32.mrf.mxu0
      %3635 = vdwg.mxu0
      %v3636 = vld [vmem:[#allocation6] sm:$0xff]
      %v3637 = vld [vmem:[#allocation6 + $0x8] sm:$0xff]
      %v3638 = vld [vmem:[#allocation6 + $0x10] sm:$0xff]
      %v3639 = vld [vmem:[#allocation6 + $0x18] sm:$0xff]
      %v3640 = vld [vmem:[#allocation6 + $0x20] sm:$0xff]
      %v3641 = vld [vmem:[#allocation6 + $0x28] sm:$0xff]
      %v3642 = vld [vmem:[#allocation6 + $0x30] sm:$0xff]
      %v3643 = vld [vmem:[#allocation6 + $0x38] sm:$0xff]
      %v3644 = vld [vmem:[#allocation6 + $0x40] sm:$0xff]
      %v3645 = vld [vmem:[#allocation6 + $0x48] sm:$0xff]
      %v3646 = vld [vmem:[#allocation6 + $0x50] sm:$0xff]
      %v3647 = vld [vmem:[#allocation6 + $0x58] sm:$0xff]
      %v3648 = vld [vmem:[#allocation6 + $0x60] sm:$0xff]
      %v3649 = vld [vmem:[#allocation6 + $0x68] sm:$0xff]
      %v3650 = vld [vmem:[#allocation6 + $0x70] sm:$0xff]
      %v3651 = vld [vmem:[#allocation6 + $0x78] sm:$0xff]
      %v3652 = vld [vmem:[#allocation6 + $0x80] sm:$0xff]
      %v3653 = vld [vmem:[#allocation6 + $0x88] sm:$0xff]
      %v3654 = vld [vmem:[#allocation6 + $0x90] sm:$0xff]
      %v3655 = vld [vmem:[#allocation6 + $0x98] sm:$0xff]
      %v3656 = vld [vmem:[#allocation6 + $0xa0] sm:$0xff]
      %v3657 = vld [vmem:[#allocation6 + $0xa8] sm:$0xff]
      %v3658 = vld [vmem:[#allocation6 + $0xb0] sm:$0xff]
      %v3659 = vld [vmem:[#allocation6 + $0xb8] sm:$0xff]
      %v3660 = vld [vmem:[#allocation6 + $0xc0] sm:$0xff]
      %v3661 = vld [vmem:[#allocation6 + $0xc8] sm:$0xff]
      %v3662 = vld [vmem:[#allocation6 + $0xd0] sm:$0xff]
      %v3663 = vld [vmem:[#allocation6 + $0xd8] sm:$0xff]
      %v3664 = vld [vmem:[#allocation6 + $0xe0] sm:$0xff]
      %v3665 = vld [vmem:[#allocation6 + $0xe8] sm:$0xff]
      %v3666 = vld [vmem:[#allocation6 + $0xf0] sm:$0xff]
      %v3667 = vld [vmem:[#allocation6 + $0xf8] sm:$0xff]
      %v3668 = vadd.f32 %v3636, %v3510
      %v3669 = vadd.f32 %v3637, %v3513
      %v3670 = vadd.f32 %v3638, %v3518
      %v3671 = vadd.f32 %v3639, %v3521
      %v3672 = vadd.f32 %v3640, %v3526
      %v3673 = vadd.f32 %v3641, %v3529
      %v3674 = vadd.f32 %v3642, %v3534
      %v3675 = vadd.f32 %v3643, %v3537
      %v3676 = vadd.f32 %v3644, %v3542
      %v3677 = vadd.f32 %v3645, %v3545
      %v3678 = vadd.f32 %v3646, %v3550
      %v3679 = vadd.f32 %v3647, %v3553
      %v3680 = vadd.f32 %v3648, %v3558
      %v3681 = vadd.f32 %v3649, %v3561
      %v3682 = vadd.f32 %v3650, %v3566
      %v3683 = vadd.f32 %v3651, %v3569
      %v3684 = vadd.f32 %v3652, %v3574
      %v3685 = vadd.f32 %v3653, %v3577
      %v3686 = vadd.f32 %v3654, %v3582
      %v3687 = vadd.f32 %v3655, %v3585
      %v3688 = vadd.f32 %v3656, %v3590
      %v3689 = vadd.f32 %v3657, %v3593
      %v3690 = vadd.f32 %v3658, %v3598
      %v3691 = vadd.f32 %v3659, %v3601
      %v3692 = vadd.f32 %v3660, %v3606
      %v3693 = vadd.f32 %v3661, %v3609
      %v3694 = vadd.f32 %v3662, %v3614
      %v3695 = vadd.f32 %v3663, %v3617
      %v3696 = vadd.f32 %v3664, %v3622
      %v3697 = vadd.f32 %v3665, %v3625
      %v3698 = vadd.f32 %v3666, %v3630
      %v3699 = vadd.f32 %v3667, %v3633
      %3700 = vst.msk [vmem:[#allocation6] sm:$0xff] %vm226, %v3668
      %3701 = vst.msk [vmem:[#allocation6 + $0x8] sm:$0xff] %vm226, %v3669
      %3702 = vst.msk [vmem:[#allocation6 + $0x10] sm:$0xff] %vm226, %v3670
      %3703 = vst.msk [vmem:[#allocation6 + $0x18] sm:$0xff] %vm226, %v3671
      %3704 = vst.msk [vmem:[#allocation6 + $0x20] sm:$0xff] %vm226, %v3672
      %3705 = vst.msk [vmem:[#allocation6 + $0x28] sm:$0xff] %vm226, %v3673
      %3706 = vst.msk [vmem:[#allocation6 + $0x30] sm:$0xff] %vm226, %v3674
      %3707 = vst.msk [vmem:[#allocation6 + $0x38] sm:$0xff] %vm226, %v3675
      %3708 = vst.msk [vmem:[#allocation6 + $0x40] sm:$0xff] %vm226, %v3676
      %3709 = vst.msk [vmem:[#allocation6 + $0x48] sm:$0xff] %vm226, %v3677
      %3710 = vst.msk [vmem:[#allocation6 + $0x50] sm:$0xff] %vm226, %v3678
      %3711 = vst.msk [vmem:[#allocation6 + $0x58] sm:$0xff] %vm226, %v3679
      %3712 = vst.msk [vmem:[#allocation6 + $0x60] sm:$0xff] %vm226, %v3680
      %3713 = vst.msk [vmem:[#allocation6 + $0x68] sm:$0xff] %vm226, %v3681
      %3714 = vst.msk [vmem:[#allocation6 + $0x70] sm:$0xff] %vm226, %v3682
      %3715 = vst.msk [vmem:[#allocation6 + $0x78] sm:$0xff] %vm226, %v3683
      %3716 = vst.msk [vmem:[#allocation6 + $0x80] sm:$0xff] %vm226, %v3684
      %3717 = vst.msk [vmem:[#allocation6 + $0x88] sm:$0xff] %vm226, %v3685
      %3718 = vst.msk [vmem:[#allocation6 + $0x90] sm:$0xff] %vm226, %v3686
      %3719 = vst.msk [vmem:[#allocation6 + $0x98] sm:$0xff] %vm226, %v3687
      %3720 = vst.msk [vmem:[#allocation6 + $0xa0] sm:$0xff] %vm226, %v3688
      %3721 = vst.msk [vmem:[#allocation6 + $0xa8] sm:$0xff] %vm226, %v3689
      %3722 = vst.msk [vmem:[#allocation6 + $0xb0] sm:$0xff] %vm226, %v3690
      %3723 = vst.msk [vmem:[#allocation6 + $0xb8] sm:$0xff] %vm226, %v3691
      %3724 = vst.msk [vmem:[#allocation6 + $0xc0] sm:$0xff] %vm226, %v3692
      %3725 = vst.msk [vmem:[#allocation6 + $0xc8] sm:$0xff] %vm226, %v3693
      %3726 = vst.msk [vmem:[#allocation6 + $0xd0] sm:$0xff] %vm226, %v3694
      %3727 = vst.msk [vmem:[#allocation6 + $0xd8] sm:$0xff] %vm226, %v3695
      %3728 = vst.msk [vmem:[#allocation6 + $0xe0] sm:$0xff] %vm226, %v3696
      %3729 = vst.msk [vmem:[#allocation6 + $0xe8] sm:$0xff] %vm226, %v3697
      %3730 = vst.msk [vmem:[#allocation6 + $0xf0] sm:$0xff] %vm226, %v3698
      %3731 = vst.msk [vmem:[#allocation6 + $0xf8] sm:$0xff] %vm226, %v3699
      %v3732 = vld [vmem:[#allocation6] sm:$0xff]
      %v3733 = vld [vmem:[#allocation6 + $0x8] sm:$0xff]
      %v3734 = vld [vmem:[#allocation6 + $0x10] sm:$0xff]
      %v3735 = vld [vmem:[#allocation6 + $0x18] sm:$0xff]
      %v3736 = vld [vmem:[#allocation6 + $0x20] sm:$0xff]
      %v3737 = vld [vmem:[#allocation6 + $0x28] sm:$0xff]
      %v3738 = vld [vmem:[#allocation6 + $0x30] sm:$0xff]
      %v3739 = vld [vmem:[#allocation6 + $0x38] sm:$0xff]
      %v3740 = vld [vmem:[#allocation6 + $0x40] sm:$0xff]
      %v3741 = vld [vmem:[#allocation6 + $0x48] sm:$0xff]
      %v3742 = vld [vmem:[#allocation6 + $0x50] sm:$0xff]
      %v3743 = vld [vmem:[#allocation6 + $0x58] sm:$0xff]
      %v3744 = vld [vmem:[#allocation6 + $0x60] sm:$0xff]
      %v3745 = vld [vmem:[#allocation6 + $0x68] sm:$0xff]
      %v3746 = vld [vmem:[#allocation6 + $0x70] sm:$0xff]
      %v3747 = vld [vmem:[#allocation6 + $0x78] sm:$0xff]
      %v3748 = vld [vmem:[#allocation6 + $0x80] sm:$0xff]
      %v3749 = vld [vmem:[#allocation6 + $0x88] sm:$0xff]
      %v3750 = vld [vmem:[#allocation6 + $0x90] sm:$0xff]
      %v3751 = vld [vmem:[#allocation6 + $0x98] sm:$0xff]
      %v3752 = vld [vmem:[#allocation6 + $0xa0] sm:$0xff]
      %v3753 = vld [vmem:[#allocation6 + $0xa8] sm:$0xff]
      %v3754 = vld [vmem:[#allocation6 + $0xb0] sm:$0xff]
      %v3755 = vld [vmem:[#allocation6 + $0xb8] sm:$0xff]
      %v3756 = vld [vmem:[#allocation6 + $0xc0] sm:$0xff]
      %v3757 = vld [vmem:[#allocation6 + $0xc8] sm:$0xff]
      %v3758 = vld [vmem:[#allocation6 + $0xd0] sm:$0xff]
      %v3759 = vld [vmem:[#allocation6 + $0xd8] sm:$0xff]
      %v3760 = vld [vmem:[#allocation6 + $0xe0] sm:$0xff]
      %v3761 = vld [vmem:[#allocation6 + $0xe8] sm:$0xff]
      %v3762 = vld [vmem:[#allocation6 + $0xf0] sm:$0xff]
      %v3763 = vld [vmem:[#allocation6 + $0xf8] sm:$0xff]
      %v3764 = vld [vmem:[%s2] sm:$0x1]
      %v3766 = vlaneseq
      %v3767 = vshrl.u32 %v3766, 7
      %v3768 = vsub.s32 0, %v3767
      %v3769 = vrot.slane %v3764, %v3768
      %v3771 = vadd.f32 %v3732, %v3769
      %v3772 = vadd.f32 %v3733, %v3769
      %v3773 = vadd.f32 %v3734, %v3769
      %v3774 = vadd.f32 %v3735, %v3769
      %v3775 = vadd.f32 %v3736, %v3769
      %v3776 = vadd.f32 %v3737, %v3769
      %v3777 = vadd.f32 %v3738, %v3769
      %v3778 = vadd.f32 %v3739, %v3769
      %v3779 = vadd.f32 %v3740, %v3769
      %v3780 = vadd.f32 %v3741, %v3769
      %v3781 = vadd.f32 %v3742, %v3769
      %v3782 = vadd.f32 %v3743, %v3769
      %v3783 = vadd.f32 %v3744, %v3769
      %v3784 = vadd.f32 %v3745, %v3769
      %v3785 = vadd.f32 %v3746, %v3769
      %v3786 = vadd.f32 %v3747, %v3769
      %v3787 = vadd.f32 %v3748, %v3769
      %v3788 = vadd.f32 %v3749, %v3769
      %v3789 = vadd.f32 %v3750, %v3769
      %v3790 = vadd.f32 %v3751, %v3769
      %v3791 = vadd.f32 %v3752, %v3769
      %v3792 = vadd.f32 %v3753, %v3769
      %v3793 = vadd.f32 %v3754, %v3769
      %v3794 = vadd.f32 %v3755, %v3769
      %v3795 = vadd.f32 %v3756, %v3769
      %v3796 = vadd.f32 %v3757, %v3769
      %v3797 = vadd.f32 %v3758, %v3769
      %v3798 = vadd.f32 %v3759, %v3769
      %v3799 = vadd.f32 %v3760, %v3769
      %v3800 = vadd.f32 %v3761, %v3769
      %v3801 = vadd.f32 %v3762, %v3769
      %v3802 = vadd.f32 %v3763, %v3769
      %v3803 = vmax.f32 %v3771, 0.0
      %v3804 = vmax.f32 %v3772, 0.0
      %v3805 = vmax.f32 %v3773, 0.0
      %v3806 = vmax.f32 %v3774, 0.0
      %v3807 = vmax.f32 %v3775, 0.0
      %v3808 = vmax.f32 %v3776, 0.0
      %v3809 = vmax.f32 %v3777, 0.0
      %v3810 = vmax.f32 %v3778, 0.0
      %v3811 = vmax.f32 %v3779, 0.0
      %v3812 = vmax.f32 %v3780, 0.0
      %v3813 = vmax.f32 %v3781, 0.0
      %v3814 = vmax.f32 %v3782, 0.0
      %v3815 = vmax.f32 %v3783, 0.0
      %v3816 = vmax.f32 %v3784, 0.0
      %v3817 = vmax.f32 %v3785, 0.0
      %v3818 = vmax.f32 %v3786, 0.0
      %v3819 = vmax.f32 %v3787, 0.0
      %v3820 = vmax.f32 %v3788, 0.0
      %v3821 = vmax.f32 %v3789, 0.0
      %v3822 = vmax.f32 %v3790, 0.0
      %v3823 = vmax.f32 %v3791, 0.0
      %v3824 = vmax.f32 %v3792, 0.0
      %v3825 = vmax.f32 %v3793, 0.0
      %v3826 = vmax.f32 %v3794, 0.0
      %v3827 = vmax.f32 %v3795, 0.0
      %v3828 = vmax.f32 %v3796, 0.0
      %v3829 = vmax.f32 %v3797, 0.0
      %v3830 = vmax.f32 %v3798, 0.0
      %v3831 = vmax.f32 %v3799, 0.0
      %v3832 = vmax.f32 %v3800, 0.0
      %v3833 = vmax.f32 %v3801, 0.0
      %v3834 = vmax.f32 %v3802, 0.0
      %s3835 = scalar_lea.vmem [#allocation3], 24
      %3836 = vst.msk [vmem:[%s3835 + $0x1] sm:$0xff] %vm226, %v3803
      %3837 = vst.msk [vmem:[%s3835 + $0x9] sm:$0xff] %vm226, %v3804
      %3838 = vst.msk [vmem:[%s3835 + $0x19] sm:$0xff] %vm226, %v3805
      %3839 = vst.msk [vmem:[%s3835 + $0x21] sm:$0xff] %vm226, %v3806
      %3840 = vst.msk [vmem:[%s3835 + $0x31] sm:$0xff] %vm226, %v3807
      %3841 = vst.msk [vmem:[%s3835 + $0x39] sm:$0xff] %vm226, %v3808
      %3842 = vst.msk [vmem:[%s3835 + $0x49] sm:$0xff] %vm226, %v3809
      %3843 = vst.msk [vmem:[%s3835 + $0x51] sm:$0xff] %vm226, %v3810
      %3844 = vst.msk [vmem:[%s3835 + $0x61] sm:$0xff] %vm226, %v3811
      %3845 = vst.msk [vmem:[%s3835 + $0x69] sm:$0xff] %vm226, %v3812
      %3846 = vst.msk [vmem:[%s3835 + $0x79] sm:$0xff] %vm226, %v3813
      %3847 = vst.msk [vmem:[%s3835 + $0x81] sm:$0xff] %vm226, %v3814
      %3848 = vst.msk [vmem:[%s3835 + $0x91] sm:$0xff] %vm226, %v3815
      %3849 = vst.msk [vmem:[%s3835 + $0x99] sm:$0xff] %vm226, %v3816
      %3850 = vst.msk [vmem:[%s3835 + $0xa9] sm:$0xff] %vm226, %v3817
      %3851 = vst.msk [vmem:[%s3835 + $0xb1] sm:$0xff] %vm226, %v3818
      %3852 = vst.msk [vmem:[%s3835 + $0xc1] sm:$0xff] %vm226, %v3819
      %3853 = vst.msk [vmem:[%s3835 + $0xc9] sm:$0xff] %vm226, %v3820
      %3854 = vst.msk [vmem:[%s3835 + $0xd9] sm:$0xff] %vm226, %v3821
      %3855 = vst.msk [vmem:[%s3835 + $0xe1] sm:$0xff] %vm226, %v3822
      %3856 = vst.msk [vmem:[%s3835 + $0xf1] sm:$0xff] %vm226, %v3823
      %3857 = vst.msk [vmem:[%s3835 + $0xf9] sm:$0xff] %vm226, %v3824
      %3858 = vst.msk [vmem:[%s3835 + $0x109] sm:$0xff] %vm226, %v3825
      %3859 = vst.msk [vmem:[%s3835 + $0x111] sm:$0xff] %vm226, %v3826
      %3860 = vst.msk [vmem:[%s3835 + $0x121] sm:$0xff] %vm226, %v3827
      %3861 = vst.msk [vmem:[%s3835 + $0x129] sm:$0xff] %vm226, %v3828
      %3862 = vst.msk [vmem:[%s3835 + $0x139] sm:$0xff] %vm226, %v3829
      %3863 = vst.msk [vmem:[%s3835 + $0x141] sm:$0xff] %vm226, %v3830
      %3864 = vst.msk [vmem:[%s3835 + $0x151] sm:$0xff] %vm226, %v3831
      %3865 = vst.msk [vmem:[%s3835 + $0x159] sm:$0xff] %vm226, %v3832
      %3866 = vst.msk [vmem:[%s3835 + $0x169] sm:$0xff] %vm226, %v3833
      %3867 = vst.msk [vmem:[%s3835 + $0x171] sm:$0xff] %vm226, %v3834
      %v3868 = vld [vmem:[#allocation3] sm:$0xff]
      %v3869 = vld [vmem:[#allocation3 + $0x8] sm:$0xff]
      %v3870 = vld [vmem:[#allocation3 + $0x18] sm:$0xff]
      %v3871 = vld [vmem:[#allocation3 + $0x20] sm:$0xff]
      %v3872 = vld [vmem:[#allocation3 + $0x30] sm:$0xff]
      %v3873 = vld [vmem:[#allocation3 + $0x38] sm:$0xff]
      %v3874 = vld [vmem:[#allocation3 + $0x48] sm:$0xff]
      %v3875 = vld [vmem:[#allocation3 + $0x50] sm:$0xff]
      %v3876 = vld [vmem:[#allocation3 + $0x60] sm:$0xff]
      %v3877 = vld [vmem:[#allocation3 + $0x68] sm:$0xff]
      %v3878 = vld [vmem:[#allocation3 + $0x78] sm:$0xff]
      %v3879 = vld [vmem:[#allocation3 + $0x80] sm:$0xff]
      %v3880 = vld [vmem:[#allocation3 + $0x90] sm:$0xff]
      %v3881 = vld [vmem:[#allocation3 + $0x98] sm:$0xff]
      %v3882 = vld [vmem:[#allocation3 + $0xa8] sm:$0xff]
      %v3883 = vld [vmem:[#allocation3 + $0xb0] sm:$0xff]
      %v3884 = vld [vmem:[#allocation3 + $0xc0] sm:$0xff]
      %v3885 = vld [vmem:[#allocation3 + $0xc8] sm:$0xff]
      %v3886 = vld [vmem:[#allocation3 + $0xd8] sm:$0xff]
      %v3887 = vld [vmem:[#allocation3 + $0xe0] sm:$0xff]
      %v3888 = vld [vmem:[#allocation3 + $0xf0] sm:$0xff]
      %v3889 = vld [vmem:[#allocation3 + $0xf8] sm:$0xff]
      %v3890 = vld [vmem:[#allocation3 + $0x108] sm:$0xff]
      %v3891 = vld [vmem:[#allocation3 + $0x110] sm:$0xff]
      %v3892 = vld [vmem:[#allocation3 + $0x120] sm:$0xff]
      %v3893 = vld [vmem:[#allocation3 + $0x128] sm:$0xff]
      %v3894 = vld [vmem:[#allocation3 + $0x138] sm:$0xff]
      %v3895 = vld [vmem:[#allocation3 + $0x140] sm:$0xff]
      %v3896 = vld [vmem:[#allocation3 + $0x150] sm:$0xff]
      %v3897 = vld [vmem:[#allocation3 + $0x158] sm:$0xff]
      %v3898 = vld [vmem:[#allocation3 + $0x168] sm:$0xff]
      %v3899 = vld [vmem:[#allocation3 + $0x170] sm:$0xff]
      %v3900 = vpack.c.bf16 %v3869, %v3868
      %v3901 = vpack.c.bf16 %v3871, %v3870
      %v3902 = vpack.c.bf16 %v3873, %v3872
      %v3903 = vpack.c.bf16 %v3875, %v3874
      %v3904 = vpack.c.bf16 %v3877, %v3876
      %v3905 = vpack.c.bf16 %v3879, %v3878
      %v3906 = vpack.c.bf16 %v3881, %v3880
      %v3907 = vpack.c.bf16 %v3883, %v3882
      %v3908 = vpack.c.bf16 %v3885, %v3884
      %v3909 = vpack.c.bf16 %v3887, %v3886
      %v3910 = vpack.c.bf16 %v3889, %v3888
      %v3911 = vpack.c.bf16 %v3891, %v3890
      %v3912 = vpack.c.bf16 %v3893, %v3892
      %v3913 = vpack.c.bf16 %v3895, %v3894
      %v3914 = vpack.c.bf16 %v3897, %v3896
      %v3915 = vpack.c.bf16 %v3899, %v3898
      %v3932 = vunpack.c.l.b16 %v3900
      %v3933 = vunpack.c.h.b16 %v3900
      %v3934 = vunpack.c.l.b16 %v3901
      %v3935 = vunpack.c.h.b16 %v3901
      %v3936 = vunpack.c.l.b16 %v3902
      %v3937 = vunpack.c.h.b16 %v3902
      %v3938 = vunpack.c.l.b16 %v3903
      %v3939 = vunpack.c.h.b16 %v3903
      %v3940 = vunpack.c.l.b16 %v3904
      %v3941 = vunpack.c.h.b16 %v3904
      %v3942 = vunpack.c.l.b16 %v3905
      %v3943 = vunpack.c.h.b16 %v3905
      %v3944 = vunpack.c.l.b16 %v3906
      %v3945 = vunpack.c.h.b16 %v3906
      %v3946 = vunpack.c.l.b16 %v3907
      %v3947 = vunpack.c.h.b16 %v3907
      %v3948 = vunpack.c.l.b16 %v3908
      %v3949 = vunpack.c.h.b16 %v3908
      %v3950 = vunpack.c.l.b16 %v3909
      %v3951 = vunpack.c.h.b16 %v3909
      %v3952 = vunpack.c.l.b16 %v3910
      %v3953 = vunpack.c.h.b16 %v3910
      %v3954 = vunpack.c.l.b16 %v3911
      %v3955 = vunpack.c.h.b16 %v3911
      %v3956 = vunpack.c.l.b16 %v3912
      %v3957 = vunpack.c.h.b16 %v3912
      %v3958 = vunpack.c.l.b16 %v3913
      %v3959 = vunpack.c.h.b16 %v3913
      %v3960 = vunpack.c.l.b16 %v3914
      %v3961 = vunpack.c.h.b16 %v3914
      %v3962 = vunpack.c.l.b16 %v3915
      %v3963 = vunpack.c.h.b16 %v3915
      %v3964 = vpack.c.b16 %v3932, %v3932
      %v3965 = vpack.c.b16 %v3933, %v3933
      %v3966 = vpack.c.b16 %v3934, %v3934
      %v3967 = vpack.c.b16 %v3935, %v3935
      %v3968 = vpack.c.b16 %v3936, %v3936
      %v3969 = vpack.c.b16 %v3937, %v3937
      %v3970 = vpack.c.b16 %v3938, %v3938
      %v3971 = vpack.c.b16 %v3939, %v3939
      %v3972 = vpack.c.b16 %v3940, %v3940
      %v3973 = vpack.c.b16 %v3941, %v3941
      %v3974 = vpack.c.b16 %v3942, %v3942
      %v3975 = vpack.c.b16 %v3943, %v3943
      %v3976 = vpack.c.b16 %v3944, %v3944
      %v3977 = vpack.c.b16 %v3945, %v3945
      %v3978 = vpack.c.b16 %v3946, %v3946
      %v3979 = vpack.c.b16 %v3947, %v3947
      %v3980 = vpack.c.b16 %v3948, %v3948
      %v3981 = vpack.c.b16 %v3949, %v3949
      %v3982 = vpack.c.b16 %v3950, %v3950
      %v3983 = vpack.c.b16 %v3951, %v3951
      %v3984 = vpack.c.b16 %v3952, %v3952
      %v3985 = vpack.c.b16 %v3953, %v3953
      %v3986 = vpack.c.b16 %v3954, %v3954
      %v3987 = vpack.c.b16 %v3955, %v3955
      %v3988 = vpack.c.b16 %v3956, %v3956
      %v3989 = vpack.c.b16 %v3957, %v3957
      %v3990 = vpack.c.b16 %v3958, %v3958
      %v3991 = vpack.c.b16 %v3959, %v3959
      %v3992 = vpack.c.b16 %v3960, %v3960
      %v3993 = vpack.c.b16 %v3961, %v3961
      %v3994 = vpack.c.b16 %v3962, %v3962
      %v3995 = vpack.c.b16 %v3963, %v3963
      %4028 = vst.msk [vmem:[#allocation5] sm:$0xf] %vm540, %v3964
      %4029 = vst.msk [vmem:[#allocation5 + $0x4] sm:$0xf] %vm540, %v3965
      %4030 = vst.msk [vmem:[#allocation5 + $0x8] sm:$0xf] %vm540, %v3966
      %4031 = vst.msk [vmem:[#allocation5 + $0xc] sm:$0xf] %vm540, %v3967
      %4032 = vst.msk [vmem:[#allocation5 + $0x10] sm:$0xf] %vm540, %v3968
      %4033 = vst.msk [vmem:[#allocation5 + $0x14] sm:$0xf] %vm540, %v3969
      %4034 = vst.msk [vmem:[#allocation5 + $0x18] sm:$0xf] %vm540, %v3970
      %4035 = vst.msk [vmem:[#allocation5 + $0x1c] sm:$0xf] %vm540, %v3971
      %4036 = vst.msk [vmem:[#allocation5 + $0x20] sm:$0xf] %vm540, %v3972
      %4037 = vst.msk [vmem:[#allocation5 + $0x24] sm:$0xf] %vm540, %v3973
      %4038 = vst.msk [vmem:[#allocation5 + $0x28] sm:$0xf] %vm540, %v3974
      %4039 = vst.msk [vmem:[#allocation5 + $0x2c] sm:$0xf] %vm540, %v3975
      %4040 = vst.msk [vmem:[#allocation5 + $0x30] sm:$0xf] %vm540, %v3976
      %4041 = vst.msk [vmem:[#allocation5 + $0x34] sm:$0xf] %vm540, %v3977
      %4042 = vst.msk [vmem:[#allocation5 + $0x38] sm:$0xf] %vm540, %v3978
      %4043 = vst.msk [vmem:[#allocation5 + $0x3c] sm:$0xf] %vm540, %v3979
      %4044 = vst.msk [vmem:[#allocation5 + $0x40] sm:$0xf] %vm540, %v3980
      %4045 = vst.msk [vmem:[#allocation5 + $0x44] sm:$0xf] %vm540, %v3981
      %4046 = vst.msk [vmem:[#allocation5 + $0x48] sm:$0xf] %vm540, %v3982
      %4047 = vst.msk [vmem:[#allocation5 + $0x4c] sm:$0xf] %vm540, %v3983
      %4048 = vst.msk [vmem:[#allocation5 + $0x50] sm:$0xf] %vm540, %v3984
      %4049 = vst.msk [vmem:[#allocation5 + $0x54] sm:$0xf] %vm540, %v3985
      %4050 = vst.msk [vmem:[#allocation5 + $0x58] sm:$0xf] %vm540, %v3986
      %4051 = vst.msk [vmem:[#allocation5 + $0x5c] sm:$0xf] %vm540, %v3987
      %4052 = vst.msk [vmem:[#allocation5 + $0x60] sm:$0xf] %vm540, %v3988
      %4053 = vst.msk [vmem:[#allocation5 + $0x64] sm:$0xf] %vm540, %v3989
      %4054 = vst.msk [vmem:[#allocation5 + $0x68] sm:$0xf] %vm540, %v3990
      %4055 = vst.msk [vmem:[#allocation5 + $0x6c] sm:$0xf] %vm540, %v3991
      %4056 = vst.msk [vmem:[#allocation5 + $0x70] sm:$0xf] %vm540, %v3992
      %4057 = vst.msk [vmem:[#allocation5 + $0x74] sm:$0xf] %vm540, %v3993
      %4058 = vst.msk [vmem:[#allocation5 + $0x78] sm:$0xf] %vm540, %v3994
      %4059 = vst.msk [vmem:[#allocation5 + $0x7c] sm:$0xf] %vm540, %v3995
      %v4060 = vld [vmem:[#allocation3 + $0x1] sm:$0xff]
      %v4061 = vld [vmem:[#allocation3 + $0x9] sm:$0xff]
      %v4062 = vld [vmem:[#allocation3 + $0x19] sm:$0xff]
      %v4063 = vld [vmem:[#allocation3 + $0x21] sm:$0xff]
      %v4064 = vld [vmem:[#allocation3 + $0x31] sm:$0xff]
      %v4065 = vld [vmem:[#allocation3 + $0x39] sm:$0xff]
      %v4066 = vld [vmem:[#allocation3 + $0x49] sm:$0xff]
      %v4067 = vld [vmem:[#allocation3 + $0x51] sm:$0xff]
      %v4068 = vld [vmem:[#allocation3 + $0x61] sm:$0xff]
      %v4069 = vld [vmem:[#allocation3 + $0x69] sm:$0xff]
      %v4070 = vld [vmem:[#allocation3 + $0x79] sm:$0xff]
      %v4071 = vld [vmem:[#allocation3 + $0x81] sm:$0xff]
      %v4072 = vld [vmem:[#allocation3 + $0x91] sm:$0xff]
      %v4073 = vld [vmem:[#allocation3 + $0x99] sm:$0xff]
      %v4074 = vld [vmem:[#allocation3 + $0xa9] sm:$0xff]
      %v4075 = vld [vmem:[#allocation3 + $0xb1] sm:$0xff]
      %v4076 = vld [vmem:[#allocation3 + $0xc1] sm:$0xff]
      %v4077 = vld [vmem:[#allocation3 + $0xc9] sm:$0xff]
      %v4078 = vld [vmem:[#allocation3 + $0xd9] sm:$0xff]
      %v4079 = vld [vmem:[#allocation3 + $0xe1] sm:$0xff]
      %v4080 = vld [vmem:[#allocation3 + $0xf1] sm:$0xff]
      %v4081 = vld [vmem:[#allocation3 + $0xf9] sm:$0xff]
      %v4082 = vld [vmem:[#allocation3 + $0x109] sm:$0xff]
      %v4083 = vld [vmem:[#allocation3 + $0x111] sm:$0xff]
      %v4084 = vld [vmem:[#allocation3 + $0x121] sm:$0xff]
      %v4085 = vld [vmem:[#allocation3 + $0x129] sm:$0xff]
      %v4086 = vld [vmem:[#allocation3 + $0x139] sm:$0xff]
      %v4087 = vld [vmem:[#allocation3 + $0x141] sm:$0xff]
      %v4088 = vld [vmem:[#allocation3 + $0x151] sm:$0xff]
      %v4089 = vld [vmem:[#allocation3 + $0x159] sm:$0xff]
      %v4090 = vld [vmem:[#allocation3 + $0x169] sm:$0xff]
      %v4091 = vld [vmem:[#allocation3 + $0x171] sm:$0xff]
      %v4092 = vpack.c.bf16 %v4061, %v4060
      %v4093 = vpack.c.bf16 %v4063, %v4062
      %v4094 = vpack.c.bf16 %v4065, %v4064
      %v4095 = vpack.c.bf16 %v4067, %v4066
      %v4096 = vpack.c.bf16 %v4069, %v4068
      %v4097 = vpack.c.bf16 %v4071, %v4070
      %v4098 = vpack.c.bf16 %v4073, %v4072
      %v4099 = vpack.c.bf16 %v4075, %v4074
      %v4100 = vpack.c.bf16 %v4077, %v4076
      %v4101 = vpack.c.bf16 %v4079, %v4078
      %v4102 = vpack.c.bf16 %v4081, %v4080
      %v4103 = vpack.c.bf16 %v4083, %v4082
      %v4104 = vpack.c.bf16 %v4085, %v4084
      %v4105 = vpack.c.bf16 %v4087, %v4086
      %v4106 = vpack.c.bf16 %v4089, %v4088
      %v4107 = vpack.c.bf16 %v4091, %v4090
      %v4124 = vunpack.c.l.b16 %v4092
      %v4125 = vunpack.c.h.b16 %v4092
      %v4126 = vunpack.c.l.b16 %v4093
      %v4127 = vunpack.c.h.b16 %v4093
      %v4128 = vunpack.c.l.b16 %v4094
      %v4129 = vunpack.c.h.b16 %v4094
      %v4130 = vunpack.c.l.b16 %v4095
      %v4131 = vunpack.c.h.b16 %v4095
      %v4132 = vunpack.c.l.b16 %v4096
      %v4133 = vunpack.c.h.b16 %v4096
      %v4134 = vunpack.c.l.b16 %v4097
      %v4135 = vunpack.c.h.b16 %v4097
      %v4136 = vunpack.c.l.b16 %v4098
      %v4137 = vunpack.c.h.b16 %v4098
      %v4138 = vunpack.c.l.b16 %v4099
      %v4139 = vunpack.c.h.b16 %v4099
      %v4140 = vunpack.c.l.b16 %v4100
      %v4141 = vunpack.c.h.b16 %v4100
      %v4142 = vunpack.c.l.b16 %v4101
      %v4143 = vunpack.c.h.b16 %v4101
      %v4144 = vunpack.c.l.b16 %v4102
      %v4145 = vunpack.c.h.b16 %v4102
      %v4146 = vunpack.c.l.b16 %v4103
      %v4147 = vunpack.c.h.b16 %v4103
      %v4148 = vunpack.c.l.b16 %v4104
      %v4149 = vunpack.c.h.b16 %v4104
      %v4150 = vunpack.c.l.b16 %v4105
      %v4151 = vunpack.c.h.b16 %v4105
      %v4152 = vunpack.c.l.b16 %v4106
      %v4153 = vunpack.c.h.b16 %v4106
      %v4154 = vunpack.c.l.b16 %v4107
      %v4155 = vunpack.c.h.b16 %v4107
      %v4156 = vpack.c.b16 %v4124, %v4124
      %v4157 = vpack.c.b16 %v4125, %v4125
      %v4158 = vpack.c.b16 %v4126, %v4126
      %v4159 = vpack.c.b16 %v4127, %v4127
      %v4160 = vpack.c.b16 %v4128, %v4128
      %v4161 = vpack.c.b16 %v4129, %v4129
      %v4162 = vpack.c.b16 %v4130, %v4130
      %v4163 = vpack.c.b16 %v4131, %v4131
      %v4164 = vpack.c.b16 %v4132, %v4132
      %v4165 = vpack.c.b16 %v4133, %v4133
      %v4166 = vpack.c.b16 %v4134, %v4134
      %v4167 = vpack.c.b16 %v4135, %v4135
      %v4168 = vpack.c.b16 %v4136, %v4136
      %v4169 = vpack.c.b16 %v4137, %v4137
      %v4170 = vpack.c.b16 %v4138, %v4138
      %v4171 = vpack.c.b16 %v4139, %v4139
      %v4172 = vpack.c.b16 %v4140, %v4140
      %v4173 = vpack.c.b16 %v4141, %v4141
      %v4174 = vpack.c.b16 %v4142, %v4142
      %v4175 = vpack.c.b16 %v4143, %v4143
      %v4176 = vpack.c.b16 %v4144, %v4144
      %v4177 = vpack.c.b16 %v4145, %v4145
      %v4178 = vpack.c.b16 %v4146, %v4146
      %v4179 = vpack.c.b16 %v4147, %v4147
      %v4180 = vpack.c.b16 %v4148, %v4148
      %v4181 = vpack.c.b16 %v4149, %v4149
      %v4182 = vpack.c.b16 %v4150, %v4150
      %v4183 = vpack.c.b16 %v4151, %v4151
      %v4184 = vpack.c.b16 %v4152, %v4152
      %v4185 = vpack.c.b16 %v4153, %v4153
      %v4186 = vpack.c.b16 %v4154, %v4154
      %v4187 = vpack.c.b16 %v4155, %v4155
      %4188 = vrot.lane.b32.xlu0 %v4156, 8
      %v4189 = vpop.permute.xlu0 %4188
      %4190 = vrot.lane.b32.xlu0 %v4157, 8
      %v4191 = vpop.permute.xlu0 %4190
      %4192 = vrot.lane.b32.xlu0 %v4158, 8
      %v4193 = vpop.permute.xlu0 %4192
      %4194 = vrot.lane.b32.xlu0 %v4159, 8
      %v4195 = vpop.permute.xlu0 %4194
      %4196 = vrot.lane.b32.xlu0 %v4160, 8
      %v4197 = vpop.permute.xlu0 %4196
      %4198 = vrot.lane.b32.xlu0 %v4161, 8
      %v4199 = vpop.permute.xlu0 %4198
      %4200 = vrot.lane.b32.xlu0 %v4162, 8
      %v4201 = vpop.permute.xlu0 %4200
      %4202 = vrot.lane.b32.xlu0 %v4163, 8
      %v4203 = vpop.permute.xlu0 %4202
      %4204 = vrot.lane.b32.xlu0 %v4164, 8
      %v4205 = vpop.permute.xlu0 %4204
      %4206 = vrot.lane.b32.xlu0 %v4165, 8
      %v4207 = vpop.permute.xlu0 %4206
      %4208 = vrot.lane.b32.xlu0 %v4166, 8
      %v4209 = vpop.permute.xlu0 %4208
      %4210 = vrot.lane.b32.xlu0 %v4167, 8
      %v4211 = vpop.permute.xlu0 %4210
      %4212 = vrot.lane.b32.xlu0 %v4168, 8
      %v4213 = vpop.permute.xlu0 %4212
      %4214 = vrot.lane.b32.xlu0 %v4169, 8
      %v4215 = vpop.permute.xlu0 %4214
      %4216 = vrot.lane.b32.xlu0 %v4170, 8
      %v4217 = vpop.permute.xlu0 %4216
      %4218 = vrot.lane.b32.xlu0 %v4171, 8
      %v4219 = vpop.permute.xlu0 %4218
      %4220 = vrot.lane.b32.xlu0 %v4172, 8
      %v4221 = vpop.permute.xlu0 %4220
      %4222 = vrot.lane.b32.xlu0 %v4173, 8
      %v4223 = vpop.permute.xlu0 %4222
      %4224 = vrot.lane.b32.xlu0 %v4174, 8
      %v4225 = vpop.permute.xlu0 %4224
      %4226 = vrot.lane.b32.xlu0 %v4175, 8
      %v4227 = vpop.permute.xlu0 %4226
      %4228 = vrot.lane.b32.xlu0 %v4176, 8
      %v4229 = vpop.permute.xlu0 %4228
      %4230 = vrot.lane.b32.xlu0 %v4177, 8
      %v4231 = vpop.permute.xlu0 %4230
      %4232 = vrot.lane.b32.xlu0 %v4178, 8
      %v4233 = vpop.permute.xlu0 %4232
      %4234 = vrot.lane.b32.xlu0 %v4179, 8
      %v4235 = vpop.permute.xlu0 %4234
      %4236 = vrot.lane.b32.xlu0 %v4180, 8
      %v4237 = vpop.permute.xlu0 %4236
      %4238 = vrot.lane.b32.xlu0 %v4181, 8
      %v4239 = vpop.permute.xlu0 %4238
      %4240 = vrot.lane.b32.xlu0 %v4182, 8
      %v4241 = vpop.permute.xlu0 %4240
      %4242 = vrot.lane.b32.xlu0 %v4183, 8
      %v4243 = vpop.permute.xlu0 %4242
      %4244 = vrot.lane.b32.xlu0 %v4184, 8
      %v4245 = vpop.permute.xlu0 %4244
      %4246 = vrot.lane.b32.xlu0 %v4185, 8
      %v4247 = vpop.permute.xlu0 %4246
      %4248 = vrot.lane.b32.xlu0 %v4186, 8
      %v4249 = vpop.permute.xlu0 %4248
      %4250 = vrot.lane.b32.xlu0 %v4187, 8
      %v4251 = vpop.permute.xlu0 %4250
      %4284 = vst.msk [vmem:[#allocation5] sm:$0xf] %vm797, %v4189
      %4285 = vst.msk [vmem:[#allocation5 + $0x4] sm:$0xf] %vm797, %v4191
      %4286 = vst.msk [vmem:[#allocation5 + $0x8] sm:$0xf] %vm797, %v4193
      %4287 = vst.msk [vmem:[#allocation5 + $0xc] sm:$0xf] %vm797, %v4195
      %4288 = vst.msk [vmem:[#allocation5 + $0x10] sm:$0xf] %vm797, %v4197
      %4289 = vst.msk [vmem:[#allocation5 + $0x14] sm:$0xf] %vm797, %v4199
      %4290 = vst.msk [vmem:[#allocation5 + $0x18] sm:$0xf] %vm797, %v4201
      %4291 = vst.msk [vmem:[#allocation5 + $0x1c] sm:$0xf] %vm797, %v4203
      %4292 = vst.msk [vmem:[#allocation5 + $0x20] sm:$0xf] %vm797, %v4205
      %4293 = vst.msk [vmem:[#allocation5 + $0x24] sm:$0xf] %vm797, %v4207
      %4294 = vst.msk [vmem:[#allocation5 + $0x28] sm:$0xf] %vm797, %v4209
      %4295 = vst.msk [vmem:[#allocation5 + $0x2c] sm:$0xf] %vm797, %v4211
      %4296 = vst.msk [vmem:[#allocation5 + $0x30] sm:$0xf] %vm797, %v4213
      %4297 = vst.msk [vmem:[#allocation5 + $0x34] sm:$0xf] %vm797, %v4215
      %4298 = vst.msk [vmem:[#allocation5 + $0x38] sm:$0xf] %vm797, %v4217
      %4299 = vst.msk [vmem:[#allocation5 + $0x3c] sm:$0xf] %vm797, %v4219
      %4300 = vst.msk [vmem:[#allocation5 + $0x40] sm:$0xf] %vm797, %v4221
      %4301 = vst.msk [vmem:[#allocation5 + $0x44] sm:$0xf] %vm797, %v4223
      %4302 = vst.msk [vmem:[#allocation5 + $0x48] sm:$0xf] %vm797, %v4225
      %4303 = vst.msk [vmem:[#allocation5 + $0x4c] sm:$0xf] %vm797, %v4227
      %4304 = vst.msk [vmem:[#allocation5 + $0x50] sm:$0xf] %vm797, %v4229
      %4305 = vst.msk [vmem:[#allocation5 + $0x54] sm:$0xf] %vm797, %v4231
      %4306 = vst.msk [vmem:[#allocation5 + $0x58] sm:$0xf] %vm797, %v4233
      %4307 = vst.msk [vmem:[#allocation5 + $0x5c] sm:$0xf] %vm797, %v4235
      %4308 = vst.msk [vmem:[#allocation5 + $0x60] sm:$0xf] %vm797, %v4237
      %4309 = vst.msk [vmem:[#allocation5 + $0x64] sm:$0xf] %vm797, %v4239
      %4310 = vst.msk [vmem:[#allocation5 + $0x68] sm:$0xf] %vm797, %v4241
      %4311 = vst.msk [vmem:[#allocation5 + $0x6c] sm:$0xf] %vm797, %v4243
      %4312 = vst.msk [vmem:[#allocation5 + $0x70] sm:$0xf] %vm797, %v4245
      %4313 = vst.msk [vmem:[#allocation5 + $0x74] sm:$0xf] %vm797, %v4247
      %4314 = vst.msk [vmem:[#allocation5 + $0x78] sm:$0xf] %vm797, %v4249
      %4315 = vst.msk [vmem:[#allocation5 + $0x7c] sm:$0xf] %vm797, %v4251
      %v4316 = vld [vmem:[#allocation3 + $0x2] sm:$0xff]
      %v4317 = vld [vmem:[#allocation3 + $0xa] sm:$0xff]
      %v4318 = vld [vmem:[#allocation3 + $0x1a] sm:$0xff]
      %v4319 = vld [vmem:[#allocation3 + $0x22] sm:$0xff]
      %v4320 = vld [vmem:[#allocation3 + $0x32] sm:$0xff]
      %v4321 = vld [vmem:[#allocation3 + $0x3a] sm:$0xff]
      %v4322 = vld [vmem:[#allocation3 + $0x4a] sm:$0xff]
      %v4323 = vld [vmem:[#allocation3 + $0x52] sm:$0xff]
      %v4324 = vld [vmem:[#allocation3 + $0x62] sm:$0xff]
      %v4325 = vld [vmem:[#allocation3 + $0x6a] sm:$0xff]
      %v4326 = vld [vmem:[#allocation3 + $0x7a] sm:$0xff]
      %v4327 = vld [vmem:[#allocation3 + $0x82] sm:$0xff]
      %v4328 = vld [vmem:[#allocation3 + $0x92] sm:$0xff]
      %v4329 = vld [vmem:[#allocation3 + $0x9a] sm:$0xff]
      %v4330 = vld [vmem:[#allocation3 + $0xaa] sm:$0xff]
      %v4331 = vld [vmem:[#allocation3 + $0xb2] sm:$0xff]
      %v4332 = vld [vmem:[#allocation3 + $0xc2] sm:$0xff]
      %v4333 = vld [vmem:[#allocation3 + $0xca] sm:$0xff]
      %v4334 = vld [vmem:[#allocation3 + $0xda] sm:$0xff]
      %v4335 = vld [vmem:[#allocation3 + $0xe2] sm:$0xff]
      %v4336 = vld [vmem:[#allocation3 + $0xf2] sm:$0xff]
      %v4337 = vld [vmem:[#allocation3 + $0xfa] sm:$0xff]
      %v4338 = vld [vmem:[#allocation3 + $0x10a] sm:$0xff]
      %v4339 = vld [vmem:[#allocation3 + $0x112] sm:$0xff]
      %v4340 = vld [vmem:[#allocation3 + $0x122] sm:$0xff]
      %v4341 = vld [vmem:[#allocation3 + $0x12a] sm:$0xff]
      %v4342 = vld [vmem:[#allocation3 + $0x13a] sm:$0xff]
      %v4343 = vld [vmem:[#allocation3 + $0x142] sm:$0xff]
      %v4344 = vld [vmem:[#allocation3 + $0x152] sm:$0xff]
      %v4345 = vld [vmem:[#allocation3 + $0x15a] sm:$0xff]
      %v4346 = vld [vmem:[#allocation3 + $0x16a] sm:$0xff]
      %v4347 = vld [vmem:[#allocation3 + $0x172] sm:$0xff]
      %v4348 = vpack.c.bf16 %v4317, %v4316
      %v4349 = vpack.c.bf16 %v4319, %v4318
      %v4350 = vpack.c.bf16 %v4321, %v4320
      %v4351 = vpack.c.bf16 %v4323, %v4322
      %v4352 = vpack.c.bf16 %v4325, %v4324
      %v4353 = vpack.c.bf16 %v4327, %v4326
      %v4354 = vpack.c.bf16 %v4329, %v4328
      %v4355 = vpack.c.bf16 %v4331, %v4330
      %v4356 = vpack.c.bf16 %v4333, %v4332
      %v4357 = vpack.c.bf16 %v4335, %v4334
      %v4358 = vpack.c.bf16 %v4337, %v4336
      %v4359 = vpack.c.bf16 %v4339, %v4338
      %v4360 = vpack.c.bf16 %v4341, %v4340
      %v4361 = vpack.c.bf16 %v4343, %v4342
      %v4362 = vpack.c.bf16 %v4345, %v4344
      %v4363 = vpack.c.bf16 %v4347, %v4346
      %v4380 = vunpack.c.l.b16 %v4348
      %v4381 = vunpack.c.h.b16 %v4348
      %v4382 = vunpack.c.l.b16 %v4349
      %v4383 = vunpack.c.h.b16 %v4349
      %v4384 = vunpack.c.l.b16 %v4350
      %v4385 = vunpack.c.h.b16 %v4350
      %v4386 = vunpack.c.l.b16 %v4351
      %v4387 = vunpack.c.h.b16 %v4351
      %v4388 = vunpack.c.l.b16 %v4352
      %v4389 = vunpack.c.h.b16 %v4352
      %v4390 = vunpack.c.l.b16 %v4353
      %v4391 = vunpack.c.h.b16 %v4353
      %v4392 = vunpack.c.l.b16 %v4354
      %v4393 = vunpack.c.h.b16 %v4354
      %v4394 = vunpack.c.l.b16 %v4355
      %v4395 = vunpack.c.h.b16 %v4355
      %v4396 = vunpack.c.l.b16 %v4356
      %v4397 = vunpack.c.h.b16 %v4356
      %v4398 = vunpack.c.l.b16 %v4357
      %v4399 = vunpack.c.h.b16 %v4357
      %v4400 = vunpack.c.l.b16 %v4358
      %v4401 = vunpack.c.h.b16 %v4358
      %v4402 = vunpack.c.l.b16 %v4359
      %v4403 = vunpack.c.h.b16 %v4359
      %v4404 = vunpack.c.l.b16 %v4360
      %v4405 = vunpack.c.h.b16 %v4360
      %v4406 = vunpack.c.l.b16 %v4361
      %v4407 = vunpack.c.h.b16 %v4361
      %v4408 = vunpack.c.l.b16 %v4362
      %v4409 = vunpack.c.h.b16 %v4362
      %v4410 = vunpack.c.l.b16 %v4363
      %v4411 = vunpack.c.h.b16 %v4363
      %v4412 = vpack.c.b16 %v4380, %v4380
      %v4413 = vpack.c.b16 %v4381, %v4381
      %v4414 = vpack.c.b16 %v4382, %v4382
      %v4415 = vpack.c.b16 %v4383, %v4383
      %v4416 = vpack.c.b16 %v4384, %v4384
      %v4417 = vpack.c.b16 %v4385, %v4385
      %v4418 = vpack.c.b16 %v4386, %v4386
      %v4419 = vpack.c.b16 %v4387, %v4387
      %v4420 = vpack.c.b16 %v4388, %v4388
      %v4421 = vpack.c.b16 %v4389, %v4389
      %v4422 = vpack.c.b16 %v4390, %v4390
      %v4423 = vpack.c.b16 %v4391, %v4391
      %v4424 = vpack.c.b16 %v4392, %v4392
      %v4425 = vpack.c.b16 %v4393, %v4393
      %v4426 = vpack.c.b16 %v4394, %v4394
      %v4427 = vpack.c.b16 %v4395, %v4395
      %v4428 = vpack.c.b16 %v4396, %v4396
      %v4429 = vpack.c.b16 %v4397, %v4397
      %v4430 = vpack.c.b16 %v4398, %v4398
      %v4431 = vpack.c.b16 %v4399, %v4399
      %v4432 = vpack.c.b16 %v4400, %v4400
      %v4433 = vpack.c.b16 %v4401, %v4401
      %v4434 = vpack.c.b16 %v4402, %v4402
      %v4435 = vpack.c.b16 %v4403, %v4403
      %v4436 = vpack.c.b16 %v4404, %v4404
      %v4437 = vpack.c.b16 %v4405, %v4405
      %v4438 = vpack.c.b16 %v4406, %v4406
      %v4439 = vpack.c.b16 %v4407, %v4407
      %v4440 = vpack.c.b16 %v4408, %v4408
      %v4441 = vpack.c.b16 %v4409, %v4409
      %v4442 = vpack.c.b16 %v4410, %v4410
      %v4443 = vpack.c.b16 %v4411, %v4411
      %4444 = vrot.lane.b32.xlu0 %v4412, 16
      %v4445 = vpop.permute.xlu0 %4444
      %4446 = vrot.lane.b32.xlu0 %v4413, 16
      %v4447 = vpop.permute.xlu0 %4446
      %4448 = vrot.lane.b32.xlu0 %v4414, 16
      %v4449 = vpop.permute.xlu0 %4448
      %4450 = vrot.lane.b32.xlu0 %v4415, 16
      %v4451 = vpop.permute.xlu0 %4450
      %4452 = vrot.lane.b32.xlu0 %v4416, 16
      %v4453 = vpop.permute.xlu0 %4452
      %4454 = vrot.lane.b32.xlu0 %v4417, 16
      %v4455 = vpop.permute.xlu0 %4454
      %4456 = vrot.lane.b32.xlu0 %v4418, 16
      %v4457 = vpop.permute.xlu0 %4456
      %4458 = vrot.lane.b32.xlu0 %v4419, 16
      %v4459 = vpop.permute.xlu0 %4458
      %4460 = vrot.lane.b32.xlu0 %v4420, 16
      %v4461 = vpop.permute.xlu0 %4460
      %4462 = vrot.lane.b32.xlu0 %v4421, 16
      %v4463 = vpop.permute.xlu0 %4462
      %4464 = vrot.lane.b32.xlu0 %v4422, 16
      %v4465 = vpop.permute.xlu0 %4464
      %4466 = vrot.lane.b32.xlu0 %v4423, 16
      %v4467 = vpop.permute.xlu0 %4466
      %4468 = vrot.lane.b32.xlu0 %v4424, 16
      %v4469 = vpop.permute.xlu0 %4468
      %4470 = vrot.lane.b32.xlu0 %v4425, 16
      %v4471 = vpop.permute.xlu0 %4470
      %4472 = vrot.lane.b32.xlu0 %v4426, 16
      %v4473 = vpop.permute.xlu0 %4472
      %4474 = vrot.lane.b32.xlu0 %v4427, 16
      %v4475 = vpop.permute.xlu0 %4474
      %4476 = vrot.lane.b32.xlu0 %v4428, 16
      %v4477 = vpop.permute.xlu0 %4476
      %4478 = vrot.lane.b32.xlu0 %v4429, 16
      %v4479 = vpop.permute.xlu0 %4478
      %4480 = vrot.lane.b32.xlu0 %v4430, 16
      %v4481 = vpop.permute.xlu0 %4480
      %4482 = vrot.lane.b32.xlu0 %v4431, 16
      %v4483 = vpop.permute.xlu0 %4482
      %4484 = vrot.lane.b32.xlu0 %v4432, 16
      %v4485 = vpop.permute.xlu0 %4484
      %4486 = vrot.lane.b32.xlu0 %v4433, 16
      %v4487 = vpop.permute.xlu0 %4486
      %4488 = vrot.lane.b32.xlu0 %v4434, 16
      %v4489 = vpop.permute.xlu0 %4488
      %4490 = vrot.lane.b32.xlu0 %v4435, 16
      %v4491 = vpop.permute.xlu0 %4490
      %4492 = vrot.lane.b32.xlu0 %v4436, 16
      %v4493 = vpop.permute.xlu0 %4492
      %4494 = vrot.lane.b32.xlu0 %v4437, 16
      %v4495 = vpop.permute.xlu0 %4494
      %4496 = vrot.lane.b32.xlu0 %v4438, 16
      %v4497 = vpop.permute.xlu0 %4496
      %4498 = vrot.lane.b32.xlu0 %v4439, 16
      %v4499 = vpop.permute.xlu0 %4498
      %4500 = vrot.lane.b32.xlu0 %v4440, 16
      %v4501 = vpop.permute.xlu0 %4500
      %4502 = vrot.lane.b32.xlu0 %v4441, 16
      %v4503 = vpop.permute.xlu0 %4502
      %4504 = vrot.lane.b32.xlu0 %v4442, 16
      %v4505 = vpop.permute.xlu0 %4504
      %4506 = vrot.lane.b32.xlu0 %v4443, 16
      %v4507 = vpop.permute.xlu0 %4506
      %4540 = vst.msk [vmem:[#allocation5] sm:$0xf] %vm1054, %v4445
      %4541 = vst.msk [vmem:[#allocation5 + $0x4] sm:$0xf] %vm1054, %v4447
      %4542 = vst.msk [vmem:[#allocation5 + $0x8] sm:$0xf] %vm1054, %v4449
      %4543 = vst.msk [vmem:[#allocation5 + $0xc] sm:$0xf] %vm1054, %v4451
      %4544 = vst.msk [vmem:[#allocation5 + $0x10] sm:$0xf] %vm1054, %v4453
      %4545 = vst.msk [vmem:[#allocation5 + $0x14] sm:$0xf] %vm1054, %v4455
      %4546 = vst.msk [vmem:[#allocation5 + $0x18] sm:$0xf] %vm1054, %v4457
      %4547 = vst.msk [vmem:[#allocation5 + $0x1c] sm:$0xf] %vm1054, %v4459
      %4548 = vst.msk [vmem:[#allocation5 + $0x20] sm:$0xf] %vm1054, %v4461
      %4549 = vst.msk [vmem:[#allocation5 + $0x24] sm:$0xf] %vm1054, %v4463
      %4550 = vst.msk [vmem:[#allocation5 + $0x28] sm:$0xf] %vm1054, %v4465
      %4551 = vst.msk [vmem:[#allocation5 + $0x2c] sm:$0xf] %vm1054, %v4467
      %4552 = vst.msk [vmem:[#allocation5 + $0x30] sm:$0xf] %vm1054, %v4469
      %4553 = vst.msk [vmem:[#allocation5 + $0x34] sm:$0xf] %vm1054, %v4471
      %4554 = vst.msk [vmem:[#allocation5 + $0x38] sm:$0xf] %vm1054, %v4473
      %4555 = vst.msk [vmem:[#allocation5 + $0x3c] sm:$0xf] %vm1054, %v4475
      %4556 = vst.msk [vmem:[#allocation5 + $0x40] sm:$0xf] %vm1054, %v4477
      %4557 = vst.msk [vmem:[#allocation5 + $0x44] sm:$0xf] %vm1054, %v4479
      %4558 = vst.msk [vmem:[#allocation5 + $0x48] sm:$0xf] %vm1054, %v4481
      %4559 = vst.msk [vmem:[#allocation5 + $0x4c] sm:$0xf] %vm1054, %v4483
      %4560 = vst.msk [vmem:[#allocation5 + $0x50] sm:$0xf] %vm1054, %v4485
      %4561 = vst.msk [vmem:[#allocation5 + $0x54] sm:$0xf] %vm1054, %v4487
      %4562 = vst.msk [vmem:[#allocation5 + $0x58] sm:$0xf] %vm1054, %v4489
      %4563 = vst.msk [vmem:[#allocation5 + $0x5c] sm:$0xf] %vm1054, %v4491
      %4564 = vst.msk [vmem:[#allocation5 + $0x60] sm:$0xf] %vm1054, %v4493
      %4565 = vst.msk [vmem:[#allocation5 + $0x64] sm:$0xf] %vm1054, %v4495
      %4566 = vst.msk [vmem:[#allocation5 + $0x68] sm:$0xf] %vm1054, %v4497
      %4567 = vst.msk [vmem:[#allocation5 + $0x6c] sm:$0xf] %vm1054, %v4499
      %4568 = vst.msk [vmem:[#allocation5 + $0x70] sm:$0xf] %vm1054, %v4501
      %4569 = vst.msk [vmem:[#allocation5 + $0x74] sm:$0xf] %vm1054, %v4503
      %4570 = vst.msk [vmem:[#allocation5 + $0x78] sm:$0xf] %vm1054, %v4505
      %4571 = vst.msk [vmem:[#allocation5 + $0x7c] sm:$0xf] %vm1054, %v4507
      %v4572 = vld [vmem:[#allocation5] sm:$0xf]
      %v4573 = vld [vmem:[#allocation5 + $0x4] sm:$0xf]
      %v4574 = vld [vmem:[#allocation5 + $0x8] sm:$0xf]
      %v4575 = vld [vmem:[#allocation5 + $0xc] sm:$0xf]
      %v4576 = vld [vmem:[#allocation5 + $0x10] sm:$0xf]
      %v4577 = vld [vmem:[#allocation5 + $0x14] sm:$0xf]
      %v4578 = vld [vmem:[#allocation5 + $0x18] sm:$0xf]
      %v4579 = vld [vmem:[#allocation5 + $0x1c] sm:$0xf]
      %v4580 = vld [vmem:[#allocation5 + $0x20] sm:$0xf]
      %v4581 = vld [vmem:[#allocation5 + $0x24] sm:$0xf]
      %v4582 = vld [vmem:[#allocation5 + $0x28] sm:$0xf]
      %v4583 = vld [vmem:[#allocation5 + $0x2c] sm:$0xf]
      %v4584 = vld [vmem:[#allocation5 + $0x30] sm:$0xf]
      %v4585 = vld [vmem:[#allocation5 + $0x34] sm:$0xf]
      %v4586 = vld [vmem:[#allocation5 + $0x38] sm:$0xf]
      %v4587 = vld [vmem:[#allocation5 + $0x3c] sm:$0xf]
      %v4588 = vld [vmem:[#allocation5 + $0x40] sm:$0xf]
      %v4589 = vld [vmem:[#allocation5 + $0x44] sm:$0xf]
      %v4590 = vld [vmem:[#allocation5 + $0x48] sm:$0xf]
      %v4591 = vld [vmem:[#allocation5 + $0x4c] sm:$0xf]
      %v4592 = vld [vmem:[#allocation5 + $0x50] sm:$0xf]
      %v4593 = vld [vmem:[#allocation5 + $0x54] sm:$0xf]
      %v4594 = vld [vmem:[#allocation5 + $0x58] sm:$0xf]
      %v4595 = vld [vmem:[#allocation5 + $0x5c] sm:$0xf]
      %v4596 = vld [vmem:[#allocation5 + $0x60] sm:$0xf]
      %v4597 = vld [vmem:[#allocation5 + $0x64] sm:$0xf]
      %v4598 = vld [vmem:[#allocation5 + $0x68] sm:$0xf]
      %v4599 = vld [vmem:[#allocation5 + $0x6c] sm:$0xf]
      %v4600 = vld [vmem:[#allocation5 + $0x70] sm:$0xf]
      %v4601 = vld [vmem:[#allocation5 + $0x74] sm:$0xf]
      %v4602 = vld [vmem:[#allocation5 + $0x78] sm:$0xf]
      %v4603 = vld [vmem:[#allocation5 + $0x7c] sm:$0xf]
      %v4604 = vld [vmem:[%s3] sm:$0xf]
      %v4605 = vld [vmem:[%s3 + $0x4] sm:$0xf]
      %v4606 = vld [vmem:[%s3 + $0x8] sm:$0xf]
      %v4639 = vunpack.c.l.b16 %v4572
      %v4640 = vunpack.c.l.b16 %v4573
      %v4641 = vunpack.c.l.b16 %v4574
      %v4642 = vunpack.c.l.b16 %v4575
      %v4643 = vunpack.c.l.b16 %v4576
      %v4644 = vunpack.c.l.b16 %v4577
      %v4645 = vunpack.c.l.b16 %v4578
      %v4646 = vunpack.c.l.b16 %v4579
      %v4647 = vunpack.c.l.b16 %v4580
      %v4648 = vunpack.c.l.b16 %v4581
      %v4649 = vunpack.c.l.b16 %v4582
      %v4650 = vunpack.c.l.b16 %v4583
      %v4651 = vunpack.c.l.b16 %v4584
      %v4652 = vunpack.c.l.b16 %v4585
      %v4653 = vunpack.c.l.b16 %v4586
      %v4654 = vunpack.c.l.b16 %v4587
      %v4655 = vunpack.c.l.b16 %v4588
      %v4656 = vunpack.c.l.b16 %v4589
      %v4657 = vunpack.c.l.b16 %v4590
      %v4658 = vunpack.c.l.b16 %v4591
      %v4659 = vunpack.c.l.b16 %v4592
      %v4660 = vunpack.c.l.b16 %v4593
      %v4661 = vunpack.c.l.b16 %v4594
      %v4662 = vunpack.c.l.b16 %v4595
      %v4663 = vunpack.c.l.b16 %v4596
      %v4664 = vunpack.c.l.b16 %v4597
      %v4665 = vunpack.c.l.b16 %v4598
      %v4666 = vunpack.c.l.b16 %v4599
      %v4667 = vunpack.c.l.b16 %v4600
      %v4668 = vunpack.c.l.b16 %v4601
      %v4669 = vunpack.c.l.b16 %v4602
      %v4670 = vunpack.c.l.b16 %v4603
      %v4671 = vpack.c.b16 %v4640, %v4639
      %v4672 = vpack.c.b16 %v4642, %v4641
      %v4673 = vpack.c.b16 %v4644, %v4643
      %v4674 = vpack.c.b16 %v4646, %v4645
      %v4675 = vpack.c.b16 %v4648, %v4647
      %v4676 = vpack.c.b16 %v4650, %v4649
      %v4677 = vpack.c.b16 %v4652, %v4651
      %v4678 = vpack.c.b16 %v4654, %v4653
      %v4679 = vpack.c.b16 %v4656, %v4655
      %v4680 = vpack.c.b16 %v4658, %v4657
      %v4681 = vpack.c.b16 %v4660, %v4659
      %v4682 = vpack.c.b16 %v4662, %v4661
      %v4683 = vpack.c.b16 %v4664, %v4663
      %v4684 = vpack.c.b16 %v4666, %v4665
      %v4685 = vpack.c.b16 %v4668, %v4667
      %v4686 = vpack.c.b16 %v4670, %v4669
      %v4690 = vunpack.c.l.b16 %v4604
      %v4691 = vunpack.c.l.b16 %v4605
      %v4692 = vunpack.c.l.b16 %v4606
      %v4693 = vpack.c.b16 %v4691, %v4690
      %v4694 = vpack.c.b16 %v4692, %v4692
      %v4697 = vsel %vm1211, %v4671, 0
      %v4700 = vsel %vm1211, %v4672, 0
      %v4703 = vsel %vm1211, %v4673, 0
      %v4706 = vsel %vm1211, %v4674, 0
      %v4709 = vsel %vm1211, %v4675, 0
      %v4712 = vsel %vm1211, %v4676, 0
      %v4715 = vsel %vm1211, %v4677, 0
      %v4718 = vsel %vm1211, %v4678, 0
      %v4721 = vsel %vm1211, %v4679, 0
      %v4724 = vsel %vm1211, %v4680, 0
      %v4727 = vsel %vm1211, %v4681, 0
      %v4730 = vsel %vm1211, %v4682, 0
      %v4733 = vsel %vm1211, %v4683, 0
      %v4736 = vsel %vm1211, %v4684, 0
      %v4739 = vsel %vm1211, %v4685, 0
      %v4742 = vsel %vm1211, %v4686, 0
      %v4745 = vsel %vm1260, %v4694, 0
      %4747 = vmatprep.subr.bf16.mxu0 0
      %4748 = vmatpush1.bf16.msra.mxu0 0
      %4749 = vmatprep.subr.bf16.mxu0 0
      %4750 = vmatpush1.bf16.msra.mxu0 0
      %4751 = vmatprep.subr.bf16.mxu0 0
      %4752 = vmatpush1.bf16.msra.mxu0 0
      %4753 = vmatprep.subr.bf16.mxu0 0
      %4754 = vmatpush1.bf16.msra.mxu0 0
      %4755 = vmatprep.subr.bf16.mxu0 0
      %4756 = vmatpush1.bf16.msra.mxu0 0
      %4757 = vmatprep.subr.bf16.mxu0 0
      %4758 = vmatpush1.bf16.msra.mxu0 0
      %4759 = vmatprep.subr.bf16.mxu0 0
      %4760 = vmatpush1.bf16.msra.mxu0 %v4745
      %4761 = vmatprep.subr.bf16.mxu0 0
      %4762 = vmatpush1.bf16.msra.mxu0 %v4693
      %4763 = vmatprep.subr.bf16.mxu0 0
      %4764 = vmatpush2.bf16.msra.mxu0 0
      %4765 = vmatprep.subr.bf16.mxu0 0
      %4766 = vmatpush2.bf16.msra.mxu0 0
      %4767 = vmatprep.subr.bf16.mxu0 0
      %4768 = vmatpush2.bf16.msra.mxu0 0
      %4769 = vmatprep.subr.bf16.mxu0 0
      %4770 = vmatpush2.bf16.msra.mxu0 0
      %4771 = vmatprep.subr.bf16.mxu0 0
      %4772 = vmatpush2.bf16.msra.mxu0 0
      %4773 = vmatprep.subr.bf16.mxu0 0
      %4774 = vmatpush2.bf16.msra.mxu0 0
      %4775 = vmatprep.subr.bf16.mxu0 0
      %4776 = vmatpush2.bf16.msra.mxu0 0
      %4777 = vmatprep.subr.bf16.mxu0 0
      %4778 = vmatpush2.bf16.msra.mxu0 0
      %4779 = vmatprep.mubr.bf16.mxu0 0
      %4780 = vmatmul.mubr.bf16.gmra.mxu0 %v4697
      %v4781 = vpop.f32.mrf.mxu0
      %v4782 = vadd.f32 0.0, %v4781
      %v4783 = vpop.f32.mrf.mxu0
      %v4784 = vpop.f32.mrf.mxu0
      %v4785 = vadd.f32 0.0, %v4784
      %v4786 = vpop.f32.mrf.mxu0
      %4787 = vmatprep.mubr.bf16.mxu0 0
      %4788 = vmatmul.mubr.bf16.gmra.mxu0 %v4700
      %v4789 = vpop.f32.mrf.mxu0
      %v4790 = vadd.f32 0.0, %v4789
      %v4791 = vpop.f32.mrf.mxu0
      %v4792 = vpop.f32.mrf.mxu0
      %v4793 = vadd.f32 0.0, %v4792
      %v4794 = vpop.f32.mrf.mxu0
      %4795 = vmatprep.mubr.bf16.mxu0 0
      %4796 = vmatmul.mubr.bf16.gmra.mxu0 %v4703
      %v4797 = vpop.f32.mrf.mxu0
      %v4798 = vadd.f32 0.0, %v4797
      %v4799 = vpop.f32.mrf.mxu0
      %v4800 = vpop.f32.mrf.mxu0
      %v4801 = vadd.f32 0.0, %v4800
      %v4802 = vpop.f32.mrf.mxu0
      %4803 = vmatprep.mubr.bf16.mxu0 0
      %4804 = vmatmul.mubr.bf16.gmra.mxu0 %v4706
      %v4805 = vpop.f32.mrf.mxu0
      %v4806 = vadd.f32 0.0, %v4805
      %v4807 = vpop.f32.mrf.mxu0
      %v4808 = vpop.f32.mrf.mxu0
      %v4809 = vadd.f32 0.0, %v4808
      %v4810 = vpop.f32.mrf.mxu0
      %4811 = vmatprep.mubr.bf16.mxu0 0
      %4812 = vmatmul.mubr.bf16.gmra.mxu0 %v4709
      %v4813 = vpop.f32.mrf.mxu0
      %v4814 = vadd.f32 0.0, %v4813
      %v4815 = vpop.f32.mrf.mxu0
      %v4816 = vpop.f32.mrf.mxu0
      %v4817 = vadd.f32 0.0, %v4816
      %v4818 = vpop.f32.mrf.mxu0
      %4819 = vmatprep.mubr.bf16.mxu0 0
      %4820 = vmatmul.mubr.bf16.gmra.mxu0 %v4712
      %v4821 = vpop.f32.mrf.mxu0
      %v4822 = vadd.f32 0.0, %v4821
      %v4823 = vpop.f32.mrf.mxu0
      %v4824 = vpop.f32.mrf.mxu0
      %v4825 = vadd.f32 0.0, %v4824
      %v4826 = vpop.f32.mrf.mxu0
      %4827 = vmatprep.mubr.bf16.mxu0 0
      %4828 = vmatmul.mubr.bf16.gmra.mxu0 %v4715
      %v4829 = vpop.f32.mrf.mxu0
      %v4830 = vadd.f32 0.0, %v4829
      %v4831 = vpop.f32.mrf.mxu0
      %v4832 = vpop.f32.mrf.mxu0
      %v4833 = vadd.f32 0.0, %v4832
      %v4834 = vpop.f32.mrf.mxu0
      %4835 = vmatprep.mubr.bf16.mxu0 0
      %4836 = vmatmul.mubr.bf16.gmra.mxu0 %v4718
      %v4837 = vpop.f32.mrf.mxu0
      %v4838 = vadd.f32 0.0, %v4837
      %v4839 = vpop.f32.mrf.mxu0
      %v4840 = vpop.f32.mrf.mxu0
      %v4841 = vadd.f32 0.0, %v4840
      %v4842 = vpop.f32.mrf.mxu0
      %4843 = vmatprep.mubr.bf16.mxu0 0
      %4844 = vmatmul.mubr.bf16.gmra.mxu0 %v4721
      %v4845 = vpop.f32.mrf.mxu0
      %v4846 = vadd.f32 0.0, %v4845
      %v4847 = vpop.f32.mrf.mxu0
      %v4848 = vpop.f32.mrf.mxu0
      %v4849 = vadd.f32 0.0, %v4848
      %v4850 = vpop.f32.mrf.mxu0
      %4851 = vmatprep.mubr.bf16.mxu0 0
      %4852 = vmatmul.mubr.bf16.gmra.mxu0 %v4724
      %v4853 = vpop.f32.mrf.mxu0
      %v4854 = vadd.f32 0.0, %v4853
      %v4855 = vpop.f32.mrf.mxu0
      %v4856 = vpop.f32.mrf.mxu0
      %v4857 = vadd.f32 0.0, %v4856
      %v4858 = vpop.f32.mrf.mxu0
      %4859 = vmatprep.mubr.bf16.mxu0 0
      %4860 = vmatmul.mubr.bf16.gmra.mxu0 %v4727
      %v4861 = vpop.f32.mrf.mxu0
      %v4862 = vadd.f32 0.0, %v4861
      %v4863 = vpop.f32.mrf.mxu0
      %v4864 = vpop.f32.mrf.mxu0
      %v4865 = vadd.f32 0.0, %v4864
      %v4866 = vpop.f32.mrf.mxu0
      %4867 = vmatprep.mubr.bf16.mxu0 0
      %4868 = vmatmul.mubr.bf16.gmra.mxu0 %v4730
      %v4869 = vpop.f32.mrf.mxu0
      %v4870 = vadd.f32 0.0, %v4869
      %v4871 = vpop.f32.mrf.mxu0
      %v4872 = vpop.f32.mrf.mxu0
      %v4873 = vadd.f32 0.0, %v4872
      %v4874 = vpop.f32.mrf.mxu0
      %4875 = vmatprep.mubr.bf16.mxu0 0
      %4876 = vmatmul.mubr.bf16.gmra.mxu0 %v4733
      %v4877 = vpop.f32.mrf.mxu0
      %v4878 = vadd.f32 0.0, %v4877
      %v4879 = vpop.f32.mrf.mxu0
      %v4880 = vpop.f32.mrf.mxu0
      %v4881 = vadd.f32 0.0, %v4880
      %v4882 = vpop.f32.mrf.mxu0
      %4883 = vmatprep.mubr.bf16.mxu0 0
      %4884 = vmatmul.mubr.bf16.gmra.mxu0 %v4736
      %v4885 = vpop.f32.mrf.mxu0
      %v4886 = vadd.f32 0.0, %v4885
      %v4887 = vpop.f32.mrf.mxu0
      %v4888 = vpop.f32.mrf.mxu0
      %v4889 = vadd.f32 0.0, %v4888
      %v4890 = vpop.f32.mrf.mxu0
      %4891 = vmatprep.mubr.bf16.mxu0 0
      %4892 = vmatmul.mubr.bf16.gmra.mxu0 %v4739
      %v4893 = vpop.f32.mrf.mxu0
      %v4894 = vadd.f32 0.0, %v4893
      %v4895 = vpop.f32.mrf.mxu0
      %v4896 = vpop.f32.mrf.mxu0
      %v4897 = vadd.f32 0.0, %v4896
      %v4898 = vpop.f32.mrf.mxu0
      %4899 = vmatprep.mubr.bf16.mxu0 0
      %4900 = vmatmul.mubr.bf16.gmra.mxu0 %v4742
      %v4901 = vpop.f32.mrf.mxu0
      %v4902 = vadd.f32 0.0, %v4901
      %v4903 = vpop.f32.mrf.mxu0
      %v4904 = vpop.f32.mrf.mxu0
      %v4905 = vadd.f32 0.0, %v4904
      %v4906 = vpop.f32.mrf.mxu0
      %4907 = vdwg.mxu0
      %4908 = vst.msk [vmem:[#allocation6] sm:$0xff] %vm226, %v4782
      %4909 = vst.msk [vmem:[#allocation6 + $0x8] sm:$0xff] %vm226, %v4785
      %4910 = vst.msk [vmem:[#allocation6 + $0x10] sm:$0xff] %vm226, %v4790
      %4911 = vst.msk [vmem:[#allocation6 + $0x18] sm:$0xff] %vm226, %v4793
      %4912 = vst.msk [vmem:[#allocation6 + $0x20] sm:$0xff] %vm226, %v4798
      %4913 = vst.msk [vmem:[#allocation6 + $0x28] sm:$0xff] %vm226, %v4801
      %4914 = vst.msk [vmem:[#allocation6 + $0x30] sm:$0xff] %vm226, %v4806
      %4915 = vst.msk [vmem:[#allocation6 + $0x38] sm:$0xff] %vm226, %v4809
      %4916 = vst.msk [vmem:[#allocation6 + $0x40] sm:$0xff] %vm226, %v4814
      %4917 = vst.msk [vmem:[#allocation6 + $0x48] sm:$0xff] %vm226, %v4817
      %4918 = vst.msk [vmem:[#allocation6 + $0x50] sm:$0xff] %vm226, %v4822
      %4919 = vst.msk [vmem:[#allocation6 + $0x58] sm:$0xff] %vm226, %v4825
      %4920 = vst.msk [vmem:[#allocation6 + $0x60] sm:$0xff] %vm226, %v4830
      %4921 = vst.msk [vmem:[#allocation6 + $0x68] sm:$0xff] %vm226, %v4833
      %4922 = vst.msk [vmem:[#allocation6 + $0x70] sm:$0xff] %vm226, %v4838
      %4923 = vst.msk [vmem:[#allocation6 + $0x78] sm:$0xff] %vm226, %v4841
      %4924 = vst.msk [vmem:[#allocation6 + $0x80] sm:$0xff] %vm226, %v4846
      %4925 = vst.msk [vmem:[#allocation6 + $0x88] sm:$0xff] %vm226, %v4849
      %4926 = vst.msk [vmem:[#allocation6 + $0x90] sm:$0xff] %vm226, %v4854
      %4927 = vst.msk [vmem:[#allocation6 + $0x98] sm:$0xff] %vm226, %v4857
      %4928 = vst.msk [vmem:[#allocation6 + $0xa0] sm:$0xff] %vm226, %v4862
      %4929 = vst.msk [vmem:[#allocation6 + $0xa8] sm:$0xff] %vm226, %v4865
      %4930 = vst.msk [vmem:[#allocation6 + $0xb0] sm:$0xff] %vm226, %v4870
      %4931 = vst.msk [vmem:[#allocation6 + $0xb8] sm:$0xff] %vm226, %v4873
      %4932 = vst.msk [vmem:[#allocation6 + $0xc0] sm:$0xff] %vm226, %v4878
      %4933 = vst.msk [vmem:[#allocation6 + $0xc8] sm:$0xff] %vm226, %v4881
      %4934 = vst.msk [vmem:[#allocation6 + $0xd0] sm:$0xff] %vm226, %v4886
      %4935 = vst.msk [vmem:[#allocation6 + $0xd8] sm:$0xff] %vm226, %v4889
      %4936 = vst.msk [vmem:[#allocation6 + $0xe0] sm:$0xff] %vm226, %v4894
      %4937 = vst.msk [vmem:[#allocation6 + $0xe8] sm:$0xff] %vm226, %v4897
      %4938 = vst.msk [vmem:[#allocation6 + $0xf0] sm:$0xff] %vm226, %v4902
      %4939 = vst.msk [vmem:[#allocation6 + $0xf8] sm:$0xff] %vm226, %v4905
      %v4940 = vld [vmem:[%s3835] sm:$0xff]
      %v4941 = vld [vmem:[%s3835 + $0x8] sm:$0xff]
      %v4942 = vld [vmem:[%s3835 + $0x18] sm:$0xff]
      %v4943 = vld [vmem:[%s3835 + $0x20] sm:$0xff]
      %v4944 = vld [vmem:[%s3835 + $0x30] sm:$0xff]
      %v4945 = vld [vmem:[%s3835 + $0x38] sm:$0xff]
      %v4946 = vld [vmem:[%s3835 + $0x48] sm:$0xff]
      %v4947 = vld [vmem:[%s3835 + $0x50] sm:$0xff]
      %v4948 = vld [vmem:[%s3835 + $0x60] sm:$0xff]
      %v4949 = vld [vmem:[%s3835 + $0x68] sm:$0xff]
      %v4950 = vld [vmem:[%s3835 + $0x78] sm:$0xff]
      %v4951 = vld [vmem:[%s3835 + $0x80] sm:$0xff]
      %v4952 = vld [vmem:[%s3835 + $0x90] sm:$0xff]
      %v4953 = vld [vmem:[%s3835 + $0x98] sm:$0xff]
      %v4954 = vld [vmem:[%s3835 + $0xa8] sm:$0xff]
      %v4955 = vld [vmem:[%s3835 + $0xb0] sm:$0xff]
      %v4956 = vld [vmem:[%s3835 + $0xc0] sm:$0xff]
      %v4957 = vld [vmem:[%s3835 + $0xc8] sm:$0xff]
      %v4958 = vld [vmem:[%s3835 + $0xd8] sm:$0xff]
      %v4959 = vld [vmem:[%s3835 + $0xe0] sm:$0xff]
      %v4960 = vld [vmem:[%s3835 + $0xf0] sm:$0xff]
      %v4961 = vld [vmem:[%s3835 + $0xf8] sm:$0xff]
      %v4962 = vld [vmem:[%s3835 + $0x108] sm:$0xff]
      %v4963 = vld [vmem:[%s3835 + $0x110] sm:$0xff]
      %v4964 = vld [vmem:[%s3835 + $0x120] sm:$0xff]
      %v4965 = vld [vmem:[%s3835 + $0x128] sm:$0xff]
      %v4966 = vld [vmem:[%s3835 + $0x138] sm:$0xff]
      %v4967 = vld [vmem:[%s3835 + $0x140] sm:$0xff]
      %v4968 = vld [vmem:[%s3835 + $0x150] sm:$0xff]
      %v4969 = vld [vmem:[%s3835 + $0x158] sm:$0xff]
      %v4970 = vld [vmem:[%s3835 + $0x168] sm:$0xff]
      %v4971 = vld [vmem:[%s3835 + $0x170] sm:$0xff]
      %v4972 = vpack.c.bf16 %v4941, %v4940
      %v4973 = vpack.c.bf16 %v4943, %v4942
      %v4974 = vpack.c.bf16 %v4945, %v4944
      %v4975 = vpack.c.bf16 %v4947, %v4946
      %v4976 = vpack.c.bf16 %v4949, %v4948
      %v4977 = vpack.c.bf16 %v4951, %v4950
      %v4978 = vpack.c.bf16 %v4953, %v4952
      %v4979 = vpack.c.bf16 %v4955, %v4954
      %v4980 = vpack.c.bf16 %v4957, %v4956
      %v4981 = vpack.c.bf16 %v4959, %v4958
      %v4982 = vpack.c.bf16 %v4961, %v4960
      %v4983 = vpack.c.bf16 %v4963, %v4962
      %v4984 = vpack.c.bf16 %v4965, %v4964
      %v4985 = vpack.c.bf16 %v4967, %v4966
      %v4986 = vpack.c.bf16 %v4969, %v4968
      %v4987 = vpack.c.bf16 %v4971, %v4970
      %v5004 = vunpack.c.l.b16 %v4972
      %v5005 = vunpack.c.h.b16 %v4972
      %v5006 = vunpack.c.l.b16 %v4973
      %v5007 = vunpack.c.h.b16 %v4973
      %v5008 = vunpack.c.l.b16 %v4974
      %v5009 = vunpack.c.h.b16 %v4974
      %v5010 = vunpack.c.l.b16 %v4975
      %v5011 = vunpack.c.h.b16 %v4975
      %v5012 = vunpack.c.l.b16 %v4976
      %v5013 = vunpack.c.h.b16 %v4976
      %v5014 = vunpack.c.l.b16 %v4977
      %v5015 = vunpack.c.h.b16 %v4977
      %v5016 = vunpack.c.l.b16 %v4978
      %v5017 = vunpack.c.h.b16 %v4978
      %v5018 = vunpack.c.l.b16 %v4979
      %v5019 = vunpack.c.h.b16 %v4979
      %v5020 = vunpack.c.l.b16 %v4980
      %v5021 = vunpack.c.h.b16 %v4980
      %v5022 = vunpack.c.l.b16 %v4981
      %v5023 = vunpack.c.h.b16 %v4981
      %v5024 = vunpack.c.l.b16 %v4982
      %v5025 = vunpack.c.h.b16 %v4982
      %v5026 = vunpack.c.l.b16 %v4983
      %v5027 = vunpack.c.h.b16 %v4983
      %v5028 = vunpack.c.l.b16 %v4984
      %v5029 = vunpack.c.h.b16 %v4984
      %v5030 = vunpack.c.l.b16 %v4985
      %v5031 = vunpack.c.h.b16 %v4985
      %v5032 = vunpack.c.l.b16 %v4986
      %v5033 = vunpack.c.h.b16 %v4986
      %v5034 = vunpack.c.l.b16 %v4987
      %v5035 = vunpack.c.h.b16 %v4987
      %v5036 = vpack.c.b16 %v5004, %v5004
      %v5037 = vpack.c.b16 %v5005, %v5005
      %v5038 = vpack.c.b16 %v5006, %v5006
      %v5039 = vpack.c.b16 %v5007, %v5007
      %v5040 = vpack.c.b16 %v5008, %v5008
      %v5041 = vpack.c.b16 %v5009, %v5009
      %v5042 = vpack.c.b16 %v5010, %v5010
      %v5043 = vpack.c.b16 %v5011, %v5011
      %v5044 = vpack.c.b16 %v5012, %v5012
      %v5045 = vpack.c.b16 %v5013, %v5013
      %v5046 = vpack.c.b16 %v5014, %v5014
      %v5047 = vpack.c.b16 %v5015, %v5015
      %v5048 = vpack.c.b16 %v5016, %v5016
      %v5049 = vpack.c.b16 %v5017, %v5017
      %v5050 = vpack.c.b16 %v5018, %v5018
      %v5051 = vpack.c.b16 %v5019, %v5019
      %v5052 = vpack.c.b16 %v5020, %v5020
      %v5053 = vpack.c.b16 %v5021, %v5021
      %v5054 = vpack.c.b16 %v5022, %v5022
      %v5055 = vpack.c.b16 %v5023, %v5023
      %v5056 = vpack.c.b16 %v5024, %v5024
      %v5057 = vpack.c.b16 %v5025, %v5025
      %v5058 = vpack.c.b16 %v5026, %v5026
      %v5059 = vpack.c.b16 %v5027, %v5027
      %v5060 = vpack.c.b16 %v5028, %v5028
      %v5061 = vpack.c.b16 %v5029, %v5029
      %v5062 = vpack.c.b16 %v5030, %v5030
      %v5063 = vpack.c.b16 %v5031, %v5031
      %v5064 = vpack.c.b16 %v5032, %v5032
      %v5065 = vpack.c.b16 %v5033, %v5033
      %v5066 = vpack.c.b16 %v5034, %v5034
      %v5067 = vpack.c.b16 %v5035, %v5035
      %5100 = vst.msk [vmem:[#allocation5] sm:$0xf] %vm540, %v5036
      %5101 = vst.msk [vmem:[#allocation5 + $0x4] sm:$0xf] %vm540, %v5037
      %5102 = vst.msk [vmem:[#allocation5 + $0x8] sm:$0xf] %vm540, %v5038
      %5103 = vst.msk [vmem:[#allocation5 + $0xc] sm:$0xf] %vm540, %v5039
      %5104 = vst.msk [vmem:[#allocation5 + $0x10] sm:$0xf] %vm540, %v5040
      %5105 = vst.msk [vmem:[#allocation5 + $0x14] sm:$0xf] %vm540, %v5041
      %5106 = vst.msk [vmem:[#allocation5 + $0x18] sm:$0xf] %vm540, %v5042
      %5107 = vst.msk [vmem:[#allocation5 + $0x1c] sm:$0xf] %vm540, %v5043
      %5108 = vst.msk [vmem:[#allocation5 + $0x20] sm:$0xf] %vm540, %v5044
      %5109 = vst.msk [vmem:[#allocation5 + $0x24] sm:$0xf] %vm540, %v5045
      %5110 = vst.msk [vmem:[#allocation5 + $0x28] sm:$0xf] %vm540, %v5046
      %5111 = vst.msk [vmem:[#allocation5 + $0x2c] sm:$0xf] %vm540, %v5047
      %5112 = vst.msk [vmem:[#allocation5 + $0x30] sm:$0xf] %vm540, %v5048
      %5113 = vst.msk [vmem:[#allocation5 + $0x34] sm:$0xf] %vm540, %v5049
      %5114 = vst.msk [vmem:[#allocation5 + $0x38] sm:$0xf] %vm540, %v5050
      %5115 = vst.msk [vmem:[#allocation5 + $0x3c] sm:$0xf] %vm540, %v5051
      %5116 = vst.msk [vmem:[#allocation5 + $0x40] sm:$0xf] %vm540, %v5052
      %5117 = vst.msk [vmem:[#allocation5 + $0x44] sm:$0xf] %vm540, %v5053
      %5118 = vst.msk [vmem:[#allocation5 + $0x48] sm:$0xf] %vm540, %v5054
      %5119 = vst.msk [vmem:[#allocation5 + $0x4c] sm:$0xf] %vm540, %v5055
      %5120 = vst.msk [vmem:[#allocation5 + $0x50] sm:$0xf] %vm540, %v5056
      %5121 = vst.msk [vmem:[#allocation5 + $0x54] sm:$0xf] %vm540, %v5057
      %5122 = vst.msk [vmem:[#allocation5 + $0x58] sm:$0xf] %vm540, %v5058
      %5123 = vst.msk [vmem:[#allocation5 + $0x5c] sm:$0xf] %vm540, %v5059
      %5124 = vst.msk [vmem:[#allocation5 + $0x60] sm:$0xf] %vm540, %v5060
      %5125 = vst.msk [vmem:[#allocation5 + $0x64] sm:$0xf] %vm540, %v5061
      %5126 = vst.msk [vmem:[#allocation5 + $0x68] sm:$0xf] %vm540, %v5062
      %5127 = vst.msk [vmem:[#allocation5 + $0x6c] sm:$0xf] %vm540, %v5063
      %5128 = vst.msk [vmem:[#allocation5 + $0x70] sm:$0xf] %vm540, %v5064
      %5129 = vst.msk [vmem:[#allocation5 + $0x74] sm:$0xf] %vm540, %v5065
      %5130 = vst.msk [vmem:[#allocation5 + $0x78] sm:$0xf] %vm540, %v5066
      %5131 = vst.msk [vmem:[#allocation5 + $0x7c] sm:$0xf] %vm540, %v5067
      %v5132 = vld [vmem:[%s3835 + $0x1] sm:$0xff]
      %v5133 = vld [vmem:[%s3835 + $0x9] sm:$0xff]
      %v5134 = vld [vmem:[%s3835 + $0x19] sm:$0xff]
      %v5135 = vld [vmem:[%s3835 + $0x21] sm:$0xff]
      %v5136 = vld [vmem:[%s3835 + $0x31] sm:$0xff]
      %v5137 = vld [vmem:[%s3835 + $0x39] sm:$0xff]
      %v5138 = vld [vmem:[%s3835 + $0x49] sm:$0xff]
      %v5139 = vld [vmem:[%s3835 + $0x51] sm:$0xff]
      %v5140 = vld [vmem:[%s3835 + $0x61] sm:$0xff]
      %v5141 = vld [vmem:[%s3835 + $0x69] sm:$0xff]
      %v5142 = vld [vmem:[%s3835 + $0x79] sm:$0xff]
      %v5143 = vld [vmem:[%s3835 + $0x81] sm:$0xff]
      %v5144 = vld [vmem:[%s3835 + $0x91] sm:$0xff]
      %v5145 = vld [vmem:[%s3835 + $0x99] sm:$0xff]
      %v5146 = vld [vmem:[%s3835 + $0xa9] sm:$0xff]
      %v5147 = vld [vmem:[%s3835 + $0xb1] sm:$0xff]
      %v5148 = vld [vmem:[%s3835 + $0xc1] sm:$0xff]
      %v5149 = vld [vmem:[%s3835 + $0xc9] sm:$0xff]
      %v5150 = vld [vmem:[%s3835 + $0xd9] sm:$0xff]
      %v5151 = vld [vmem:[%s3835 + $0xe1] sm:$0xff]
      %v5152 = vld [vmem:[%s3835 + $0xf1] sm:$0xff]
      %v5153 = vld [vmem:[%s3835 + $0xf9] sm:$0xff]
      %v5154 = vld [vmem:[%s3835 + $0x109] sm:$0xff]
      %v5155 = vld [vmem:[%s3835 + $0x111] sm:$0xff]
      %v5156 = vld [vmem:[%s3835 + $0x121] sm:$0xff]
      %v5157 = vld [vmem:[%s3835 + $0x129] sm:$0xff]
      %v5158 = vld [vmem:[%s3835 + $0x139] sm:$0xff]
      %v5159 = vld [vmem:[%s3835 + $0x141] sm:$0xff]
      %v5160 = vld [vmem:[%s3835 + $0x151] sm:$0xff]
      %v5161 = vld [vmem:[%s3835 + $0x159] sm:$0xff]
      %v5162 = vld [vmem:[%s3835 + $0x169] sm:$0xff]
      %v5163 = vld [vmem:[%s3835 + $0x171] sm:$0xff]
      %v5164 = vpack.c.bf16 %v5133, %v5132
      %v5165 = vpack.c.bf16 %v5135, %v5134
      %v5166 = vpack.c.bf16 %v5137, %v5136
      %v5167 = vpack.c.bf16 %v5139, %v5138
      %v5168 = vpack.c.bf16 %v5141, %v5140
      %v5169 = vpack.c.bf16 %v5143, %v5142
      %v5170 = vpack.c.bf16 %v5145, %v5144
      %v5171 = vpack.c.bf16 %v5147, %v5146
      %v5172 = vpack.c.bf16 %v5149, %v5148
      %v5173 = vpack.c.bf16 %v5151, %v5150
      %v5174 = vpack.c.bf16 %v5153, %v5152
      %v5175 = vpack.c.bf16 %v5155, %v5154
      %v5176 = vpack.c.bf16 %v5157, %v5156
      %v5177 = vpack.c.bf16 %v5159, %v5158
      %v5178 = vpack.c.bf16 %v5161, %v5160
      %v5179 = vpack.c.bf16 %v5163, %v5162
      %v5196 = vunpack.c.l.b16 %v5164
      %v5197 = vunpack.c.h.b16 %v5164
      %v5198 = vunpack.c.l.b16 %v5165
      %v5199 = vunpack.c.h.b16 %v5165
      %v5200 = vunpack.c.l.b16 %v5166
      %v5201 = vunpack.c.h.b16 %v5166
      %v5202 = vunpack.c.l.b16 %v5167
      %v5203 = vunpack.c.h.b16 %v5167
      %v5204 = vunpack.c.l.b16 %v5168
      %v5205 = vunpack.c.h.b16 %v5168
      %v5206 = vunpack.c.l.b16 %v5169
      %v5207 = vunpack.c.h.b16 %v5169
      %v5208 = vunpack.c.l.b16 %v5170
      %v5209 = vunpack.c.h.b16 %v5170
      %v5210 = vunpack.c.l.b16 %v5171
      %v5211 = vunpack.c.h.b16 %v5171
      %v5212 = vunpack.c.l.b16 %v5172
      %v5213 = vunpack.c.h.b16 %v5172
      %v5214 = vunpack.c.l.b16 %v5173
      %v5215 = vunpack.c.h.b16 %v5173
      %v5216 = vunpack.c.l.b16 %v5174
      %v5217 = vunpack.c.h.b16 %v5174
      %v5218 = vunpack.c.l.b16 %v5175
      %v5219 = vunpack.c.h.b16 %v5175
      %v5220 = vunpack.c.l.b16 %v5176
      %v5221 = vunpack.c.h.b16 %v5176
      %v5222 = vunpack.c.l.b16 %v5177
      %v5223 = vunpack.c.h.b16 %v5177
      %v5224 = vunpack.c.l.b16 %v5178
      %v5225 = vunpack.c.h.b16 %v5178
      %v5226 = vunpack.c.l.b16 %v5179
      %v5227 = vunpack.c.h.b16 %v5179
      %v5228 = vpack.c.b16 %v5196, %v5196
      %v5229 = vpack.c.b16 %v5197, %v5197
      %v5230 = vpack.c.b16 %v5198, %v5198
      %v5231 = vpack.c.b16 %v5199, %v5199
      %v5232 = vpack.c.b16 %v5200, %v5200
      %v5233 = vpack.c.b16 %v5201, %v5201
      %v5234 = vpack.c.b16 %v5202, %v5202
      %v5235 = vpack.c.b16 %v5203, %v5203
      %v5236 = vpack.c.b16 %v5204, %v5204
      %v5237 = vpack.c.b16 %v5205, %v5205
      %v5238 = vpack.c.b16 %v5206, %v5206
      %v5239 = vpack.c.b16 %v5207, %v5207
      %v5240 = vpack.c.b16 %v5208, %v5208
      %v5241 = vpack.c.b16 %v5209, %v5209
      %v5242 = vpack.c.b16 %v5210, %v5210
      %v5243 = vpack.c.b16 %v5211, %v5211
      %v5244 = vpack.c.b16 %v5212, %v5212
      %v5245 = vpack.c.b16 %v5213, %v5213
      %v5246 = vpack.c.b16 %v5214, %v5214
      %v5247 = vpack.c.b16 %v5215, %v5215
      %v5248 = vpack.c.b16 %v5216, %v5216
      %v5249 = vpack.c.b16 %v5217, %v5217
      %v5250 = vpack.c.b16 %v5218, %v5218
      %v5251 = vpack.c.b16 %v5219, %v5219
      %v5252 = vpack.c.b16 %v5220, %v5220
      %v5253 = vpack.c.b16 %v5221, %v5221
      %v5254 = vpack.c.b16 %v5222, %v5222
      %v5255 = vpack.c.b16 %v5223, %v5223
      %v5256 = vpack.c.b16 %v5224, %v5224
      %v5257 = vpack.c.b16 %v5225, %v5225
      %v5258 = vpack.c.b16 %v5226, %v5226
      %v5259 = vpack.c.b16 %v5227, %v5227
      %5260 = vrot.lane.b32.xlu0 %v5228, 8
      %v5261 = vpop.permute.xlu0 %5260
      %5262 = vrot.lane.b32.xlu0 %v5229, 8
      %v5263 = vpop.permute.xlu0 %5262
      %5264 = vrot.lane.b32.xlu0 %v5230, 8
      %v5265 = vpop.permute.xlu0 %5264
      %5266 = vrot.lane.b32.xlu0 %v5231, 8
      %v5267 = vpop.permute.xlu0 %5266
      %5268 = vrot.lane.b32.xlu0 %v5232, 8
      %v5269 = vpop.permute.xlu0 %5268
      %5270 = vrot.lane.b32.xlu0 %v5233, 8
      %v5271 = vpop.permute.xlu0 %5270
      %5272 = vrot.lane.b32.xlu0 %v5234, 8
      %v5273 = vpop.permute.xlu0 %5272
      %5274 = vrot.lane.b32.xlu0 %v5235, 8
      %v5275 = vpop.permute.xlu0 %5274
      %5276 = vrot.lane.b32.xlu0 %v5236, 8
      %v5277 = vpop.permute.xlu0 %5276
      %5278 = vrot.lane.b32.xlu0 %v5237, 8
      %v5279 = vpop.permute.xlu0 %5278
      %5280 = vrot.lane.b32.xlu0 %v5238, 8
      %v5281 = vpop.permute.xlu0 %5280
      %5282 = vrot.lane.b32.xlu0 %v5239, 8
      %v5283 = vpop.permute.xlu0 %5282
      %5284 = vrot.lane.b32.xlu0 %v5240, 8
      %v5285 = vpop.permute.xlu0 %5284
      %5286 = vrot.lane.b32.xlu0 %v5241, 8
      %v5287 = vpop.permute.xlu0 %5286
      %5288 = vrot.lane.b32.xlu0 %v5242, 8
      %v5289 = vpop.permute.xlu0 %5288
      %5290 = vrot.lane.b32.xlu0 %v5243, 8
      %v5291 = vpop.permute.xlu0 %5290
      %5292 = vrot.lane.b32.xlu0 %v5244, 8
      %v5293 = vpop.permute.xlu0 %5292
      %5294 = vrot.lane.b32.xlu0 %v5245, 8
      %v5295 = vpop.permute.xlu0 %5294
      %5296 = vrot.lane.b32.xlu0 %v5246, 8
      %v5297 = vpop.permute.xlu0 %5296
      %5298 = vrot.lane.b32.xlu0 %v5247, 8
      %v5299 = vpop.permute.xlu0 %5298
      %5300 = vrot.lane.b32.xlu0 %v5248, 8
      %v5301 = vpop.permute.xlu0 %5300
      %5302 = vrot.lane.b32.xlu0 %v5249, 8
      %v5303 = vpop.permute.xlu0 %5302
      %5304 = vrot.lane.b32.xlu0 %v5250, 8
      %v5305 = vpop.permute.xlu0 %5304
      %5306 = vrot.lane.b32.xlu0 %v5251, 8
      %v5307 = vpop.permute.xlu0 %5306
      %5308 = vrot.lane.b32.xlu0 %v5252, 8
      %v5309 = vpop.permute.xlu0 %5308
      %5310 = vrot.lane.b32.xlu0 %v5253, 8
      %v5311 = vpop.permute.xlu0 %5310
      %5312 = vrot.lane.b32.xlu0 %v5254, 8
      %v5313 = vpop.permute.xlu0 %5312
      %5314 = vrot.lane.b32.xlu0 %v5255, 8
      %v5315 = vpop.permute.xlu0 %5314
      %5316 = vrot.lane.b32.xlu0 %v5256, 8
      %v5317 = vpop.permute.xlu0 %5316
      %5318 = vrot.lane.b32.xlu0 %v5257, 8
      %v5319 = vpop.permute.xlu0 %5318
      %5320 = vrot.lane.b32.xlu0 %v5258, 8
      %v5321 = vpop.permute.xlu0 %5320
      %5322 = vrot.lane.b32.xlu0 %v5259, 8
      %v5323 = vpop.permute.xlu0 %5322
      %5356 = vst.msk [vmem:[#allocation5] sm:$0xf] %vm797, %v5261
      %5357 = vst.msk [vmem:[#allocation5 + $0x4] sm:$0xf] %vm797, %v5263
      %5358 = vst.msk [vmem:[#allocation5 + $0x8] sm:$0xf] %vm797, %v5265
      %5359 = vst.msk [vmem:[#allocation5 + $0xc] sm:$0xf] %vm797, %v5267
      %5360 = vst.msk [vmem:[#allocation5 + $0x10] sm:$0xf] %vm797, %v5269
      %5361 = vst.msk [vmem:[#allocation5 + $0x14] sm:$0xf] %vm797, %v5271
      %5362 = vst.msk [vmem:[#allocation5 + $0x18] sm:$0xf] %vm797, %v5273
      %5363 = vst.msk [vmem:[#allocation5 + $0x1c] sm:$0xf] %vm797, %v5275
      %5364 = vst.msk [vmem:[#allocation5 + $0x20] sm:$0xf] %vm797, %v5277
      %5365 = vst.msk [vmem:[#allocation5 + $0x24] sm:$0xf] %vm797, %v5279
      %5366 = vst.msk [vmem:[#allocation5 + $0x28] sm:$0xf] %vm797, %v5281
      %5367 = vst.msk [vmem:[#allocation5 + $0x2c] sm:$0xf] %vm797, %v5283
      %5368 = vst.msk [vmem:[#allocation5 + $0x30] sm:$0xf] %vm797, %v5285
      %5369 = vst.msk [vmem:[#allocation5 + $0x34] sm:$0xf] %vm797, %v5287
      %5370 = vst.msk [vmem:[#allocation5 + $0x38] sm:$0xf] %vm797, %v5289
      %5371 = vst.msk [vmem:[#allocation5 + $0x3c] sm:$0xf] %vm797, %v5291
      %5372 = vst.msk [vmem:[#allocation5 + $0x40] sm:$0xf] %vm797, %v5293
      %5373 = vst.msk [vmem:[#allocation5 + $0x44] sm:$0xf] %vm797, %v5295
      %5374 = vst.msk [vmem:[#allocation5 + $0x48] sm:$0xf] %vm797, %v5297
      %5375 = vst.msk [vmem:[#allocation5 + $0x4c] sm:$0xf] %vm797, %v5299
      %5376 = vst.msk [vmem:[#allocation5 + $0x50] sm:$0xf] %vm797, %v5301
      %5377 = vst.msk [vmem:[#allocation5 + $0x54] sm:$0xf] %vm797, %v5303
      %5378 = vst.msk [vmem:[#allocation5 + $0x58] sm:$0xf] %vm797, %v5305
      %5379 = vst.msk [vmem:[#allocation5 + $0x5c] sm:$0xf] %vm797, %v5307
      %5380 = vst.msk [vmem:[#allocation5 + $0x60] sm:$0xf] %vm797, %v5309
      %5381 = vst.msk [vmem:[#allocation5 + $0x64] sm:$0xf] %vm797, %v5311
      %5382 = vst.msk [vmem:[#allocation5 + $0x68] sm:$0xf] %vm797, %v5313
      %5383 = vst.msk [vmem:[#allocation5 + $0x6c] sm:$0xf] %vm797, %v5315
      %5384 = vst.msk [vmem:[#allocation5 + $0x70] sm:$0xf] %vm797, %v5317
      %5385 = vst.msk [vmem:[#allocation5 + $0x74] sm:$0xf] %vm797, %v5319
      %5386 = vst.msk [vmem:[#allocation5 + $0x78] sm:$0xf] %vm797, %v5321
      %5387 = vst.msk [vmem:[#allocation5 + $0x7c] sm:$0xf] %vm797, %v5323
      %v5388 = vld [vmem:[%s3835 + $0x2] sm:$0xff]
      %v5389 = vld [vmem:[%s3835 + $0xa] sm:$0xff]
      %v5390 = vld [vmem:[%s3835 + $0x1a] sm:$0xff]
      %v5391 = vld [vmem:[%s3835 + $0x22] sm:$0xff]
      %v5392 = vld [vmem:[%s3835 + $0x32] sm:$0xff]
      %v5393 = vld [vmem:[%s3835 + $0x3a] sm:$0xff]
      %v5394 = vld [vmem:[%s3835 + $0x4a] sm:$0xff]
      %v5395 = vld [vmem:[%s3835 + $0x52] sm:$0xff]
      %v5396 = vld [vmem:[%s3835 + $0x62] sm:$0xff]
      %v5397 = vld [vmem:[%s3835 + $0x6a] sm:$0xff]
      %v5398 = vld [vmem:[%s3835 + $0x7a] sm:$0xff]
      %v5399 = vld [vmem:[%s3835 + $0x82] sm:$0xff]
      %v5400 = vld [vmem:[%s3835 + $0x92] sm:$0xff]
      %v5401 = vld [vmem:[%s3835 + $0x9a] sm:$0xff]
      %v5402 = vld [vmem:[%s3835 + $0xaa] sm:$0xff]
      %v5403 = vld [vmem:[%s3835 + $0xb2] sm:$0xff]
      %v5404 = vld [vmem:[%s3835 + $0xc2] sm:$0xff]
      %v5405 = vld [vmem:[%s3835 + $0xca] sm:$0xff]
      %v5406 = vld [vmem:[%s3835 + $0xda] sm:$0xff]
      %v5407 = vld [vmem:[%s3835 + $0xe2] sm:$0xff]
      %v5408 = vld [vmem:[%s3835 + $0xf2] sm:$0xff]
      %v5409 = vld [vmem:[%s3835 + $0xfa] sm:$0xff]
      %v5410 = vld [vmem:[%s3835 + $0x10a] sm:$0xff]
      %v5411 = vld [vmem:[%s3835 + $0x112] sm:$0xff]
      %v5412 = vld [vmem:[%s3835 + $0x122] sm:$0xff]
      %v5413 = vld [vmem:[%s3835 + $0x12a] sm:$0xff]
      %v5414 = vld [vmem:[%s3835 + $0x13a] sm:$0xff]
      %v5415 = vld [vmem:[%s3835 + $0x142] sm:$0xff]
      %v5416 = vld [vmem:[%s3835 + $0x152] sm:$0xff]
      %v5417 = vld [vmem:[%s3835 + $0x15a] sm:$0xff]
      %v5418 = vld [vmem:[%s3835 + $0x16a] sm:$0xff]
      %v5419 = vld [vmem:[%s3835 + $0x172] sm:$0xff]
      %v5420 = vpack.c.bf16 %v5389, %v5388
      %v5421 = vpack.c.bf16 %v5391, %v5390
      %v5422 = vpack.c.bf16 %v5393, %v5392
      %v5423 = vpack.c.bf16 %v5395, %v5394
      %v5424 = vpack.c.bf16 %v5397, %v5396
      %v5425 = vpack.c.bf16 %v5399, %v5398
      %v5426 = vpack.c.bf16 %v5401, %v5400
      %v5427 = vpack.c.bf16 %v5403, %v5402
      %v5428 = vpack.c.bf16 %v5405, %v5404
      %v5429 = vpack.c.bf16 %v5407, %v5406
      %v5430 = vpack.c.bf16 %v5409, %v5408
      %v5431 = vpack.c.bf16 %v5411, %v5410
      %v5432 = vpack.c.bf16 %v5413, %v5412
      %v5433 = vpack.c.bf16 %v5415, %v5414
      %v5434 = vpack.c.bf16 %v5417, %v5416
      %v5435 = vpack.c.bf16 %v5419, %v5418
      %v5452 = vunpack.c.l.b16 %v5420
      %v5453 = vunpack.c.h.b16 %v5420
      %v5454 = vunpack.c.l.b16 %v5421
      %v5455 = vunpack.c.h.b16 %v5421
      %v5456 = vunpack.c.l.b16 %v5422
      %v5457 = vunpack.c.h.b16 %v5422
      %v5458 = vunpack.c.l.b16 %v5423
      %v5459 = vunpack.c.h.b16 %v5423
      %v5460 = vunpack.c.l.b16 %v5424
      %v5461 = vunpack.c.h.b16 %v5424
      %v5462 = vunpack.c.l.b16 %v5425
      %v5463 = vunpack.c.h.b16 %v5425
      %v5464 = vunpack.c.l.b16 %v5426
      %v5465 = vunpack.c.h.b16 %v5426
      %v5466 = vunpack.c.l.b16 %v5427
      %v5467 = vunpack.c.h.b16 %v5427
      %v5468 = vunpack.c.l.b16 %v5428
      %v5469 = vunpack.c.h.b16 %v5428
      %v5470 = vunpack.c.l.b16 %v5429
      %v5471 = vunpack.c.h.b16 %v5429
      %v5472 = vunpack.c.l.b16 %v5430
      %v5473 = vunpack.c.h.b16 %v5430
      %v5474 = vunpack.c.l.b16 %v5431
      %v5475 = vunpack.c.h.b16 %v5431
      %v5476 = vunpack.c.l.b16 %v5432
      %v5477 = vunpack.c.h.b16 %v5432
      %v5478 = vunpack.c.l.b16 %v5433
      %v5479 = vunpack.c.h.b16 %v5433
      %v5480 = vunpack.c.l.b16 %v5434
      %v5481 = vunpack.c.h.b16 %v5434
      %v5482 = vunpack.c.l.b16 %v5435
      %v5483 = vunpack.c.h.b16 %v5435
      %v5484 = vpack.c.b16 %v5452, %v5452
      %v5485 = vpack.c.b16 %v5453, %v5453
      %v5486 = vpack.c.b16 %v5454, %v5454
      %v5487 = vpack.c.b16 %v5455, %v5455
      %v5488 = vpack.c.b16 %v5456, %v5456
      %v5489 = vpack.c.b16 %v5457, %v5457
      %v5490 = vpack.c.b16 %v5458, %v5458
      %v5491 = vpack.c.b16 %v5459, %v5459
      %v5492 = vpack.c.b16 %v5460, %v5460
      %v5493 = vpack.c.b16 %v5461, %v5461
      %v5494 = vpack.c.b16 %v5462, %v5462
      %v5495 = vpack.c.b16 %v5463, %v5463
      %v5496 = vpack.c.b16 %v5464, %v5464
      %v5497 = vpack.c.b16 %v5465, %v5465
      %v5498 = vpack.c.b16 %v5466, %v5466
      %v5499 = vpack.c.b16 %v5467, %v5467
      %v5500 = vpack.c.b16 %v5468, %v5468
      %v5501 = vpack.c.b16 %v5469, %v5469
      %v5502 = vpack.c.b16 %v5470, %v5470
      %v5503 = vpack.c.b16 %v5471, %v5471
      %v5504 = vpack.c.b16 %v5472, %v5472
      %v5505 = vpack.c.b16 %v5473, %v5473
      %v5506 = vpack.c.b16 %v5474, %v5474
      %v5507 = vpack.c.b16 %v5475, %v5475
      %v5508 = vpack.c.b16 %v5476, %v5476
      %v5509 = vpack.c.b16 %v5477, %v5477
      %v5510 = vpack.c.b16 %v5478, %v5478
      %v5511 = vpack.c.b16 %v5479, %v5479
      %v5512 = vpack.c.b16 %v5480, %v5480
      %v5513 = vpack.c.b16 %v5481, %v5481
      %v5514 = vpack.c.b16 %v5482, %v5482
      %v5515 = vpack.c.b16 %v5483, %v5483
      %5516 = vrot.lane.b32.xlu0 %v5484, 16
      %v5517 = vpop.permute.xlu0 %5516
      %5518 = vrot.lane.b32.xlu0 %v5485, 16
      %v5519 = vpop.permute.xlu0 %5518
      %5520 = vrot.lane.b32.xlu0 %v5486, 16
      %v5521 = vpop.permute.xlu0 %5520
      %5522 = vrot.lane.b32.xlu0 %v5487, 16
      %v5523 = vpop.permute.xlu0 %5522
      %5524 = vrot.lane.b32.xlu0 %v5488, 16
      %v5525 = vpop.permute.xlu0 %5524
      %5526 = vrot.lane.b32.xlu0 %v5489, 16
      %v5527 = vpop.permute.xlu0 %5526
      %5528 = vrot.lane.b32.xlu0 %v5490, 16
      %v5529 = vpop.permute.xlu0 %5528
      %5530 = vrot.lane.b32.xlu0 %v5491, 16
      %v5531 = vpop.permute.xlu0 %5530
      %5532 = vrot.lane.b32.xlu0 %v5492, 16
      %v5533 = vpop.permute.xlu0 %5532
      %5534 = vrot.lane.b32.xlu0 %v5493, 16
      %v5535 = vpop.permute.xlu0 %5534
      %5536 = vrot.lane.b32.xlu0 %v5494, 16
      %v5537 = vpop.permute.xlu0 %5536
      %5538 = vrot.lane.b32.xlu0 %v5495, 16
      %v5539 = vpop.permute.xlu0 %5538
      %5540 = vrot.lane.b32.xlu0 %v5496, 16
      %v5541 = vpop.permute.xlu0 %5540
      %5542 = vrot.lane.b32.xlu0 %v5497, 16
      %v5543 = vpop.permute.xlu0 %5542
      %5544 = vrot.lane.b32.xlu0 %v5498, 16
      %v5545 = vpop.permute.xlu0 %5544
      %5546 = vrot.lane.b32.xlu0 %v5499, 16
      %v5547 = vpop.permute.xlu0 %5546
      %5548 = vrot.lane.b32.xlu0 %v5500, 16
      %v5549 = vpop.permute.xlu0 %5548
      %5550 = vrot.lane.b32.xlu0 %v5501, 16
      %v5551 = vpop.permute.xlu0 %5550
      %5552 = vrot.lane.b32.xlu0 %v5502, 16
      %v5553 = vpop.permute.xlu0 %5552
      %5554 = vrot.lane.b32.xlu0 %v5503, 16
      %v5555 = vpop.permute.xlu0 %5554
      %5556 = vrot.lane.b32.xlu0 %v5504, 16
      %v5557 = vpop.permute.xlu0 %5556
      %5558 = vrot.lane.b32.xlu0 %v5505, 16
      %v5559 = vpop.permute.xlu0 %5558
      %5560 = vrot.lane.b32.xlu0 %v5506, 16
      %v5561 = vpop.permute.xlu0 %5560
      %5562 = vrot.lane.b32.xlu0 %v5507, 16
      %v5563 = vpop.permute.xlu0 %5562
      %5564 = vrot.lane.b32.xlu0 %v5508, 16
      %v5565 = vpop.permute.xlu0 %5564
      %5566 = vrot.lane.b32.xlu0 %v5509, 16
      %v5567 = vpop.permute.xlu0 %5566
      %5568 = vrot.lane.b32.xlu0 %v5510, 16
      %v5569 = vpop.permute.xlu0 %5568
      %5570 = vrot.lane.b32.xlu0 %v5511, 16
      %v5571 = vpop.permute.xlu0 %5570
      %5572 = vrot.lane.b32.xlu0 %v5512, 16
      %v5573 = vpop.permute.xlu0 %5572
      %5574 = vrot.lane.b32.xlu0 %v5513, 16
      %v5575 = vpop.permute.xlu0 %5574
      %5576 = vrot.lane.b32.xlu0 %v5514, 16
      %v5577 = vpop.permute.xlu0 %5576
      %5578 = vrot.lane.b32.xlu0 %v5515, 16
      %v5579 = vpop.permute.xlu0 %5578
      %5612 = vst.msk [vmem:[#allocation5] sm:$0xf] %vm1054, %v5517
      %5613 = vst.msk [vmem:[#allocation5 + $0x4] sm:$0xf] %vm1054, %v5519
      %5614 = vst.msk [vmem:[#allocation5 + $0x8] sm:$0xf] %vm1054, %v5521
      %5615 = vst.msk [vmem:[#allocation5 + $0xc] sm:$0xf] %vm1054, %v5523
      %5616 = vst.msk [vmem:[#allocation5 + $0x10] sm:$0xf] %vm1054, %v5525
      %5617 = vst.msk [vmem:[#allocation5 + $0x14] sm:$0xf] %vm1054, %v5527
      %5618 = vst.msk [vmem:[#allocation5 + $0x18] sm:$0xf] %vm1054, %v5529
      %5619 = vst.msk [vmem:[#allocation5 + $0x1c] sm:$0xf] %vm1054, %v5531
      %5620 = vst.msk [vmem:[#allocation5 + $0x20] sm:$0xf] %vm1054, %v5533
      %5621 = vst.msk [vmem:[#allocation5 + $0x24] sm:$0xf] %vm1054, %v5535
      %5622 = vst.msk [vmem:[#allocation5 + $0x28] sm:$0xf] %vm1054, %v5537
      %5623 = vst.msk [vmem:[#allocation5 + $0x2c] sm:$0xf] %vm1054, %v5539
      %5624 = vst.msk [vmem:[#allocation5 + $0x30] sm:$0xf] %vm1054, %v5541
      %5625 = vst.msk [vmem:[#allocation5 + $0x34] sm:$0xf] %vm1054, %v5543
      %5626 = vst.msk [vmem:[#allocation5 + $0x38] sm:$0xf] %vm1054, %v5545
      %5627 = vst.msk [vmem:[#allocation5 + $0x3c] sm:$0xf] %vm1054, %v5547
      %5628 = vst.msk [vmem:[#allocation5 + $0x40] sm:$0xf] %vm1054, %v5549
      %5629 = vst.msk [vmem:[#allocation5 + $0x44] sm:$0xf] %vm1054, %v5551
      %5630 = vst.msk [vmem:[#allocation5 + $0x48] sm:$0xf] %vm1054, %v5553
      %5631 = vst.msk [vmem:[#allocation5 + $0x4c] sm:$0xf] %vm1054, %v5555
      %5632 = vst.msk [vmem:[#allocation5 + $0x50] sm:$0xf] %vm1054, %v5557
      %5633 = vst.msk [vmem:[#allocation5 + $0x54] sm:$0xf] %vm1054, %v5559
      %5634 = vst.msk [vmem:[#allocation5 + $0x58] sm:$0xf] %vm1054, %v5561
      %5635 = vst.msk [vmem:[#allocation5 + $0x5c] sm:$0xf] %vm1054, %v5563
      %5636 = vst.msk [vmem:[#allocation5 + $0x60] sm:$0xf] %vm1054, %v5565
      %5637 = vst.msk [vmem:[#allocation5 + $0x64] sm:$0xf] %vm1054, %v5567
      %5638 = vst.msk [vmem:[#allocation5 + $0x68] sm:$0xf] %vm1054, %v5569
      %5639 = vst.msk [vmem:[#allocation5 + $0x6c] sm:$0xf] %vm1054, %v5571
      %5640 = vst.msk [vmem:[#allocation5 + $0x70] sm:$0xf] %vm1054, %v5573
      %5641 = vst.msk [vmem:[#allocation5 + $0x74] sm:$0xf] %vm1054, %v5575
      %5642 = vst.msk [vmem:[#allocation5 + $0x78] sm:$0xf] %vm1054, %v5577
      %5643 = vst.msk [vmem:[#allocation5 + $0x7c] sm:$0xf] %vm1054, %v5579
      %v5644 = vld [vmem:[#allocation5] sm:$0xf]
      %v5645 = vld [vmem:[#allocation5 + $0x4] sm:$0xf]
      %v5646 = vld [vmem:[#allocation5 + $0x8] sm:$0xf]
      %v5647 = vld [vmem:[#allocation5 + $0xc] sm:$0xf]
      %v5648 = vld [vmem:[#allocation5 + $0x10] sm:$0xf]
      %v5649 = vld [vmem:[#allocation5 + $0x14] sm:$0xf]
      %v5650 = vld [vmem:[#allocation5 + $0x18] sm:$0xf]
      %v5651 = vld [vmem:[#allocation5 + $0x1c] sm:$0xf]
      %v5652 = vld [vmem:[#allocation5 + $0x20] sm:$0xf]
      %v5653 = vld [vmem:[#allocation5 + $0x24] sm:$0xf]
      %v5654 = vld [vmem:[#allocation5 + $0x28] sm:$0xf]
      %v5655 = vld [vmem:[#allocation5 + $0x2c] sm:$0xf]
      %v5656 = vld [vmem:[#allocation5 + $0x30] sm:$0xf]
      %v5657 = vld [vmem:[#allocation5 + $0x34] sm:$0xf]
      %v5658 = vld [vmem:[#allocation5 + $0x38] sm:$0xf]
      %v5659 = vld [vmem:[#allocation5 + $0x3c] sm:$0xf]
      %v5660 = vld [vmem:[#allocation5 + $0x40] sm:$0xf]
      %v5661 = vld [vmem:[#allocation5 + $0x44] sm:$0xf]
      %v5662 = vld [vmem:[#allocation5 + $0x48] sm:$0xf]
      %v5663 = vld [vmem:[#allocation5 + $0x4c] sm:$0xf]
      %v5664 = vld [vmem:[#allocation5 + $0x50] sm:$0xf]
      %v5665 = vld [vmem:[#allocation5 + $0x54] sm:$0xf]
      %v5666 = vld [vmem:[#allocation5 + $0x58] sm:$0xf]
      %v5667 = vld [vmem:[#allocation5 + $0x5c] sm:$0xf]
      %v5668 = vld [vmem:[#allocation5 + $0x60] sm:$0xf]
      %v5669 = vld [vmem:[#allocation5 + $0x64] sm:$0xf]
      %v5670 = vld [vmem:[#allocation5 + $0x68] sm:$0xf]
      %v5671 = vld [vmem:[#allocation5 + $0x6c] sm:$0xf]
      %v5672 = vld [vmem:[#allocation5 + $0x70] sm:$0xf]
      %v5673 = vld [vmem:[#allocation5 + $0x74] sm:$0xf]
      %v5674 = vld [vmem:[#allocation5 + $0x78] sm:$0xf]
      %v5675 = vld [vmem:[#allocation5 + $0x7c] sm:$0xf]
      %s5676 = scalar_lea.vmem %s3, 12
      %v5677 = vld [vmem:[%s5676] sm:$0xf]
      %v5678 = vld [vmem:[%s5676 + $0x4] sm:$0xf]
      %v5679 = vld [vmem:[%s5676 + $0x8] sm:$0xf]
      %v5712 = vunpack.c.l.b16 %v5644
      %v5713 = vunpack.c.l.b16 %v5645
      %v5714 = vunpack.c.l.b16 %v5646
      %v5715 = vunpack.c.l.b16 %v5647
      %v5716 = vunpack.c.l.b16 %v5648
      %v5717 = vunpack.c.l.b16 %v5649
      %v5718 = vunpack.c.l.b16 %v5650
      %v5719 = vunpack.c.l.b16 %v5651
      %v5720 = vunpack.c.l.b16 %v5652
      %v5721 = vunpack.c.l.b16 %v5653
      %v5722 = vunpack.c.l.b16 %v5654
      %v5723 = vunpack.c.l.b16 %v5655
      %v5724 = vunpack.c.l.b16 %v5656
      %v5725 = vunpack.c.l.b16 %v5657
      %v5726 = vunpack.c.l.b16 %v5658
      %v5727 = vunpack.c.l.b16 %v5659
      %v5728 = vunpack.c.l.b16 %v5660
      %v5729 = vunpack.c.l.b16 %v5661
      %v5730 = vunpack.c.l.b16 %v5662
      %v5731 = vunpack.c.l.b16 %v5663
      %v5732 = vunpack.c.l.b16 %v5664
      %v5733 = vunpack.c.l.b16 %v5665
      %v5734 = vunpack.c.l.b16 %v5666
      %v5735 = vunpack.c.l.b16 %v5667
      %v5736 = vunpack.c.l.b16 %v5668
      %v5737 = vunpack.c.l.b16 %v5669
      %v5738 = vunpack.c.l.b16 %v5670
      %v5739 = vunpack.c.l.b16 %v5671
      %v5740 = vunpack.c.l.b16 %v5672
      %v5741 = vunpack.c.l.b16 %v5673
      %v5742 = vunpack.c.l.b16 %v5674
      %v5743 = vunpack.c.l.b16 %v5675
      %v5744 = vpack.c.b16 %v5713, %v5712
      %v5745 = vpack.c.b16 %v5715, %v5714
      %v5746 = vpack.c.b16 %v5717, %v5716
      %v5747 = vpack.c.b16 %v5719, %v5718
      %v5748 = vpack.c.b16 %v5721, %v5720
      %v5749 = vpack.c.b16 %v5723, %v5722
      %v5750 = vpack.c.b16 %v5725, %v5724
      %v5751 = vpack.c.b16 %v5727, %v5726
      %v5752 = vpack.c.b16 %v5729, %v5728
      %v5753 = vpack.c.b16 %v5731, %v5730
      %v5754 = vpack.c.b16 %v5733, %v5732
      %v5755 = vpack.c.b16 %v5735, %v5734
      %v5756 = vpack.c.b16 %v5737, %v5736
      %v5757 = vpack.c.b16 %v5739, %v5738
      %v5758 = vpack.c.b16 %v5741, %v5740
      %v5759 = vpack.c.b16 %v5743, %v5742
      %v5763 = vunpack.c.l.b16 %v5677
      %v5764 = vunpack.c.l.b16 %v5678
      %v5765 = vunpack.c.l.b16 %v5679
      %v5766 = vpack.c.b16 %v5764, %v5763
      %v5767 = vpack.c.b16 %v5765, %v5765
      %v5770 = vsel %vm1211, %v5744, 0
      %v5773 = vsel %vm1211, %v5745, 0
      %v5776 = vsel %vm1211, %v5746, 0
      %v5779 = vsel %vm1211, %v5747, 0
      %v5782 = vsel %vm1211, %v5748, 0
      %v5785 = vsel %vm1211, %v5749, 0
      %v5788 = vsel %vm1211, %v5750, 0
      %v5791 = vsel %vm1211, %v5751, 0
      %v5794 = vsel %vm1211, %v5752, 0
      %v5797 = vsel %vm1211, %v5753, 0
      %v5800 = vsel %vm1211, %v5754, 0
      %v5803 = vsel %vm1211, %v5755, 0
      %v5806 = vsel %vm1211, %v5756, 0
      %v5809 = vsel %vm1211, %v5757, 0
      %v5812 = vsel %vm1211, %v5758, 0
      %v5815 = vsel %vm1211, %v5759, 0
      %v5818 = vsel %vm1260, %v5767, 0
      %5820 = vmatprep.subr.bf16.mxu0 0
      %5821 = vmatpush1.bf16.msra.mxu0 0
      %5822 = vmatprep.subr.bf16.mxu0 0
      %5823 = vmatpush1.bf16.msra.mxu0 0
      %5824 = vmatprep.subr.bf16.mxu0 0
      %5825 = vmatpush1.bf16.msra.mxu0 0
      %5826 = vmatprep.subr.bf16.mxu0 0
      %5827 = vmatpush1.bf16.msra.mxu0 0
      %5828 = vmatprep.subr.bf16.mxu0 0
      %5829 = vmatpush1.bf16.msra.mxu0 0
      %5830 = vmatprep.subr.bf16.mxu0 0
      %5831 = vmatpush1.bf16.msra.mxu0 0
      %5832 = vmatprep.subr.bf16.mxu0 0
      %5833 = vmatpush1.bf16.msra.mxu0 %v5818
      %5834 = vmatprep.subr.bf16.mxu0 0
      %5835 = vmatpush1.bf16.msra.mxu0 %v5766
      %5836 = vmatprep.subr.bf16.mxu0 0
      %5837 = vmatpush2.bf16.msra.mxu0 0
      %5838 = vmatprep.subr.bf16.mxu0 0
      %5839 = vmatpush2.bf16.msra.mxu0 0
      %5840 = vmatprep.subr.bf16.mxu0 0
      %5841 = vmatpush2.bf16.msra.mxu0 0
      %5842 = vmatprep.subr.bf16.mxu0 0
      %5843 = vmatpush2.bf16.msra.mxu0 0
      %5844 = vmatprep.subr.bf16.mxu0 0
      %5845 = vmatpush2.bf16.msra.mxu0 0
      %5846 = vmatprep.subr.bf16.mxu0 0
      %5847 = vmatpush2.bf16.msra.mxu0 0
      %5848 = vmatprep.subr.bf16.mxu0 0
      %5849 = vmatpush2.bf16.msra.mxu0 0
      %5850 = vmatprep.subr.bf16.mxu0 0
      %5851 = vmatpush2.bf16.msra.mxu0 0
      %5852 = vmatprep.mubr.bf16.mxu0 0
      %5853 = vmatmul.mubr.bf16.gmra.mxu0 %v5770
      %v5854 = vpop.f32.mrf.mxu0
      %v5855 = vadd.f32 0.0, %v5854
      %v5856 = vpop.f32.mrf.mxu0
      %v5857 = vpop.f32.mrf.mxu0
      %v5858 = vadd.f32 0.0, %v5857
      %v5859 = vpop.f32.mrf.mxu0
      %5860 = vmatprep.mubr.bf16.mxu0 0
      %5861 = vmatmul.mubr.bf16.gmra.mxu0 %v5773
      %v5862 = vpop.f32.mrf.mxu0
      %v5863 = vadd.f32 0.0, %v5862
      %v5864 = vpop.f32.mrf.mxu0
      %v5865 = vpop.f32.mrf.mxu0
      %v5866 = vadd.f32 0.0, %v5865
      %v5867 = vpop.f32.mrf.mxu0
      %5868 = vmatprep.mubr.bf16.mxu0 0
      %5869 = vmatmul.mubr.bf16.gmra.mxu0 %v5776
      %v5870 = vpop.f32.mrf.mxu0
      %v5871 = vadd.f32 0.0, %v5870
      %v5872 = vpop.f32.mrf.mxu0
      %v5873 = vpop.f32.mrf.mxu0
      %v5874 = vadd.f32 0.0, %v5873
      %v5875 = vpop.f32.mrf.mxu0
      %5876 = vmatprep.mubr.bf16.mxu0 0
      %5877 = vmatmul.mubr.bf16.gmra.mxu0 %v5779
      %v5878 = vpop.f32.mrf.mxu0
      %v5879 = vadd.f32 0.0, %v5878
      %v5880 = vpop.f32.mrf.mxu0
      %v5881 = vpop.f32.mrf.mxu0
      %v5882 = vadd.f32 0.0, %v5881
      %v5883 = vpop.f32.mrf.mxu0
      %5884 = vmatprep.mubr.bf16.mxu0 0
      %5885 = vmatmul.mubr.bf16.gmra.mxu0 %v5782
      %v5886 = vpop.f32.mrf.mxu0
      %v5887 = vadd.f32 0.0, %v5886
      %v5888 = vpop.f32.mrf.mxu0
      %v5889 = vpop.f32.mrf.mxu0
      %v5890 = vadd.f32 0.0, %v5889
      %v5891 = vpop.f32.mrf.mxu0
      %5892 = vmatprep.mubr.bf16.mxu0 0
      %5893 = vmatmul.mubr.bf16.gmra.mxu0 %v5785
      %v5894 = vpop.f32.mrf.mxu0
      %v5895 = vadd.f32 0.0, %v5894
      %v5896 = vpop.f32.mrf.mxu0
      %v5897 = vpop.f32.mrf.mxu0
      %v5898 = vadd.f32 0.0, %v5897
      %v5899 = vpop.f32.mrf.mxu0
      %5900 = vmatprep.mubr.bf16.mxu0 0
      %5901 = vmatmul.mubr.bf16.gmra.mxu0 %v5788
      %v5902 = vpop.f32.mrf.mxu0
      %v5903 = vadd.f32 0.0, %v5902
      %v5904 = vpop.f32.mrf.mxu0
      %v5905 = vpop.f32.mrf.mxu0
      %v5906 = vadd.f32 0.0, %v5905
      %v5907 = vpop.f32.mrf.mxu0
      %5908 = vmatprep.mubr.bf16.mxu0 0
      %5909 = vmatmul.mubr.bf16.gmra.mxu0 %v5791
      %v5910 = vpop.f32.mrf.mxu0
      %v5911 = vadd.f32 0.0, %v5910
      %v5912 = vpop.f32.mrf.mxu0
      %v5913 = vpop.f32.mrf.mxu0
      %v5914 = vadd.f32 0.0, %v5913
      %v5915 = vpop.f32.mrf.mxu0
      %5916 = vmatprep.mubr.bf16.mxu0 0
      %5917 = vmatmul.mubr.bf16.gmra.mxu0 %v5794
      %v5918 = vpop.f32.mrf.mxu0
      %v5919 = vadd.f32 0.0, %v5918
      %v5920 = vpop.f32.mrf.mxu0
      %v5921 = vpop.f32.mrf.mxu0
      %v5922 = vadd.f32 0.0, %v5921
      %v5923 = vpop.f32.mrf.mxu0
      %5924 = vmatprep.mubr.bf16.mxu0 0
      %5925 = vmatmul.mubr.bf16.gmra.mxu0 %v5797
      %v5926 = vpop.f32.mrf.mxu0
      %v5927 = vadd.f32 0.0, %v5926
      %v5928 = vpop.f32.mrf.mxu0
      %v5929 = vpop.f32.mrf.mxu0
      %v5930 = vadd.f32 0.0, %v5929
      %v5931 = vpop.f32.mrf.mxu0
      %5932 = vmatprep.mubr.bf16.mxu0 0
      %5933 = vmatmul.mubr.bf16.gmra.mxu0 %v5800
      %v5934 = vpop.f32.mrf.mxu0
      %v5935 = vadd.f32 0.0, %v5934
      %v5936 = vpop.f32.mrf.mxu0
      %v5937 = vpop.f32.mrf.mxu0
      %v5938 = vadd.f32 0.0, %v5937
      %v5939 = vpop.f32.mrf.mxu0
      %5940 = vmatprep.mubr.bf16.mxu0 0
      %5941 = vmatmul.mubr.bf16.gmra.mxu0 %v5803
      %v5942 = vpop.f32.mrf.mxu0
      %v5943 = vadd.f32 0.0, %v5942
      %v5944 = vpop.f32.mrf.mxu0
      %v5945 = vpop.f32.mrf.mxu0
      %v5946 = vadd.f32 0.0, %v5945
      %v5947 = vpop.f32.mrf.mxu0
      %5948 = vmatprep.mubr.bf16.mxu0 0
      %5949 = vmatmul.mubr.bf16.gmra.mxu0 %v5806
      %v5950 = vpop.f32.mrf.mxu0
      %v5951 = vadd.f32 0.0, %v5950
      %v5952 = vpop.f32.mrf.mxu0
      %v5953 = vpop.f32.mrf.mxu0
      %v5954 = vadd.f32 0.0, %v5953
      %v5955 = vpop.f32.mrf.mxu0
      %5956 = vmatprep.mubr.bf16.mxu0 0
      %5957 = vmatmul.mubr.bf16.gmra.mxu0 %v5809
      %v5958 = vpop.f32.mrf.mxu0
      %v5959 = vadd.f32 0.0, %v5958
      %v5960 = vpop.f32.mrf.mxu0
      %v5961 = vpop.f32.mrf.mxu0
      %v5962 = vadd.f32 0.0, %v5961
      %v5963 = vpop.f32.mrf.mxu0
      %5964 = vmatprep.mubr.bf16.mxu0 0
      %5965 = vmatmul.mubr.bf16.gmra.mxu0 %v5812
      %v5966 = vpop.f32.mrf.mxu0
      %v5967 = vadd.f32 0.0, %v5966
      %v5968 = vpop.f32.mrf.mxu0
      %v5969 = vpop.f32.mrf.mxu0
      %v5970 = vadd.f32 0.0, %v5969
      %v5971 = vpop.f32.mrf.mxu0
      %5972 = vmatprep.mubr.bf16.mxu0 0
      %5973 = vmatmul.mubr.bf16.gmra.mxu0 %v5815
      %v5974 = vpop.f32.mrf.mxu0
      %v5975 = vadd.f32 0.0, %v5974
      %v5976 = vpop.f32.mrf.mxu0
      %v5977 = vpop.f32.mrf.mxu0
      %v5978 = vadd.f32 0.0, %v5977
      %v5979 = vpop.f32.mrf.mxu0
      %5980 = vdwg.mxu0
      %v5981 = vld [vmem:[#allocation6] sm:$0xff]
      %v5982 = vld [vmem:[#allocation6 + $0x8] sm:$0xff]
      %v5983 = vld [vmem:[#allocation6 + $0x10] sm:$0xff]
      %v5984 = vld [vmem:[#allocation6 + $0x18] sm:$0xff]
      %v5985 = vld [vmem:[#allocation6 + $0x20] sm:$0xff]
      %v5986 = vld [vmem:[#allocation6 + $0x28] sm:$0xff]
      %v5987 = vld [vmem:[#allocation6 + $0x30] sm:$0xff]
      %v5988 = vld [vmem:[#allocation6 + $0x38] sm:$0xff]
      %v5989 = vld [vmem:[#allocation6 + $0x40] sm:$0xff]
      %v5990 = vld [vmem:[#allocation6 + $0x48] sm:$0xff]
      %v5991 = vld [vmem:[#allocation6 + $0x50] sm:$0xff]
      %v5992 = vld [vmem:[#allocation6 + $0x58] sm:$0xff]
      %v5993 = vld [vmem:[#allocation6 + $0x60] sm:$0xff]
      %v5994 = vld [vmem:[#allocation6 + $0x68] sm:$0xff]
      %v5995 = vld [vmem:[#allocation6 + $0x70] sm:$0xff]
      %v5996 = vld [vmem:[#allocation6 + $0x78] sm:$0xff]
      %v5997 = vld [vmem:[#allocation6 + $0x80] sm:$0xff]
      %v5998 = vld [vmem:[#allocation6 + $0x88] sm:$0xff]
      %v5999 = vld [vmem:[#allocation6 + $0x90] sm:$0xff]
      %v6000 = vld [vmem:[#allocation6 + $0x98] sm:$0xff]
      %v6001 = vld [vmem:[#allocation6 + $0xa0] sm:$0xff]
      %v6002 = vld [vmem:[#allocation6 + $0xa8] sm:$0xff]
      %v6003 = vld [vmem:[#allocation6 + $0xb0] sm:$0xff]
      %v6004 = vld [vmem:[#allocation6 + $0xb8] sm:$0xff]
      %v6005 = vld [vmem:[#allocation6 + $0xc0] sm:$0xff]
      %v6006 = vld [vmem:[#allocation6 + $0xc8] sm:$0xff]
      %v6007 = vld [vmem:[#allocation6 + $0xd0] sm:$0xff]
      %v6008 = vld [vmem:[#allocation6 + $0xd8] sm:$0xff]
      %v6009 = vld [vmem:[#allocation6 + $0xe0] sm:$0xff]
      %v6010 = vld [vmem:[#allocation6 + $0xe8] sm:$0xff]
      %v6011 = vld [vmem:[#allocation6 + $0xf0] sm:$0xff]
      %v6012 = vld [vmem:[#allocation6 + $0xf8] sm:$0xff]
      %v6013 = vadd.f32 %v5981, %v5855
      %v6014 = vadd.f32 %v5982, %v5858
      %v6015 = vadd.f32 %v5983, %v5863
      %v6016 = vadd.f32 %v5984, %v5866
      %v6017 = vadd.f32 %v5985, %v5871
      %v6018 = vadd.f32 %v5986, %v5874
      %v6019 = vadd.f32 %v5987, %v5879
      %v6020 = vadd.f32 %v5988, %v5882
      %v6021 = vadd.f32 %v5989, %v5887
      %v6022 = vadd.f32 %v5990, %v5890
      %v6023 = vadd.f32 %v5991, %v5895
      %v6024 = vadd.f32 %v5992, %v5898
      %v6025 = vadd.f32 %v5993, %v5903
      %v6026 = vadd.f32 %v5994, %v5906
      %v6027 = vadd.f32 %v5995, %v5911
      %v6028 = vadd.f32 %v5996, %v5914
      %v6029 = vadd.f32 %v5997, %v5919
      %v6030 = vadd.f32 %v5998, %v5922
      %v6031 = vadd.f32 %v5999, %v5927
      %v6032 = vadd.f32 %v6000, %v5930
      %v6033 = vadd.f32 %v6001, %v5935
      %v6034 = vadd.f32 %v6002, %v5938
      %v6035 = vadd.f32 %v6003, %v5943
      %v6036 = vadd.f32 %v6004, %v5946
      %v6037 = vadd.f32 %v6005, %v5951
      %v6038 = vadd.f32 %v6006, %v5954
      %v6039 = vadd.f32 %v6007, %v5959
      %v6040 = vadd.f32 %v6008, %v5962
      %v6041 = vadd.f32 %v6009, %v5967
      %v6042 = vadd.f32 %v6010, %v5970
      %v6043 = vadd.f32 %v6011, %v5975
      %v6044 = vadd.f32 %v6012, %v5978
      %6045 = vst.msk [vmem:[#allocation6] sm:$0xff] %vm226, %v6013
      %6046 = vst.msk [vmem:[#allocation6 + $0x8] sm:$0xff] %vm226, %v6014
      %6047 = vst.msk [vmem:[#allocation6 + $0x10] sm:$0xff] %vm226, %v6015
      %6048 = vst.msk [vmem:[#allocation6 + $0x18] sm:$0xff] %vm226, %v6016
      %6049 = vst.msk [vmem:[#allocation6 + $0x20] sm:$0xff] %vm226, %v6017
      %6050 = vst.msk [vmem:[#allocation6 + $0x28] sm:$0xff] %vm226, %v6018
      %6051 = vst.msk [vmem:[#allocation6 + $0x30] sm:$0xff] %vm226, %v6019
      %6052 = vst.msk [vmem:[#allocation6 + $0x38] sm:$0xff] %vm226, %v6020
      %6053 = vst.msk [vmem:[#allocation6 + $0x40] sm:$0xff] %vm226, %v6021
      %6054 = vst.msk [vmem:[#allocation6 + $0x48] sm:$0xff] %vm226, %v6022
      %6055 = vst.msk [vmem:[#allocation6 + $0x50] sm:$0xff] %vm226, %v6023
      %6056 = vst.msk [vmem:[#allocation6 + $0x58] sm:$0xff] %vm226, %v6024
      %6057 = vst.msk [vmem:[#allocation6 + $0x60] sm:$0xff] %vm226, %v6025
      %6058 = vst.msk [vmem:[#allocation6 + $0x68] sm:$0xff] %vm226, %v6026
      %6059 = vst.msk [vmem:[#allocation6 + $0x70] sm:$0xff] %vm226, %v6027
      %6060 = vst.msk [vmem:[#allocation6 + $0x78] sm:$0xff] %vm226, %v6028
      %6061 = vst.msk [vmem:[#allocation6 + $0x80] sm:$0xff] %vm226, %v6029
      %6062 = vst.msk [vmem:[#allocation6 + $0x88] sm:$0xff] %vm226, %v6030
      %6063 = vst.msk [vmem:[#allocation6 + $0x90] sm:$0xff] %vm226, %v6031
      %6064 = vst.msk [vmem:[#allocation6 + $0x98] sm:$0xff] %vm226, %v6032
      %6065 = vst.msk [vmem:[#allocation6 + $0xa0] sm:$0xff] %vm226, %v6033
      %6066 = vst.msk [vmem:[#allocation6 + $0xa8] sm:$0xff] %vm226, %v6034
      %6067 = vst.msk [vmem:[#allocation6 + $0xb0] sm:$0xff] %vm226, %v6035
      %6068 = vst.msk [vmem:[#allocation6 + $0xb8] sm:$0xff] %vm226, %v6036
      %6069 = vst.msk [vmem:[#allocation6 + $0xc0] sm:$0xff] %vm226, %v6037
      %6070 = vst.msk [vmem:[#allocation6 + $0xc8] sm:$0xff] %vm226, %v6038
      %6071 = vst.msk [vmem:[#allocation6 + $0xd0] sm:$0xff] %vm226, %v6039
      %6072 = vst.msk [vmem:[#allocation6 + $0xd8] sm:$0xff] %vm226, %v6040
      %6073 = vst.msk [vmem:[#allocation6 + $0xe0] sm:$0xff] %vm226, %v6041
      %6074 = vst.msk [vmem:[#allocation6 + $0xe8] sm:$0xff] %vm226, %v6042
      %6075 = vst.msk [vmem:[#allocation6 + $0xf0] sm:$0xff] %vm226, %v6043
      %6076 = vst.msk [vmem:[#allocation6 + $0xf8] sm:$0xff] %vm226, %v6044
      %s6077 = scalar_lea.vmem [#allocation3], 48
      %v6078 = vld [vmem:[%s6077] sm:$0xff]
      %v6079 = vld [vmem:[%s6077 + $0x8] sm:$0xff]
      %v6080 = vld [vmem:[%s6077 + $0x18] sm:$0xff]
      %v6081 = vld [vmem:[%s6077 + $0x20] sm:$0xff]
      %v6082 = vld [vmem:[%s6077 + $0x30] sm:$0xff]
      %v6083 = vld [vmem:[%s6077 + $0x38] sm:$0xff]
      %v6084 = vld [vmem:[%s6077 + $0x48] sm:$0xff]
      %v6085 = vld [vmem:[%s6077 + $0x50] sm:$0xff]
      %v6086 = vld [vmem:[%s6077 + $0x60] sm:$0xff]
      %v6087 = vld [vmem:[%s6077 + $0x68] sm:$0xff]
      %v6088 = vld [vmem:[%s6077 + $0x78] sm:$0xff]
      %v6089 = vld [vmem:[%s6077 + $0x80] sm:$0xff]
      %v6090 = vld [vmem:[%s6077 + $0x90] sm:$0xff]
      %v6091 = vld [vmem:[%s6077 + $0x98] sm:$0xff]
      %v6092 = vld [vmem:[%s6077 + $0xa8] sm:$0xff]
      %v6093 = vld [vmem:[%s6077 + $0xb0] sm:$0xff]
      %v6094 = vld [vmem:[%s6077 + $0xc0] sm:$0xff]
      %v6095 = vld [vmem:[%s6077 + $0xc8] sm:$0xff]
      %v6096 = vld [vmem:[%s6077 + $0xd8] sm:$0xff]
      %v6097 = vld [vmem:[%s6077 + $0xe0] sm:$0xff]
      %v6098 = vld [vmem:[%s6077 + $0xf0] sm:$0xff]
      %v6099 = vld [vmem:[%s6077 + $0xf8] sm:$0xff]
      %v6100 = vld [vmem:[%s6077 + $0x108] sm:$0xff]
      %v6101 = vld [vmem:[%s6077 + $0x110] sm:$0xff]
      %v6102 = vld [vmem:[%s6077 + $0x120] sm:$0xff]
      %v6103 = vld [vmem:[%s6077 + $0x128] sm:$0xff]
      %v6104 = vld [vmem:[%s6077 + $0x138] sm:$0xff]
      %v6105 = vld [vmem:[%s6077 + $0x140] sm:$0xff]
      %v6106 = vld [vmem:[%s6077 + $0x150] sm:$0xff]
      %v6107 = vld [vmem:[%s6077 + $0x158] sm:$0xff]
      %v6108 = vld [vmem:[%s6077 + $0x168] sm:$0xff]
      %v6109 = vld [vmem:[%s6077 + $0x170] sm:$0xff]
      %v6110 = vpack.c.bf16 %v6079, %v6078
      %v6111 = vpack.c.bf16 %v6081, %v6080
      %v6112 = vpack.c.bf16 %v6083, %v6082
      %v6113 = vpack.c.bf16 %v6085, %v6084
      %v6114 = vpack.c.bf16 %v6087, %v6086
      %v6115 = vpack.c.bf16 %v6089, %v6088
      %v6116 = vpack.c.bf16 %v6091, %v6090
      %v6117 = vpack.c.bf16 %v6093, %v6092
      %v6118 = vpack.c.bf16 %v6095, %v6094
      %v6119 = vpack.c.bf16 %v6097, %v6096
      %v6120 = vpack.c.bf16 %v6099, %v6098
      %v6121 = vpack.c.bf16 %v6101, %v6100
      %v6122 = vpack.c.bf16 %v6103, %v6102
      %v6123 = vpack.c.bf16 %v6105, %v6104
      %v6124 = vpack.c.bf16 %v6107, %v6106
      %v6125 = vpack.c.bf16 %v6109, %v6108
      %v6142 = vunpack.c.l.b16 %v6110
      %v6143 = vunpack.c.h.b16 %v6110
      %v6144 = vunpack.c.l.b16 %v6111
      %v6145 = vunpack.c.h.b16 %v6111
      %v6146 = vunpack.c.l.b16 %v6112
      %v6147 = vunpack.c.h.b16 %v6112
      %v6148 = vunpack.c.l.b16 %v6113
      %v6149 = vunpack.c.h.b16 %v6113
      %v6150 = vunpack.c.l.b16 %v6114
      %v6151 = vunpack.c.h.b16 %v6114
      %v6152 = vunpack.c.l.b16 %v6115
      %v6153 = vunpack.c.h.b16 %v6115
      %v6154 = vunpack.c.l.b16 %v6116
      %v6155 = vunpack.c.h.b16 %v6116
      %v6156 = vunpack.c.l.b16 %v6117
      %v6157 = vunpack.c.h.b16 %v6117
      %v6158 = vunpack.c.l.b16 %v6118
      %v6159 = vunpack.c.h.b16 %v6118
      %v6160 = vunpack.c.l.b16 %v6119
      %v6161 = vunpack.c.h.b16 %v6119
      %v6162 = vunpack.c.l.b16 %v6120
      %v6163 = vunpack.c.h.b16 %v6120
      %v6164 = vunpack.c.l.b16 %v6121
      %v6165 = vunpack.c.h.b16 %v6121
      %v6166 = vunpack.c.l.b16 %v6122
      %v6167 = vunpack.c.h.b16 %v6122
      %v6168 = vunpack.c.l.b16 %v6123
      %v6169 = vunpack.c.h.b16 %v6123
      %v6170 = vunpack.c.l.b16 %v6124
      %v6171 = vunpack.c.h.b16 %v6124
      %v6172 = vunpack.c.l.b16 %v6125
      %v6173 = vunpack.c.h.b16 %v6125
      %v6174 = vpack.c.b16 %v6142, %v6142
      %v6175 = vpack.c.b16 %v6143, %v6143
      %v6176 = vpack.c.b16 %v6144, %v6144
      %v6177 = vpack.c.b16 %v6145, %v6145
      %v6178 = vpack.c.b16 %v6146, %v6146
      %v6179 = vpack.c.b16 %v6147, %v6147
      %v6180 = vpack.c.b16 %v6148, %v6148
      %v6181 = vpack.c.b16 %v6149, %v6149
      %v6182 = vpack.c.b16 %v6150, %v6150
      %v6183 = vpack.c.b16 %v6151, %v6151
      %v6184 = vpack.c.b16 %v6152, %v6152
      %v6185 = vpack.c.b16 %v6153, %v6153
      %v6186 = vpack.c.b16 %v6154, %v6154
      %v6187 = vpack.c.b16 %v6155, %v6155
      %v6188 = vpack.c.b16 %v6156, %v6156
      %v6189 = vpack.c.b16 %v6157, %v6157
      %v6190 = vpack.c.b16 %v6158, %v6158
      %v6191 = vpack.c.b16 %v6159, %v6159
      %v6192 = vpack.c.b16 %v6160, %v6160
      %v6193 = vpack.c.b16 %v6161, %v6161
      %v6194 = vpack.c.b16 %v6162, %v6162
      %v6195 = vpack.c.b16 %v6163, %v6163
      %v6196 = vpack.c.b16 %v6164, %v6164
      %v6197 = vpack.c.b16 %v6165, %v6165
      %v6198 = vpack.c.b16 %v6166, %v6166
      %v6199 = vpack.c.b16 %v6167, %v6167
      %v6200 = vpack.c.b16 %v6168, %v6168
      %v6201 = vpack.c.b16 %v6169, %v6169
      %v6202 = vpack.c.b16 %v6170, %v6170
      %v6203 = vpack.c.b16 %v6171, %v6171
      %v6204 = vpack.c.b16 %v6172, %v6172
      %v6205 = vpack.c.b16 %v6173, %v6173
      %6238 = vst.msk [vmem:[#allocation5] sm:$0xf] %vm540, %v6174
      %6239 = vst.msk [vmem:[#allocation5 + $0x4] sm:$0xf] %vm540, %v6175
      %6240 = vst.msk [vmem:[#allocation5 + $0x8] sm:$0xf] %vm540, %v6176
      %6241 = vst.msk [vmem:[#allocation5 + $0xc] sm:$0xf] %vm540, %v6177
      %6242 = vst.msk [vmem:[#allocation5 + $0x10] sm:$0xf] %vm540, %v6178
      %6243 = vst.msk [vmem:[#allocation5 + $0x14] sm:$0xf] %vm540, %v6179
      %6244 = vst.msk [vmem:[#allocation5 + $0x18] sm:$0xf] %vm540, %v6180
      %6245 = vst.msk [vmem:[#allocation5 + $0x1c] sm:$0xf] %vm540, %v6181
      %6246 = vst.msk [vmem:[#allocation5 + $0x20] sm:$0xf] %vm540, %v6182
      %6247 = vst.msk [vmem:[#allocation5 + $0x24] sm:$0xf] %vm540, %v6183
      %6248 = vst.msk [vmem:[#allocation5 + $0x28] sm:$0xf] %vm540, %v6184
      %6249 = vst.msk [vmem:[#allocation5 + $0x2c] sm:$0xf] %vm540, %v6185
      %6250 = vst.msk [vmem:[#allocation5 + $0x30] sm:$0xf] %vm540, %v6186
      %6251 = vst.msk [vmem:[#allocation5 + $0x34] sm:$0xf] %vm540, %v6187
      %6252 = vst.msk [vmem:[#allocation5 + $0x38] sm:$0xf] %vm540, %v6188
      %6253 = vst.msk [vmem:[#allocation5 + $0x3c] sm:$0xf] %vm540, %v6189
      %6254 = vst.msk [vmem:[#allocation5 + $0x40] sm:$0xf] %vm540, %v6190
      %6255 = vst.msk [vmem:[#allocation5 + $0x44] sm:$0xf] %vm540, %v6191
      %6256 = vst.msk [vmem:[#allocation5 + $0x48] sm:$0xf] %vm540, %v6192
      %6257 = vst.msk [vmem:[#allocation5 + $0x4c] sm:$0xf] %vm540, %v6193
      %6258 = vst.msk [vmem:[#allocation5 + $0x50] sm:$0xf] %vm540, %v6194
      %6259 = vst.msk [vmem:[#allocation5 + $0x54] sm:$0xf] %vm540, %v6195
      %6260 = vst.msk [vmem:[#allocation5 + $0x58] sm:$0xf] %vm540, %v6196
      %6261 = vst.msk [vmem:[#allocation5 + $0x5c] sm:$0xf] %vm540, %v6197
      %6262 = vst.msk [vmem:[#allocation5 + $0x60] sm:$0xf] %vm540, %v6198
      %6263 = vst.msk [vmem:[#allocation5 + $0x64] sm:$0xf] %vm540, %v6199
      %6264 = vst.msk [vmem:[#allocation5 + $0x68] sm:$0xf] %vm540, %v6200
      %6265 = vst.msk [vmem:[#allocation5 + $0x6c] sm:$0xf] %vm540, %v6201
      %6266 = vst.msk [vmem:[#allocation5 + $0x70] sm:$0xf] %vm540, %v6202
      %6267 = vst.msk [vmem:[#allocation5 + $0x74] sm:$0xf] %vm540, %v6203
      %6268 = vst.msk [vmem:[#allocation5 + $0x78] sm:$0xf] %vm540, %v6204
      %6269 = vst.msk [vmem:[#allocation5 + $0x7c] sm:$0xf] %vm540, %v6205
      %v6270 = vld [vmem:[%s6077 + $0x1] sm:$0xff]
      %v6271 = vld [vmem:[%s6077 + $0x9] sm:$0xff]
      %v6272 = vld [vmem:[%s6077 + $0x19] sm:$0xff]
      %v6273 = vld [vmem:[%s6077 + $0x21] sm:$0xff]
      %v6274 = vld [vmem:[%s6077 + $0x31] sm:$0xff]
      %v6275 = vld [vmem:[%s6077 + $0x39] sm:$0xff]
      %v6276 = vld [vmem:[%s6077 + $0x49] sm:$0xff]
      %v6277 = vld [vmem:[%s6077 + $0x51] sm:$0xff]
      %v6278 = vld [vmem:[%s6077 + $0x61] sm:$0xff]
      %v6279 = vld [vmem:[%s6077 + $0x69] sm:$0xff]
      %v6280 = vld [vmem:[%s6077 + $0x79] sm:$0xff]
      %v6281 = vld [vmem:[%s6077 + $0x81] sm:$0xff]
      %v6282 = vld [vmem:[%s6077 + $0x91] sm:$0xff]
      %v6283 = vld [vmem:[%s6077 + $0x99] sm:$0xff]
      %v6284 = vld [vmem:[%s6077 + $0xa9] sm:$0xff]
      %v6285 = vld [vmem:[%s6077 + $0xb1] sm:$0xff]
      %v6286 = vld [vmem:[%s6077 + $0xc1] sm:$0xff]
      %v6287 = vld [vmem:[%s6077 + $0xc9] sm:$0xff]
      %v6288 = vld [vmem:[%s6077 + $0xd9] sm:$0xff]
      %v6289 = vld [vmem:[%s6077 + $0xe1] sm:$0xff]
      %v6290 = vld [vmem:[%s6077 + $0xf1] sm:$0xff]
      %v6291 = vld [vmem:[%s6077 + $0xf9] sm:$0xff]
      %v6292 = vld [vmem:[%s6077 + $0x109] sm:$0xff]
      %v6293 = vld [vmem:[%s6077 + $0x111] sm:$0xff]
      %v6294 = vld [vmem:[%s6077 + $0x121] sm:$0xff]
      %v6295 = vld [vmem:[%s6077 + $0x129] sm:$0xff]
      %v6296 = vld [vmem:[%s6077 + $0x139] sm:$0xff]
      %v6297 = vld [vmem:[%s6077 + $0x141] sm:$0xff]
      %v6298 = vld [vmem:[%s6077 + $0x151] sm:$0xff]
      %v6299 = vld [vmem:[%s6077 + $0x159] sm:$0xff]
      %v6300 = vld [vmem:[%s6077 + $0x169] sm:$0xff]
      %v6301 = vld [vmem:[%s6077 + $0x171] sm:$0xff]
      %v6302 = vpack.c.bf16 %v6271, %v6270
      %v6303 = vpack.c.bf16 %v6273, %v6272
      %v6304 = vpack.c.bf16 %v6275, %v6274
      %v6305 = vpack.c.bf16 %v6277, %v6276
      %v6306 = vpack.c.bf16 %v6279, %v6278
      %v6307 = vpack.c.bf16 %v6281, %v6280
      %v6308 = vpack.c.bf16 %v6283, %v6282
      %v6309 = vpack.c.bf16 %v6285, %v6284
      %v6310 = vpack.c.bf16 %v6287, %v6286
      %v6311 = vpack.c.bf16 %v6289, %v6288
      %v6312 = vpack.c.bf16 %v6291, %v6290
      %v6313 = vpack.c.bf16 %v6293, %v6292
      %v6314 = vpack.c.bf16 %v6295, %v6294
      %v6315 = vpack.c.bf16 %v6297, %v6296
      %v6316 = vpack.c.bf16 %v6299, %v6298
      %v6317 = vpack.c.bf16 %v6301, %v6300
      %v6334 = vunpack.c.l.b16 %v6302
      %v6335 = vunpack.c.h.b16 %v6302
      %v6336 = vunpack.c.l.b16 %v6303
      %v6337 = vunpack.c.h.b16 %v6303
      %v6338 = vunpack.c.l.b16 %v6304
      %v6339 = vunpack.c.h.b16 %v6304
      %v6340 = vunpack.c.l.b16 %v6305
      %v6341 = vunpack.c.h.b16 %v6305
      %v6342 = vunpack.c.l.b16 %v6306
      %v6343 = vunpack.c.h.b16 %v6306
      %v6344 = vunpack.c.l.b16 %v6307
      %v6345 = vunpack.c.h.b16 %v6307
      %v6346 = vunpack.c.l.b16 %v6308
      %v6347 = vunpack.c.h.b16 %v6308
      %v6348 = vunpack.c.l.b16 %v6309
      %v6349 = vunpack.c.h.b16 %v6309
      %v6350 = vunpack.c.l.b16 %v6310
      %v6351 = vunpack.c.h.b16 %v6310
      %v6352 = vunpack.c.l.b16 %v6311
      %v6353 = vunpack.c.h.b16 %v6311
      %v6354 = vunpack.c.l.b16 %v6312
      %v6355 = vunpack.c.h.b16 %v6312
      %v6356 = vunpack.c.l.b16 %v6313
      %v6357 = vunpack.c.h.b16 %v6313
      %v6358 = vunpack.c.l.b16 %v6314
      %v6359 = vunpack.c.h.b16 %v6314
      %v6360 = vunpack.c.l.b16 %v6315
      %v6361 = vunpack.c.h.b16 %v6315
      %v6362 = vunpack.c.l.b16 %v6316
      %v6363 = vunpack.c.h.b16 %v6316
      %v6364 = vunpack.c.l.b16 %v6317
      %v6365 = vunpack.c.h.b16 %v6317
      %v6366 = vpack.c.b16 %v6334, %v6334
      %v6367 = vpack.c.b16 %v6335, %v6335
      %v6368 = vpack.c.b16 %v6336, %v6336
      %v6369 = vpack.c.b16 %v6337, %v6337
      %v6370 = vpack.c.b16 %v6338, %v6338
      %v6371 = vpack.c.b16 %v6339, %v6339
      %v6372 = vpack.c.b16 %v6340, %v6340
      %v6373 = vpack.c.b16 %v6341, %v6341
      %v6374 = vpack.c.b16 %v6342, %v6342
      %v6375 = vpack.c.b16 %v6343, %v6343
      %v6376 = vpack.c.b16 %v6344, %v6344
      %v6377 = vpack.c.b16 %v6345, %v6345
      %v6378 = vpack.c.b16 %v6346, %v6346
      %v6379 = vpack.c.b16 %v6347, %v6347
      %v6380 = vpack.c.b16 %v6348, %v6348
      %v6381 = vpack.c.b16 %v6349, %v6349
      %v6382 = vpack.c.b16 %v6350, %v6350
      %v6383 = vpack.c.b16 %v6351, %v6351
      %v6384 = vpack.c.b16 %v6352, %v6352
      %v6385 = vpack.c.b16 %v6353, %v6353
      %v6386 = vpack.c.b16 %v6354, %v6354
      %v6387 = vpack.c.b16 %v6355, %v6355
      %v6388 = vpack.c.b16 %v6356, %v6356
      %v6389 = vpack.c.b16 %v6357, %v6357
      %v6390 = vpack.c.b16 %v6358, %v6358
      %v6391 = vpack.c.b16 %v6359, %v6359
      %v6392 = vpack.c.b16 %v6360, %v6360
      %v6393 = vpack.c.b16 %v6361, %v6361
      %v6394 = vpack.c.b16 %v6362, %v6362
      %v6395 = vpack.c.b16 %v6363, %v6363
      %v6396 = vpack.c.b16 %v6364, %v6364
      %v6397 = vpack.c.b16 %v6365, %v6365
      %6398 = vrot.lane.b32.xlu0 %v6366, 8
      %v6399 = vpop.permute.xlu0 %6398
      %6400 = vrot.lane.b32.xlu0 %v6367, 8
      %v6401 = vpop.permute.xlu0 %6400
      %6402 = vrot.lane.b32.xlu0 %v6368, 8
      %v6403 = vpop.permute.xlu0 %6402
      %6404 = vrot.lane.b32.xlu0 %v6369, 8
      %v6405 = vpop.permute.xlu0 %6404
      %6406 = vrot.lane.b32.xlu0 %v6370, 8
      %v6407 = vpop.permute.xlu0 %6406
      %6408 = vrot.lane.b32.xlu0 %v6371, 8
      %v6409 = vpop.permute.xlu0 %6408
      %6410 = vrot.lane.b32.xlu0 %v6372, 8
      %v6411 = vpop.permute.xlu0 %6410
      %6412 = vrot.lane.b32.xlu0 %v6373, 8
      %v6413 = vpop.permute.xlu0 %6412
      %6414 = vrot.lane.b32.xlu0 %v6374, 8
      %v6415 = vpop.permute.xlu0 %6414
      %6416 = vrot.lane.b32.xlu0 %v6375, 8
      %v6417 = vpop.permute.xlu0 %6416
      %6418 = vrot.lane.b32.xlu0 %v6376, 8
      %v6419 = vpop.permute.xlu0 %6418
      %6420 = vrot.lane.b32.xlu0 %v6377, 8
      %v6421 = vpop.permute.xlu0 %6420
      %6422 = vrot.lane.b32.xlu0 %v6378, 8
      %v6423 = vpop.permute.xlu0 %6422
      %6424 = vrot.lane.b32.xlu0 %v6379, 8
      %v6425 = vpop.permute.xlu0 %6424
      %6426 = vrot.lane.b32.xlu0 %v6380, 8
      %v6427 = vpop.permute.xlu0 %6426
      %6428 = vrot.lane.b32.xlu0 %v6381, 8
      %v6429 = vpop.permute.xlu0 %6428
      %6430 = vrot.lane.b32.xlu0 %v6382, 8
      %v6431 = vpop.permute.xlu0 %6430
      %6432 = vrot.lane.b32.xlu0 %v6383, 8
      %v6433 = vpop.permute.xlu0 %6432
      %6434 = vrot.lane.b32.xlu0 %v6384, 8
      %v6435 = vpop.permute.xlu0 %6434
      %6436 = vrot.lane.b32.xlu0 %v6385, 8
      %v6437 = vpop.permute.xlu0 %6436
      %6438 = vrot.lane.b32.xlu0 %v6386, 8
      %v6439 = vpop.permute.xlu0 %6438
      %6440 = vrot.lane.b32.xlu0 %v6387, 8
      %v6441 = vpop.permute.xlu0 %6440
      %6442 = vrot.lane.b32.xlu0 %v6388, 8
      %v6443 = vpop.permute.xlu0 %6442
      %6444 = vrot.lane.b32.xlu0 %v6389, 8
      %v6445 = vpop.permute.xlu0 %6444
      %6446 = vrot.lane.b32.xlu0 %v6390, 8
      %v6447 = vpop.permute.xlu0 %6446
      %6448 = vrot.lane.b32.xlu0 %v6391, 8
      %v6449 = vpop.permute.xlu0 %6448
      %6450 = vrot.lane.b32.xlu0 %v6392, 8
      %v6451 = vpop.permute.xlu0 %6450
      %6452 = vrot.lane.b32.xlu0 %v6393, 8
      %v6453 = vpop.permute.xlu0 %6452
      %6454 = vrot.lane.b32.xlu0 %v6394, 8
      %v6455 = vpop.permute.xlu0 %6454
      %6456 = vrot.lane.b32.xlu0 %v6395, 8
      %v6457 = vpop.permute.xlu0 %6456
      %6458 = vrot.lane.b32.xlu0 %v6396, 8
      %v6459 = vpop.permute.xlu0 %6458
      %6460 = vrot.lane.b32.xlu0 %v6397, 8
      %v6461 = vpop.permute.xlu0 %6460
      %6494 = vst.msk [vmem:[#allocation5] sm:$0xf] %vm797, %v6399
      %6495 = vst.msk [vmem:[#allocation5 + $0x4] sm:$0xf] %vm797, %v6401
      %6496 = vst.msk [vmem:[#allocation5 + $0x8] sm:$0xf] %vm797, %v6403
      %6497 = vst.msk [vmem:[#allocation5 + $0xc] sm:$0xf] %vm797, %v6405
      %6498 = vst.msk [vmem:[#allocation5 + $0x10] sm:$0xf] %vm797, %v6407
      %6499 = vst.msk [vmem:[#allocation5 + $0x14] sm:$0xf] %vm797, %v6409
      %6500 = vst.msk [vmem:[#allocation5 + $0x18] sm:$0xf] %vm797, %v6411
      %6501 = vst.msk [vmem:[#allocation5 + $0x1c] sm:$0xf] %vm797, %v6413
      %6502 = vst.msk [vmem:[#allocation5 + $0x20] sm:$0xf] %vm797, %v6415
      %6503 = vst.msk [vmem:[#allocation5 + $0x24] sm:$0xf] %vm797, %v6417
      %6504 = vst.msk [vmem:[#allocation5 + $0x28] sm:$0xf] %vm797, %v6419
      %6505 = vst.msk [vmem:[#allocation5 + $0x2c] sm:$0xf] %vm797, %v6421
      %6506 = vst.msk [vmem:[#allocation5 + $0x30] sm:$0xf] %vm797, %v6423
      %6507 = vst.msk [vmem:[#allocation5 + $0x34] sm:$0xf] %vm797, %v6425
      %6508 = vst.msk [vmem:[#allocation5 + $0x38] sm:$0xf] %vm797, %v6427
      %6509 = vst.msk [vmem:[#allocation5 + $0x3c] sm:$0xf] %vm797, %v6429
      %6510 = vst.msk [vmem:[#allocation5 + $0x40] sm:$0xf] %vm797, %v6431
      %6511 = vst.msk [vmem:[#allocation5 + $0x44] sm:$0xf] %vm797, %v6433
      %6512 = vst.msk [vmem:[#allocation5 + $0x48] sm:$0xf] %vm797, %v6435
      %6513 = vst.msk [vmem:[#allocation5 + $0x4c] sm:$0xf] %vm797, %v6437
      %6514 = vst.msk [vmem:[#allocation5 + $0x50] sm:$0xf] %vm797, %v6439
      %6515 = vst.msk [vmem:[#allocation5 + $0x54] sm:$0xf] %vm797, %v6441
      %6516 = vst.msk [vmem:[#allocation5 + $0x58] sm:$0xf] %vm797, %v6443
      %6517 = vst.msk [vmem:[#allocation5 + $0x5c] sm:$0xf] %vm797, %v6445
      %6518 = vst.msk [vmem:[#allocation5 + $0x60] sm:$0xf] %vm797, %v6447
      %6519 = vst.msk [vmem:[#allocation5 + $0x64] sm:$0xf] %vm797, %v6449
      %6520 = vst.msk [vmem:[#allocation5 + $0x68] sm:$0xf] %vm797, %v6451
      %6521 = vst.msk [vmem:[#allocation5 + $0x6c] sm:$0xf] %vm797, %v6453
      %6522 = vst.msk [vmem:[#allocation5 + $0x70] sm:$0xf] %vm797, %v6455
      %6523 = vst.msk [vmem:[#allocation5 + $0x74] sm:$0xf] %vm797, %v6457
      %6524 = vst.msk [vmem:[#allocation5 + $0x78] sm:$0xf] %vm797, %v6459
      %6525 = vst.msk [vmem:[#allocation5 + $0x7c] sm:$0xf] %vm797, %v6461
      %v6526 = vld [vmem:[%s6077 + $0x2] sm:$0xff]
      %v6527 = vld [vmem:[%s6077 + $0xa] sm:$0xff]
      %v6528 = vld [vmem:[%s6077 + $0x1a] sm:$0xff]
      %v6529 = vld [vmem:[%s6077 + $0x22] sm:$0xff]
      %v6530 = vld [vmem:[%s6077 + $0x32] sm:$0xff]
      %v6531 = vld [vmem:[%s6077 + $0x3a] sm:$0xff]
      %v6532 = vld [vmem:[%s6077 + $0x4a] sm:$0xff]
      %v6533 = vld [vmem:[%s6077 + $0x52] sm:$0xff]
      %v6534 = vld [vmem:[%s6077 + $0x62] sm:$0xff]
      %v6535 = vld [vmem:[%s6077 + $0x6a] sm:$0xff]
      %v6536 = vld [vmem:[%s6077 + $0x7a] sm:$0xff]
      %v6537 = vld [vmem:[%s6077 + $0x82] sm:$0xff]
      %v6538 = vld [vmem:[%s6077 + $0x92] sm:$0xff]
      %v6539 = vld [vmem:[%s6077 + $0x9a] sm:$0xff]
      %v6540 = vld [vmem:[%s6077 + $0xaa] sm:$0xff]
      %v6541 = vld [vmem:[%s6077 + $0xb2] sm:$0xff]
      %v6542 = vld [vmem:[%s6077 + $0xc2] sm:$0xff]
      %v6543 = vld [vmem:[%s6077 + $0xca] sm:$0xff]
      %v6544 = vld [vmem:[%s6077 + $0xda] sm:$0xff]
      %v6545 = vld [vmem:[%s6077 + $0xe2] sm:$0xff]
      %v6546 = vld [vmem:[%s6077 + $0xf2] sm:$0xff]
      %v6547 = vld [vmem:[%s6077 + $0xfa] sm:$0xff]
      %v6548 = vld [vmem:[%s6077 + $0x10a] sm:$0xff]
      %v6549 = vld [vmem:[%s6077 + $0x112] sm:$0xff]
      %v6550 = vld [vmem:[%s6077 + $0x122] sm:$0xff]
      %v6551 = vld [vmem:[%s6077 + $0x12a] sm:$0xff]
      %v6552 = vld [vmem:[%s6077 + $0x13a] sm:$0xff]
      %v6553 = vld [vmem:[%s6077 + $0x142] sm:$0xff]
      %v6554 = vld [vmem:[%s6077 + $0x152] sm:$0xff]
      %v6555 = vld [vmem:[%s6077 + $0x15a] sm:$0xff]
      %v6556 = vld [vmem:[%s6077 + $0x16a] sm:$0xff]
      %v6557 = vld [vmem:[%s6077 + $0x172] sm:$0xff]
      %v6558 = vpack.c.bf16 %v6527, %v6526
      %v6559 = vpack.c.bf16 %v6529, %v6528
      %v6560 = vpack.c.bf16 %v6531, %v6530
      %v6561 = vpack.c.bf16 %v6533, %v6532
      %v6562 = vpack.c.bf16 %v6535, %v6534
      %v6563 = vpack.c.bf16 %v6537, %v6536
      %v6564 = vpack.c.bf16 %v6539, %v6538
      %v6565 = vpack.c.bf16 %v6541, %v6540
      %v6566 = vpack.c.bf16 %v6543, %v6542
      %v6567 = vpack.c.bf16 %v6545, %v6544
      %v6568 = vpack.c.bf16 %v6547, %v6546
      %v6569 = vpack.c.bf16 %v6549, %v6548
      %v6570 = vpack.c.bf16 %v6551, %v6550
      %v6571 = vpack.c.bf16 %v6553, %v6552
      %v6572 = vpack.c.bf16 %v6555, %v6554
      %v6573 = vpack.c.bf16 %v6557, %v6556
      %v6590 = vunpack.c.l.b16 %v6558
      %v6591 = vunpack.c.h.b16 %v6558
      %v6592 = vunpack.c.l.b16 %v6559
      %v6593 = vunpack.c.h.b16 %v6559
      %v6594 = vunpack.c.l.b16 %v6560
      %v6595 = vunpack.c.h.b16 %v6560
      %v6596 = vunpack.c.l.b16 %v6561
      %v6597 = vunpack.c.h.b16 %v6561
      %v6598 = vunpack.c.l.b16 %v6562
      %v6599 = vunpack.c.h.b16 %v6562
      %v6600 = vunpack.c.l.b16 %v6563
      %v6601 = vunpack.c.h.b16 %v6563
      %v6602 = vunpack.c.l.b16 %v6564
      %v6603 = vunpack.c.h.b16 %v6564
      %v6604 = vunpack.c.l.b16 %v6565
      %v6605 = vunpack.c.h.b16 %v6565
      %v6606 = vunpack.c.l.b16 %v6566
      %v6607 = vunpack.c.h.b16 %v6566
      %v6608 = vunpack.c.l.b16 %v6567
      %v6609 = vunpack.c.h.b16 %v6567
      %v6610 = vunpack.c.l.b16 %v6568
      %v6611 = vunpack.c.h.b16 %v6568
      %v6612 = vunpack.c.l.b16 %v6569
      %v6613 = vunpack.c.h.b16 %v6569
      %v6614 = vunpack.c.l.b16 %v6570
      %v6615 = vunpack.c.h.b16 %v6570
      %v6616 = vunpack.c.l.b16 %v6571
      %v6617 = vunpack.c.h.b16 %v6571
      %v6618 = vunpack.c.l.b16 %v6572
      %v6619 = vunpack.c.h.b16 %v6572
      %v6620 = vunpack.c.l.b16 %v6573
      %v6621 = vunpack.c.h.b16 %v6573
      %v6622 = vpack.c.b16 %v6590, %v6590
      %v6623 = vpack.c.b16 %v6591, %v6591
      %v6624 = vpack.c.b16 %v6592, %v6592
      %v6625 = vpack.c.b16 %v6593, %v6593
      %v6626 = vpack.c.b16 %v6594, %v6594
      %v6627 = vpack.c.b16 %v6595, %v6595
      %v6628 = vpack.c.b16 %v6596, %v6596
      %v6629 = vpack.c.b16 %v6597, %v6597
      %v6630 = vpack.c.b16 %v6598, %v6598
      %v6631 = vpack.c.b16 %v6599, %v6599
      %v6632 = vpack.c.b16 %v6600, %v6600
      %v6633 = vpack.c.b16 %v6601, %v6601
      %v6634 = vpack.c.b16 %v6602, %v6602
      %v6635 = vpack.c.b16 %v6603, %v6603
      %v6636 = vpack.c.b16 %v6604, %v6604
      %v6637 = vpack.c.b16 %v6605, %v6605
      %v6638 = vpack.c.b16 %v6606, %v6606
      %v6639 = vpack.c.b16 %v6607, %v6607
      %v6640 = vpack.c.b16 %v6608, %v6608
      %v6641 = vpack.c.b16 %v6609, %v6609
      %v6642 = vpack.c.b16 %v6610, %v6610
      %v6643 = vpack.c.b16 %v6611, %v6611
      %v6644 = vpack.c.b16 %v6612, %v6612
      %v6645 = vpack.c.b16 %v6613, %v6613
      %v6646 = vpack.c.b16 %v6614, %v6614
      %v6647 = vpack.c.b16 %v6615, %v6615
      %v6648 = vpack.c.b16 %v6616, %v6616
      %v6649 = vpack.c.b16 %v6617, %v6617
      %v6650 = vpack.c.b16 %v6618, %v6618
      %v6651 = vpack.c.b16 %v6619, %v6619
      %v6652 = vpack.c.b16 %v6620, %v6620
      %v6653 = vpack.c.b16 %v6621, %v6621
      %6654 = vrot.lane.b32.xlu0 %v6622, 16
      %v6655 = vpop.permute.xlu0 %6654
      %6656 = vrot.lane.b32.xlu0 %v6623, 16
      %v6657 = vpop.permute.xlu0 %6656
      %6658 = vrot.lane.b32.xlu0 %v6624, 16
      %v6659 = vpop.permute.xlu0 %6658
      %6660 = vrot.lane.b32.xlu0 %v6625, 16
      %v6661 = vpop.permute.xlu0 %6660
      %6662 = vrot.lane.b32.xlu0 %v6626, 16
      %v6663 = vpop.permute.xlu0 %6662
      %6664 = vrot.lane.b32.xlu0 %v6627, 16
      %v6665 = vpop.permute.xlu0 %6664
      %6666 = vrot.lane.b32.xlu0 %v6628, 16
      %v6667 = vpop.permute.xlu0 %6666
      %6668 = vrot.lane.b32.xlu0 %v6629, 16
      %v6669 = vpop.permute.xlu0 %6668
      %6670 = vrot.lane.b32.xlu0 %v6630, 16
      %v6671 = vpop.permute.xlu0 %6670
      %6672 = vrot.lane.b32.xlu0 %v6631, 16
      %v6673 = vpop.permute.xlu0 %6672
      %6674 = vrot.lane.b32.xlu0 %v6632, 16
      %v6675 = vpop.permute.xlu0 %6674
      %6676 = vrot.lane.b32.xlu0 %v6633, 16
      %v6677 = vpop.permute.xlu0 %6676
      %6678 = vrot.lane.b32.xlu0 %v6634, 16
      %v6679 = vpop.permute.xlu0 %6678
      %6680 = vrot.lane.b32.xlu0 %v6635, 16
      %v6681 = vpop.permute.xlu0 %6680
      %6682 = vrot.lane.b32.xlu0 %v6636, 16
      %v6683 = vpop.permute.xlu0 %6682
      %6684 = vrot.lane.b32.xlu0 %v6637, 16
      %v6685 = vpop.permute.xlu0 %6684
      %6686 = vrot.lane.b32.xlu0 %v6638, 16
      %v6687 = vpop.permute.xlu0 %6686
      %6688 = vrot.lane.b32.xlu0 %v6639, 16
      %v6689 = vpop.permute.xlu0 %6688
      %6690 = vrot.lane.b32.xlu0 %v6640, 16
      %v6691 = vpop.permute.xlu0 %6690
      %6692 = vrot.lane.b32.xlu0 %v6641, 16
      %v6693 = vpop.permute.xlu0 %6692
      %6694 = vrot.lane.b32.xlu0 %v6642, 16
      %v6695 = vpop.permute.xlu0 %6694
      %6696 = vrot.lane.b32.xlu0 %v6643, 16
      %v6697 = vpop.permute.xlu0 %6696
      %6698 = vrot.lane.b32.xlu0 %v6644, 16
      %v6699 = vpop.permute.xlu0 %6698
      %6700 = vrot.lane.b32.xlu0 %v6645, 16
      %v6701 = vpop.permute.xlu0 %6700
      %6702 = vrot.lane.b32.xlu0 %v6646, 16
      %v6703 = vpop.permute.xlu0 %6702
      %6704 = vrot.lane.b32.xlu0 %v6647, 16
      %v6705 = vpop.permute.xlu0 %6704
      %6706 = vrot.lane.b32.xlu0 %v6648, 16
      %v6707 = vpop.permute.xlu0 %6706
      %6708 = vrot.lane.b32.xlu0 %v6649, 16
      %v6709 = vpop.permute.xlu0 %6708
      %6710 = vrot.lane.b32.xlu0 %v6650, 16
      %v6711 = vpop.permute.xlu0 %6710
      %6712 = vrot.lane.b32.xlu0 %v6651, 16
      %v6713 = vpop.permute.xlu0 %6712
      %6714 = vrot.lane.b32.xlu0 %v6652, 16
      %v6715 = vpop.permute.xlu0 %6714
      %6716 = vrot.lane.b32.xlu0 %v6653, 16
      %v6717 = vpop.permute.xlu0 %6716
      %6750 = vst.msk [vmem:[#allocation5] sm:$0xf] %vm1054, %v6655
      %6751 = vst.msk [vmem:[#allocation5 + $0x4] sm:$0xf] %vm1054, %v6657
      %6752 = vst.msk [vmem:[#allocation5 + $0x8] sm:$0xf] %vm1054, %v6659
      %6753 = vst.msk [vmem:[#allocation5 + $0xc] sm:$0xf] %vm1054, %v6661
      %6754 = vst.msk [vmem:[#allocation5 + $0x10] sm:$0xf] %vm1054, %v6663
      %6755 = vst.msk [vmem:[#allocation5 + $0x14] sm:$0xf] %vm1054, %v6665
      %6756 = vst.msk [vmem:[#allocation5 + $0x18] sm:$0xf] %vm1054, %v6667
      %6757 = vst.msk [vmem:[#allocation5 + $0x1c] sm:$0xf] %vm1054, %v6669
      %6758 = vst.msk [vmem:[#allocation5 + $0x20] sm:$0xf] %vm1054, %v6671
      %6759 = vst.msk [vmem:[#allocation5 + $0x24] sm:$0xf] %vm1054, %v6673
      %6760 = vst.msk [vmem:[#allocation5 + $0x28] sm:$0xf] %vm1054, %v6675
      %6761 = vst.msk [vmem:[#allocation5 + $0x2c] sm:$0xf] %vm1054, %v6677
      %6762 = vst.msk [vmem:[#allocation5 + $0x30] sm:$0xf] %vm1054, %v6679
      %6763 = vst.msk [vmem:[#allocation5 + $0x34] sm:$0xf] %vm1054, %v6681
      %6764 = vst.msk [vmem:[#allocation5 + $0x38] sm:$0xf] %vm1054, %v6683
      %6765 = vst.msk [vmem:[#allocation5 + $0x3c] sm:$0xf] %vm1054, %v6685
      %6766 = vst.msk [vmem:[#allocation5 + $0x40] sm:$0xf] %vm1054, %v6687
      %6767 = vst.msk [vmem:[#allocation5 + $0x44] sm:$0xf] %vm1054, %v6689
      %6768 = vst.msk [vmem:[#allocation5 + $0x48] sm:$0xf] %vm1054, %v6691
      %6769 = vst.msk [vmem:[#allocation5 + $0x4c] sm:$0xf] %vm1054, %v6693
      %6770 = vst.msk [vmem:[#allocation5 + $0x50] sm:$0xf] %vm1054, %v6695
      %6771 = vst.msk [vmem:[#allocation5 + $0x54] sm:$0xf] %vm1054, %v6697
      %6772 = vst.msk [vmem:[#allocation5 + $0x58] sm:$0xf] %vm1054, %v6699
      %6773 = vst.msk [vmem:[#allocation5 + $0x5c] sm:$0xf] %vm1054, %v6701
      %6774 = vst.msk [vmem:[#allocation5 + $0x60] sm:$0xf] %vm1054, %v6703
      %6775 = vst.msk [vmem:[#allocation5 + $0x64] sm:$0xf] %vm1054, %v6705
      %6776 = vst.msk [vmem:[#allocation5 + $0x68] sm:$0xf] %vm1054, %v6707
      %6777 = vst.msk [vmem:[#allocation5 + $0x6c] sm:$0xf] %vm1054, %v6709
      %6778 = vst.msk [vmem:[#allocation5 + $0x70] sm:$0xf] %vm1054, %v6711
      %6779 = vst.msk [vmem:[#allocation5 + $0x74] sm:$0xf] %vm1054, %v6713
      %6780 = vst.msk [vmem:[#allocation5 + $0x78] sm:$0xf] %vm1054, %v6715
      %6781 = vst.msk [vmem:[#allocation5 + $0x7c] sm:$0xf] %vm1054, %v6717
      %v6782 = vld [vmem:[#allocation5] sm:$0xf]
      %v6783 = vld [vmem:[#allocation5 + $0x4] sm:$0xf]
      %v6784 = vld [vmem:[#allocation5 + $0x8] sm:$0xf]
      %v6785 = vld [vmem:[#allocation5 + $0xc] sm:$0xf]
      %v6786 = vld [vmem:[#allocation5 + $0x10] sm:$0xf]
      %v6787 = vld [vmem:[#allocation5 + $0x14] sm:$0xf]
      %v6788 = vld [vmem:[#allocation5 + $0x18] sm:$0xf]
      %v6789 = vld [vmem:[#allocation5 + $0x1c] sm:$0xf]
      %v6790 = vld [vmem:[#allocation5 + $0x20] sm:$0xf]
      %v6791 = vld [vmem:[#allocation5 + $0x24] sm:$0xf]
      %v6792 = vld [vmem:[#allocation5 + $0x28] sm:$0xf]
      %v6793 = vld [vmem:[#allocation5 + $0x2c] sm:$0xf]
      %v6794 = vld [vmem:[#allocation5 + $0x30] sm:$0xf]
      %v6795 = vld [vmem:[#allocation5 + $0x34] sm:$0xf]
      %v6796 = vld [vmem:[#allocation5 + $0x38] sm:$0xf]
      %v6797 = vld [vmem:[#allocation5 + $0x3c] sm:$0xf]
      %v6798 = vld [vmem:[#allocation5 + $0x40] sm:$0xf]
      %v6799 = vld [vmem:[#allocation5 + $0x44] sm:$0xf]
      %v6800 = vld [vmem:[#allocation5 + $0x48] sm:$0xf]
      %v6801 = vld [vmem:[#allocation5 + $0x4c] sm:$0xf]
      %v6802 = vld [vmem:[#allocation5 + $0x50] sm:$0xf]
      %v6803 = vld [vmem:[#allocation5 + $0x54] sm:$0xf]
      %v6804 = vld [vmem:[#allocation5 + $0x58] sm:$0xf]
      %v6805 = vld [vmem:[#allocation5 + $0x5c] sm:$0xf]
      %v6806 = vld [vmem:[#allocation5 + $0x60] sm:$0xf]
      %v6807 = vld [vmem:[#allocation5 + $0x64] sm:$0xf]
      %v6808 = vld [vmem:[#allocation5 + $0x68] sm:$0xf]
      %v6809 = vld [vmem:[#allocation5 + $0x6c] sm:$0xf]
      %v6810 = vld [vmem:[#allocation5 + $0x70] sm:$0xf]
      %v6811 = vld [vmem:[#allocation5 + $0x74] sm:$0xf]
      %v6812 = vld [vmem:[#allocation5 + $0x78] sm:$0xf]
      %v6813 = vld [vmem:[#allocation5 + $0x7c] sm:$0xf]
      %s6814 = scalar_lea.vmem %s3, 24
      %v6815 = vld [vmem:[%s6814] sm:$0xf]
      %v6816 = vld [vmem:[%s6814 + $0x4] sm:$0xf]
      %v6817 = vld [vmem:[%s6814 + $0x8] sm:$0xf]
      %v6850 = vunpack.c.l.b16 %v6782
      %v6851 = vunpack.c.l.b16 %v6783
      %v6852 = vunpack.c.l.b16 %v6784
      %v6853 = vunpack.c.l.b16 %v6785
      %v6854 = vunpack.c.l.b16 %v6786
      %v6855 = vunpack.c.l.b16 %v6787
      %v6856 = vunpack.c.l.b16 %v6788
      %v6857 = vunpack.c.l.b16 %v6789
      %v6858 = vunpack.c.l.b16 %v6790
      %v6859 = vunpack.c.l.b16 %v6791
      %v6860 = vunpack.c.l.b16 %v6792
      %v6861 = vunpack.c.l.b16 %v6793
      %v6862 = vunpack.c.l.b16 %v6794
      %v6863 = vunpack.c.l.b16 %v6795
      %v6864 = vunpack.c.l.b16 %v6796
      %v6865 = vunpack.c.l.b16 %v6797
      %v6866 = vunpack.c.l.b16 %v6798
      %v6867 = vunpack.c.l.b16 %v6799
      %v6868 = vunpack.c.l.b16 %v6800
      %v6869 = vunpack.c.l.b16 %v6801
      %v6870 = vunpack.c.l.b16 %v6802
      %v6871 = vunpack.c.l.b16 %v6803
      %v6872 = vunpack.c.l.b16 %v6804
      %v6873 = vunpack.c.l.b16 %v6805
      %v6874 = vunpack.c.l.b16 %v6806
      %v6875 = vunpack.c.l.b16 %v6807
      %v6876 = vunpack.c.l.b16 %v6808
      %v6877 = vunpack.c.l.b16 %v6809
      %v6878 = vunpack.c.l.b16 %v6810
      %v6879 = vunpack.c.l.b16 %v6811
      %v6880 = vunpack.c.l.b16 %v6812
      %v6881 = vunpack.c.l.b16 %v6813
      %v6882 = vpack.c.b16 %v6851, %v6850
      %v6883 = vpack.c.b16 %v6853, %v6852
      %v6884 = vpack.c.b16 %v6855, %v6854
      %v6885 = vpack.c.b16 %v6857, %v6856
      %v6886 = vpack.c.b16 %v6859, %v6858
      %v6887 = vpack.c.b16 %v6861, %v6860
      %v6888 = vpack.c.b16 %v6863, %v6862
      %v6889 = vpack.c.b16 %v6865, %v6864
      %v6890 = vpack.c.b16 %v6867, %v6866
      %v6891 = vpack.c.b16 %v6869, %v6868
      %v6892 = vpack.c.b16 %v6871, %v6870
      %v6893 = vpack.c.b16 %v6873, %v6872
      %v6894 = vpack.c.b16 %v6875, %v6874
      %v6895 = vpack.c.b16 %v6877, %v6876
      %v6896 = vpack.c.b16 %v6879, %v6878
      %v6897 = vpack.c.b16 %v6881, %v6880
      %v6901 = vunpack.c.l.b16 %v6815
      %v6902 = vunpack.c.l.b16 %v6816
      %v6903 = vunpack.c.l.b16 %v6817
      %v6904 = vpack.c.b16 %v6902, %v6901
      %v6905 = vpack.c.b16 %v6903, %v6903
      %v6908 = vsel %vm1211, %v6882, 0
      %v6911 = vsel %vm1211, %v6883, 0
      %v6914 = vsel %vm1211, %v6884, 0
      %v6917 = vsel %vm1211, %v6885, 0
      %v6920 = vsel %vm1211, %v6886, 0
      %v6923 = vsel %vm1211, %v6887, 0
      %v6926 = vsel %vm1211, %v6888, 0
      %v6929 = vsel %vm1211, %v6889, 0
      %v6932 = vsel %vm1211, %v6890, 0
      %v6935 = vsel %vm1211, %v6891, 0
      %v6938 = vsel %vm1211, %v6892, 0
      %v6941 = vsel %vm1211, %v6893, 0
      %v6944 = vsel %vm1211, %v6894, 0
      %v6947 = vsel %vm1211, %v6895, 0
      %v6950 = vsel %vm1211, %v6896, 0
      %v6953 = vsel %vm1211, %v6897, 0
      %v6956 = vsel %vm1260, %v6905, 0
      %6958 = vmatprep.subr.bf16.mxu0 0
      %6959 = vmatpush1.bf16.msra.mxu0 0
      %6960 = vmatprep.subr.bf16.mxu0 0
      %6961 = vmatpush1.bf16.msra.mxu0 0
      %6962 = vmatprep.subr.bf16.mxu0 0
      %6963 = vmatpush1.bf16.msra.mxu0 0
      %6964 = vmatprep.subr.bf16.mxu0 0
      %6965 = vmatpush1.bf16.msra.mxu0 0
      %6966 = vmatprep.subr.bf16.mxu0 0
      %6967 = vmatpush1.bf16.msra.mxu0 0
      %6968 = vmatprep.subr.bf16.mxu0 0
      %6969 = vmatpush1.bf16.msra.mxu0 0
      %6970 = vmatprep.subr.bf16.mxu0 0
      %6971 = vmatpush1.bf16.msra.mxu0 %v6956
      %6972 = vmatprep.subr.bf16.mxu0 0
      %6973 = vmatpush1.bf16.msra.mxu0 %v6904
      %6974 = vmatprep.subr.bf16.mxu0 0
      %6975 = vmatpush2.bf16.msra.mxu0 0
      %6976 = vmatprep.subr.bf16.mxu0 0
      %6977 = vmatpush2.bf16.msra.mxu0 0
      %6978 = vmatprep.subr.bf16.mxu0 0
      %6979 = vmatpush2.bf16.msra.mxu0 0
      %6980 = vmatprep.subr.bf16.mxu0 0
      %6981 = vmatpush2.bf16.msra.mxu0 0
      %6982 = vmatprep.subr.bf16.mxu0 0
      %6983 = vmatpush2.bf16.msra.mxu0 0
      %6984 = vmatprep.subr.bf16.mxu0 0
      %6985 = vmatpush2.bf16.msra.mxu0 0
      %6986 = vmatprep.subr.bf16.mxu0 0
      %6987 = vmatpush2.bf16.msra.mxu0 0
      %6988 = vmatprep.subr.bf16.mxu0 0
      %6989 = vmatpush2.bf16.msra.mxu0 0
      %6990 = vmatprep.mubr.bf16.mxu0 0
      %6991 = vmatmul.mubr.bf16.gmra.mxu0 %v6908
      %v6992 = vpop.f32.mrf.mxu0
      %v6993 = vadd.f32 0.0, %v6992
      %v6994 = vpop.f32.mrf.mxu0
      %v6995 = vpop.f32.mrf.mxu0
      %v6996 = vadd.f32 0.0, %v6995
      %v6997 = vpop.f32.mrf.mxu0
      %6998 = vmatprep.mubr.bf16.mxu0 0
      %6999 = vmatmul.mubr.bf16.gmra.mxu0 %v6911
      %v7000 = vpop.f32.mrf.mxu0
      %v7001 = vadd.f32 0.0, %v7000
      %v7002 = vpop.f32.mrf.mxu0
      %v7003 = vpop.f32.mrf.mxu0
      %v7004 = vadd.f32 0.0, %v7003
      %v7005 = vpop.f32.mrf.mxu0
      %7006 = vmatprep.mubr.bf16.mxu0 0
      %7007 = vmatmul.mubr.bf16.gmra.mxu0 %v6914
      %v7008 = vpop.f32.mrf.mxu0
      %v7009 = vadd.f32 0.0, %v7008
      %v7010 = vpop.f32.mrf.mxu0
      %v7011 = vpop.f32.mrf.mxu0
      %v7012 = vadd.f32 0.0, %v7011
      %v7013 = vpop.f32.mrf.mxu0
      %7014 = vmatprep.mubr.bf16.mxu0 0
      %7015 = vmatmul.mubr.bf16.gmra.mxu0 %v6917
      %v7016 = vpop.f32.mrf.mxu0
      %v7017 = vadd.f32 0.0, %v7016
      %v7018 = vpop.f32.mrf.mxu0
      %v7019 = vpop.f32.mrf.mxu0
      %v7020 = vadd.f32 0.0, %v7019
      %v7021 = vpop.f32.mrf.mxu0
      %7022 = vmatprep.mubr.bf16.mxu0 0
      %7023 = vmatmul.mubr.bf16.gmra.mxu0 %v6920
      %v7024 = vpop.f32.mrf.mxu0
      %v7025 = vadd.f32 0.0, %v7024
      %v7026 = vpop.f32.mrf.mxu0
      %v7027 = vpop.f32.mrf.mxu0
      %v7028 = vadd.f32 0.0, %v7027
      %v7029 = vpop.f32.mrf.mxu0
      %7030 = vmatprep.mubr.bf16.mxu0 0
      %7031 = vmatmul.mubr.bf16.gmra.mxu0 %v6923
      %v7032 = vpop.f32.mrf.mxu0
      %v7033 = vadd.f32 0.0, %v7032
      %v7034 = vpop.f32.mrf.mxu0
      %v7035 = vpop.f32.mrf.mxu0
      %v7036 = vadd.f32 0.0, %v7035
      %v7037 = vpop.f32.mrf.mxu0
      %7038 = vmatprep.mubr.bf16.mxu0 0
      %7039 = vmatmul.mubr.bf16.gmra.mxu0 %v6926
      %v7040 = vpop.f32.mrf.mxu0
      %v7041 = vadd.f32 0.0, %v7040
      %v7042 = vpop.f32.mrf.mxu0
      %v7043 = vpop.f32.mrf.mxu0
      %v7044 = vadd.f32 0.0, %v7043
      %v7045 = vpop.f32.mrf.mxu0
      %7046 = vmatprep.mubr.bf16.mxu0 0
      %7047 = vmatmul.mubr.bf16.gmra.mxu0 %v6929
      %v7048 = vpop.f32.mrf.mxu0
      %v7049 = vadd.f32 0.0, %v7048
      %v7050 = vpop.f32.mrf.mxu0
      %v7051 = vpop.f32.mrf.mxu0
      %v7052 = vadd.f32 0.0, %v7051
      %v7053 = vpop.f32.mrf.mxu0
      %7054 = vmatprep.mubr.bf16.mxu0 0
      %7055 = vmatmul.mubr.bf16.gmra.mxu0 %v6932
      %v7056 = vpop.f32.mrf.mxu0
      %v7057 = vadd.f32 0.0, %v7056
      %v7058 = vpop.f32.mrf.mxu0
      %v7059 = vpop.f32.mrf.mxu0
      %v7060 = vadd.f32 0.0, %v7059
      %v7061 = vpop.f32.mrf.mxu0
      %7062 = vmatprep.mubr.bf16.mxu0 0
      %7063 = vmatmul.mubr.bf16.gmra.mxu0 %v6935
      %v7064 = vpop.f32.mrf.mxu0
      %v7065 = vadd.f32 0.0, %v7064
      %v7066 = vpop.f32.mrf.mxu0
      %v7067 = vpop.f32.mrf.mxu0
      %v7068 = vadd.f32 0.0, %v7067
      %v7069 = vpop.f32.mrf.mxu0
      %7070 = vmatprep.mubr.bf16.mxu0 0
      %7071 = vmatmul.mubr.bf16.gmra.mxu0 %v6938
      %v7072 = vpop.f32.mrf.mxu0
      %v7073 = vadd.f32 0.0, %v7072
      %v7074 = vpop.f32.mrf.mxu0
      %v7075 = vpop.f32.mrf.mxu0
      %v7076 = vadd.f32 0.0, %v7075
      %v7077 = vpop.f32.mrf.mxu0
      %7078 = vmatprep.mubr.bf16.mxu0 0
      %7079 = vmatmul.mubr.bf16.gmra.mxu0 %v6941
      %v7080 = vpop.f32.mrf.mxu0
      %v7081 = vadd.f32 0.0, %v7080
      %v7082 = vpop.f32.mrf.mxu0
      %v7083 = vpop.f32.mrf.mxu0
      %v7084 = vadd.f32 0.0, %v7083
      %v7085 = vpop.f32.mrf.mxu0
      %7086 = vmatprep.mubr.bf16.mxu0 0
      %7087 = vmatmul.mubr.bf16.gmra.mxu0 %v6944
      %v7088 = vpop.f32.mrf.mxu0
      %v7089 = vadd.f32 0.0, %v7088
      %v7090 = vpop.f32.mrf.mxu0
      %v7091 = vpop.f32.mrf.mxu0
      %v7092 = vadd.f32 0.0, %v7091
      %v7093 = vpop.f32.mrf.mxu0
      %7094 = vmatprep.mubr.bf16.mxu0 0
      %7095 = vmatmul.mubr.bf16.gmra.mxu0 %v6947
      %v7096 = vpop.f32.mrf.mxu0
      %v7097 = vadd.f32 0.0, %v7096
      %v7098 = vpop.f32.mrf.mxu0
      %v7099 = vpop.f32.mrf.mxu0
      %v7100 = vadd.f32 0.0, %v7099
      %v7101 = vpop.f32.mrf.mxu0
      %7102 = vmatprep.mubr.bf16.mxu0 0
      %7103 = vmatmul.mubr.bf16.gmra.mxu0 %v6950
      %v7104 = vpop.f32.mrf.mxu0
      %v7105 = vadd.f32 0.0, %v7104
      %v7106 = vpop.f32.mrf.mxu0
      %v7107 = vpop.f32.mrf.mxu0
      %v7108 = vadd.f32 0.0, %v7107
      %v7109 = vpop.f32.mrf.mxu0
      %7110 = vmatprep.mubr.bf16.mxu0 0
      %7111 = vmatmul.mubr.bf16.gmra.mxu0 %v6953
      %v7112 = vpop.f32.mrf.mxu0
      %v7113 = vadd.f32 0.0, %v7112
      %v7114 = vpop.f32.mrf.mxu0
      %v7115 = vpop.f32.mrf.mxu0
      %v7116 = vadd.f32 0.0, %v7115
      %v7117 = vpop.f32.mrf.mxu0
      %7118 = vdwg.mxu0
      %v7119 = vld [vmem:[#allocation6] sm:$0xff]
      %v7120 = vld [vmem:[#allocation6 + $0x8] sm:$0xff]
      %v7121 = vld [vmem:[#allocation6 + $0x10] sm:$0xff]
      %v7122 = vld [vmem:[#allocation6 + $0x18] sm:$0xff]
      %v7123 = vld [vmem:[#allocation6 + $0x20] sm:$0xff]
      %v7124 = vld [vmem:[#allocation6 + $0x28] sm:$0xff]
      %v7125 = vld [vmem:[#allocation6 + $0x30] sm:$0xff]
      %v7126 = vld [vmem:[#allocation6 + $0x38] sm:$0xff]
      %v7127 = vld [vmem:[#allocation6 + $0x40] sm:$0xff]
      %v7128 = vld [vmem:[#allocation6 + $0x48] sm:$0xff]
      %v7129 = vld [vmem:[#allocation6 + $0x50] sm:$0xff]
      %v7130 = vld [vmem:[#allocation6 + $0x58] sm:$0xff]
      %v7131 = vld [vmem:[#allocation6 + $0x60] sm:$0xff]
      %v7132 = vld [vmem:[#allocation6 + $0x68] sm:$0xff]
      %v7133 = vld [vmem:[#allocation6 + $0x70] sm:$0xff]
      %v7134 = vld [vmem:[#allocation6 + $0x78] sm:$0xff]
      %v7135 = vld [vmem:[#allocation6 + $0x80] sm:$0xff]
      %v7136 = vld [vmem:[#allocation6 + $0x88] sm:$0xff]
      %v7137 = vld [vmem:[#allocation6 + $0x90] sm:$0xff]
      %v7138 = vld [vmem:[#allocation6 + $0x98] sm:$0xff]
      %v7139 = vld [vmem:[#allocation6 + $0xa0] sm:$0xff]
      %v7140 = vld [vmem:[#allocation6 + $0xa8] sm:$0xff]
      %v7141 = vld [vmem:[#allocation6 + $0xb0] sm:$0xff]
      %v7142 = vld [vmem:[#allocation6 + $0xb8] sm:$0xff]
      %v7143 = vld [vmem:[#allocation6 + $0xc0] sm:$0xff]
      %v7144 = vld [vmem:[#allocation6 + $0xc8] sm:$0xff]
      %v7145 = vld [vmem:[#allocation6 + $0xd0] sm:$0xff]
      %v7146 = vld [vmem:[#allocation6 + $0xd8] sm:$0xff]
      %v7147 = vld [vmem:[#allocation6 + $0xe0] sm:$0xff]
      %v7148 = vld [vmem:[#allocation6 + $0xe8] sm:$0xff]
      %v7149 = vld [vmem:[#allocation6 + $0xf0] sm:$0xff]
      %v7150 = vld [vmem:[#allocation6 + $0xf8] sm:$0xff]
      %v7151 = vadd.f32 %v7119, %v6993
      %v7152 = vadd.f32 %v7120, %v6996
      %v7153 = vadd.f32 %v7121, %v7001
      %v7154 = vadd.f32 %v7122, %v7004
      %v7155 = vadd.f32 %v7123, %v7009
      %v7156 = vadd.f32 %v7124, %v7012
      %v7157 = vadd.f32 %v7125, %v7017
      %v7158 = vadd.f32 %v7126, %v7020
      %v7159 = vadd.f32 %v7127, %v7025
      %v7160 = vadd.f32 %v7128, %v7028
      %v7161 = vadd.f32 %v7129, %v7033
      %v7162 = vadd.f32 %v7130, %v7036
      %v7163 = vadd.f32 %v7131, %v7041
      %v7164 = vadd.f32 %v7132, %v7044
      %v7165 = vadd.f32 %v7133, %v7049
      %v7166 = vadd.f32 %v7134, %v7052
      %v7167 = vadd.f32 %v7135, %v7057
      %v7168 = vadd.f32 %v7136, %v7060
      %v7169 = vadd.f32 %v7137, %v7065
      %v7170 = vadd.f32 %v7138, %v7068
      %v7171 = vadd.f32 %v7139, %v7073
      %v7172 = vadd.f32 %v7140, %v7076
      %v7173 = vadd.f32 %v7141, %v7081
      %v7174 = vadd.f32 %v7142, %v7084
      %v7175 = vadd.f32 %v7143, %v7089
      %v7176 = vadd.f32 %v7144, %v7092
      %v7177 = vadd.f32 %v7145, %v7097
      %v7178 = vadd.f32 %v7146, %v7100
      %v7179 = vadd.f32 %v7147, %v7105
      %v7180 = vadd.f32 %v7148, %v7108
      %v7181 = vadd.f32 %v7149, %v7113
      %v7182 = vadd.f32 %v7150, %v7116
      %7183 = vst.msk [vmem:[#allocation6] sm:$0xff] %vm226, %v7151
      %7184 = vst.msk [vmem:[#allocation6 + $0x8] sm:$0xff] %vm226, %v7152
      %7185 = vst.msk [vmem:[#allocation6 + $0x10] sm:$0xff] %vm226, %v7153
      %7186 = vst.msk [vmem:[#allocation6 + $0x18] sm:$0xff] %vm226, %v7154
      %7187 = vst.msk [vmem:[#allocation6 + $0x20] sm:$0xff] %vm226, %v7155
      %7188 = vst.msk [vmem:[#allocation6 + $0x28] sm:$0xff] %vm226, %v7156
      %7189 = vst.msk [vmem:[#allocation6 + $0x30] sm:$0xff] %vm226, %v7157
      %7190 = vst.msk [vmem:[#allocation6 + $0x38] sm:$0xff] %vm226, %v7158
      %7191 = vst.msk [vmem:[#allocation6 + $0x40] sm:$0xff] %vm226, %v7159
      %7192 = vst.msk [vmem:[#allocation6 + $0x48] sm:$0xff] %vm226, %v7160
      %7193 = vst.msk [vmem:[#allocation6 + $0x50] sm:$0xff] %vm226, %v7161
      %7194 = vst.msk [vmem:[#allocation6 + $0x58] sm:$0xff] %vm226, %v7162
      %7195 = vst.msk [vmem:[#allocation6 + $0x60] sm:$0xff] %vm226, %v7163
      %7196 = vst.msk [vmem:[#allocation6 + $0x68] sm:$0xff] %vm226, %v7164
      %7197 = vst.msk [vmem:[#allocation6 + $0x70] sm:$0xff] %vm226, %v7165
      %7198 = vst.msk [vmem:[#allocation6 + $0x78] sm:$0xff] %vm226, %v7166
      %7199 = vst.msk [vmem:[#allocation6 + $0x80] sm:$0xff] %vm226, %v7167
      %7200 = vst.msk [vmem:[#allocation6 + $0x88] sm:$0xff] %vm226, %v7168
      %7201 = vst.msk [vmem:[#allocation6 + $0x90] sm:$0xff] %vm226, %v7169
      %7202 = vst.msk [vmem:[#allocation6 + $0x98] sm:$0xff] %vm226, %v7170
      %7203 = vst.msk [vmem:[#allocation6 + $0xa0] sm:$0xff] %vm226, %v7171
      %7204 = vst.msk [vmem:[#allocation6 + $0xa8] sm:$0xff] %vm226, %v7172
      %7205 = vst.msk [vmem:[#allocation6 + $0xb0] sm:$0xff] %vm226, %v7173
      %7206 = vst.msk [vmem:[#allocation6 + $0xb8] sm:$0xff] %vm226, %v7174
      %7207 = vst.msk [vmem:[#allocation6 + $0xc0] sm:$0xff] %vm226, %v7175
      %7208 = vst.msk [vmem:[#allocation6 + $0xc8] sm:$0xff] %vm226, %v7176
      %7209 = vst.msk [vmem:[#allocation6 + $0xd0] sm:$0xff] %vm226, %v7177
      %7210 = vst.msk [vmem:[#allocation6 + $0xd8] sm:$0xff] %vm226, %v7178
      %7211 = vst.msk [vmem:[#allocation6 + $0xe0] sm:$0xff] %vm226, %v7179
      %7212 = vst.msk [vmem:[#allocation6 + $0xe8] sm:$0xff] %vm226, %v7180
      %7213 = vst.msk [vmem:[#allocation6 + $0xf0] sm:$0xff] %vm226, %v7181
      %7214 = vst.msk [vmem:[#allocation6 + $0xf8] sm:$0xff] %vm226, %v7182
      %v7215 = vld [vmem:[#allocation6] sm:$0xff]
      %v7216 = vld [vmem:[#allocation6 + $0x8] sm:$0xff]
      %v7217 = vld [vmem:[#allocation6 + $0x10] sm:$0xff]
      %v7218 = vld [vmem:[#allocation6 + $0x18] sm:$0xff]
      %v7219 = vld [vmem:[#allocation6 + $0x20] sm:$0xff]
      %v7220 = vld [vmem:[#allocation6 + $0x28] sm:$0xff]
      %v7221 = vld [vmem:[#allocation6 + $0x30] sm:$0xff]
      %v7222 = vld [vmem:[#allocation6 + $0x38] sm:$0xff]
      %v7223 = vld [vmem:[#allocation6 + $0x40] sm:$0xff]
      %v7224 = vld [vmem:[#allocation6 + $0x48] sm:$0xff]
      %v7225 = vld [vmem:[#allocation6 + $0x50] sm:$0xff]
      %v7226 = vld [vmem:[#allocation6 + $0x58] sm:$0xff]
      %v7227 = vld [vmem:[#allocation6 + $0x60] sm:$0xff]
      %v7228 = vld [vmem:[#allocation6 + $0x68] sm:$0xff]
      %v7229 = vld [vmem:[#allocation6 + $0x70] sm:$0xff]
      %v7230 = vld [vmem:[#allocation6 + $0x78] sm:$0xff]
      %v7231 = vld [vmem:[#allocation6 + $0x80] sm:$0xff]
      %v7232 = vld [vmem:[#allocation6 + $0x88] sm:$0xff]
      %v7233 = vld [vmem:[#allocation6 + $0x90] sm:$0xff]
      %v7234 = vld [vmem:[#allocation6 + $0x98] sm:$0xff]
      %v7235 = vld [vmem:[#allocation6 + $0xa0] sm:$0xff]
      %v7236 = vld [vmem:[#allocation6 + $0xa8] sm:$0xff]
      %v7237 = vld [vmem:[#allocation6 + $0xb0] sm:$0xff]
      %v7238 = vld [vmem:[#allocation6 + $0xb8] sm:$0xff]
      %v7239 = vld [vmem:[#allocation6 + $0xc0] sm:$0xff]
      %v7240 = vld [vmem:[#allocation6 + $0xc8] sm:$0xff]
      %v7241 = vld [vmem:[#allocation6 + $0xd0] sm:$0xff]
      %v7242 = vld [vmem:[#allocation6 + $0xd8] sm:$0xff]
      %v7243 = vld [vmem:[#allocation6 + $0xe0] sm:$0xff]
      %v7244 = vld [vmem:[#allocation6 + $0xe8] sm:$0xff]
      %v7245 = vld [vmem:[#allocation6 + $0xf0] sm:$0xff]
      %v7246 = vld [vmem:[#allocation6 + $0xf8] sm:$0xff]
      %v7247 = vld [vmem:[%s4] sm:$0x1]
      %v7249 = vlaneseq
      %v7250 = vshrl.u32 %v7249, 7
      %v7251 = vsub.s32 0, %v7250
      %v7252 = vrot.slane %v7247, %v7251
      %v7254 = vadd.f32 %v7215, %v7252
      %v7255 = vadd.f32 %v7216, %v7252
      %v7256 = vadd.f32 %v7217, %v7252
      %v7257 = vadd.f32 %v7218, %v7252
      %v7258 = vadd.f32 %v7219, %v7252
      %v7259 = vadd.f32 %v7220, %v7252
      %v7260 = vadd.f32 %v7221, %v7252
      %v7261 = vadd.f32 %v7222, %v7252
      %v7262 = vadd.f32 %v7223, %v7252
      %v7263 = vadd.f32 %v7224, %v7252
      %v7264 = vadd.f32 %v7225, %v7252
      %v7265 = vadd.f32 %v7226, %v7252
      %v7266 = vadd.f32 %v7227, %v7252
      %v7267 = vadd.f32 %v7228, %v7252
      %v7268 = vadd.f32 %v7229, %v7252
      %v7269 = vadd.f32 %v7230, %v7252
      %v7270 = vadd.f32 %v7231, %v7252
      %v7271 = vadd.f32 %v7232, %v7252
      %v7272 = vadd.f32 %v7233, %v7252
      %v7273 = vadd.f32 %v7234, %v7252
      %v7274 = vadd.f32 %v7235, %v7252
      %v7275 = vadd.f32 %v7236, %v7252
      %v7276 = vadd.f32 %v7237, %v7252
      %v7277 = vadd.f32 %v7238, %v7252
      %v7278 = vadd.f32 %v7239, %v7252
      %v7279 = vadd.f32 %v7240, %v7252
      %v7280 = vadd.f32 %v7241, %v7252
      %v7281 = vadd.f32 %v7242, %v7252
      %v7282 = vadd.f32 %v7243, %v7252
      %v7283 = vadd.f32 %v7244, %v7252
      %v7284 = vadd.f32 %v7245, %v7252
      %v7285 = vadd.f32 %v7246, %v7252
      %v7286 = vmax.f32 %v7254, 0.0
      %v7287 = vmax.f32 %v7255, 0.0
      %v7288 = vmax.f32 %v7256, 0.0
      %v7289 = vmax.f32 %v7257, 0.0
      %v7290 = vmax.f32 %v7258, 0.0
      %v7291 = vmax.f32 %v7259, 0.0
      %v7292 = vmax.f32 %v7260, 0.0
      %v7293 = vmax.f32 %v7261, 0.0
      %v7294 = vmax.f32 %v7262, 0.0
      %v7295 = vmax.f32 %v7263, 0.0
      %v7296 = vmax.f32 %v7264, 0.0
      %v7297 = vmax.f32 %v7265, 0.0
      %v7298 = vmax.f32 %v7266, 0.0
      %v7299 = vmax.f32 %v7267, 0.0
      %v7300 = vmax.f32 %v7268, 0.0
      %v7301 = vmax.f32 %v7269, 0.0
      %v7302 = vmax.f32 %v7270, 0.0
      %v7303 = vmax.f32 %v7271, 0.0
      %v7304 = vmax.f32 %v7272, 0.0
      %v7305 = vmax.f32 %v7273, 0.0
      %v7306 = vmax.f32 %v7274, 0.0
      %v7307 = vmax.f32 %v7275, 0.0
      %v7308 = vmax.f32 %v7276, 0.0
      %v7309 = vmax.f32 %v7277, 0.0
      %v7310 = vmax.f32 %v7278, 0.0
      %v7311 = vmax.f32 %v7279, 0.0
      %v7312 = vmax.f32 %v7280, 0.0
      %v7313 = vmax.f32 %v7281, 0.0
      %v7314 = vmax.f32 %v7282, 0.0
      %v7315 = vmax.f32 %v7283, 0.0
      %v7316 = vmax.f32 %v7284, 0.0
      %v7317 = vmax.f32 %v7285, 0.0
      %7318 = vst.msk [vmem:[%s224] sm:$0xff] %vm226, %v7286
      %7319 = vst.msk [vmem:[%s224 + $0x8] sm:$0xff] %vm226, %v7287
      %7320 = vst.msk [vmem:[%s224 + $0x10] sm:$0xff] %vm226, %v7288
      %7321 = vst.msk [vmem:[%s224 + $0x18] sm:$0xff] %vm226, %v7289
      %7322 = vst.msk [vmem:[%s224 + $0x20] sm:$0xff] %vm226, %v7290
      %7323 = vst.msk [vmem:[%s224 + $0x28] sm:$0xff] %vm226, %v7291
      %7324 = vst.msk [vmem:[%s224 + $0x30] sm:$0xff] %vm226, %v7292
      %7325 = vst.msk [vmem:[%s224 + $0x38] sm:$0xff] %vm226, %v7293
      %7326 = vst.msk [vmem:[%s224 + $0x40] sm:$0xff] %vm226, %v7294
      %7327 = vst.msk [vmem:[%s224 + $0x48] sm:$0xff] %vm226, %v7295
      %7328 = vst.msk [vmem:[%s224 + $0x50] sm:$0xff] %vm226, %v7296
      %7329 = vst.msk [vmem:[%s224 + $0x58] sm:$0xff] %vm226, %v7297
      %7330 = vst.msk [vmem:[%s224 + $0x60] sm:$0xff] %vm226, %v7298
      %7331 = vst.msk [vmem:[%s224 + $0x68] sm:$0xff] %vm226, %v7299
      %7332 = vst.msk [vmem:[%s224 + $0x70] sm:$0xff] %vm226, %v7300
      %7333 = vst.msk [vmem:[%s224 + $0x78] sm:$0xff] %vm226, %v7301
      %7334 = vst.msk [vmem:[%s224 + $0x80] sm:$0xff] %vm226, %v7302
      %7335 = vst.msk [vmem:[%s224 + $0x88] sm:$0xff] %vm226, %v7303
      %7336 = vst.msk [vmem:[%s224 + $0x90] sm:$0xff] %vm226, %v7304
      %7337 = vst.msk [vmem:[%s224 + $0x98] sm:$0xff] %vm226, %v7305
      %7338 = vst.msk [vmem:[%s224 + $0xa0] sm:$0xff] %vm226, %v7306
      %7339 = vst.msk [vmem:[%s224 + $0xa8] sm:$0xff] %vm226, %v7307
      %7340 = vst.msk [vmem:[%s224 + $0xb0] sm:$0xff] %vm226, %v7308
      %7341 = vst.msk [vmem:[%s224 + $0xb8] sm:$0xff] %vm226, %v7309
      %7342 = vst.msk [vmem:[%s224 + $0xc0] sm:$0xff] %vm226, %v7310
      %7343 = vst.msk [vmem:[%s224 + $0xc8] sm:$0xff] %vm226, %v7311
      %7344 = vst.msk [vmem:[%s224 + $0xd0] sm:$0xff] %vm226, %v7312
      %7345 = vst.msk [vmem:[%s224 + $0xd8] sm:$0xff] %vm226, %v7313
      %7346 = vst.msk [vmem:[%s224 + $0xe0] sm:$0xff] %vm226, %v7314
      %7347 = vst.msk [vmem:[%s224 + $0xe8] sm:$0xff] %vm226, %v7315
      %7348 = vst.msk [vmem:[%s224 + $0xf0] sm:$0xff] %vm226, %v7316
      %7349 = vst.msk [vmem:[%s224 + $0xf8] sm:$0xff] %vm226, %v7317
      %p7350 = scmp.lt.s32.totalorder %s16, 1
      %s7351 = scalar_select %p7350, %s16, 1
      %s7352 = smul.addr %s7351, 32
      %s7353 = smul.addr %s7352, 8
      %s7354 = scalar_lea.vmem %s5, %s7353
      // Predicated region
      $region41: #{double_conv_forward.1} parent=39 // pred_check
        %p7355 = pneg %p144
      $region42: #{double_conv_forward.1} parent=39 // pred_check_branch
        %7357 = sbr.rel (%p7355) target = $region44
      $region43: #{double_conv_forward.1} parent=39 // pred_region
        _
      $region44: #{double_conv_forward.1} parent=39 // pred_fallthru
        _
    $region40: #{double_conv_forward.1} parent=5 // pred_fallthru
      _
    %p7358 = scmp.le.s32.totalorder 2, %s11
    // Predicated region
    $region45: #{double_conv_forward.1} parent=5 // pred_check
      %p7359 = pneg %p7358
    $region46: #{double_conv_forward.1} parent=5 // pred_check_branch
      %7361 = sbr.rel (%p7359) target = $region48
    $region47: #{double_conv_forward.1} parent=5 // pred_region
      %s7362 = ssub.s32 %s11, 2
      // Predicated region
      $region49: #{double_conv_forward.1} parent=47 // pred_check
        %p7363 = pneg %p150
      $region50: #{double_conv_forward.1} parent=47 // pred_check_branch
        %7365 = sbr.rel (%p7363) target = $region52
      $region51: #{double_conv_forward.1} parent=47 // pred_region
        %p7366 = scmp.lt.s32.totalorder %s17, 1
        %s7367 = scalar_select %p7366, %s17, 1
        %s7368 = smul.addr %s7367, 32
        %s7369 = smul.addr %s7368, 8
        %s7370 = scalar_lea.vmem %s5, %s7369
      $region52: #{double_conv_forward.1} parent=47 // pred_fallthru
        _
    $region48: #{double_conv_forward.1} parent=5 // pred_fallthru
      _
  $region6: #{double_conv_forward.1} parent=0 // loop_footer
    %s15 = sadd.s32 1, %s11
  $region7: #{double_conv_forward.1} parent=0 // loop_footer_branch
    %10 = sbr.rel target = $region3
  $region8: #{double_conv_forward.1} parent=0 // loop_exit
    _

</llo_original>
